<compile_context>
chip_gen: v7x
topology: tpu7x:2x2x1
jax: 0.10.0
libtpu: 0.0.40
codegen_flags: <defaults>
</compile_context>

<pallas_src>
import functools

import jax
import jax.numpy as jnp
import numpy as np
from jax.experimental import pallas as pl
from jax.experimental.pallas import tpu as pltpu

TM_DEFAULT = 256      # rows per M-tile (256-512 fits v5e/v6e/v7x VMEM comfortably)
NEG_SLOPE = 0.2
EPS = 1e-5


# ----------------------------- Pallas kernels --------------------------------

def _matmul_kernel(p_ref, w_ref, b_ref, o_ref, *, act):
    # p: [TM, K] bf16, w: [K, Cp] bf16, b: [1, Cp] f32  -> MXU matmul, f32 accumulate
    acc = jnp.dot(p_ref[...], w_ref[...], preferred_element_type=jnp.float32)
    acc = acc + b_ref[...]
    if act == "relu":
        acc = jnp.maximum(acc, 0.0)
    elif act == "lrelu":
        acc = jnp.where(acc > 0, acc, NEG_SLOPE * acc)
    o_ref[...] = acc.astype(o_ref.dtype)


def _matmul_res_kernel(p_ref, w_ref, b_ref, r_ref, o_ref, *, act):
    # Same as above but fuses the residual (shortcut) add: out = conv(p) + b + r
    acc = jnp.dot(p_ref[...], w_ref[...], preferred_element_type=jnp.float32)
    acc = acc + b_ref[...]
    if act == "relu":
        acc = jnp.maximum(acc, 0.0)
    elif act == "lrelu":
        acc = jnp.where(acc > 0, acc, NEG_SLOPE * acc)
    acc = acc + r_ref[...].astype(jnp.float32)
    o_ref[...] = acc.astype(o_ref.dtype)


def _spade_mod_kernel(p_ref, xn_ref, w_ref, b_ref, o_ref, *, cp, do_lrelu):
    # One fused kernel: gamma-conv and beta-conv (weights concatenated along the
    # lane axis as [K, 2*cp]) + SPADE modulation + optional LeakyReLU.
    acc = jnp.dot(p_ref[...], w_ref[...], preferred_element_type=jnp.float32)
    acc = acc + b_ref[...]
    gamma = acc[:, :cp]
    beta = acc[:, cp:]
    out = xn_ref[...] * (1.0 + gamma) + beta
    if do_lrelu:
        out = jnp.where(out > 0, out, NEG_SLOPE * out)
    o_ref[...] = out.astype(o_ref.dtype)


# ----------------------------- pallas_call wrappers ---------------------------

def _round_up(x, m):
    return (x + m - 1) // m * m


def _pad_cols(a, cp):
    c = a.shape[-1]
    if c == cp:
        return a
    pad = [(0, 0)] * (a.ndim - 1) + [(0, cp - c)]
    return jnp.pad(a, pad)


def fused_matmul(patches, w_mat, bias, *, act=None, residual=None, tm=TM_DEFAULT):
    """[M, K] @ [K, Cp] + bias (+ residual) (+ activation), tiled over M."""
    M, K = patches.shape
    Cp = w_mat.shape[1]
    tm_eff = min(tm, _round_up(M, 8))
    Mp = _round_up(M, tm_eff)
    if Mp != M:
        patches = jnp.pad(patches, ((0, Mp - M), (0, 0)))
        if residual is not None:
            residual = jnp.pad(residual, ((0, Mp - M), (0, 0)))

    in_specs = [
        pl.BlockSpec((tm_eff, K), lambda i: (i, 0)),
        pl.BlockSpec((K, Cp), lambda i: (0, 0)),
        pl.BlockSpec((1, Cp), lambda i: (0, 0)),
    ]
    args = [patches, w_mat, bias]
    if residual is not None:
        in_specs.append(pl.BlockSpec((tm_eff, Cp), lambda i: (i, 0)))
        args.append(residual)
        kernel = functools.partial(_matmul_res_kernel, act=act)
    else:
        kernel = functools.partial(_matmul_kernel, act=act)

    out = pl.pallas_call(
        kernel,
        out_shape=jax.ShapeDtypeStruct((Mp, Cp), jnp.float32),
        grid=(Mp // tm_eff,),
        in_specs=in_specs,
        out_specs=pl.BlockSpec((tm_eff, Cp), lambda i: (i, 0)),
        compiler_params=pltpu.CompilerParams(dimension_semantics=("parallel",)),
    )(*args)
    return out[:M]


def spade_modulate(patches, xn_flat, w_gb, b_gb, *, cp, do_lrelu, tm=TM_DEFAULT):
    """Fused gamma/beta conv + SPADE modulation (+ LeakyReLU), tiled over M."""
    M, K = patches.shape
    C2 = w_gb.shape[1]
    tm_eff = min(tm, _round_up(M, 8))
    Mp = _round_up(M, tm_eff)
    if Mp != M:
        patches = jnp.pad(patches, ((0, Mp - M), (0, 0)))
        xn_flat = jnp.pad(xn_flat, ((0, Mp - M), (0, 0)))

    kernel = functools.partial(_spade_mod_kernel, cp=cp, do_lrelu=do_lrelu)
    out = pl.pallas_call(
        kernel,
        out_shape=jax.ShapeDtypeStruct((Mp, cp), jnp.float32),
        grid=(Mp // tm_eff,),
        in_specs=[
            pl.BlockSpec((tm_eff, K), lambda i: (i, 0)),
            pl.BlockSpec((tm_eff, cp), lambda i: (i, 0)),
            pl.BlockSpec((K, C2), lambda i: (0, 0)),
            pl.BlockSpec((1, C2), lambda i: (0, 0)),
        ],
        out_specs=pl.BlockSpec((tm_eff, cp), lambda i: (i, 0)),
        compiler_params=pltpu.CompilerParams(dimension_semantics=("parallel",)),
    )(patches, xn_flat, w_gb, b_gb)
    return out[:M]


# ------------------------------- JAX glue -------------------------------------

def _im2col3x3(x_bf16):
    """x: [N, H+2, W+2, C] (already padded) -> [N*H*W, 9*C] in (kh, kw, c) order."""
    N, Hp, Wp, C = x_bf16.shape
    Ho, Wo = Hp - 2, Wp - 2
    cols = [x_bf16[:, i:i + Ho, j:j + Wo, :] for i in range(3) for j in range(3)]
    p = jnp.concatenate(cols, axis=-1)
    return p.reshape(N * Ho * Wo, 9 * C), (N, Ho, Wo)


def conv3x3(x_nhwc, w, b, *, pad_mode, act=None, residual=None):
    """3x3 stride-1 conv (zero or reflect pad 1) as a fused Pallas matmul."""
    cin = x_nhwc.shape[-1]
    cout = w.shape[-1]
    cp = _round_up(cout, 128)
    mode = "constant" if pad_mode == "zero" else "reflect"
    xp = jnp.pad(x_nhwc, ((0, 0), (1, 1), (1, 1), (0, 0)), mode=mode)
    patches, (N, Ho, Wo) = _im2col3x3(xp.astype(jnp.bfloat16))
    w_mat = _pad_cols(w.reshape(9 * cin, cout), cp).astype(jnp.bfloat16)
    b_mat = _pad_cols(b[None, :].astype(jnp.float32), cp)
    res = None
    if residual is not None:
        res = _pad_cols(residual.reshape(N * Ho * Wo, cout).astype(jnp.float32), cp)
    out = fused_matmul(patches, w_mat, b_mat, act=act, residual=res)
    return out[:, :cout].reshape(N, Ho, Wo, cout)


def conv1x1(x_nhwc, w):
    """1x1 conv (bias-free, for the learned shortcut) as a Pallas matmul."""
    N, H, W, cin = x_nhwc.shape
    cout = w.shape[-1]
    cp = _round_up(cout, 128)
    patches = x_nhwc.reshape(N * H * W, cin).astype(jnp.bfloat16)
    w_mat = _pad_cols(w.reshape(cin, cout), cp).astype(jnp.bfloat16)
    b_mat = jnp.zeros((1, cp), jnp.float32)
    out = fused_matmul(patches, w_mat, b_mat, act=None)
    return out[:, :cout].reshape(N, H, W, cout)


def _nearest_resize(seg_nhwc, H, W):
    N, Hs, Ws, C = seg_nhwc.shape
    if (Hs, Ws) == (H, W):
        return seg_nhwc
    hi = (jnp.arange(H) * Hs // H).astype(jnp.int32)
    wi = (jnp.arange(W) * Ws // W).astype(jnp.int32)
    return seg_nhwc[:, hi][:, :, wi]


def spade_norm(x_nhwc, seg_nhwc, p, *, fuse_lrelu):
    """SPADE('spadeinstance3x3') + (optionally fused) LeakyReLU(0.2)."""
    N, H, W, C = x_nhwc.shape
    xf = x_nhwc.astype(jnp.float32)
    mean = jnp.mean(xf, axis=(1, 2), keepdims=True)          # InstanceNorm2d stats
    var = jnp.var(xf, axis=(1, 2), keepdims=True)
    xn = (xf - mean) * jax.lax.rsqrt(var + EPS)

    seg = _nearest_resize(seg_nhwc, H, W).astype(jnp.float32)
    # shared MLP: conv3x3 (zero pad 1) + ReLU, fused in Pallas
    actv = conv3x3(seg, p["w_shared"], p["b_shared"], pad_mode="zero", act="relu")

    # gamma/beta convs + modulation + activation, fused in one Pallas kernel
    cp = _round_up(C, 128)
    nh = actv.shape[-1]
    ap = jnp.pad(actv, ((0, 0), (1, 1), (1, 1), (0, 0)))
    patches, _ = _im2col3x3(ap.astype(jnp.bfloat16))
    w_g = _pad_cols(p["w_gamma"].reshape(9 * nh, C), cp)
    w_b = _pad_cols(p["w_beta"].reshape(9 * nh, C), cp)
    w_gb = jnp.concatenate([w_g, w_b], axis=1).astype(jnp.bfloat16)
    b_gb = jnp.concatenate([_pad_cols(p["b_gamma"][None, :], cp),
                            _pad_cols(p["b_beta"][None, :], cp)], axis=1
                           ).astype(jnp.float32)
    xn_flat = _pad_cols(xn.reshape(N * H * W, C), cp)
    out = spade_modulate(patches, xn_flat, w_gb, b_gb, cp=cp, do_lrelu=fuse_lrelu)
    return out[:, :C].reshape(N, H, W, C)


# ----------------------------- block forward ----------------------------------

def spade_resnet_block_forward(x_nchw, seg_nchw, params):
    x = jnp.transpose(x_nchw, (0, 2, 3, 1))                   # NCHW -> NHWC
    seg = jnp.transpose(seg_nchw, (0, 2, 3, 1))

    # shortcut: conv_s(norm_s(x, seg)) if fin != fout else identity
    if params["learned_shortcut"]:
        xs_n = spade_norm(x, seg, params["norm_s"], fuse_lrelu=False)
        x_s = conv1x1(xs_n, params["w_convs"])
    else:
        x_s = x.astype(jnp.float32)

    # main path: conv_0(reflect_pad(actvn(norm_0(x)))) ; conv_1(reflect_pad(actvn(norm_1(.))))
    h = spade_norm(x, seg, params["norm_0"], fuse_lrelu=True)
    h = conv3x3(h, params["w_conv0"], params["b_conv0"], pad_mode="reflect")
    h = spade_norm(h, seg, params["norm_1"], fuse_lrelu=True)
    out = conv3x3(h, params["w_conv1"], params["b_conv1"], pad_mode="reflect",
                  residual=x_s)                               # residual add fused
    # TODO(synk): SELayer (use_se=True) and spectral_norm ('spectral' in norm_G) paths
    #             are not implemented; this block uses use_se=False, norm_G without spectral.
    return jnp.transpose(out, (0, 3, 1, 2))                   # NHWC -> NCHW


def init_spade_resnet_block_params(key, fin, fout, ic=1, nhidden=128, gain=0.02):
    """Mirrors init_weights('normal', 0.02): conv weights ~ N(0, 0.02), biases 0."""
    fmiddle = min(fin, fout)
    learned_shortcut = fin != fout
    keys = iter(jax.random.split(key, 16))

    def conv_w(cin, cout, k=3):
        return gain * jax.random.normal(next(keys), (k, k, cin, cout), jnp.float32)

    def spade_params(norm_nc):
        return dict(
            w_shared=conv_w(ic, nhidden), b_shared=jnp.zeros((nhidden,), jnp.float32),
            w_gamma=conv_w(nhidden, norm_nc), b_gamma=jnp.zeros((norm_nc,), jnp.float32),
            w_beta=conv_w(nhidden, norm_nc), b_beta=jnp.zeros((norm_nc,), jnp.float32),
        )

    params = dict(
        learned_shortcut=learned_shortcut,
        norm_0=spade_params(fin),
        norm_1=spade_params(fmiddle),
        w_conv0=conv_w(fin, fmiddle), b_conv0=jnp.zeros((fmiddle,), jnp.float32),
        w_conv1=conv_w(fmiddle, fout), b_conv1=jnp.zeros((fout,), jnp.float32),
    )
    if learned_shortcut:
        params["norm_s"] = spade_params(fin)
        params["w_convs"] = conv_w(fin, fout, k=1)            # bias=False
    return params


# --------------------------- pure-JAX reference --------------------------------

def _ref_conv(x, w, b, *, pad):
    out = jax.lax.conv_general_dilated(
        x, w, window_strides=(1, 1), padding=((pad, pad), (pad, pad)),
        dimension_numbers=("NHWC", "HWIO", "NHWC"))
    return out if b is None else out + b


def spade_resnet_block_reference(x_nchw, seg_nchw, params):
    x = jnp.transpose(x_nchw, (0, 2, 3, 1)).astype(jnp.float32)
    seg = jnp.transpose(seg_nchw, (0, 2, 3, 1)).astype(jnp.float32)

    def ref_spade(xx, p, lrelu):
        mean = jnp.mean(xx, (1, 2), keepdims=True)
        var = jnp.var(xx, (1, 2), keepdims=True)
        xn = (xx - mean) * jax.lax.rsqrt(var + EPS)
        segr = _nearest_resize(seg, xx.shape[1], xx.shape[2])
        actv = jax.nn.relu(_ref_conv(segr, p["w_shared"], p["b_shared"], pad=1))
        gamma = _ref_conv(actv, p["w_gamma"], p["b_gamma"], pad=1)
        beta = _ref_conv(actv, p["w_beta"], p["b_beta"], pad=1)
        out = xn * (1.0 + gamma) + beta
        return jnp.where(out > 0, out, NEG_SLOPE * out) if lrelu else out

    if params["learned_shortcut"]:
        x_s = _ref_conv(ref_spade(x, params["norm_s"], False), params["w_convs"], None, pad=0)
    else:
        x_s = x

    def refl(z):
        return jnp.pad(z, ((0, 0), (1, 1), (1, 1), (0, 0)), mode="reflect")

    h = _ref_conv(refl(ref_spade(x, params["norm_0"], True)),
                  params["w_conv0"], params["b_conv0"], pad=0)
    h = _ref_conv(refl(ref_spade(h, params["norm_1"], True)),
                  params["w_conv1"], params["b_conv1"], pad=0)
    return jnp.transpose(x_s + h, (0, 3, 1, 2))


# --------------------------------- main -----------------------------------------

if __name__ == "__main__":
    key = jax.random.PRNGKey(0)
    k_param, k_x, k_seg = jax.random.split(key, 3)

    fin, fout = 32, 64            # fin != fout -> learned shortcut path exercised
    N, H, W = 2, 16, 16
    x = jax.random.normal(k_x, (N, fin, H, W), jnp.float32)
    seg = jax.random.normal(k_seg, (N, 1, 8, 8), jnp.float32)   # resized to 16x16 inside

    params = init_spade_resnet_block_params(k_param, fin, fout, ic=1, nhidden=128)

    fwd = jax.jit(lambda xx, ss: spade_resnet_block_forward(xx, ss, params))
    out = jax.block_until_ready(fwd(x, seg))

    assert out.shape == (N, fout, H, W), out.shape
    assert bool(jnp.all(jnp.isfinite(out)))

    ref = jax.block_until_ready(spade_resnet_block_reference(x, seg, params))
    np.testing.assert_allclose(np.asarray(out), np.asarray(ref), rtol=5e-2, atol=5e-2)

    print("KERNEL_OK")
</pallas_src>

<mosaic_0001>
module attributes {stable_mosaic.version = 11 : i64} {
  func.func @_matmul_kernel(%arg0: i32, %arg1: memref<256x9xbf16, #tpu.memory_space<vmem>>, %arg2: memref<9x128xbf16, #tpu.memory_space<vmem>>, %arg3: memref<1x128xf32, #tpu.memory_space<vmem>>, %arg4: memref<256x128xf32, #tpu.memory_space<vmem>>) attributes {dimension_semantics = [#tpu.dimension_semantics<parallel>], iteration_bounds = array<i64: 2>, scalar_prefetch = 0 : i64, scratch_operands = 0 : i64, tpu.core_type = #tpu.core_type<tc>, window_params = [{transform_indices = @transform_0, window_bounds = array<i64: 256, 9>}, {pipeline_mode = #tpu.pipeline_mode<synchronous>, transform_indices = @transform_1, window_bounds = array<i64: 9, 128>}, {pipeline_mode = #tpu.pipeline_mode<synchronous>, transform_indices = @transform_2, window_bounds = array<i64: 1, 128>}, {transform_indices = @transform_3, window_bounds = array<i64: 256, 128>}]} {
    %c0 = arith.constant 0 : index
    %c0_0 = arith.constant 0 : index
    %0 = vector.load %arg1[%c0, %c0_0] : memref<256x9xbf16, #tpu.memory_space<vmem>>, vector<256x9xbf16>
    %c0_1 = arith.constant 0 : index
    %c0_2 = arith.constant 0 : index
    %1 = vector.load %arg2[%c0_1, %c0_2] : memref<9x128xbf16, #tpu.memory_space<vmem>>, vector<9x128xbf16>
    %cst = arith.constant dense<0.000000e+00> : vector<256x128xf32>
    %2 = tpu.matmul %0, %1, %cst {dimension_numbers = #tpu.dot_dimension_numbers<[1], [0], [0], [1], [0, 0, 1, 1], [], []>} : vector<256x9xbf16>, vector<9x128xbf16>, vector<256x128xf32> -> vector<256x128xf32>
    %c0_3 = arith.constant 0 : index
    %c0_4 = arith.constant 0 : index
    %3 = vector.load %arg3[%c0_3, %c0_4] : memref<1x128xf32, #tpu.memory_space<vmem>>, vector<1x128xf32>
    %4 = vector.broadcast %3 : vector<1x128xf32> to vector<256x128xf32>
    %5 = arith.addf %2, %4 : vector<256x128xf32>
    %cst_5 = arith.constant 0.000000e+00 : f32
    %6 = vector.broadcast %cst_5 : f32 to vector<256x128xf32>
    %7 = arith.maximumf %5, %6 : vector<256x128xf32>
    %c0_6 = arith.constant 0 : index
    %c0_7 = arith.constant 0 : index
    %8 = vector.load %arg4[%c0_6, %c0_7] : memref<256x128xf32, #tpu.memory_space<vmem>>, vector<256x128xf32>
    tpu.vector_store %arg4[%c0_6, %c0_7], %7 {strides = array<i32>} : memref<256x128xf32, #tpu.memory_space<vmem>>, vector<256x128xf32>,
    return
  }
  func.func @transform_0(%arg0: i32) -> (i32, i32) {
    %c0_i32 = arith.constant 0 : i32
    %c0_i32_0 = arith.constant 0 : i32
    return %arg0, %c0_i32 : i32, i32
  }
  func.func @transform_1(%arg0: i32) -> (i32, i32) {
    %c0_i32 = arith.constant 0 : i32
    %c0_i32_0 = arith.constant 0 : i32
    %c0_i32_1 = arith.constant 0 : i32
    return %c0_i32, %c0_i32_0 : i32, i32
  }
  func.func @transform_2(%arg0: i32) -> (i32, i32) {
    %c0_i32 = arith.constant 0 : i32
    %c0_i32_0 = arith.constant 0 : i32
    %c0_i32_1 = arith.constant 0 : i32
    return %c0_i32, %c0_i32_0 : i32, i32
  }
  func.func @transform_3(%arg0: i32) -> (i32, i32) {
    %c0_i32 = arith.constant 0 : i32
    %c0_i32_0 = arith.constant 0 : i32
    return %arg0, %c0_i32 : i32, i32
  }
}

module attributes {stable_mosaic.version = 11 : i64} {
  func.func @_spade_mod_kernel(%arg0: i32, %arg1: memref<256x1152xbf16, #tpu.memory_space<vmem>>, %arg2: memref<256x128xf32, #tpu.memory_space<vmem>>, %arg3: memref<1152x256xbf16, #tpu.memory_space<vmem>>, %arg4: memref<1x256xf32, #tpu.memory_space<vmem>>, %arg5: memref<256x128xf32, #tpu.memory_space<vmem>>) attributes {dimension_semantics = [#tpu.dimension_semantics<parallel>], iteration_bounds = array<i64: 2>, scalar_prefetch = 0 : i64, scratch_operands = 0 : i64, tpu.core_type = #tpu.core_type<tc>, window_params = [{transform_indices = @transform_0, window_bounds = array<i64: 256, 1152>}, {transform_indices = @transform_1, window_bounds = array<i64: 256, 128>}, {pipeline_mode = #tpu.pipeline_mode<synchronous>, transform_indices = @transform_2, window_bounds = array<i64: 1152, 256>}, {pipeline_mode = #tpu.pipeline_mode<synchronous>, transform_indices = @transform_3, window_bounds = array<i64: 1, 256>}, {transform_indices = @transform_4, window_bounds = array<i64: 256, 128>}]} {
    %c0 = arith.constant 0 : index
    %c0_0 = arith.constant 0 : index
    %0 = vector.load %arg1[%c0, %c0_0] : memref<256x1152xbf16, #tpu.memory_space<vmem>>, vector<256x1152xbf16>
    %c0_1 = arith.constant 0 : index
    %c0_2 = arith.constant 0 : index
    %1 = vector.load %arg3[%c0_1, %c0_2] : memref<1152x256xbf16, #tpu.memory_space<vmem>>, vector<1152x256xbf16>
    %cst = arith.constant dense<0.000000e+00> : vector<256x256xf32>
    %2 = tpu.matmul %0, %1, %cst {dimension_numbers = #tpu.dot_dimension_numbers<[1], [0], [0], [1], [0, 0, 1, 1], [], []>} : vector<256x1152xbf16>, vector<1152x256xbf16>, vector<256x256xf32> -> vector<256x256xf32>
    %c0_3 = arith.constant 0 : index
    %c0_4 = arith.constant 0 : index
    %3 = vector.load %arg4[%c0_3, %c0_4] : memref<1x256xf32, #tpu.memory_space<vmem>>, vector<1x256xf32>
    %4 = vector.broadcast %3 : vector<1x256xf32> to vector<256x256xf32>
    %5 = arith.addf %2, %4 : vector<256x256xf32>
    %6 = vector.extract_strided_slice %5 {offsets = [0, 0], sizes = [256, 128], strides = [1, 1]} : vector<256x256xf32> to vector<256x128xf32>
    %7 = vector.extract_strided_slice %5 {offsets = [0, 128], sizes = [256, 128], strides = [1, 1]} : vector<256x256xf32> to vector<256x128xf32>
    %c0_5 = arith.constant 0 : index
    %c0_6 = arith.constant 0 : index
    %8 = vector.load %arg2[%c0_5, %c0_6] : memref<256x128xf32, #tpu.memory_space<vmem>>, vector<256x128xf32>
    %cst_7 = arith.constant 1.000000e+00 : f32
    %9 = vector.broadcast %cst_7 : f32 to vector<256x128xf32>
    %10 = arith.addf %9, %6 : vector<256x128xf32>
    %11 = arith.mulf %8, %10 : vector<256x128xf32>
    %12 = arith.addf %11, %7 : vector<256x128xf32>
    %cst_8 = arith.constant 0.000000e+00 : f32
    %13 = vector.broadcast %cst_8 : f32 to vector<256x128xf32>
    %14 = arith.cmpf ogt, %12, %13 : vector<256x128xf32>
    %cst_9 = arith.constant 2.000000e-01 : f32
    %15 = vector.broadcast %cst_9 : f32 to vector<256x128xf32>
    %16 = arith.mulf %15, %12 : vector<256x128xf32>
    %17 = arith.select %14, %12, %16 : vector<256x128xi1>, vector<256x128xf32>
    %c0_10 = arith.constant 0 : index
    %c0_11 = arith.constant 0 : index
    %18 = vector.load %arg5[%c0_10, %c0_11] : memref<256x128xf32, #tpu.memory_space<vmem>>, vector<256x128xf32>
    tpu.vector_store %arg5[%c0_10, %c0_11], %17 {strides = array<i32>} : memref<256x128xf32, #tpu.memory_space<vmem>>, vector<256x128xf32>,
    return
  }
  func.func @transform_0(%arg0: i32) -> (i32, i32) {
    %c0_i32 = arith.constant 0 : i32
    %c0_i32_0 = arith.constant 0 : i32
    return %arg0, %c0_i32 : i32, i32
  }
  func.func @transform_1(%arg0: i32) -> (i32, i32) {
    %c0_i32 = arith.constant 0 : i32
    %c0_i32_0 = arith.constant 0 : i32
    return %arg0, %c0_i32 : i32, i32
  }
  func.func @transform_2(%arg0: i32) -> (i32, i32) {
    %c0_i32 = arith.constant 0 : i32
    %c0_i32_0 = arith.constant 0 : i32
    %c0_i32_1 = arith.constant 0 : i32
    return %c0_i32, %c0_i32_0 : i32, i32
  }
  func.func @transform_3(%arg0: i32) -> (i32, i32) {
    %c0_i32 = arith.constant 0 : i32
    %c0_i32_0 = arith.constant 0 : i32
    %c0_i32_1 = arith.constant 0 : i32
    return %c0_i32, %c0_i32_0 : i32, i32
  }
  func.func @transform_4(%arg0: i32) -> (i32, i32) {
    %c0_i32 = arith.constant 0 : i32
    %c0_i32_0 = arith.constant 0 : i32
    return %arg0, %c0_i32 : i32, i32
  }
}

module attributes {stable_mosaic.version = 11 : i64} {
  func.func @_matmul_kernel(%arg0: i32, %arg1: memref<256x288xbf16, #tpu.memory_space<vmem>>, %arg2: memref<288x128xbf16, #tpu.memory_space<vmem>>, %arg3: memref<1x128xf32, #tpu.memory_space<vmem>>, %arg4: memref<256x128xf32, #tpu.memory_space<vmem>>) attributes {dimension_semantics = [#tpu.dimension_semantics<parallel>], iteration_bounds = array<i64: 2>, scalar_prefetch = 0 : i64, scratch_operands = 0 : i64, tpu.core_type = #tpu.core_type<tc>, window_params = [{transform_indices = @transform_0, window_bounds = array<i64: 256, 288>}, {pipeline_mode = #tpu.pipeline_mode<synchronous>, transform_indices = @transform_1, window_bounds = array<i64: 288, 128>}, {pipeline_mode = #tpu.pipeline_mode<synchronous>, transform_indices = @transform_2, window_bounds = array<i64: 1, 128>}, {transform_indices = @transform_3, window_bounds = array<i64: 256, 128>}]} {
    %c0 = arith.constant 0 : index
    %c0_0 = arith.constant 0 : index
    %0 = vector.load %arg1[%c0, %c0_0] : memref<256x288xbf16, #tpu.memory_space<vmem>>, vector<256x288xbf16>
    %c0_1 = arith.constant 0 : index
    %c0_2 = arith.constant 0 : index
    %1 = vector.load %arg2[%c0_1, %c0_2] : memref<288x128xbf16, #tpu.memory_space<vmem>>, vector<288x128xbf16>
    %cst = arith.constant dense<0.000000e+00> : vector<256x128xf32>
    %2 = tpu.matmul %0, %1, %cst {dimension_numbers = #tpu.dot_dimension_numbers<[1], [0], [0], [1], [0, 0, 1, 1], [], []>} : vector<256x288xbf16>, vector<288x128xbf16>, vector<256x128xf32> -> vector<256x128xf32>
    %c0_3 = arith.constant 0 : index
    %c0_4 = arith.constant 0 : index
    %3 = vector.load %arg3[%c0_3, %c0_4] : memref<1x128xf32, #tpu.memory_space<vmem>>, vector<1x128xf32>
    %4 = vector.broadcast %3 : vector<1x128xf32> to vector<256x128xf32>
    %5 = arith.addf %2, %4 : vector<256x128xf32>
    %c0_5 = arith.constant 0 : index
    %c0_6 = arith.constant 0 : index
    %6 = vector.load %arg4[%c0_5, %c0_6] : memref<256x128xf32, #tpu.memory_space<vmem>>, vector<256x128xf32>
    tpu.vector_store %arg4[%c0_5, %c0_6], %5 {strides = array<i32>} : memref<256x128xf32, #tpu.memory_space<vmem>>, vector<256x128xf32>,
    return
  }
  func.func @transform_0(%arg0: i32) -> (i32, i32) {
    %c0_i32 = arith.constant 0 : i32
    %c0_i32_0 = arith.constant 0 : i32
    return %arg0, %c0_i32 : i32, i32
  }
  func.func @transform_1(%arg0: i32) -> (i32, i32) {
    %c0_i32 = arith.constant 0 : i32
    %c0_i32_0 = arith.constant 0 : i32
    %c0_i32_1 = arith.constant 0 : i32
    return %c0_i32, %c0_i32_0 : i32, i32
  }
  func.func @transform_2(%arg0: i32) -> (i32, i32) {
    %c0_i32 = arith.constant 0 : i32
    %c0_i32_0 = arith.constant 0 : i32
    %c0_i32_1 = arith.constant 0 : i32
    return %c0_i32, %c0_i32_0 : i32, i32
  }
  func.func @transform_3(%arg0: i32) -> (i32, i32) {
    %c0_i32 = arith.constant 0 : i32
    %c0_i32_0 = arith.constant 0 : i32
    return %arg0, %c0_i32 : i32, i32
  }
}

module attributes {stable_mosaic.version = 11 : i64} {
  func.func @_matmul_kernel(%arg0: i32, %arg1: memref<256x9xbf16, #tpu.memory_space<vmem>>, %arg2: memref<9x128xbf16, #tpu.memory_space<vmem>>, %arg3: memref<1x128xf32, #tpu.memory_space<vmem>>, %arg4: memref<256x128xf32, #tpu.memory_space<vmem>>) attributes {dimension_semantics = [#tpu.dimension_semantics<parallel>], iteration_bounds = array<i64: 2>, scalar_prefetch = 0 : i64, scratch_operands = 0 : i64, tpu.core_type = #tpu.core_type<tc>, window_params = [{transform_indices = @transform_0, window_bounds = array<i64: 256, 9>}, {pipeline_mode = #tpu.pipeline_mode<synchronous>, transform_indices = @transform_1, window_bounds = array<i64: 9, 128>}, {pipeline_mode = #tpu.pipeline_mode<synchronous>, transform_indices = @transform_2, window_bounds = array<i64: 1, 128>}, {transform_indices = @transform_3, window_bounds = array<i64: 256, 128>}]} {
    %c0 = arith.constant 0 : index
    %c0_0 = arith.constant 0 : index
    %0 = vector.load %arg1[%c0, %c0_0] : memref<256x9xbf16, #tpu.memory_space<vmem>>, vector<256x9xbf16>
    %c0_1 = arith.constant 0 : index
    %c0_2 = arith.constant 0 : index
    %1 = vector.load %arg2[%c0_1, %c0_2] : memref<9x128xbf16, #tpu.memory_space<vmem>>, vector<9x128xbf16>
    %cst = arith.constant dense<0.000000e+00> : vector<256x128xf32>
    %2 = tpu.matmul %0, %1, %cst {dimension_numbers = #tpu.dot_dimension_numbers<[1], [0], [0], [1], [0, 0, 1, 1], [], []>} : vector<256x9xbf16>, vector<9x128xbf16>, vector<256x128xf32> -> vector<256x128xf32>
    %c0_3 = arith.constant 0 : index
    %c0_4 = arith.constant 0 : index
    %3 = vector.load %arg3[%c0_3, %c0_4] : memref<1x128xf32, #tpu.memory_space<vmem>>, vector<1x128xf32>
    %4 = vector.broadcast %3 : vector<1x128xf32> to vector<256x128xf32>
    %5 = arith.addf %2, %4 : vector<256x128xf32>
    %cst_5 = arith.constant 0.000000e+00 : f32
    %6 = vector.broadcast %cst_5 : f32 to vector<256x128xf32>
    %7 = arith.maximumf %5, %6 : vector<256x128xf32>
    %c0_6 = arith.constant 0 : index
    %c0_7 = arith.constant 0 : index
    %8 = vector.load %arg4[%c0_6, %c0_7] : memref<256x128xf32, #tpu.memory_space<vmem>>, vector<256x128xf32>
    tpu.vector_store %arg4[%c0_6, %c0_7], %7 {strides = array<i32>} : memref<256x128xf32, #tpu.memory_space<vmem>>, vector<256x128xf32>,
    return
  }
  func.func @transform_0(%arg0: i32) -> (i32, i32) {
    %c0_i32 = arith.constant 0 : i32
    %c0_i32_0 = arith.constant 0 : i32
    return %arg0, %c0_i32 : i32, i32
  }
  func.func @transform_1(%arg0: i32) -> (i32, i32) {
    %c0_i32 = arith.constant 0 : i32
    %c0_i32_0 = arith.constant 0 : i32
    %c0_i32_1 = arith.constant 0 : i32
    return %c0_i32, %c0_i32_0 : i32, i32
  }
  func.func @transform_2(%arg0: i32) -> (i32, i32) {
    %c0_i32 = arith.constant 0 : i32
    %c0_i32_0 = arith.constant 0 : i32
    %c0_i32_1 = arith.constant 0 : i32
    return %c0_i32, %c0_i32_0 : i32, i32
  }
  func.func @transform_3(%arg0: i32) -> (i32, i32) {
    %c0_i32 = arith.constant 0 : i32
    %c0_i32_0 = arith.constant 0 : i32
    return %arg0, %c0_i32 : i32, i32
  }
}

module attributes {stable_mosaic.version = 11 : i64} {
  func.func @_spade_mod_kernel(%arg0: i32, %arg1: memref<256x1152xbf16, #tpu.memory_space<vmem>>, %arg2: memref<256x128xf32, #tpu.memory_space<vmem>>, %arg3: memref<1152x256xbf16, #tpu.memory_space<vmem>>, %arg4: memref<1x256xf32, #tpu.memory_space<vmem>>, %arg5: memref<256x128xf32, #tpu.memory_space<vmem>>) attributes {dimension_semantics = [#tpu.dimension_semantics<parallel>], iteration_bounds = array<i64: 2>, scalar_prefetch = 0 : i64, scratch_operands = 0 : i64, tpu.core_type = #tpu.core_type<tc>, window_params = [{transform_indices = @transform_0, window_bounds = array<i64: 256, 1152>}, {transform_indices = @transform_1, window_bounds = array<i64: 256, 128>}, {pipeline_mode = #tpu.pipeline_mode<synchronous>, transform_indices = @transform_2, window_bounds = array<i64: 1152, 256>}, {pipeline_mode = #tpu.pipeline_mode<synchronous>, transform_indices = @transform_3, window_bounds = array<i64: 1, 256>}, {transform_indices = @transform_4, window_bounds = array<i64: 256, 128>}]} {
    %c0 = arith.constant 0 : index
    %c0_0 = arith.constant 0 : index
    %0 = vector.load %arg1[%c0, %c0_0] : memref<256x1152xbf16, #tpu.memory_space<vmem>>, vector<256x1152xbf16>
    %c0_1 = arith.constant 0 : index
    %c0_2 = arith.constant 0 : index
    %1 = vector.load %arg3[%c0_1, %c0_2] : memref<1152x256xbf16, #tpu.memory_space<vmem>>, vector<1152x256xbf16>
    %cst = arith.constant dense<0.000000e+00> : vector<256x256xf32>
    %2 = tpu.matmul %0, %1, %cst {dimension_numbers = #tpu.dot_dimension_numbers<[1], [0], [0], [1], [0, 0, 1, 1], [], []>} : vector<256x1152xbf16>, vector<1152x256xbf16>, vector<256x256xf32> -> vector<256x256xf32>
    %c0_3 = arith.constant 0 : index
    %c0_4 = arith.constant 0 : index
    %3 = vector.load %arg4[%c0_3, %c0_4] : memref<1x256xf32, #tpu.memory_space<vmem>>, vector<1x256xf32>
    %4 = vector.broadcast %3 : vector<1x256xf32> to vector<256x256xf32>
    %5 = arith.addf %2, %4 : vector<256x256xf32>
    %6 = vector.extract_strided_slice %5 {offsets = [0, 0], sizes = [256, 128], strides = [1, 1]} : vector<256x256xf32> to vector<256x128xf32>
    %7 = vector.extract_strided_slice %5 {offsets = [0, 128], sizes = [256, 128], strides = [1, 1]} : vector<256x256xf32> to vector<256x128xf32>
    %c0_5 = arith.constant 0 : index
    %c0_6 = arith.constant 0 : index
    %8 = vector.load %arg2[%c0_5, %c0_6] : memref<256x128xf32, #tpu.memory_space<vmem>>, vector<256x128xf32>
    %cst_7 = arith.constant 1.000000e+00 : f32
    %9 = vector.broadcast %cst_7 : f32 to vector<256x128xf32>
    %10 = arith.addf %9, %6 : vector<256x128xf32>
    %11 = arith.mulf %8, %10 : vector<256x128xf32>
    %12 = arith.addf %11, %7 : vector<256x128xf32>
    %c0_8 = arith.constant 0 : index
    %c0_9 = arith.constant 0 : index
    %13 = vector.load %arg5[%c0_8, %c0_9] : memref<256x128xf32, #tpu.memory_space<vmem>>, vector<256x128xf32>
    tpu.vector_store %arg5[%c0_8, %c0_9], %12 {strides = array<i32>} : memref<256x128xf32, #tpu.memory_space<vmem>>, vector<256x128xf32>,
    return
  }
  func.func @transform_0(%arg0: i32) -> (i32, i32) {
    %c0_i32 = arith.constant 0 : i32
    %c0_i32_0 = arith.constant 0 : i32
    return %arg0, %c0_i32 : i32, i32
  }
  func.func @transform_1(%arg0: i32) -> (i32, i32) {
    %c0_i32 = arith.constant 0 : i32
    %c0_i32_0 = arith.constant 0 : i32
    return %arg0, %c0_i32 : i32, i32
  }
  func.func @transform_2(%arg0: i32) -> (i32, i32) {
    %c0_i32 = arith.constant 0 : i32
    %c0_i32_0 = arith.constant 0 : i32
    %c0_i32_1 = arith.constant 0 : i32
    return %c0_i32, %c0_i32_0 : i32, i32
  }
  func.func @transform_3(%arg0: i32) -> (i32, i32) {
    %c0_i32 = arith.constant 0 : i32
    %c0_i32_0 = arith.constant 0 : i32
    %c0_i32_1 = arith.constant 0 : i32
    return %c0_i32, %c0_i32_0 : i32, i32
  }
  func.func @transform_4(%arg0: i32) -> (i32, i32) {
    %c0_i32 = arith.constant 0 : i32
    %c0_i32_0 = arith.constant 0 : i32
    return %arg0, %c0_i32 : i32, i32
  }
}

module attributes {stable_mosaic.version = 11 : i64} {
  func.func @_matmul_kernel(%arg0: i32, %arg1: memref<256x32xbf16, #tpu.memory_space<vmem>>, %arg2: memref<32x128xbf16, #tpu.memory_space<vmem>>, %arg3: memref<1x128xf32, #tpu.memory_space<vmem>>, %arg4: memref<256x128xf32, #tpu.memory_space<vmem>>) attributes {dimension_semantics = [#tpu.dimension_semantics<parallel>], iteration_bounds = array<i64: 2>, scalar_prefetch = 0 : i64, scratch_operands = 0 : i64, tpu.core_type = #tpu.core_type<tc>, window_params = [{transform_indices = @transform_0, window_bounds = array<i64: 256, 32>}, {pipeline_mode = #tpu.pipeline_mode<synchronous>, transform_indices = @transform_1, window_bounds = array<i64: 32, 128>}, {pipeline_mode = #tpu.pipeline_mode<synchronous>, transform_indices = @transform_2, window_bounds = array<i64: 1, 128>}, {transform_indices = @transform_3, window_bounds = array<i64: 256, 128>}]} {
    %c0 = arith.constant 0 : index
    %c0_0 = arith.constant 0 : index
    %0 = vector.load %arg1[%c0, %c0_0] : memref<256x32xbf16, #tpu.memory_space<vmem>>, vector<256x32xbf16>
    %c0_1 = arith.constant 0 : index
    %c0_2 = arith.constant 0 : index
    %1 = vector.load %arg2[%c0_1, %c0_2] : memref<32x128xbf16, #tpu.memory_space<vmem>>, vector<32x128xbf16>
    %cst = arith.constant dense<0.000000e+00> : vector<256x128xf32>
    %2 = tpu.matmul %0, %1, %cst {dimension_numbers = #tpu.dot_dimension_numbers<[1], [0], [0], [1], [0, 0, 1, 1], [], []>} : vector<256x32xbf16>, vector<32x128xbf16>, vector<256x128xf32> -> vector<256x128xf32>
    %c0_3 = arith.constant 0 : index
    %c0_4 = arith.constant 0 : index
    %3 = vector.load %arg3[%c0_3, %c0_4] : memref<1x128xf32, #tpu.memory_space<vmem>>, vector<1x128xf32>
    %4 = vector.broadcast %3 : vector<1x128xf32> to vector<256x128xf32>
    %5 = arith.addf %2, %4 : vector<256x128xf32>
    %c0_5 = arith.constant 0 : index
    %c0_6 = arith.constant 0 : index
    %6 = vector.load %arg4[%c0_5, %c0_6] : memref<256x128xf32, #tpu.memory_space<vmem>>, vector<256x128xf32>
    tpu.vector_store %arg4[%c0_5, %c0_6], %5 {strides = array<i32>} : memref<256x128xf32, #tpu.memory_space<vmem>>, vector<256x128xf32>,
    return
  }
  func.func @transform_0(%arg0: i32) -> (i32, i32) {
    %c0_i32 = arith.constant 0 : i32
    %c0_i32_0 = arith.constant 0 : i32
    return %arg0, %c0_i32 : i32, i32
  }
  func.func @transform_1(%arg0: i32) -> (i32, i32) {
    %c0_i32 = arith.constant 0 : i32
    %c0_i32_0 = arith.constant 0 : i32
    %c0_i32_1 = arith.constant 0 : i32
    return %c0_i32, %c0_i32_0 : i32, i32
  }
  func.func @transform_2(%arg0: i32) -> (i32, i32) {
    %c0_i32 = arith.constant 0 : i32
    %c0_i32_0 = arith.constant 0 : i32
    %c0_i32_1 = arith.constant 0 : i32
    return %c0_i32, %c0_i32_0 : i32, i32
  }
  func.func @transform_3(%arg0: i32) -> (i32, i32) {
    %c0_i32 = arith.constant 0 : i32
    %c0_i32_0 = arith.constant 0 : i32
    return %arg0, %c0_i32 : i32, i32
  }
}

module attributes {stable_mosaic.version = 11 : i64} {
  func.func @_matmul_res_kernel(%arg0: i32, %arg1: memref<256x288xbf16, #tpu.memory_space<vmem>>, %arg2: memref<288x128xbf16, #tpu.memory_space<vmem>>, %arg3: memref<1x128xf32, #tpu.memory_space<vmem>>, %arg4: memref<256x128xf32, #tpu.memory_space<vmem>>, %arg5: memref<256x128xf32, #tpu.memory_space<vmem>>) attributes {dimension_semantics = [#tpu.dimension_semantics<parallel>], iteration_bounds = array<i64: 2>, scalar_prefetch = 0 : i64, scratch_operands = 0 : i64, tpu.core_type = #tpu.core_type<tc>, window_params = [{transform_indices = @transform_0, window_bounds = array<i64: 256, 288>}, {pipeline_mode = #tpu.pipeline_mode<synchronous>, transform_indices = @transform_1, window_bounds = array<i64: 288, 128>}, {pipeline_mode = #tpu.pipeline_mode<synchronous>, transform_indices = @transform_2, window_bounds = array<i64: 1, 128>}, {transform_indices = @transform_3, window_bounds = array<i64: 256, 128>}, {transform_indices = @transform_4, window_bounds = array<i64: 256, 128>}]} {
    %c0 = arith.constant 0 : index
    %c0_0 = arith.constant 0 : index
    %0 = vector.load %arg1[%c0, %c0_0] : memref<256x288xbf16, #tpu.memory_space<vmem>>, vector<256x288xbf16>
    %c0_1 = arith.constant 0 : index
    %c0_2 = arith.constant 0 : index
    %1 = vector.load %arg2[%c0_1, %c0_2] : memref<288x128xbf16, #tpu.memory_space<vmem>>, vector<288x128xbf16>
    %cst = arith.constant dense<0.000000e+00> : vector<256x128xf32>
    %2 = tpu.matmul %0, %1, %cst {dimension_numbers = #tpu.dot_dimension_numbers<[1], [0], [0], [1], [0, 0, 1, 1], [], []>} : vector<256x288xbf16>, vector<288x128xbf16>, vector<256x128xf32> -> vector<256x128xf32>
    %c0_3 = arith.constant 0 : index
    %c0_4 = arith.constant 0 : index
    %3 = vector.load %arg3[%c0_3, %c0_4] : memref<1x128xf32, #tpu.memory_space<vmem>>, vector<1x128xf32>
    %4 = vector.broadcast %3 : vector<1x128xf32> to vector<256x128xf32>
    %5 = arith.addf %2, %4 : vector<256x128xf32>
    %c0_5 = arith.constant 0 : index
    %c0_6 = arith.constant 0 : index
    %6 = vector.load %arg4[%c0_5, %c0_6] : memref<256x128xf32, #tpu.memory_space<vmem>>, vector<256x128xf32>
    %7 = arith.addf %5, %6 : vector<256x128xf32>
    %c0_7 = arith.constant 0 : index
    %c0_8 = arith.constant 0 : index
    %8 = vector.load %arg5[%c0_7, %c0_8] : memref<256x128xf32, #tpu.memory_space<vmem>>, vector<256x128xf32>
    tpu.vector_store %arg5[%c0_7, %c0_8], %7 {strides = array<i32>} : memref<256x128xf32, #tpu.memory_space<vmem>>, vector<256x128xf32>,
    return
  }
  func.func @transform_0(%arg0: i32) -> (i32, i32) {
    %c0_i32 = arith.constant 0 : i32
    %c0_i32_0 = arith.constant 0 : i32
    return %arg0, %c0_i32 : i32, i32
  }
  func.func @transform_1(%arg0: i32) -> (i32, i32) {
    %c0_i32 = arith.constant 0 : i32
    %c0_i32_0 = arith.constant 0 : i32
    %c0_i32_1 = arith.constant 0 : i32
    return %c0_i32, %c0_i32_0 : i32, i32
  }
  func.func @transform_2(%arg0: i32) -> (i32, i32) {
    %c0_i32 = arith.constant 0 : i32
    %c0_i32_0 = arith.constant 0 : i32
    %c0_i32_1 = arith.constant 0 : i32
    return %c0_i32, %c0_i32_0 : i32, i32
  }
  func.func @transform_3(%arg0: i32) -> (i32, i32) {
    %c0_i32 = arith.constant 0 : i32
    %c0_i32_0 = arith.constant 0 : i32
    return %arg0, %c0_i32 : i32, i32
  }
  func.func @transform_4(%arg0: i32) -> (i32, i32) {
    %c0_i32 = arith.constant 0 : i32
    %c0_i32_0 = arith.constant 0 : i32
    return %arg0, %c0_i32 : i32, i32
  }
}

</mosaic_0001>

<llo_original>
// kernel: _lambda_.12
$region0: #{_lambda_.12}
  #allocation0 [shape = 'u32[]', space=smem, size = 0x4, offset = 0x4, fixed_abs, tag = 'smem constant byte address 0x4 - core index']
  #allocation1 [shape = 'u32[144,128]{1,0:T(1,128)}', space=vmem, size = 0x12000, scoped, tag = 'internal scratch']
  %s0 = inlined_call_operand.vmem [shape: bf16[512,9], index: 0, kind: input, shape index: {}]
  %s1 = inlined_call_operand.hbm [shape: bf16[9,128], index: 1, kind: input, shape index: {}]
  %s2 = inlined_call_operand.vmem [shape: f32[1,128], index: 2, kind: input, shape index: {}]
  %s3 = inlined_call_operand.vmem [shape: f32[512,128], index: 3, kind: output, shape index: {}]
  %s4 = sld [smem:[#allocation0]]
  $region49: #{_lambda_.12} parent=0
    _
  %s6 = ssub.s32 1, %s4
  %s7 = scalar_select 0, %s6, %s4
  $region1: #{_lambda_.12} parent=0
    #allocation2 [shape = 'u8[4096]{0}', space=vmem, size = 0x1000, scoped, tag = 'input window, operand 1, single buffered']
    #allocation3 [shape = 's32[2]{0}', space=sflag, size = 0x8, scoped, tag = 'scoped memory for _lambda_.12']
    %8 = vsyncpa [#allocation3], 0
    loop: start=0, step=1, limit=4
    $region2: #{_lambda_.12} parent=1 // loop_pre_header
      _
    $region3: #{_lambda_.12} parent=1 // loop_header
      %s10 = sphi 0, %s14
      %p11 = scmp.ge.s32.totalorder %s10, 4
      %s20 = sphi 0, %s22
      %s23 = sphi 0, %s20
      %s24 = sphi 0, %s23
      %s40 = sphi 0, %s24
      %s44 = sphi 0, %s44
      %s46 = sphi 0, %s44
      %s47 = sphi 0, %s46
      %s61 = sphi 0, %s47
      %s65 = sphi 0, %s65
      %s67 = sphi 0, %s65
      %s68 = sphi 0, %s67
      %s82 = sphi 0, %s68
      %s88 = sphi 0, %s90
      %s91 = sphi 0, %s88
      %s92 = sphi 0, %s91
      %s108 = sphi 0, %s92
    $region4: #{_lambda_.12} parent=1 // loop_header_branch
      %13 = sbr.rel (%p11) target = $region8
    $region5: #{_lambda_.12} parent=1 // loop_body
      %s15 = ssub.s32 %s10, 1
      %s16 = ssub.s32 %s10, 2
      %s17 = sadd.s32 %s10, 1
      %s18 = ssub.s32 %s10, %s17
      %p19 = scmp.eq.s32.totalorder %s18, 0
      %s21 = sadd.s32 %s20, 1
      %s22 = scalar_select %p19, %s20, %s21
      %p25 = pneg %p19
      %p26 = scmp.eq.s32.totalorder %s10, 1
      %p27 = por %p25, %p26
      %p28 = scmp.ne.s32.totalorder %s20, %s23
      %p29 = scmp.eq.s32.totalorder %s10, 0
      %p30 = por %p28, %p29
      %p31 = scmp.ne.s32.totalorder %s20, %s23
      %p32 = scmp.eq.s32.totalorder %s15, 1
      %p33 = por %p31, %p32
      %p34 = scmp.ne.s32.totalorder %s23, %s24
      %p35 = scmp.eq.s32.totalorder %s15, 0
      %p36 = por %p34, %p35
      %p37 = scmp.ne.s32.totalorder %s23, %s24
      %p38 = scmp.eq.s32.totalorder %s16, 1
      %p39 = por %p37, %p38
      %p41 = scmp.ne.s32.totalorder %s24, %s40
      %p42 = scmp.eq.s32.totalorder %s16, 0
      %p43 = por %p41, %p42
      %s45 = sadd.s32 %s44, 1
      %p48 = scmp.eq.s32.totalorder %s10, 1
      %p49 = scmp.ne.s32.totalorder %s44, %s46
      %p50 = scmp.eq.s32.totalorder %s10, 0
      %p51 = por %p49, %p50
      %p52 = scmp.ne.s32.totalorder %s44, %s46
      %p53 = scmp.eq.s32.totalorder %s15, 1
      %p54 = por %p52, %p53
      %p55 = scmp.ne.s32.totalorder %s46, %s47
      %p56 = scmp.eq.s32.totalorder %s15, 0
      %p57 = por %p55, %p56
      %p58 = scmp.ne.s32.totalorder %s46, %s47
      %p59 = scmp.eq.s32.totalorder %s16, 1
      %p60 = por %p58, %p59
      %p62 = scmp.ne.s32.totalorder %s47, %s61
      %p63 = scmp.eq.s32.totalorder %s16, 0
      %p64 = por %p62, %p63
      %s66 = sadd.s32 %s65, 1
      %p69 = scmp.eq.s32.totalorder %s10, 1
      %p70 = scmp.ne.s32.totalorder %s65, %s67
      %p71 = scmp.eq.s32.totalorder %s10, 0
      %p72 = por %p70, %p71
      %p73 = scmp.ne.s32.totalorder %s65, %s67
      %p74 = scmp.eq.s32.totalorder %s15, 1
      %p75 = por %p73, %p74
      %p76 = scmp.ne.s32.totalorder %s67, %s68
      %p77 = scmp.eq.s32.totalorder %s15, 0
      %p78 = por %p76, %p77
      %p79 = scmp.ne.s32.totalorder %s67, %s68
      %p80 = scmp.eq.s32.totalorder %s16, 1
      %p81 = por %p79, %p80
      %p83 = scmp.ne.s32.totalorder %s68, %s82
      %p84 = scmp.eq.s32.totalorder %s16, 0
      %p85 = por %p83, %p84
      %s86 = ssub.s32 %s10, %s17
      %p87 = scmp.eq.s32.totalorder %s86, 0
      %s89 = sadd.s32 %s88, 1
      %s90 = scalar_select %p87, %s88, %s89
      %p93 = pneg %p87
      %p94 = scmp.eq.s32.totalorder %s10, 1
      %p95 = por %p93, %p94
      %p96 = scmp.ne.s32.totalorder %s88, %s91
      %p97 = scmp.eq.s32.totalorder %s10, 0
      %p98 = por %p96, %p97
      %p99 = scmp.ne.s32.totalorder %s88, %s91
      %p100 = scmp.eq.s32.totalorder %s15, 1
      %p101 = por %p99, %p100
      %p102 = scmp.ne.s32.totalorder %s91, %s92
      %p103 = scmp.eq.s32.totalorder %s15, 0
      %p104 = por %p102, %p103
      %p105 = scmp.ne.s32.totalorder %s91, %s92
      %p106 = scmp.eq.s32.totalorder %s16, 1
      %p107 = por %p105, %p106
      %p109 = scmp.ne.s32.totalorder %s92, %s108
      %p110 = scmp.eq.s32.totalorder %s16, 0
      %p111 = por %p109, %p110
      %p112 = scmp.le.s32.totalorder 1, %s10
      %p113 = scmp.lt.s32.totalorder %s10, 3
      %p114 = pnand %p112, %p113
      %p115 = pneg %p114
      // Predicated region
      $region9: #{_lambda_.12} parent=5 // pred_check
        _
      $region10: #{_lambda_.12} parent=5 // pred_check_branch
        %117 = sbr.rel (%p114) target = $region12
      $region11: #{_lambda_.12} parent=5 // pred_region
        %s118 = ssub.s32 %s10, 1
        // Predicated region
        $region13: #{_lambda_.12} parent=11 // pred_check
          %p119 = pneg %p57
        $region14: #{_lambda_.12} parent=11 // pred_check_branch
          %121 = sbr.rel (%p119) target = $region16
        $region15: #{_lambda_.12} parent=11 // pred_region
          %s123 = ssub.s32 128, 128
          %124 = vsyncadd [#allocation3], %s123
          %s125 = sshll.u32 [#allocation2], 4
          %s126 = int_to_ptr.vmem [resolvable:$true] %s125
          %131 = dma.hbm_to_vmem [thread:$0]  %s1, 128, %s126, [#allocation3], 64, 64, 4
        $region16: #{_lambda_.12} parent=11 // pred_fallthru
          _
        // Predicated region
        $region17: #{_lambda_.12} parent=11 // pred_check
          %p132 = pneg %p78
        $region18: #{_lambda_.12} parent=11 // pred_check_branch
          %134 = sbr.rel (%p132) target = $region20
        $region19: #{_lambda_.12} parent=11 // pred_region
          _
        $region20: #{_lambda_.12} parent=11 // pred_fallthru
          _
      $region12: #{_lambda_.12} parent=5 // pred_fallthru
        _
      %p135 = scmp.lt.s32.totalorder %s10, 2
      // Predicated region
      $region21: #{_lambda_.12} parent=5 // pred_check
        %p136 = pneg %p135
      $region22: #{_lambda_.12} parent=5 // pred_check_branch
        %138 = sbr.rel (%p136) target = $region24
      $region23: #{_lambda_.12} parent=5 // pred_region
        // Predicated region
        $region25: #{_lambda_.12} parent=23 // pred_check
          %p139 = pneg %p30
        $region26: #{_lambda_.12} parent=23 // pred_check_branch
          %141 = sbr.rel (%p139) target = $region28
        $region27: #{_lambda_.12} parent=23 // pred_region
          %s142 = smul.u32 32, %s10
          %p143 = scmp.lt.s32.totalorder %s142, 63
          %s144 = scalar_select %p143, %s142, 63
          %s145 = smul.addr %s144, 4
          %s146 = scalar_lea.vmem %s0, %s145
          %s147 = smul.u32 32, %s10
        $region28: #{_lambda_.12} parent=23 // pred_fallthru
          _
      $region24: #{_lambda_.12} parent=5 // pred_fallthru
        _
      %p148 = scmp.le.s32.totalorder 1, %s10
      %p149 = scmp.lt.s32.totalorder %s10, 3
      %p150 = pnand %p148, %p149
      %p151 = pneg %p150
      // Predicated region
      $region29: #{_lambda_.12} parent=5 // pred_check
        _
      $region30: #{_lambda_.12} parent=5 // pred_check_branch
        %153 = sbr.rel (%p150) target = $region32
      $region31: #{_lambda_.12} parent=5 // pred_region
        %s154 = ssub.s32 %s10, 1
        // Predicated region
        $region33: #{_lambda_.12} parent=31 // pred_check
          %p155 = pneg %p57
        $region34: #{_lambda_.12} parent=31 // pred_check_branch
          %157 = sbr.rel (%p155) target = $region36
        $region35: #{_lambda_.12} parent=31 // pred_region
          %158 = dma.done [#allocation3], 128
        $region36: #{_lambda_.12} parent=31 // pred_fallthru
          _
        %s159 = smul.u32 32, %s15
        %p160 = scmp.lt.s32.totalorder %s159, 63
        %s161 = scalar_select %p160, %s159, 63
        %s162 = smul.addr %s161, 4
        %s163 = scalar_lea.vmem %s0, %s162
        %p164 = pneg %p36
        %p165 = pneg %p33
        %p166 = pneg %p57
        %p167 = pneg %p54
        %p168 = pneg %p78
        %p169 = pneg %p75
        %p170 = pneg %p104
        %p171 = pneg %p101
        %s172 = smul.u32 32, %s15
        %p173 = scmp.lt.s32.totalorder %s172, 63
        %s174 = scalar_select %p173, %s172, 63
        %s175 = smul.addr %s174, 8
        %s176 = scalar_lea.vmem %s3, %s175
        %s177 = smul.u32 32, %s15
        %p178 = scmp.lt.s32.totalorder %s177, 63
        %s179 = scalar_select %p178, %s177, 63
        %s180 = smul.addr %s179, 4
        %s181 = scalar_lea.vmem %s0, %s180
        %s182 = smul.u32 32, %s15
        %s183 = smul.u32 32, %s15
        %p184 = scmp.lt.s32.totalorder %s183, 63
        %s185 = scalar_select %p184, %s183, 63
        %s186 = smul.addr %s185, 8
        %s187 = scalar_lea.vmem %s3, %s186
        %s188 = smul.u32 32, %s15
        %v190 = vld [vmem:[%s181] sm:$0xf]
        %v191 = vld [vmem:[%s181 + $0x4] sm:$0xf]
        %v192 = vld [vmem:[%s181 + $0x8] sm:$0xf]
        %v193 = vld [vmem:[%s181 + $0xc] sm:$0xf]
        %v194 = vld [vmem:[%s181 + $0x10] sm:$0xf]
        %v195 = vld [vmem:[%s181 + $0x14] sm:$0xf]
        %v196 = vld [vmem:[%s181 + $0x18] sm:$0xf]
        %v197 = vld [vmem:[%s181 + $0x1c] sm:$0xf]
        %v198 = vld [vmem:[%s181 + $0x20] sm:$0xf]
        %v199 = vld [vmem:[%s181 + $0x24] sm:$0xf]
        %v200 = vld [vmem:[%s181 + $0x28] sm:$0xf]
        %v201 = vld [vmem:[%s181 + $0x2c] sm:$0xf]
        %v202 = vld [vmem:[%s181 + $0x30] sm:$0xf]
        %v203 = vld [vmem:[%s181 + $0x34] sm:$0xf]
        %v204 = vld [vmem:[%s181 + $0x38] sm:$0xf]
        %v205 = vld [vmem:[%s181 + $0x3c] sm:$0xf]
        %v206 = vld [vmem:[%s181 + $0x40] sm:$0xf]
        %v207 = vld [vmem:[%s181 + $0x44] sm:$0xf]
        %v208 = vld [vmem:[%s181 + $0x48] sm:$0xf]
        %v209 = vld [vmem:[%s181 + $0x4c] sm:$0xf]
        %v210 = vld [vmem:[%s181 + $0x50] sm:$0xf]
        %v211 = vld [vmem:[%s181 + $0x54] sm:$0xf]
        %v212 = vld [vmem:[%s181 + $0x58] sm:$0xf]
        %v213 = vld [vmem:[%s181 + $0x5c] sm:$0xf]
        %v214 = vld [vmem:[%s181 + $0x60] sm:$0xf]
        %v215 = vld [vmem:[%s181 + $0x64] sm:$0xf]
        %v216 = vld [vmem:[%s181 + $0x68] sm:$0xf]
        %v217 = vld [vmem:[%s181 + $0x6c] sm:$0xf]
        %v218 = vld [vmem:[%s181 + $0x70] sm:$0xf]
        %v219 = vld [vmem:[%s181 + $0x74] sm:$0xf]
        %v220 = vld [vmem:[%s181 + $0x78] sm:$0xf]
        %v221 = vld [vmem:[%s181 + $0x7c] sm:$0xf]
        %v222 = vld [vmem:[#allocation2] sm:$0xf]
        %v223 = vld [vmem:[#allocation2 + $0x4] sm:$0x1]
        %v224 = vld [vmem:[%s2] sm:$0x1]
        %v226 = vlaneseq
        %v227 = vshrl.u32 %v226, 7
        %v228 = vsub.s32 0, %v227
        %v229 = vrot.slane %v224, %v228
        %v263 = vunpack.c.l.b16 %v190
        %v264 = vunpack.c.l.b16 %v191
        %v265 = vunpack.c.l.b16 %v192
        %v266 = vunpack.c.l.b16 %v193
        %v267 = vunpack.c.l.b16 %v194
        %v268 = vunpack.c.l.b16 %v195
        %v269 = vunpack.c.l.b16 %v196
        %v270 = vunpack.c.l.b16 %v197
        %v271 = vunpack.c.l.b16 %v198
        %v272 = vunpack.c.l.b16 %v199
        %v273 = vunpack.c.l.b16 %v200
        %v274 = vunpack.c.l.b16 %v201
        %v275 = vunpack.c.l.b16 %v202
        %v276 = vunpack.c.l.b16 %v203
        %v277 = vunpack.c.l.b16 %v204
        %v278 = vunpack.c.l.b16 %v205
        %v279 = vunpack.c.l.b16 %v206
        %v280 = vunpack.c.l.b16 %v207
        %v281 = vunpack.c.l.b16 %v208
        %v282 = vunpack.c.l.b16 %v209
        %v283 = vunpack.c.l.b16 %v210
        %v284 = vunpack.c.l.b16 %v211
        %v285 = vunpack.c.l.b16 %v212
        %v286 = vunpack.c.l.b16 %v213
        %v287 = vunpack.c.l.b16 %v214
        %v288 = vunpack.c.l.b16 %v215
        %v289 = vunpack.c.l.b16 %v216
        %v290 = vunpack.c.l.b16 %v217
        %v291 = vunpack.c.l.b16 %v218
        %v292 = vunpack.c.l.b16 %v219
        %v293 = vunpack.c.l.b16 %v220
        %v294 = vunpack.c.l.b16 %v221
        %v295 = vpack.c.b16 %v264, %v263
        %v296 = vpack.c.b16 %v266, %v265
        %v297 = vpack.c.b16 %v268, %v267
        %v298 = vpack.c.b16 %v270, %v269
        %v299 = vpack.c.b16 %v272, %v271
        %v300 = vpack.c.b16 %v274, %v273
        %v301 = vpack.c.b16 %v276, %v275
        %v302 = vpack.c.b16 %v278, %v277
        %v303 = vpack.c.b16 %v280, %v279
        %v304 = vpack.c.b16 %v282, %v281
        %v305 = vpack.c.b16 %v284, %v283
        %v306 = vpack.c.b16 %v286, %v285
        %v307 = vpack.c.b16 %v288, %v287
        %v308 = vpack.c.b16 %v290, %v289
        %v309 = vpack.c.b16 %v292, %v291
        %v310 = vpack.c.b16 %v294, %v293
        %v313 = vunpack.c.l.b16 %v222
        %v314 = vunpack.c.l.b16 %v223
        %v315 = vpack.c.b16 %v314, %v313
        %vm316 = vcmask 72704
        %v318 = vsel %vm316, %v295, 0
        %v321 = vsel %vm316, %v296, 0
        %v324 = vsel %vm316, %v297, 0
        %v327 = vsel %vm316, %v298, 0
        %v330 = vsel %vm316, %v299, 0
        %v333 = vsel %vm316, %v300, 0
        %v336 = vsel %vm316, %v301, 0
        %v339 = vsel %vm316, %v302, 0
        %v342 = vsel %vm316, %v303, 0
        %v345 = vsel %vm316, %v304, 0
        %v348 = vsel %vm316, %v305, 0
        %v351 = vsel %vm316, %v306, 0
        %v354 = vsel %vm316, %v307, 0
        %v357 = vsel %vm316, %v308, 0
        %v360 = vsel %vm316, %v309, 0
        %v363 = vsel %vm316, %v310, 0
        %vm365 = vcmask 1043456
        %vm366 = vcmask 1044480
        %v367 = vsel %vm365, 4294967295, 65535
        %v368 = vsel %vm366, %v367, 0
        %v370 = vand.u32 %v315, %v368
        %372 = vmatprep.subr.bf16.mxu0 0
        %373 = vmatpush1.bf16.msra.mxu0 %v370
        %374 = vmatprep.subr.bf16.mxu0 0
        %375 = vmatpush1.bf16.msra.mxu0 0
        %376 = vmatprep.subr.bf16.mxu0 0
        %377 = vmatpush1.bf16.msra.mxu0 0
        %378 = vmatprep.subr.bf16.mxu0 0
        %379 = vmatpush1.bf16.msra.mxu0 0
        %380 = vmatprep.subr.bf16.mxu0 0
        %381 = vmatpush1.bf16.msra.mxu0 0
        %382 = vmatprep.subr.bf16.mxu0 0
        %383 = vmatpush1.bf16.msra.mxu0 0
        %384 = vmatprep.subr.bf16.mxu0 0
        %385 = vmatpush1.bf16.msra.mxu0 0
        %386 = vmatprep.subr.bf16.mxu0 0
        %387 = vmatpush1.bf16.msra.mxu0 0
        %388 = vmatprep.subr.bf16.mxu0 0
        %389 = vmatpush1.bf16.msra.mxu0 0
        %390 = vmatprep.subr.bf16.mxu0 0
        %391 = vmatpush1.bf16.msra.mxu0 0
        %392 = vmatprep.subr.bf16.mxu0 0
        %393 = vmatpush1.bf16.msra.mxu0 0
        %394 = vmatprep.subr.bf16.mxu0 0
        %395 = vmatpush1.bf16.msra.mxu0 0
        %396 = vmatprep.subr.bf16.mxu0 0
        %397 = vmatpush1.bf16.msra.mxu0 0
        %398 = vmatprep.subr.bf16.mxu0 0
        %399 = vmatpush1.bf16.msra.mxu0 0
        %400 = vmatprep.subr.bf16.mxu0 0
        %401 = vmatpush1.bf16.msra.mxu0 0
        %402 = vmatprep.subr.bf16.mxu0 0
        %403 = vmatpush1.bf16.msra.mxu0 0
        %404 = vmatprep.mubr.bf16.mxu0 0
        %405 = vmatmul.mubr.bf16.gmra.mrb[0].mxu0 %v318
        %v406 = vpop.f32.mrb[0].mxu0
        %v407 = vadd.f32 %v229, %v406
        %v408 = vpop.f32.mrb[0].mxu0
        %v409 = vpop.f32.mrb[0].mxu0
        %v410 = vadd.f32 %v229, %v409
        %v411 = vpop.f32.mrb[0].mxu0
        %412 = vmatprep.mubr.bf16.mxu0 0
        %413 = vmatmul.mubr.bf16.gmra.mrb[0].mxu0 %v321
        %v414 = vpop.f32.mrb[0].mxu0
        %v415 = vadd.f32 %v229, %v414
        %v416 = vpop.f32.mrb[0].mxu0
        %v417 = vpop.f32.mrb[0].mxu0
        %v418 = vadd.f32 %v229, %v417
        %v419 = vpop.f32.mrb[0].mxu0
        %420 = vmatprep.mubr.bf16.mxu0 0
        %421 = vmatmul.mubr.bf16.gmra.mrb[0].mxu0 %v324
        %v422 = vpop.f32.mrb[0].mxu0
        %v423 = vadd.f32 %v229, %v422
        %v424 = vpop.f32.mrb[0].mxu0
        %v425 = vpop.f32.mrb[0].mxu0
        %v426 = vadd.f32 %v229, %v425
        %v427 = vpop.f32.mrb[0].mxu0
        %428 = vmatprep.mubr.bf16.mxu0 0
        %429 = vmatmul.mubr.bf16.gmra.mrb[0].mxu0 %v327
        %v430 = vpop.f32.mrb[0].mxu0
        %v431 = vadd.f32 %v229, %v430
        %v432 = vpop.f32.mrb[0].mxu0
        %v433 = vpop.f32.mrb[0].mxu0
        %v434 = vadd.f32 %v229, %v433
        %v435 = vpop.f32.mrb[0].mxu0
        %436 = vmatprep.mubr.bf16.mxu0 0
        %437 = vmatmul.mubr.bf16.gmra.mrb[0].mxu0 %v330
        %v438 = vpop.f32.mrb[0].mxu0
        %v439 = vadd.f32 %v229, %v438
        %v440 = vpop.f32.mrb[0].mxu0
        %v441 = vpop.f32.mrb[0].mxu0
        %v442 = vadd.f32 %v229, %v441
        %v443 = vpop.f32.mrb[0].mxu0
        %444 = vmatprep.mubr.bf16.mxu0 0
        %445 = vmatmul.mubr.bf16.gmra.mrb[0].mxu0 %v333
        %v446 = vpop.f32.mrb[0].mxu0
        %v447 = vadd.f32 %v229, %v446
        %v448 = vpop.f32.mrb[0].mxu0
        %v449 = vpop.f32.mrb[0].mxu0
        %v450 = vadd.f32 %v229, %v449
        %v451 = vpop.f32.mrb[0].mxu0
        %452 = vmatprep.mubr.bf16.mxu0 0
        %453 = vmatmul.mubr.bf16.gmra.mrb[0].mxu0 %v336
        %v454 = vpop.f32.mrb[0].mxu0
        %v455 = vadd.f32 %v229, %v454
        %v456 = vpop.f32.mrb[0].mxu0
        %v457 = vpop.f32.mrb[0].mxu0
        %v458 = vadd.f32 %v229, %v457
        %v459 = vpop.f32.mrb[0].mxu0
        %460 = vmatprep.mubr.bf16.mxu0 0
        %461 = vmatmul.mubr.bf16.gmra.mrb[0].mxu0 %v339
        %v462 = vpop.f32.mrb[0].mxu0
        %v463 = vadd.f32 %v229, %v462
        %v464 = vpop.f32.mrb[0].mxu0
        %v465 = vpop.f32.mrb[0].mxu0
        %v466 = vadd.f32 %v229, %v465
        %v467 = vpop.f32.mrb[0].mxu0
        %468 = vmatprep.mubr.bf16.mxu0 0
        %469 = vmatmul.mubr.bf16.gmra.mrb[0].mxu0 %v342
        %v470 = vpop.f32.mrb[0].mxu0
        %v471 = vadd.f32 %v229, %v470
        %v472 = vpop.f32.mrb[0].mxu0
        %v473 = vpop.f32.mrb[0].mxu0
        %v474 = vadd.f32 %v229, %v473
        %v475 = vpop.f32.mrb[0].mxu0
        %476 = vmatprep.mubr.bf16.mxu0 0
        %477 = vmatmul.mubr.bf16.gmra.mrb[0].mxu0 %v345
        %v478 = vpop.f32.mrb[0].mxu0
        %v479 = vadd.f32 %v229, %v478
        %v480 = vpop.f32.mrb[0].mxu0
        %v481 = vpop.f32.mrb[0].mxu0
        %v482 = vadd.f32 %v229, %v481
        %v483 = vpop.f32.mrb[0].mxu0
        %484 = vmatprep.mubr.bf16.mxu0 0
        %485 = vmatmul.mubr.bf16.gmra.mrb[0].mxu0 %v348
        %v486 = vpop.f32.mrb[0].mxu0
        %v487 = vadd.f32 %v229, %v486
        %v488 = vpop.f32.mrb[0].mxu0
        %v489 = vpop.f32.mrb[0].mxu0
        %v490 = vadd.f32 %v229, %v489
        %v491 = vpop.f32.mrb[0].mxu0
        %492 = vmatprep.mubr.bf16.mxu0 0
        %493 = vmatmul.mubr.bf16.gmra.mrb[0].mxu0 %v351
        %v494 = vpop.f32.mrb[0].mxu0
        %v495 = vadd.f32 %v229, %v494
        %v496 = vpop.f32.mrb[0].mxu0
        %v497 = vpop.f32.mrb[0].mxu0
        %v498 = vadd.f32 %v229, %v497
        %v499 = vpop.f32.mrb[0].mxu0
        %500 = vmatprep.mubr.bf16.mxu0 0
        %501 = vmatmul.mubr.bf16.gmra.mrb[0].mxu0 %v354
        %v502 = vpop.f32.mrb[0].mxu0
        %v503 = vadd.f32 %v229, %v502
        %v504 = vpop.f32.mrb[0].mxu0
        %v505 = vpop.f32.mrb[0].mxu0
        %v506 = vadd.f32 %v229, %v505
        %v507 = vpop.f32.mrb[0].mxu0
        %508 = vmatprep.mubr.bf16.mxu0 0
        %509 = vmatmul.mubr.bf16.gmra.mrb[0].mxu0 %v357
        %v510 = vpop.f32.mrb[0].mxu0
        %v511 = vadd.f32 %v229, %v510
        %v512 = vpop.f32.mrb[0].mxu0
        %v513 = vpop.f32.mrb[0].mxu0
        %v514 = vadd.f32 %v229, %v513
        %v515 = vpop.f32.mrb[0].mxu0
        %516 = vmatprep.mubr.bf16.mxu0 0
        %517 = vmatmul.mubr.bf16.gmra.mrb[0].mxu0 %v360
        %v518 = vpop.f32.mrb[0].mxu0
        %v519 = vadd.f32 %v229, %v518
        %v520 = vpop.f32.mrb[0].mxu0
        %v521 = vpop.f32.mrb[0].mxu0
        %v522 = vadd.f32 %v229, %v521
        %v523 = vpop.f32.mrb[0].mxu0
        %524 = vmatprep.mubr.bf16.mxu0 0
        %525 = vmatmul.mubr.bf16.gmra.mrb[0].mxu0 %v363
        %v526 = vpop.f32.mrb[0].mxu0
        %v527 = vadd.f32 %v229, %v526
        %v528 = vpop.f32.mrb[0].mxu0
        %v529 = vpop.f32.mrb[0].mxu0
        %v530 = vadd.f32 %v229, %v529
        %v531 = vpop.f32.mrb[0].mxu0
        %532 = vdwg.mxu0
        %v533 = vmax.f32 %v407, 0.0
        %v534 = vmax.f32 %v410, 0.0
        %v535 = vmax.f32 %v415, 0.0
        %v536 = vmax.f32 %v418, 0.0
        %v537 = vmax.f32 %v423, 0.0
        %v538 = vmax.f32 %v426, 0.0
        %v539 = vmax.f32 %v431, 0.0
        %v540 = vmax.f32 %v434, 0.0
        %v541 = vmax.f32 %v439, 0.0
        %v542 = vmax.f32 %v442, 0.0
        %v543 = vmax.f32 %v447, 0.0
        %v544 = vmax.f32 %v450, 0.0
        %v545 = vmax.f32 %v455, 0.0
        %v546 = vmax.f32 %v458, 0.0
        %v547 = vmax.f32 %v463, 0.0
        %v548 = vmax.f32 %v466, 0.0
        %v549 = vmax.f32 %v471, 0.0
        %v550 = vmax.f32 %v474, 0.0
        %v551 = vmax.f32 %v479, 0.0
        %v552 = vmax.f32 %v482, 0.0
        %v553 = vmax.f32 %v487, 0.0
        %v554 = vmax.f32 %v490, 0.0
        %v555 = vmax.f32 %v495, 0.0
        %v556 = vmax.f32 %v498, 0.0
        %v557 = vmax.f32 %v503, 0.0
        %v558 = vmax.f32 %v506, 0.0
        %v559 = vmax.f32 %v511, 0.0
        %v560 = vmax.f32 %v514, 0.0
        %v561 = vmax.f32 %v519, 0.0
        %v562 = vmax.f32 %v522, 0.0
        %v563 = vmax.f32 %v527, 0.0
        %v564 = vmax.f32 %v530, 0.0
        %565 = vst [vmem:[%s187] sm:$0xff] %v533
        %566 = vst [vmem:[%s187 + $0x8] sm:$0xff] %v534
        %567 = vst [vmem:[%s187 + $0x10] sm:$0xff] %v535
        %568 = vst [vmem:[%s187 + $0x18] sm:$0xff] %v536
        %569 = vst [vmem:[%s187 + $0x20] sm:$0xff] %v537
        %570 = vst [vmem:[%s187 + $0x28] sm:$0xff] %v538
        %571 = vst [vmem:[%s187 + $0x30] sm:$0xff] %v539
        %572 = vst [vmem:[%s187 + $0x38] sm:$0xff] %v540
        %573 = vst [vmem:[%s187 + $0x40] sm:$0xff] %v541
        %574 = vst [vmem:[%s187 + $0x48] sm:$0xff] %v542
        %575 = vst [vmem:[%s187 + $0x50] sm:$0xff] %v543
        %576 = vst [vmem:[%s187 + $0x58] sm:$0xff] %v544
        %577 = vst [vmem:[%s187 + $0x60] sm:$0xff] %v545
        %578 = vst [vmem:[%s187 + $0x68] sm:$0xff] %v546
        %579 = vst [vmem:[%s187 + $0x70] sm:$0xff] %v547
        %580 = vst [vmem:[%s187 + $0x78] sm:$0xff] %v548
        %581 = vst [vmem:[%s187 + $0x80] sm:$0xff] %v549
        %582 = vst [vmem:[%s187 + $0x88] sm:$0xff] %v550
        %583 = vst [vmem:[%s187 + $0x90] sm:$0xff] %v551
        %584 = vst [vmem:[%s187 + $0x98] sm:$0xff] %v552
        %585 = vst [vmem:[%s187 + $0xa0] sm:$0xff] %v553
        %586 = vst [vmem:[%s187 + $0xa8] sm:$0xff] %v554
        %587 = vst [vmem:[%s187 + $0xb0] sm:$0xff] %v555
        %588 = vst [vmem:[%s187 + $0xb8] sm:$0xff] %v556
        %589 = vst [vmem:[%s187 + $0xc0] sm:$0xff] %v557
        %590 = vst [vmem:[%s187 + $0xc8] sm:$0xff] %v558
        %591 = vst [vmem:[%s187 + $0xd0] sm:$0xff] %v559
        %592 = vst [vmem:[%s187 + $0xd8] sm:$0xff] %v560
        %593 = vst [vmem:[%s187 + $0xe0] sm:$0xff] %v561
        %594 = vst [vmem:[%s187 + $0xe8] sm:$0xff] %v562
        %595 = vst [vmem:[%s187 + $0xf0] sm:$0xff] %v563
        %596 = vst [vmem:[%s187 + $0xf8] sm:$0xff] %v564
        %s597 = smul.u32 32, %s15
        %p598 = scmp.lt.s32.totalorder %s597, 63
        %s599 = scalar_select %p598, %s597, 63
        %s600 = smul.addr %s599, 8
        %s601 = scalar_lea.vmem %s3, %s600
        // Predicated region
        $region37: #{_lambda_.12} parent=31 // pred_check
          %p602 = pneg %p101
        $region38: #{_lambda_.12} parent=31 // pred_check_branch
          %604 = sbr.rel (%p602) target = $region40
        $region39: #{_lambda_.12} parent=31 // pred_region
          %s605 = smul.u32 32, %s15
        $region40: #{_lambda_.12} parent=31 // pred_fallthru
          _
      $region32: #{_lambda_.12} parent=5 // pred_fallthru
        _
      %p606 = scmp.le.s32.totalorder 2, %s10
      // Predicated region
      $region41: #{_lambda_.12} parent=5 // pred_check
        %p607 = pneg %p606
      $region42: #{_lambda_.12} parent=5 // pred_check_branch
        %609 = sbr.rel (%p607) target = $region44
      $region43: #{_lambda_.12} parent=5 // pred_region
        %s610 = ssub.s32 %s10, 2
        // Predicated region
        $region45: #{_lambda_.12} parent=43 // pred_check
          %p611 = pneg %p107
        $region46: #{_lambda_.12} parent=43 // pred_check_branch
          %613 = sbr.rel (%p611) target = $region48
        $region47: #{_lambda_.12} parent=43 // pred_region
          %s614 = smul.u32 32, %s16
          %p615 = scmp.lt.s32.totalorder %s614, 63
          %s616 = scalar_select %p615, %s614, 63
          %s617 = smul.addr %s616, 8
          %s618 = scalar_lea.vmem %s3, %s617
        $region48: #{_lambda_.12} parent=43 // pred_fallthru
          _
      $region44: #{_lambda_.12} parent=5 // pred_fallthru
        _
    $region6: #{_lambda_.12} parent=1 // loop_footer
      %s14 = sadd.s32 1, %s10
    $region7: #{_lambda_.12} parent=1 // loop_footer_branch
      %9 = sbr.rel target = $region3
    $region8: #{_lambda_.12} parent=1 // loop_exit
      _
    %619 = vsyncpa [#allocation3], 1
    %s620 = scalar_lea.sflag [#allocation3], 1
    %621 = vsyncpa %s620, 1

// kernel: _lambda_.14
$region0: #{_lambda_.14}
  #allocation0 [shape = 'u32[]', space=smem, size = 0x4, offset = 0x4, fixed_abs, tag = 'smem constant byte address 0x4 - core index']
  #allocation1 [shape = 'u32[144,128]{1,0:T(1,128)}', space=vmem, size = 0x12000, scoped, tag = 'internal scratch']
  %s0 = inlined_call_operand.vmem [shape: bf16[512,288], index: 0, kind: input, shape index: {}]
  %s1 = inlined_call_operand.vmem [shape: bf16[288,128], index: 1, kind: input, shape index: {}]
  %s2 = inlined_call_operand.vmem [shape: f32[1,128], index: 2, kind: input, shape index: {}]
  %s3 = inlined_call_operand.vmem [shape: f32[512,128], index: 3, kind: output, shape index: {}]
  %s4 = sld [smem:[#allocation0]]
  $region45: #{_lambda_.14} parent=0
    _
  %s6 = ssub.s32 1, %s4
  %s7 = scalar_select 0, %s6, %s4
  loop: start=0, step=1, limit=4
  $region2: #{_lambda_.14} parent=0 // loop_pre_header
    _
  $region3: #{_lambda_.14} parent=0 // loop_header
    %s9 = sphi 0, %s13
    %p10 = scmp.ge.s32.totalorder %s9, 4
    %s19 = sphi 0, %s21
    %s22 = sphi 0, %s19
    %s23 = sphi 0, %s22
    %s39 = sphi 0, %s23
    %s43 = sphi 0, %s43
    %s45 = sphi 0, %s43
    %s46 = sphi 0, %s45
    %s60 = sphi 0, %s46
    %s64 = sphi 0, %s64
    %s66 = sphi 0, %s64
    %s67 = sphi 0, %s66
    %s81 = sphi 0, %s67
    %s87 = sphi 0, %s89
    %s90 = sphi 0, %s87
    %s91 = sphi 0, %s90
    %s107 = sphi 0, %s91
  $region4: #{_lambda_.14} parent=0 // loop_header_branch
    %12 = sbr.rel (%p10) target = $region8
  $region5: #{_lambda_.14} parent=0 // loop_body
    %s14 = ssub.s32 %s9, 1
    %s15 = ssub.s32 %s9, 2
    %s16 = sadd.s32 %s9, 1
    %s17 = ssub.s32 %s9, %s16
    %p18 = scmp.eq.s32.totalorder %s17, 0
    %s20 = sadd.s32 %s19, 1
    %s21 = scalar_select %p18, %s19, %s20
    %p24 = pneg %p18
    %p25 = scmp.eq.s32.totalorder %s9, 1
    %p26 = por %p24, %p25
    %p27 = scmp.ne.s32.totalorder %s19, %s22
    %p28 = scmp.eq.s32.totalorder %s9, 0
    %p29 = por %p27, %p28
    %p30 = scmp.ne.s32.totalorder %s19, %s22
    %p31 = scmp.eq.s32.totalorder %s14, 1
    %p32 = por %p30, %p31
    %p33 = scmp.ne.s32.totalorder %s22, %s23
    %p34 = scmp.eq.s32.totalorder %s14, 0
    %p35 = por %p33, %p34
    %p36 = scmp.ne.s32.totalorder %s22, %s23
    %p37 = scmp.eq.s32.totalorder %s15, 1
    %p38 = por %p36, %p37
    %p40 = scmp.ne.s32.totalorder %s23, %s39
    %p41 = scmp.eq.s32.totalorder %s15, 0
    %p42 = por %p40, %p41
    %s44 = sadd.s32 %s43, 1
    %p47 = scmp.eq.s32.totalorder %s9, 1
    %p48 = scmp.ne.s32.totalorder %s43, %s45
    %p49 = scmp.eq.s32.totalorder %s9, 0
    %p50 = por %p48, %p49
    %p51 = scmp.ne.s32.totalorder %s43, %s45
    %p52 = scmp.eq.s32.totalorder %s14, 1
    %p53 = por %p51, %p52
    %p54 = scmp.ne.s32.totalorder %s45, %s46
    %p55 = scmp.eq.s32.totalorder %s14, 0
    %p56 = por %p54, %p55
    %p57 = scmp.ne.s32.totalorder %s45, %s46
    %p58 = scmp.eq.s32.totalorder %s15, 1
    %p59 = por %p57, %p58
    %p61 = scmp.ne.s32.totalorder %s46, %s60
    %p62 = scmp.eq.s32.totalorder %s15, 0
    %p63 = por %p61, %p62
    %s65 = sadd.s32 %s64, 1
    %p68 = scmp.eq.s32.totalorder %s9, 1
    %p69 = scmp.ne.s32.totalorder %s64, %s66
    %p70 = scmp.eq.s32.totalorder %s9, 0
    %p71 = por %p69, %p70
    %p72 = scmp.ne.s32.totalorder %s64, %s66
    %p73 = scmp.eq.s32.totalorder %s14, 1
    %p74 = por %p72, %p73
    %p75 = scmp.ne.s32.totalorder %s66, %s67
    %p76 = scmp.eq.s32.totalorder %s14, 0
    %p77 = por %p75, %p76
    %p78 = scmp.ne.s32.totalorder %s66, %s67
    %p79 = scmp.eq.s32.totalorder %s15, 1
    %p80 = por %p78, %p79
    %p82 = scmp.ne.s32.totalorder %s67, %s81
    %p83 = scmp.eq.s32.totalorder %s15, 0
    %p84 = por %p82, %p83
    %s85 = ssub.s32 %s9, %s16
    %p86 = scmp.eq.s32.totalorder %s85, 0
    %s88 = sadd.s32 %s87, 1
    %s89 = scalar_select %p86, %s87, %s88
    %p92 = pneg %p86
    %p93 = scmp.eq.s32.totalorder %s9, 1
    %p94 = por %p92, %p93
    %p95 = scmp.ne.s32.totalorder %s87, %s90
    %p96 = scmp.eq.s32.totalorder %s9, 0
    %p97 = por %p95, %p96
    %p98 = scmp.ne.s32.totalorder %s87, %s90
    %p99 = scmp.eq.s32.totalorder %s14, 1
    %p100 = por %p98, %p99
    %p101 = scmp.ne.s32.totalorder %s90, %s91
    %p102 = scmp.eq.s32.totalorder %s14, 0
    %p103 = por %p101, %p102
    %p104 = scmp.ne.s32.totalorder %s90, %s91
    %p105 = scmp.eq.s32.totalorder %s15, 1
    %p106 = por %p104, %p105
    %p108 = scmp.ne.s32.totalorder %s91, %s107
    %p109 = scmp.eq.s32.totalorder %s15, 0
    %p110 = por %p108, %p109
    %p111 = scmp.le.s32.totalorder 1, %s9
    %p112 = scmp.lt.s32.totalorder %s9, 3
    %p113 = pnand %p111, %p112
    %p114 = pneg %p113
    // Predicated region
    $region9: #{_lambda_.14} parent=5 // pred_check
      _
    $region10: #{_lambda_.14} parent=5 // pred_check_branch
      %116 = sbr.rel (%p113) target = $region12
    $region11: #{_lambda_.14} parent=5 // pred_region
      %s117 = ssub.s32 %s9, 1
      // Predicated region
      $region13: #{_lambda_.14} parent=11 // pred_check
        %p118 = pneg %p56
      $region14: #{_lambda_.14} parent=11 // pred_check_branch
        %120 = sbr.rel (%p118) target = $region16
      $region15: #{_lambda_.14} parent=11 // pred_region
        _
      $region16: #{_lambda_.14} parent=11 // pred_fallthru
        _
      // Predicated region
      $region17: #{_lambda_.14} parent=11 // pred_check
        %p121 = pneg %p77
      $region18: #{_lambda_.14} parent=11 // pred_check_branch
        %123 = sbr.rel (%p121) target = $region20
      $region19: #{_lambda_.14} parent=11 // pred_region
        _
      $region20: #{_lambda_.14} parent=11 // pred_fallthru
        _
    $region12: #{_lambda_.14} parent=5 // pred_fallthru
      _
    %p124 = scmp.lt.s32.totalorder %s9, 2
    // Predicated region
    $region21: #{_lambda_.14} parent=5 // pred_check
      %p125 = pneg %p124
    $region22: #{_lambda_.14} parent=5 // pred_check_branch
      %127 = sbr.rel (%p125) target = $region24
    $region23: #{_lambda_.14} parent=5 // pred_region
      // Predicated region
      $region25: #{_lambda_.14} parent=23 // pred_check
        %p128 = pneg %p29
      $region26: #{_lambda_.14} parent=23 // pred_check_branch
        %130 = sbr.rel (%p128) target = $region28
      $region27: #{_lambda_.14} parent=23 // pred_region
        %s131 = smul.u32 32, %s9
        %p132 = scmp.lt.s32.totalorder %s131, 63
        %s133 = scalar_select %p132, %s131, 63
        %s134 = smul.addr %s133, 3
        %s135 = smul.addr %s134, 4
        %s136 = scalar_lea.vmem %s0, %s135
        %s137 = smul.u32 32, %s9
      $region28: #{_lambda_.14} parent=23 // pred_fallthru
        _
    $region24: #{_lambda_.14} parent=5 // pred_fallthru
      _
    %p138 = scmp.le.s32.totalorder 1, %s9
    %p139 = scmp.lt.s32.totalorder %s9, 3
    %p140 = pnand %p138, %p139
    %p141 = pneg %p140
    // Predicated region
    $region29: #{_lambda_.14} parent=5 // pred_check
      _
    $region30: #{_lambda_.14} parent=5 // pred_check_branch
      %143 = sbr.rel (%p140) target = $region32
    $region31: #{_lambda_.14} parent=5 // pred_region
      %s144 = ssub.s32 %s9, 1
      %s145 = smul.u32 32, %s14
      %p146 = scmp.lt.s32.totalorder %s145, 63
      %s147 = scalar_select %p146, %s145, 63
      %s148 = smul.addr %s147, 3
      %s149 = smul.addr %s148, 4
      %s150 = scalar_lea.vmem %s0, %s149
      %p151 = pneg %p35
      %p152 = pneg %p32
      %p153 = pneg %p56
      %p154 = pneg %p53
      %p155 = pneg %p77
      %p156 = pneg %p74
      %p157 = pneg %p103
      %p158 = pneg %p100
      %s159 = smul.u32 32, %s14
      %p160 = scmp.lt.s32.totalorder %s159, 63
      %s161 = scalar_select %p160, %s159, 63
      %s162 = smul.addr %s161, 8
      %s163 = scalar_lea.vmem %s3, %s162
      %s164 = smul.u32 32, %s14
      %p165 = scmp.lt.s32.totalorder %s164, 63
      %s166 = scalar_select %p165, %s164, 63
      %s167 = smul.addr %s166, 3
      %s168 = smul.addr %s167, 4
      %s169 = scalar_lea.vmem %s0, %s168
      %s170 = smul.u32 32, %s14
      %s171 = smul.u32 32, %s14
      %p172 = scmp.lt.s32.totalorder %s171, 63
      %s173 = scalar_select %p172, %s171, 63
      %s174 = smul.addr %s173, 8
      %s175 = scalar_lea.vmem %s3, %s174
      %s176 = smul.u32 32, %s14
      %v178 = vld [vmem:[%s169] sm:$0xff]
      %v179 = vld [vmem:[%s169 + $0x8] sm:$0xf]
      %v180 = vld [vmem:[%s169 + $0xc] sm:$0xff]
      %v181 = vld [vmem:[%s169 + $0x14] sm:$0xf]
      %v182 = vld [vmem:[%s169 + $0x18] sm:$0xff]
      %v183 = vld [vmem:[%s169 + $0x20] sm:$0xf]
      %v184 = vld [vmem:[%s169 + $0x24] sm:$0xff]
      %v185 = vld [vmem:[%s169 + $0x2c] sm:$0xf]
      %v186 = vld [vmem:[%s169 + $0x30] sm:$0xff]
      %v187 = vld [vmem:[%s169 + $0x38] sm:$0xf]
      %v188 = vld [vmem:[%s169 + $0x3c] sm:$0xff]
      %v189 = vld [vmem:[%s169 + $0x44] sm:$0xf]
      %v190 = vld [vmem:[%s169 + $0x48] sm:$0xff]
      %v191 = vld [vmem:[%s169 + $0x50] sm:$0xf]
      %v192 = vld [vmem:[%s169 + $0x54] sm:$0xff]
      %v193 = vld [vmem:[%s169 + $0x5c] sm:$0xf]
      %v194 = vld [vmem:[%s169 + $0x60] sm:$0xff]
      %v195 = vld [vmem:[%s169 + $0x68] sm:$0xf]
      %v196 = vld [vmem:[%s169 + $0x6c] sm:$0xff]
      %v197 = vld [vmem:[%s169 + $0x74] sm:$0xf]
      %v198 = vld [vmem:[%s169 + $0x78] sm:$0xff]
      %v199 = vld [vmem:[%s169 + $0x80] sm:$0xf]
      %v200 = vld [vmem:[%s169 + $0x84] sm:$0xff]
      %v201 = vld [vmem:[%s169 + $0x8c] sm:$0xf]
      %v202 = vld [vmem:[%s169 + $0x90] sm:$0xff]
      %v203 = vld [vmem:[%s169 + $0x98] sm:$0xf]
      %v204 = vld [vmem:[%s169 + $0x9c] sm:$0xff]
      %v205 = vld [vmem:[%s169 + $0xa4] sm:$0xf]
      %v206 = vld [vmem:[%s169 + $0xa8] sm:$0xff]
      %v207 = vld [vmem:[%s169 + $0xb0] sm:$0xf]
      %v208 = vld [vmem:[%s169 + $0xb4] sm:$0xff]
      %v209 = vld [vmem:[%s169 + $0xbc] sm:$0xf]
      %v210 = vld [vmem:[%s169 + $0xc0] sm:$0xff]
      %v211 = vld [vmem:[%s169 + $0xc8] sm:$0xf]
      %v212 = vld [vmem:[%s169 + $0xcc] sm:$0xff]
      %v213 = vld [vmem:[%s169 + $0xd4] sm:$0xf]
      %v214 = vld [vmem:[%s169 + $0xd8] sm:$0xff]
      %v215 = vld [vmem:[%s169 + $0xe0] sm:$0xf]
      %v216 = vld [vmem:[%s169 + $0xe4] sm:$0xff]
      %v217 = vld [vmem:[%s169 + $0xec] sm:$0xf]
      %v218 = vld [vmem:[%s169 + $0xf0] sm:$0xff]
      %v219 = vld [vmem:[%s169 + $0xf8] sm:$0xf]
      %v220 = vld [vmem:[%s169 + $0xfc] sm:$0xff]
      %v221 = vld [vmem:[%s169 + $0x104] sm:$0xf]
      %v222 = vld [vmem:[%s169 + $0x108] sm:$0xff]
      %v223 = vld [vmem:[%s169 + $0x110] sm:$0xf]
      %v224 = vld [vmem:[%s169 + $0x114] sm:$0xff]
      %v225 = vld [vmem:[%s169 + $0x11c] sm:$0xf]
      %v226 = vld [vmem:[%s169 + $0x120] sm:$0xff]
      %v227 = vld [vmem:[%s169 + $0x128] sm:$0xf]
      %v228 = vld [vmem:[%s169 + $0x12c] sm:$0xff]
      %v229 = vld [vmem:[%s169 + $0x134] sm:$0xf]
      %v230 = vld [vmem:[%s169 + $0x138] sm:$0xff]
      %v231 = vld [vmem:[%s169 + $0x140] sm:$0xf]
      %v232 = vld [vmem:[%s169 + $0x144] sm:$0xff]
      %v233 = vld [vmem:[%s169 + $0x14c] sm:$0xf]
      %v234 = vld [vmem:[%s169 + $0x150] sm:$0xff]
      %v235 = vld [vmem:[%s169 + $0x158] sm:$0xf]
      %v236 = vld [vmem:[%s169 + $0x15c] sm:$0xff]
      %v237 = vld [vmem:[%s169 + $0x164] sm:$0xf]
      %v238 = vld [vmem:[%s169 + $0x168] sm:$0xff]
      %v239 = vld [vmem:[%s169 + $0x170] sm:$0xf]
      %v240 = vld [vmem:[%s169 + $0x174] sm:$0xff]
      %v241 = vld [vmem:[%s169 + $0x17c] sm:$0xf]
      %v242 = vld [vmem:[%s1] sm:$0xf]
      %v243 = vld [vmem:[%s1 + $0x4] sm:$0xf]
      %v244 = vld [vmem:[%s1 + $0x8] sm:$0xf]
      %v245 = vld [vmem:[%s1 + $0xc] sm:$0xf]
      %v246 = vld [vmem:[%s1 + $0x10] sm:$0xf]
      %v247 = vld [vmem:[%s1 + $0x14] sm:$0xf]
      %v248 = vld [vmem:[%s1 + $0x18] sm:$0xf]
      %v249 = vld [vmem:[%s1 + $0x1c] sm:$0xf]
      %v250 = vld [vmem:[%s1 + $0x20] sm:$0xf]
      %v251 = vld [vmem:[%s1 + $0x24] sm:$0xf]
      %v252 = vld [vmem:[%s1 + $0x28] sm:$0xf]
      %v253 = vld [vmem:[%s1 + $0x2c] sm:$0xf]
      %v254 = vld [vmem:[%s1 + $0x30] sm:$0xf]
      %v255 = vld [vmem:[%s1 + $0x34] sm:$0xf]
      %v256 = vld [vmem:[%s1 + $0x38] sm:$0xf]
      %v257 = vld [vmem:[%s1 + $0x3c] sm:$0xf]
      %v258 = vld [vmem:[%s1 + $0x40] sm:$0xf]
      %v259 = vld [vmem:[%s1 + $0x44] sm:$0xf]
      %v260 = vld [vmem:[%s1 + $0x48] sm:$0xf]
      %v261 = vld [vmem:[%s1 + $0x4c] sm:$0xf]
      %v262 = vld [vmem:[%s1 + $0x50] sm:$0xf]
      %v263 = vld [vmem:[%s1 + $0x54] sm:$0xf]
      %v264 = vld [vmem:[%s1 + $0x58] sm:$0xf]
      %v265 = vld [vmem:[%s1 + $0x5c] sm:$0xf]
      %v266 = vld [vmem:[%s1 + $0x60] sm:$0xf]
      %v267 = vld [vmem:[%s1 + $0x64] sm:$0xf]
      %v268 = vld [vmem:[%s1 + $0x68] sm:$0xf]
      %v269 = vld [vmem:[%s1 + $0x6c] sm:$0xf]
      %v270 = vld [vmem:[%s1 + $0x70] sm:$0xf]
      %v271 = vld [vmem:[%s1 + $0x74] sm:$0xf]
      %v272 = vld [vmem:[%s1 + $0x78] sm:$0xf]
      %v273 = vld [vmem:[%s1 + $0x7c] sm:$0xf]
      %v274 = vld [vmem:[%s1 + $0x80] sm:$0xf]
      %v275 = vld [vmem:[%s1 + $0x84] sm:$0xf]
      %v276 = vld [vmem:[%s1 + $0x88] sm:$0xf]
      %v277 = vld [vmem:[%s1 + $0x8c] sm:$0xf]
      %v278 = vld [vmem:[%s2] sm:$0x1]
      %v280 = vlaneseq
      %v281 = vshrl.u32 %v280, 7
      %v282 = vsub.s32 0, %v281
      %v283 = vrot.slane %v278, %v282
      %v349 = vunpack.c.l.b16 %v178
      %v350 = vunpack.c.h.b16 %v178
      %v351 = vunpack.c.l.b16 %v179
      %v352 = vunpack.c.l.b16 %v180
      %v353 = vunpack.c.h.b16 %v180
      %v354 = vunpack.c.l.b16 %v181
      %v355 = vunpack.c.l.b16 %v182
      %v356 = vunpack.c.h.b16 %v182
      %v357 = vunpack.c.l.b16 %v183
      %v358 = vunpack.c.l.b16 %v184
      %v359 = vunpack.c.h.b16 %v184
      %v360 = vunpack.c.l.b16 %v185
      %v361 = vunpack.c.l.b16 %v186
      %v362 = vunpack.c.h.b16 %v186
      %v363 = vunpack.c.l.b16 %v187
      %v364 = vunpack.c.l.b16 %v188
      %v365 = vunpack.c.h.b16 %v188
      %v366 = vunpack.c.l.b16 %v189
      %v367 = vunpack.c.l.b16 %v190
      %v368 = vunpack.c.h.b16 %v190
      %v369 = vunpack.c.l.b16 %v191
      %v370 = vunpack.c.l.b16 %v192
      %v371 = vunpack.c.h.b16 %v192
      %v372 = vunpack.c.l.b16 %v193
      %v373 = vunpack.c.l.b16 %v194
      %v374 = vunpack.c.h.b16 %v194
      %v375 = vunpack.c.l.b16 %v195
      %v376 = vunpack.c.l.b16 %v196
      %v377 = vunpack.c.h.b16 %v196
      %v378 = vunpack.c.l.b16 %v197
      %v379 = vunpack.c.l.b16 %v198
      %v380 = vunpack.c.h.b16 %v198
      %v381 = vunpack.c.l.b16 %v199
      %v382 = vunpack.c.l.b16 %v200
      %v383 = vunpack.c.h.b16 %v200
      %v384 = vunpack.c.l.b16 %v201
      %v385 = vunpack.c.l.b16 %v202
      %v386 = vunpack.c.h.b16 %v202
      %v387 = vunpack.c.l.b16 %v203
      %v388 = vunpack.c.l.b16 %v204
      %v389 = vunpack.c.h.b16 %v204
      %v390 = vunpack.c.l.b16 %v205
      %v391 = vunpack.c.l.b16 %v206
      %v392 = vunpack.c.h.b16 %v206
      %v393 = vunpack.c.l.b16 %v207
      %v394 = vunpack.c.l.b16 %v208
      %v395 = vunpack.c.h.b16 %v208
      %v396 = vunpack.c.l.b16 %v209
      %v397 = vunpack.c.l.b16 %v210
      %v398 = vunpack.c.h.b16 %v210
      %v399 = vunpack.c.l.b16 %v211
      %v400 = vunpack.c.l.b16 %v212
      %v401 = vunpack.c.h.b16 %v212
      %v402 = vunpack.c.l.b16 %v213
      %v403 = vunpack.c.l.b16 %v214
      %v404 = vunpack.c.h.b16 %v214
      %v405 = vunpack.c.l.b16 %v215
      %v406 = vunpack.c.l.b16 %v216
      %v407 = vunpack.c.h.b16 %v216
      %v408 = vunpack.c.l.b16 %v217
      %v409 = vunpack.c.l.b16 %v218
      %v410 = vunpack.c.h.b16 %v218
      %v411 = vunpack.c.l.b16 %v219
      %v412 = vunpack.c.l.b16 %v220
      %v413 = vunpack.c.h.b16 %v220
      %v414 = vunpack.c.l.b16 %v221
      %v415 = vunpack.c.l.b16 %v222
      %v416 = vunpack.c.h.b16 %v222
      %v417 = vunpack.c.l.b16 %v223
      %v418 = vunpack.c.l.b16 %v224
      %v419 = vunpack.c.h.b16 %v224
      %v420 = vunpack.c.l.b16 %v225
      %v421 = vunpack.c.l.b16 %v226
      %v422 = vunpack.c.h.b16 %v226
      %v423 = vunpack.c.l.b16 %v227
      %v424 = vunpack.c.l.b16 %v228
      %v425 = vunpack.c.h.b16 %v228
      %v426 = vunpack.c.l.b16 %v229
      %v427 = vunpack.c.l.b16 %v230
      %v428 = vunpack.c.h.b16 %v230
      %v429 = vunpack.c.l.b16 %v231
      %v430 = vunpack.c.l.b16 %v232
      %v431 = vunpack.c.h.b16 %v232
      %v432 = vunpack.c.l.b16 %v233
      %v433 = vunpack.c.l.b16 %v234
      %v434 = vunpack.c.h.b16 %v234
      %v435 = vunpack.c.l.b16 %v235
      %v436 = vunpack.c.l.b16 %v236
      %v437 = vunpack.c.h.b16 %v236
      %v438 = vunpack.c.l.b16 %v237
      %v439 = vunpack.c.l.b16 %v238
      %v440 = vunpack.c.h.b16 %v238
      %v441 = vunpack.c.l.b16 %v239
      %v442 = vunpack.c.l.b16 %v240
      %v443 = vunpack.c.h.b16 %v240
      %v444 = vunpack.c.l.b16 %v241
      %v445 = vpack.c.b16 %v352, %v349
      %v446 = vpack.c.b16 %v353, %v350
      %v447 = vpack.c.b16 %v354, %v351
      %v448 = vpack.c.b16 %v358, %v355
      %v449 = vpack.c.b16 %v359, %v356
      %v450 = vpack.c.b16 %v360, %v357
      %v451 = vpack.c.b16 %v364, %v361
      %v452 = vpack.c.b16 %v365, %v362
      %v453 = vpack.c.b16 %v366, %v363
      %v454 = vpack.c.b16 %v370, %v367
      %v455 = vpack.c.b16 %v371, %v368
      %v456 = vpack.c.b16 %v372, %v369
      %v457 = vpack.c.b16 %v376, %v373
      %v458 = vpack.c.b16 %v377, %v374
      %v459 = vpack.c.b16 %v378, %v375
      %v460 = vpack.c.b16 %v382, %v379
      %v461 = vpack.c.b16 %v383, %v380
      %v462 = vpack.c.b16 %v384, %v381
      %v463 = vpack.c.b16 %v388, %v385
      %v464 = vpack.c.b16 %v389, %v386
      %v465 = vpack.c.b16 %v390, %v387
      %v466 = vpack.c.b16 %v394, %v391
      %v467 = vpack.c.b16 %v395, %v392
      %v468 = vpack.c.b16 %v396, %v393
      %v469 = vpack.c.b16 %v400, %v397
      %v470 = vpack.c.b16 %v401, %v398
      %v471 = vpack.c.b16 %v402, %v399
      %v472 = vpack.c.b16 %v406, %v403
      %v473 = vpack.c.b16 %v407, %v404
      %v474 = vpack.c.b16 %v408, %v405
      %v475 = vpack.c.b16 %v412, %v409
      %v476 = vpack.c.b16 %v413, %v410
      %v477 = vpack.c.b16 %v414, %v411
      %v478 = vpack.c.b16 %v418, %v415
      %v479 = vpack.c.b16 %v419, %v416
      %v480 = vpack.c.b16 %v420, %v417
      %v481 = vpack.c.b16 %v424, %v421
      %v482 = vpack.c.b16 %v425, %v422
      %v483 = vpack.c.b16 %v426, %v423
      %v484 = vpack.c.b16 %v430, %v427
      %v485 = vpack.c.b16 %v431, %v428
      %v486 = vpack.c.b16 %v432, %v429
      %v487 = vpack.c.b16 %v436, %v433
      %v488 = vpack.c.b16 %v437, %v434
      %v489 = vpack.c.b16 %v438, %v435
      %v490 = vpack.c.b16 %v442, %v439
      %v491 = vpack.c.b16 %v443, %v440
      %v492 = vpack.c.b16 %v444, %v441
      %v561 = vunpack.c.l.b16 %v242
      %v562 = vunpack.c.l.b16 %v243
      %v563 = vunpack.c.l.b16 %v244
      %v564 = vunpack.c.l.b16 %v245
      %v565 = vunpack.c.l.b16 %v246
      %v566 = vunpack.c.l.b16 %v247
      %v567 = vunpack.c.l.b16 %v248
      %v568 = vunpack.c.l.b16 %v249
      %v569 = vunpack.c.l.b16 %v250
      %v570 = vunpack.c.l.b16 %v251
      %v571 = vunpack.c.l.b16 %v252
      %v572 = vunpack.c.l.b16 %v253
      %v573 = vunpack.c.l.b16 %v254
      %v574 = vunpack.c.l.b16 %v255
      %v575 = vunpack.c.l.b16 %v256
      %v576 = vunpack.c.l.b16 %v257
      %v577 = vunpack.c.l.b16 %v258
      %v578 = vunpack.c.l.b16 %v259
      %v579 = vunpack.c.l.b16 %v260
      %v580 = vunpack.c.l.b16 %v261
      %v581 = vunpack.c.l.b16 %v262
      %v582 = vunpack.c.l.b16 %v263
      %v583 = vunpack.c.l.b16 %v264
      %v584 = vunpack.c.l.b16 %v265
      %v585 = vunpack.c.l.b16 %v266
      %v586 = vunpack.c.l.b16 %v267
      %v587 = vunpack.c.l.b16 %v268
      %v588 = vunpack.c.l.b16 %v269
      %v589 = vunpack.c.l.b16 %v270
      %v590 = vunpack.c.l.b16 %v271
      %v591 = vunpack.c.l.b16 %v272
      %v592 = vunpack.c.l.b16 %v273
      %v593 = vunpack.c.l.b16 %v274
      %v594 = vunpack.c.l.b16 %v275
      %v595 = vunpack.c.l.b16 %v276
      %v596 = vunpack.c.l.b16 %v277
      %v597 = vpack.c.b16 %v562, %v561
      %v598 = vpack.c.b16 %v564, %v563
      %v599 = vpack.c.b16 %v566, %v565
      %v600 = vpack.c.b16 %v568, %v567
      %v601 = vpack.c.b16 %v570, %v569
      %v602 = vpack.c.b16 %v572, %v571
      %v603 = vpack.c.b16 %v574, %v573
      %v604 = vpack.c.b16 %v576, %v575
      %v605 = vpack.c.b16 %v578, %v577
      %v606 = vpack.c.b16 %v580, %v579
      %v607 = vpack.c.b16 %v582, %v581
      %v608 = vpack.c.b16 %v584, %v583
      %v609 = vpack.c.b16 %v586, %v585
      %v610 = vpack.c.b16 %v588, %v587
      %v611 = vpack.c.b16 %v590, %v589
      %v612 = vpack.c.b16 %v592, %v591
      %v613 = vpack.c.b16 %v594, %v593
      %v614 = vpack.c.b16 %v596, %v595
      %vm633 = vcmask 261120
      %v635 = vsel %vm633, %v447, 0
      %v638 = vsel %vm633, %v450, 0
      %v641 = vsel %vm633, %v453, 0
      %v644 = vsel %vm633, %v456, 0
      %v647 = vsel %vm633, %v459, 0
      %v650 = vsel %vm633, %v462, 0
      %v653 = vsel %vm633, %v465, 0
      %v656 = vsel %vm633, %v468, 0
      %v659 = vsel %vm633, %v471, 0
      %v662 = vsel %vm633, %v474, 0
      %v665 = vsel %vm633, %v477, 0
      %v668 = vsel %vm633, %v480, 0
      %v671 = vsel %vm633, %v483, 0
      %v674 = vsel %vm633, %v486, 0
      %v677 = vsel %vm633, %v489, 0
      %v680 = vsel %vm633, %v492, 0
      %682 = vmatprep.subr.bf16.mxu0 0
      %683 = vmatpush1.bf16.msra.mxu0 %v597
      %684 = vmatprep.subr.bf16.mxu0 0
      %685 = vmatpush1.bf16.msra.mxu0 %v598
      %686 = vmatprep.subr.bf16.mxu0 0
      %687 = vmatpush1.bf16.msra.mxu0 %v599
      %688 = vmatprep.subr.bf16.mxu0 0
      %689 = vmatpush1.bf16.msra.mxu0 %v600
      %690 = vmatprep.subr.bf16.mxu0 0
      %691 = vmatpush1.bf16.msra.mxu0 %v601
      %692 = vmatprep.subr.bf16.mxu0 0
      %693 = vmatpush1.bf16.msra.mxu0 %v602
      %694 = vmatprep.subr.bf16.mxu0 0
      %695 = vmatpush1.bf16.msra.mxu0 %v603
      %696 = vmatprep.subr.bf16.mxu0 0
      %697 = vmatpush1.bf16.msra.mxu0 %v604
      %698 = vmatprep.subr.bf16.mxu0 0
      %699 = vmatpush1.bf16.msra.mxu0 %v605
      %700 = vmatprep.subr.bf16.mxu0 0
      %701 = vmatpush1.bf16.msra.mxu0 %v606
      %702 = vmatprep.subr.bf16.mxu0 0
      %703 = vmatpush1.bf16.msra.mxu0 %v607
      %704 = vmatprep.subr.bf16.mxu0 0
      %705 = vmatpush1.bf16.msra.mxu0 %v608
      %706 = vmatprep.subr.bf16.mxu0 0
      %707 = vmatpush1.bf16.msra.mxu0 %v609
      %708 = vmatprep.subr.bf16.mxu0 0
      %709 = vmatpush1.bf16.msra.mxu0 %v610
      %710 = vmatprep.subr.bf16.mxu0 0
      %711 = vmatpush1.bf16.msra.mxu0 %v611
      %712 = vmatprep.subr.bf16.mxu0 0
      %713 = vmatpush1.bf16.msra.mxu0 %v612
      %714 = vmatprep.mubr.bf16.mxu0 %v446
      %715 = vmatmul.mubr.bf16.gmra.mrb[0].mxu0 %v445
      %v716 = vpop.f32.mrb[0].mxu0
      %v717 = vadd.f32 %v283, %v716
      %v718 = vpop.f32.mrb[0].mxu0
      %v719 = vpop.f32.mrb[0].mxu0
      %v720 = vadd.f32 %v283, %v719
      %v721 = vpop.f32.mrb[0].mxu0
      %722 = vmatprep.mubr.bf16.mxu0 %v449
      %723 = vmatmul.mubr.bf16.gmra.mrb[0].mxu0 %v448
      %v724 = vpop.f32.mrb[0].mxu0
      %v725 = vadd.f32 %v283, %v724
      %v726 = vpop.f32.mrb[0].mxu0
      %v727 = vpop.f32.mrb[0].mxu0
      %v728 = vadd.f32 %v283, %v727
      %v729 = vpop.f32.mrb[0].mxu0
      %730 = vmatprep.mubr.bf16.mxu0 %v452
      %731 = vmatmul.mubr.bf16.gmra.mrb[0].mxu0 %v451
      %v732 = vpop.f32.mrb[0].mxu0
      %v733 = vadd.f32 %v283, %v732
      %v734 = vpop.f32.mrb[0].mxu0
      %v735 = vpop.f32.mrb[0].mxu0
      %v736 = vadd.f32 %v283, %v735
      %v737 = vpop.f32.mrb[0].mxu0
      %738 = vmatprep.mubr.bf16.mxu0 %v455
      %739 = vmatmul.mubr.bf16.gmra.mrb[0].mxu0 %v454
      %v740 = vpop.f32.mrb[0].mxu0
      %v741 = vadd.f32 %v283, %v740
      %v742 = vpop.f32.mrb[0].mxu0
      %v743 = vpop.f32.mrb[0].mxu0
      %v744 = vadd.f32 %v283, %v743
      %v745 = vpop.f32.mrb[0].mxu0
      %746 = vmatprep.mubr.bf16.mxu0 %v458
      %747 = vmatmul.mubr.bf16.gmra.mrb[0].mxu0 %v457
      %v748 = vpop.f32.mrb[0].mxu0
      %v749 = vadd.f32 %v283, %v748
      %v750 = vpop.f32.mrb[0].mxu0
      %v751 = vpop.f32.mrb[0].mxu0
      %v752 = vadd.f32 %v283, %v751
      %v753 = vpop.f32.mrb[0].mxu0
      %754 = vmatprep.mubr.bf16.mxu0 %v461
      %755 = vmatmul.mubr.bf16.gmra.mrb[0].mxu0 %v460
      %v756 = vpop.f32.mrb[0].mxu0
      %v757 = vadd.f32 %v283, %v756
      %v758 = vpop.f32.mrb[0].mxu0
      %v759 = vpop.f32.mrb[0].mxu0
      %v760 = vadd.f32 %v283, %v759
      %v761 = vpop.f32.mrb[0].mxu0
      %762 = vmatprep.mubr.bf16.mxu0 %v464
      %763 = vmatmul.mubr.bf16.gmra.mrb[0].mxu0 %v463
      %v764 = vpop.f32.mrb[0].mxu0
      %v765 = vadd.f32 %v283, %v764
      %v766 = vpop.f32.mrb[0].mxu0
      %v767 = vpop.f32.mrb[0].mxu0
      %v768 = vadd.f32 %v283, %v767
      %v769 = vpop.f32.mrb[0].mxu0
      %770 = vmatprep.mubr.bf16.mxu0 %v467
      %771 = vmatmul.mubr.bf16.gmra.mrb[0].mxu0 %v466
      %v772 = vpop.f32.mrb[0].mxu0
      %v773 = vadd.f32 %v283, %v772
      %v774 = vpop.f32.mrb[0].mxu0
      %v775 = vpop.f32.mrb[0].mxu0
      %v776 = vadd.f32 %v283, %v775
      %v777 = vpop.f32.mrb[0].mxu0
      %778 = vmatprep.mubr.bf16.mxu0 %v470
      %779 = vmatmul.mubr.bf16.gmra.mrb[0].mxu0 %v469
      %v780 = vpop.f32.mrb[0].mxu0
      %v781 = vadd.f32 %v283, %v780
      %v782 = vpop.f32.mrb[0].mxu0
      %v783 = vpop.f32.mrb[0].mxu0
      %v784 = vadd.f32 %v283, %v783
      %v785 = vpop.f32.mrb[0].mxu0
      %786 = vmatprep.mubr.bf16.mxu0 %v473
      %787 = vmatmul.mubr.bf16.gmra.mrb[0].mxu0 %v472
      %v788 = vpop.f32.mrb[0].mxu0
      %v789 = vadd.f32 %v283, %v788
      %v790 = vpop.f32.mrb[0].mxu0
      %v791 = vpop.f32.mrb[0].mxu0
      %v792 = vadd.f32 %v283, %v791
      %v793 = vpop.f32.mrb[0].mxu0
      %794 = vmatprep.mubr.bf16.mxu0 %v476
      %795 = vmatmul.mubr.bf16.gmra.mrb[0].mxu0 %v475
      %v796 = vpop.f32.mrb[0].mxu0
      %v797 = vadd.f32 %v283, %v796
      %v798 = vpop.f32.mrb[0].mxu0
      %v799 = vpop.f32.mrb[0].mxu0
      %v800 = vadd.f32 %v283, %v799
      %v801 = vpop.f32.mrb[0].mxu0
      %802 = vmatprep.mubr.bf16.mxu0 %v479
      %803 = vmatmul.mubr.bf16.gmra.mrb[0].mxu0 %v478
      %v804 = vpop.f32.mrb[0].mxu0
      %v805 = vadd.f32 %v283, %v804
      %v806 = vpop.f32.mrb[0].mxu0
      %v807 = vpop.f32.mrb[0].mxu0
      %v808 = vadd.f32 %v283, %v807
      %v809 = vpop.f32.mrb[0].mxu0
      %810 = vmatprep.mubr.bf16.mxu0 %v482
      %811 = vmatmul.mubr.bf16.gmra.mrb[0].mxu0 %v481
      %v812 = vpop.f32.mrb[0].mxu0
      %v813 = vadd.f32 %v283, %v812
      %v814 = vpop.f32.mrb[0].mxu0
      %v815 = vpop.f32.mrb[0].mxu0
      %v816 = vadd.f32 %v283, %v815
      %v817 = vpop.f32.mrb[0].mxu0
      %818 = vmatprep.mubr.bf16.mxu0 %v485
      %819 = vmatmul.mubr.bf16.gmra.mrb[0].mxu0 %v484
      %v820 = vpop.f32.mrb[0].mxu0
      %v821 = vadd.f32 %v283, %v820
      %v822 = vpop.f32.mrb[0].mxu0
      %v823 = vpop.f32.mrb[0].mxu0
      %v824 = vadd.f32 %v283, %v823
      %v825 = vpop.f32.mrb[0].mxu0
      %826 = vmatprep.mubr.bf16.mxu0 %v488
      %827 = vmatmul.mubr.bf16.gmra.mrb[0].mxu0 %v487
      %v828 = vpop.f32.mrb[0].mxu0
      %v829 = vadd.f32 %v283, %v828
      %v830 = vpop.f32.mrb[0].mxu0
      %v831 = vpop.f32.mrb[0].mxu0
      %v832 = vadd.f32 %v283, %v831
      %v833 = vpop.f32.mrb[0].mxu0
      %834 = vmatprep.mubr.bf16.mxu0 %v491
      %835 = vmatmul.mubr.bf16.gmra.mrb[0].mxu0 %v490
      %v836 = vpop.f32.mrb[0].mxu0
      %v837 = vadd.f32 %v283, %v836
      %v838 = vpop.f32.mrb[0].mxu0
      %v839 = vpop.f32.mrb[0].mxu0
      %v840 = vadd.f32 %v283, %v839
      %v841 = vpop.f32.mrb[0].mxu0
      %842 = vdwg.mxu0
      %843 = vmatprep.subr.bf16.mxu0 0
      %844 = vmatpush1.bf16.msra.mxu0 %v613
      %845 = vmatprep.subr.bf16.mxu0 0
      %846 = vmatpush1.bf16.msra.mxu0 %v614
      %847 = vmatprep.subr.bf16.mxu0 0
      %848 = vmatpush1.bf16.msra.mxu0 0
      %849 = vmatprep.subr.bf16.mxu0 0
      %850 = vmatpush1.bf16.msra.mxu0 0
      %851 = vmatprep.subr.bf16.mxu0 0
      %852 = vmatpush1.bf16.msra.mxu0 0
      %853 = vmatprep.subr.bf16.mxu0 0
      %854 = vmatpush1.bf16.msra.mxu0 0
      %855 = vmatprep.subr.bf16.mxu0 0
      %856 = vmatpush1.bf16.msra.mxu0 0
      %857 = vmatprep.subr.bf16.mxu0 0
      %858 = vmatpush1.bf16.msra.mxu0 0
      %859 = vmatprep.subr.bf16.mxu0 0
      %860 = vmatpush1.bf16.msra.mxu0 0
      %861 = vmatprep.subr.bf16.mxu0 0
      %862 = vmatpush1.bf16.msra.mxu0 0
      %863 = vmatprep.subr.bf16.mxu0 0
      %864 = vmatpush1.bf16.msra.mxu0 0
      %865 = vmatprep.subr.bf16.mxu0 0
      %866 = vmatpush1.bf16.msra.mxu0 0
      %867 = vmatprep.subr.bf16.mxu0 0
      %868 = vmatpush1.bf16.msra.mxu0 0
      %869 = vmatprep.subr.bf16.mxu0 0
      %870 = vmatpush1.bf16.msra.mxu0 0
      %871 = vmatprep.subr.bf16.mxu0 0
      %872 = vmatpush1.bf16.msra.mxu0 0
      %873 = vmatprep.subr.bf16.mxu0 0
      %874 = vmatpush1.bf16.msra.mxu0 0
      %875 = vmatprep.mubr.bf16.mxu0 0
      %876 = vmatmul.mubr.bf16.gmra.mrb[0].mxu0 %v635
      %v877 = vpop.f32.mrb[0].mxu0
      %v878 = vadd.f32 %v717, %v877
      %v879 = vpop.f32.mrb[0].mxu0
      %v880 = vpop.f32.mrb[0].mxu0
      %v881 = vadd.f32 %v720, %v880
      %v882 = vpop.f32.mrb[0].mxu0
      %883 = vmatprep.mubr.bf16.mxu0 0
      %884 = vmatmul.mubr.bf16.gmra.mrb[0].mxu0 %v638
      %v885 = vpop.f32.mrb[0].mxu0
      %v886 = vadd.f32 %v725, %v885
      %v887 = vpop.f32.mrb[0].mxu0
      %v888 = vpop.f32.mrb[0].mxu0
      %v889 = vadd.f32 %v728, %v888
      %v890 = vpop.f32.mrb[0].mxu0
      %891 = vmatprep.mubr.bf16.mxu0 0
      %892 = vmatmul.mubr.bf16.gmra.mrb[0].mxu0 %v641
      %v893 = vpop.f32.mrb[0].mxu0
      %v894 = vadd.f32 %v733, %v893
      %v895 = vpop.f32.mrb[0].mxu0
      %v896 = vpop.f32.mrb[0].mxu0
      %v897 = vadd.f32 %v736, %v896
      %v898 = vpop.f32.mrb[0].mxu0
      %899 = vmatprep.mubr.bf16.mxu0 0
      %900 = vmatmul.mubr.bf16.gmra.mrb[0].mxu0 %v644
      %v901 = vpop.f32.mrb[0].mxu0
      %v902 = vadd.f32 %v741, %v901
      %v903 = vpop.f32.mrb[0].mxu0
      %v904 = vpop.f32.mrb[0].mxu0
      %v905 = vadd.f32 %v744, %v904
      %v906 = vpop.f32.mrb[0].mxu0
      %907 = vmatprep.mubr.bf16.mxu0 0
      %908 = vmatmul.mubr.bf16.gmra.mrb[0].mxu0 %v647
      %v909 = vpop.f32.mrb[0].mxu0
      %v910 = vadd.f32 %v749, %v909
      %v911 = vpop.f32.mrb[0].mxu0
      %v912 = vpop.f32.mrb[0].mxu0
      %v913 = vadd.f32 %v752, %v912
      %v914 = vpop.f32.mrb[0].mxu0
      %915 = vmatprep.mubr.bf16.mxu0 0
      %916 = vmatmul.mubr.bf16.gmra.mrb[0].mxu0 %v650
      %v917 = vpop.f32.mrb[0].mxu0
      %v918 = vadd.f32 %v757, %v917
      %v919 = vpop.f32.mrb[0].mxu0
      %v920 = vpop.f32.mrb[0].mxu0
      %v921 = vadd.f32 %v760, %v920
      %v922 = vpop.f32.mrb[0].mxu0
      %923 = vmatprep.mubr.bf16.mxu0 0
      %924 = vmatmul.mubr.bf16.gmra.mrb[0].mxu0 %v653
      %v925 = vpop.f32.mrb[0].mxu0
      %v926 = vadd.f32 %v765, %v925
      %v927 = vpop.f32.mrb[0].mxu0
      %v928 = vpop.f32.mrb[0].mxu0
      %v929 = vadd.f32 %v768, %v928
      %v930 = vpop.f32.mrb[0].mxu0
      %931 = vmatprep.mubr.bf16.mxu0 0
      %932 = vmatmul.mubr.bf16.gmra.mrb[0].mxu0 %v656
      %v933 = vpop.f32.mrb[0].mxu0
      %v934 = vadd.f32 %v773, %v933
      %v935 = vpop.f32.mrb[0].mxu0
      %v936 = vpop.f32.mrb[0].mxu0
      %v937 = vadd.f32 %v776, %v936
      %v938 = vpop.f32.mrb[0].mxu0
      %939 = vmatprep.mubr.bf16.mxu0 0
      %940 = vmatmul.mubr.bf16.gmra.mrb[0].mxu0 %v659
      %v941 = vpop.f32.mrb[0].mxu0
      %v942 = vadd.f32 %v781, %v941
      %v943 = vpop.f32.mrb[0].mxu0
      %v944 = vpop.f32.mrb[0].mxu0
      %v945 = vadd.f32 %v784, %v944
      %v946 = vpop.f32.mrb[0].mxu0
      %947 = vmatprep.mubr.bf16.mxu0 0
      %948 = vmatmul.mubr.bf16.gmra.mrb[0].mxu0 %v662
      %v949 = vpop.f32.mrb[0].mxu0
      %v950 = vadd.f32 %v789, %v949
      %v951 = vpop.f32.mrb[0].mxu0
      %v952 = vpop.f32.mrb[0].mxu0
      %v953 = vadd.f32 %v792, %v952
      %v954 = vpop.f32.mrb[0].mxu0
      %955 = vmatprep.mubr.bf16.mxu0 0
      %956 = vmatmul.mubr.bf16.gmra.mrb[0].mxu0 %v665
      %v957 = vpop.f32.mrb[0].mxu0
      %v958 = vadd.f32 %v797, %v957
      %v959 = vpop.f32.mrb[0].mxu0
      %v960 = vpop.f32.mrb[0].mxu0
      %v961 = vadd.f32 %v800, %v960
      %v962 = vpop.f32.mrb[0].mxu0
      %963 = vmatprep.mubr.bf16.mxu0 0
      %964 = vmatmul.mubr.bf16.gmra.mrb[0].mxu0 %v668
      %v965 = vpop.f32.mrb[0].mxu0
      %v966 = vadd.f32 %v805, %v965
      %v967 = vpop.f32.mrb[0].mxu0
      %v968 = vpop.f32.mrb[0].mxu0
      %v969 = vadd.f32 %v808, %v968
      %v970 = vpop.f32.mrb[0].mxu0
      %971 = vmatprep.mubr.bf16.mxu0 0
      %972 = vmatmul.mubr.bf16.gmra.mrb[0].mxu0 %v671
      %v973 = vpop.f32.mrb[0].mxu0
      %v974 = vadd.f32 %v813, %v973
      %v975 = vpop.f32.mrb[0].mxu0
      %v976 = vpop.f32.mrb[0].mxu0
      %v977 = vadd.f32 %v816, %v976
      %v978 = vpop.f32.mrb[0].mxu0
      %979 = vmatprep.mubr.bf16.mxu0 0
      %980 = vmatmul.mubr.bf16.gmra.mrb[0].mxu0 %v674
      %v981 = vpop.f32.mrb[0].mxu0
      %v982 = vadd.f32 %v821, %v981
      %v983 = vpop.f32.mrb[0].mxu0
      %v984 = vpop.f32.mrb[0].mxu0
      %v985 = vadd.f32 %v824, %v984
      %v986 = vpop.f32.mrb[0].mxu0
      %987 = vmatprep.mubr.bf16.mxu0 0
      %988 = vmatmul.mubr.bf16.gmra.mrb[0].mxu0 %v677
      %v989 = vpop.f32.mrb[0].mxu0
      %v990 = vadd.f32 %v829, %v989
      %v991 = vpop.f32.mrb[0].mxu0
      %v992 = vpop.f32.mrb[0].mxu0
      %v993 = vadd.f32 %v832, %v992
      %v994 = vpop.f32.mrb[0].mxu0
      %995 = vmatprep.mubr.bf16.mxu0 0
      %996 = vmatmul.mubr.bf16.gmra.mrb[0].mxu0 %v680
      %v997 = vpop.f32.mrb[0].mxu0
      %v998 = vadd.f32 %v837, %v997
      %v999 = vpop.f32.mrb[0].mxu0
      %v1000 = vpop.f32.mrb[0].mxu0
      %v1001 = vadd.f32 %v840, %v1000
      %v1002 = vpop.f32.mrb[0].mxu0
      %1003 = vdwg.mxu0
      %1004 = vst [vmem:[%s175] sm:$0xff] %v878
      %1005 = vst [vmem:[%s175 + $0x8] sm:$0xff] %v881
      %1006 = vst [vmem:[%s175 + $0x10] sm:$0xff] %v886
      %1007 = vst [vmem:[%s175 + $0x18] sm:$0xff] %v889
      %1008 = vst [vmem:[%s175 + $0x20] sm:$0xff] %v894
      %1009 = vst [vmem:[%s175 + $0x28] sm:$0xff] %v897
      %1010 = vst [vmem:[%s175 + $0x30] sm:$0xff] %v902
      %1011 = vst [vmem:[%s175 + $0x38] sm:$0xff] %v905
      %1012 = vst [vmem:[%s175 + $0x40] sm:$0xff] %v910
      %1013 = vst [vmem:[%s175 + $0x48] sm:$0xff] %v913
      %1014 = vst [vmem:[%s175 + $0x50] sm:$0xff] %v918
      %1015 = vst [vmem:[%s175 + $0x58] sm:$0xff] %v921
      %1016 = vst [vmem:[%s175 + $0x60] sm:$0xff] %v926
      %1017 = vst [vmem:[%s175 + $0x68] sm:$0xff] %v929
      %1018 = vst [vmem:[%s175 + $0x70] sm:$0xff] %v934
      %1019 = vst [vmem:[%s175 + $0x78] sm:$0xff] %v937
      %1020 = vst [vmem:[%s175 + $0x80] sm:$0xff] %v942
      %1021 = vst [vmem:[%s175 + $0x88] sm:$0xff] %v945
      %1022 = vst [vmem:[%s175 + $0x90] sm:$0xff] %v950
      %1023 = vst [vmem:[%s175 + $0x98] sm:$0xff] %v953
      %1024 = vst [vmem:[%s175 + $0xa0] sm:$0xff] %v958
      %1025 = vst [vmem:[%s175 + $0xa8] sm:$0xff] %v961
      %1026 = vst [vmem:[%s175 + $0xb0] sm:$0xff] %v966
      %1027 = vst [vmem:[%s175 + $0xb8] sm:$0xff] %v969
      %1028 = vst [vmem:[%s175 + $0xc0] sm:$0xff] %v974
      %1029 = vst [vmem:[%s175 + $0xc8] sm:$0xff] %v977
      %1030 = vst [vmem:[%s175 + $0xd0] sm:$0xff] %v982
      %1031 = vst [vmem:[%s175 + $0xd8] sm:$0xff] %v985
      %1032 = vst [vmem:[%s175 + $0xe0] sm:$0xff] %v990
      %1033 = vst [vmem:[%s175 + $0xe8] sm:$0xff] %v993
      %1034 = vst [vmem:[%s175 + $0xf0] sm:$0xff] %v998
      %1035 = vst [vmem:[%s175 + $0xf8] sm:$0xff] %v1001
      %s1036 = smul.u32 32, %s14
      %p1037 = scmp.lt.s32.totalorder %s1036, 63
      %s1038 = scalar_select %p1037, %s1036, 63
      %s1039 = smul.addr %s1038, 8
      %s1040 = scalar_lea.vmem %s3, %s1039
      // Predicated region
      $region33: #{_lambda_.14} parent=31 // pred_check
        %p1041 = pneg %p100
      $region34: #{_lambda_.14} parent=31 // pred_check_branch
        %1043 = sbr.rel (%p1041) target = $region36
      $region35: #{_lambda_.14} parent=31 // pred_region
        %s1044 = smul.u32 32, %s14
      $region36: #{_lambda_.14} parent=31 // pred_fallthru
        _
    $region32: #{_lambda_.14} parent=5 // pred_fallthru
      _
    %p1045 = scmp.le.s32.totalorder 2, %s9
    // Predicated region
    $region37: #{_lambda_.14} parent=5 // pred_check
      %p1046 = pneg %p1045
    $region38: #{_lambda_.14} parent=5 // pred_check_branch
      %1048 = sbr.rel (%p1046) target = $region40
    $region39: #{_lambda_.14} parent=5 // pred_region
      %s1049 = ssub.s32 %s9, 2
      // Predicated region
      $region41: #{_lambda_.14} parent=39 // pred_check
        %p1050 = pneg %p106
      $region42: #{_lambda_.14} parent=39 // pred_check_branch
        %1052 = sbr.rel (%p1050) target = $region44
      $region43: #{_lambda_.14} parent=39 // pred_region
        %s1053 = smul.u32 32, %s15
        %p1054 = scmp.lt.s32.totalorder %s1053, 63
        %s1055 = scalar_select %p1054, %s1053, 63
        %s1056 = smul.addr %s1055, 8
        %s1057 = scalar_lea.vmem %s3, %s1056
      $region44: #{_lambda_.14} parent=39 // pred_fallthru
        _
    $region40: #{_lambda_.14} parent=5 // pred_fallthru
      _
  $region6: #{_lambda_.14} parent=0 // loop_footer
    %s13 = sadd.s32 1, %s9
  $region7: #{_lambda_.14} parent=0 // loop_footer_branch
    %8 = sbr.rel target = $region3
  $region8: #{_lambda_.14} parent=0 // loop_exit
    _

// kernel: _lambda_.13
$region0: #{_lambda_.13}
  #allocation0 [shape = 'u32[]', space=smem, size = 0x4, offset = 0x4, fixed_abs, tag = 'smem constant byte address 0x4 - core index']
  #allocation1 [shape = 'u32[144,128]{1,0:T(1,128)}', space=vmem, size = 0x12000, scoped, tag = 'internal scratch']
  %s0 = inlined_call_operand.vmem [shape: bf16[512,1152], index: 0, kind: input, shape index: {}]
  %s1 = inlined_call_operand.vmem [shape: f32[512,128], index: 1, kind: input, shape index: {}]
  %s2 = inlined_call_operand.vmem [shape: bf16[1152,256], index: 2, kind: input, shape index: {}]
  %s3 = inlined_call_operand.vmem [shape: f32[1,256], index: 3, kind: input, shape index: {}]
  %s4 = inlined_call_operand.vmem [shape: f32[512,128], index: 4, kind: output, shape index: {}]
  %s5 = sld [smem:[#allocation0]]
  $region49: #{_lambda_.13} parent=0
    _
  %s7 = ssub.s32 1, %s5
  %s8 = scalar_select 0, %s7, %s5
  loop: start=0, step=1, limit=4
  $region2: #{_lambda_.13} parent=0 // loop_pre_header
    _
  $region3: #{_lambda_.13} parent=0 // loop_header
    %s10 = sphi 0, %s14
    %p11 = scmp.ge.s32.totalorder %s10, 4
    %s20 = sphi 0, %s22
    %s23 = sphi 0, %s20
    %s24 = sphi 0, %s23
    %s40 = sphi 0, %s24
    %s46 = sphi 0, %s48
    %s49 = sphi 0, %s46
    %s50 = sphi 0, %s49
    %s66 = sphi 0, %s50
    %s70 = sphi 0, %s70
    %s72 = sphi 0, %s70
    %s73 = sphi 0, %s72
    %s87 = sphi 0, %s73
    %s91 = sphi 0, %s91
    %s93 = sphi 0, %s91
    %s94 = sphi 0, %s93
    %s108 = sphi 0, %s94
    %s114 = sphi 0, %s116
    %s117 = sphi 0, %s114
    %s118 = sphi 0, %s117
    %s134 = sphi 0, %s118
  $region4: #{_lambda_.13} parent=0 // loop_header_branch
    %13 = sbr.rel (%p11) target = $region8
  $region5: #{_lambda_.13} parent=0 // loop_body
    %s15 = ssub.s32 %s10, 1
    %s16 = ssub.s32 %s10, 2
    %s17 = sadd.s32 %s10, 1
    %s18 = ssub.s32 %s10, %s17
    %p19 = scmp.eq.s32.totalorder %s18, 0
    %s21 = sadd.s32 %s20, 1
    %s22 = scalar_select %p19, %s20, %s21
    %p25 = pneg %p19
    %p26 = scmp.eq.s32.totalorder %s10, 1
    %p27 = por %p25, %p26
    %p28 = scmp.ne.s32.totalorder %s20, %s23
    %p29 = scmp.eq.s32.totalorder %s10, 0
    %p30 = por %p28, %p29
    %p31 = scmp.ne.s32.totalorder %s20, %s23
    %p32 = scmp.eq.s32.totalorder %s15, 1
    %p33 = por %p31, %p32
    %p34 = scmp.ne.s32.totalorder %s23, %s24
    %p35 = scmp.eq.s32.totalorder %s15, 0
    %p36 = por %p34, %p35
    %p37 = scmp.ne.s32.totalorder %s23, %s24
    %p38 = scmp.eq.s32.totalorder %s16, 1
    %p39 = por %p37, %p38
    %p41 = scmp.ne.s32.totalorder %s24, %s40
    %p42 = scmp.eq.s32.totalorder %s16, 0
    %p43 = por %p41, %p42
    %s44 = ssub.s32 %s10, %s17
    %p45 = scmp.eq.s32.totalorder %s44, 0
    %s47 = sadd.s32 %s46, 1
    %s48 = scalar_select %p45, %s46, %s47
    %p51 = pneg %p45
    %p52 = scmp.eq.s32.totalorder %s10, 1
    %p53 = por %p51, %p52
    %p54 = scmp.ne.s32.totalorder %s46, %s49
    %p55 = scmp.eq.s32.totalorder %s10, 0
    %p56 = por %p54, %p55
    %p57 = scmp.ne.s32.totalorder %s46, %s49
    %p58 = scmp.eq.s32.totalorder %s15, 1
    %p59 = por %p57, %p58
    %p60 = scmp.ne.s32.totalorder %s49, %s50
    %p61 = scmp.eq.s32.totalorder %s15, 0
    %p62 = por %p60, %p61
    %p63 = scmp.ne.s32.totalorder %s49, %s50
    %p64 = scmp.eq.s32.totalorder %s16, 1
    %p65 = por %p63, %p64
    %p67 = scmp.ne.s32.totalorder %s50, %s66
    %p68 = scmp.eq.s32.totalorder %s16, 0
    %p69 = por %p67, %p68
    %s71 = sadd.s32 %s70, 1
    %p74 = scmp.eq.s32.totalorder %s10, 1
    %p75 = scmp.ne.s32.totalorder %s70, %s72
    %p76 = scmp.eq.s32.totalorder %s10, 0
    %p77 = por %p75, %p76
    %p78 = scmp.ne.s32.totalorder %s70, %s72
    %p79 = scmp.eq.s32.totalorder %s15, 1
    %p80 = por %p78, %p79
    %p81 = scmp.ne.s32.totalorder %s72, %s73
    %p82 = scmp.eq.s32.totalorder %s15, 0
    %p83 = por %p81, %p82
    %p84 = scmp.ne.s32.totalorder %s72, %s73
    %p85 = scmp.eq.s32.totalorder %s16, 1
    %p86 = por %p84, %p85
    %p88 = scmp.ne.s32.totalorder %s73, %s87
    %p89 = scmp.eq.s32.totalorder %s16, 0
    %p90 = por %p88, %p89
    %s92 = sadd.s32 %s91, 1
    %p95 = scmp.eq.s32.totalorder %s10, 1
    %p96 = scmp.ne.s32.totalorder %s91, %s93
    %p97 = scmp.eq.s32.totalorder %s10, 0
    %p98 = por %p96, %p97
    %p99 = scmp.ne.s32.totalorder %s91, %s93
    %p100 = scmp.eq.s32.totalorder %s15, 1
    %p101 = por %p99, %p100
    %p102 = scmp.ne.s32.totalorder %s93, %s94
    %p103 = scmp.eq.s32.totalorder %s15, 0
    %p104 = por %p102, %p103
    %p105 = scmp.ne.s32.totalorder %s93, %s94
    %p106 = scmp.eq.s32.totalorder %s16, 1
    %p107 = por %p105, %p106
    %p109 = scmp.ne.s32.totalorder %s94, %s108
    %p110 = scmp.eq.s32.totalorder %s16, 0
    %p111 = por %p109, %p110
    %s112 = ssub.s32 %s10, %s17
    %p113 = scmp.eq.s32.totalorder %s112, 0
    %s115 = sadd.s32 %s114, 1
    %s116 = scalar_select %p113, %s114, %s115
    %p119 = pneg %p113
    %p120 = scmp.eq.s32.totalorder %s10, 1
    %p121 = por %p119, %p120
    %p122 = scmp.ne.s32.totalorder %s114, %s117
    %p123 = scmp.eq.s32.totalorder %s10, 0
    %p124 = por %p122, %p123
    %p125 = scmp.ne.s32.totalorder %s114, %s117
    %p126 = scmp.eq.s32.totalorder %s15, 1
    %p127 = por %p125, %p126
    %p128 = scmp.ne.s32.totalorder %s117, %s118
    %p129 = scmp.eq.s32.totalorder %s15, 0
    %p130 = por %p128, %p129
    %p131 = scmp.ne.s32.totalorder %s117, %s118
    %p132 = scmp.eq.s32.totalorder %s16, 1
    %p133 = por %p131, %p132
    %p135 = scmp.ne.s32.totalorder %s118, %s134
    %p136 = scmp.eq.s32.totalorder %s16, 0
    %p137 = por %p135, %p136
    %p138 = scmp.le.s32.totalorder 1, %s10
    %p139 = scmp.lt.s32.totalorder %s10, 3
    %p140 = pnand %p138, %p139
    %p141 = pneg %p140
    // Predicated region
    $region9: #{_lambda_.13} parent=5 // pred_check
      _
    $region10: #{_lambda_.13} parent=5 // pred_check_branch
      %143 = sbr.rel (%p140) target = $region12
    $region11: #{_lambda_.13} parent=5 // pred_region
      %s144 = ssub.s32 %s10, 1
      // Predicated region
      $region13: #{_lambda_.13} parent=11 // pred_check
        %p145 = pneg %p83
      $region14: #{_lambda_.13} parent=11 // pred_check_branch
        %147 = sbr.rel (%p145) target = $region16
      $region15: #{_lambda_.13} parent=11 // pred_region
        _
      $region16: #{_lambda_.13} parent=11 // pred_fallthru
        _
      // Predicated region
      $region17: #{_lambda_.13} parent=11 // pred_check
        %p148 = pneg %p104
      $region18: #{_lambda_.13} parent=11 // pred_check_branch
        %150 = sbr.rel (%p148) target = $region20
      $region19: #{_lambda_.13} parent=11 // pred_region
        _
      $region20: #{_lambda_.13} parent=11 // pred_fallthru
        _
    $region12: #{_lambda_.13} parent=5 // pred_fallthru
      _
    %p151 = scmp.lt.s32.totalorder %s10, 2
    // Predicated region
    $region21: #{_lambda_.13} parent=5 // pred_check
      %p152 = pneg %p151
    $region22: #{_lambda_.13} parent=5 // pred_check_branch
      %154 = sbr.rel (%p152) target = $region24
    $region23: #{_lambda_.13} parent=5 // pred_region
      // Predicated region
      $region25: #{_lambda_.13} parent=23 // pred_check
        %p155 = pneg %p30
      $region26: #{_lambda_.13} parent=23 // pred_check_branch
        %157 = sbr.rel (%p155) target = $region28
      $region27: #{_lambda_.13} parent=23 // pred_region
        %s158 = smul.u32 32, %s10
        %p159 = scmp.lt.s32.totalorder %s158, 63
        %s160 = scalar_select %p159, %s158, 63
        %s161 = smul.addr %s160, 9
        %s162 = smul.addr %s161, 4
        %s163 = scalar_lea.vmem %s0, %s162
        %s164 = smul.u32 32, %s10
      $region28: #{_lambda_.13} parent=23 // pred_fallthru
        _
      // Predicated region
      $region29: #{_lambda_.13} parent=23 // pred_check
        %p165 = pneg %p56
      $region30: #{_lambda_.13} parent=23 // pred_check_branch
        %167 = sbr.rel (%p165) target = $region32
      $region31: #{_lambda_.13} parent=23 // pred_region
        %s168 = smul.u32 32, %s10
        %p169 = scmp.lt.s32.totalorder %s168, 63
        %s170 = scalar_select %p169, %s168, 63
        %s171 = smul.addr %s170, 8
        %s172 = scalar_lea.vmem %s1, %s171
        %s173 = smul.u32 32, %s10
      $region32: #{_lambda_.13} parent=23 // pred_fallthru
        _
    $region24: #{_lambda_.13} parent=5 // pred_fallthru
      _
    %p174 = scmp.le.s32.totalorder 1, %s10
    %p175 = scmp.lt.s32.totalorder %s10, 3
    %p176 = pnand %p174, %p175
    %p177 = pneg %p176
    // Predicated region
    $region33: #{_lambda_.13} parent=5 // pred_check
      _
    $region34: #{_lambda_.13} parent=5 // pred_check_branch
      %179 = sbr.rel (%p176) target = $region36
    $region35: #{_lambda_.13} parent=5 // pred_region
      %s180 = ssub.s32 %s10, 1
      %s181 = smul.u32 32, %s15
      %p182 = scmp.lt.s32.totalorder %s181, 63
      %s183 = scalar_select %p182, %s181, 63
      %s184 = smul.addr %s183, 9
      %s185 = smul.addr %s184, 4
      %s186 = scalar_lea.vmem %s0, %s185
      %p187 = pneg %p36
      %p188 = pneg %p33
      %s189 = smul.u32 32, %s15
      %p190 = scmp.lt.s32.totalorder %s189, 63
      %s191 = scalar_select %p190, %s189, 63
      %s192 = smul.addr %s191, 8
      %s193 = scalar_lea.vmem %s1, %s192
      %p194 = pneg %p62
      %p195 = pneg %p59
      %p196 = pneg %p83
      %p197 = pneg %p80
      %p198 = pneg %p104
      %p199 = pneg %p101
      %p200 = pneg %p130
      %p201 = pneg %p127
      %s202 = smul.u32 32, %s15
      %p203 = scmp.lt.s32.totalorder %s202, 63
      %s204 = scalar_select %p203, %s202, 63
      %s205 = smul.addr %s204, 8
      %s206 = scalar_lea.vmem %s4, %s205
      %s207 = smul.u32 32, %s15
      %p208 = scmp.lt.s32.totalorder %s207, 63
      %s209 = scalar_select %p208, %s207, 63
      %s210 = smul.addr %s209, 9
      %s211 = smul.addr %s210, 4
      %s212 = scalar_lea.vmem %s0, %s211
      %s213 = smul.u32 32, %s15
      %s214 = smul.u32 32, %s15
      %p215 = scmp.lt.s32.totalorder %s214, 63
      %s216 = scalar_select %p215, %s214, 63
      %s217 = smul.addr %s216, 8
      %s218 = scalar_lea.vmem %s1, %s217
      %s219 = smul.u32 32, %s15
      %s220 = smul.u32 32, %s15
      %p221 = scmp.lt.s32.totalorder %s220, 63
      %s222 = scalar_select %p221, %s220, 63
      %s223 = smul.addr %s222, 8
      %s224 = scalar_lea.vmem %s4, %s223
      %s225 = smul.u32 32, %s15
      %v227 = vld [vmem:[%s212] sm:$0xff]
      %v228 = vld [vmem:[%s212 + $0x8] sm:$0xff]
      %v229 = vld [vmem:[%s212 + $0x10] sm:$0xff]
      %v230 = vld [vmem:[%s212 + $0x18] sm:$0xff]
      %v231 = vld [vmem:[%s212 + $0x20] sm:$0xf]
      %v232 = vld [vmem:[%s212 + $0x24] sm:$0xff]
      %v233 = vld [vmem:[%s212 + $0x2c] sm:$0xff]
      %v234 = vld [vmem:[%s212 + $0x34] sm:$0xff]
      %v235 = vld [vmem:[%s212 + $0x3c] sm:$0xff]
      %v236 = vld [vmem:[%s212 + $0x44] sm:$0xf]
      %v237 = vld [vmem:[%s212 + $0x48] sm:$0xff]
      %v238 = vld [vmem:[%s212 + $0x50] sm:$0xff]
      %v239 = vld [vmem:[%s212 + $0x58] sm:$0xff]
      %v240 = vld [vmem:[%s212 + $0x60] sm:$0xff]
      %v241 = vld [vmem:[%s212 + $0x68] sm:$0xf]
      %v242 = vld [vmem:[%s212 + $0x6c] sm:$0xff]
      %v243 = vld [vmem:[%s212 + $0x74] sm:$0xff]
      %v244 = vld [vmem:[%s212 + $0x7c] sm:$0xff]
      %v245 = vld [vmem:[%s212 + $0x84] sm:$0xff]
      %v246 = vld [vmem:[%s212 + $0x8c] sm:$0xf]
      %v247 = vld [vmem:[%s212 + $0x90] sm:$0xff]
      %v248 = vld [vmem:[%s212 + $0x98] sm:$0xff]
      %v249 = vld [vmem:[%s212 + $0xa0] sm:$0xff]
      %v250 = vld [vmem:[%s212 + $0xa8] sm:$0xff]
      %v251 = vld [vmem:[%s212 + $0xb0] sm:$0xf]
      %v252 = vld [vmem:[%s212 + $0xb4] sm:$0xff]
      %v253 = vld [vmem:[%s212 + $0xbc] sm:$0xff]
      %v254 = vld [vmem:[%s212 + $0xc4] sm:$0xff]
      %v255 = vld [vmem:[%s212 + $0xcc] sm:$0xff]
      %v256 = vld [vmem:[%s212 + $0xd4] sm:$0xf]
      %v257 = vld [vmem:[%s212 + $0xd8] sm:$0xff]
      %v258 = vld [vmem:[%s212 + $0xe0] sm:$0xff]
      %v259 = vld [vmem:[%s212 + $0xe8] sm:$0xff]
      %v260 = vld [vmem:[%s212 + $0xf0] sm:$0xff]
      %v261 = vld [vmem:[%s212 + $0xf8] sm:$0xf]
      %v262 = vld [vmem:[%s212 + $0xfc] sm:$0xff]
      %v263 = vld [vmem:[%s212 + $0x104] sm:$0xff]
      %v264 = vld [vmem:[%s212 + $0x10c] sm:$0xff]
      %v265 = vld [vmem:[%s212 + $0x114] sm:$0xff]
      %v266 = vld [vmem:[%s212 + $0x11c] sm:$0xf]
      %v267 = vld [vmem:[%s212 + $0x120] sm:$0xff]
      %v268 = vld [vmem:[%s212 + $0x128] sm:$0xff]
      %v269 = vld [vmem:[%s212 + $0x130] sm:$0xff]
      %v270 = vld [vmem:[%s212 + $0x138] sm:$0xff]
      %v271 = vld [vmem:[%s212 + $0x140] sm:$0xf]
      %v272 = vld [vmem:[%s212 + $0x144] sm:$0xff]
      %v273 = vld [vmem:[%s212 + $0x14c] sm:$0xff]
      %v274 = vld [vmem:[%s212 + $0x154] sm:$0xff]
      %v275 = vld [vmem:[%s212 + $0x15c] sm:$0xff]
      %v276 = vld [vmem:[%s212 + $0x164] sm:$0xf]
      %v277 = vld [vmem:[%s212 + $0x168] sm:$0xff]
      %v278 = vld [vmem:[%s212 + $0x170] sm:$0xff]
      %v279 = vld [vmem:[%s212 + $0x178] sm:$0xff]
      %v280 = vld [vmem:[%s212 + $0x180] sm:$0xff]
      %v281 = vld [vmem:[%s212 + $0x188] sm:$0xf]
      %v282 = vld [vmem:[%s212 + $0x18c] sm:$0xff]
      %v283 = vld [vmem:[%s212 + $0x194] sm:$0xff]
      %v284 = vld [vmem:[%s212 + $0x19c] sm:$0xff]
      %v285 = vld [vmem:[%s212 + $0x1a4] sm:$0xff]
      %v286 = vld [vmem:[%s212 + $0x1ac] sm:$0xf]
      %v287 = vld [vmem:[%s212 + $0x1b0] sm:$0xff]
      %v288 = vld [vmem:[%s212 + $0x1b8] sm:$0xff]
      %v289 = vld [vmem:[%s212 + $0x1c0] sm:$0xff]
      %v290 = vld [vmem:[%s212 + $0x1c8] sm:$0xff]
      %v291 = vld [vmem:[%s212 + $0x1d0] sm:$0xf]
      %v292 = vld [vmem:[%s212 + $0x1d4] sm:$0xff]
      %v293 = vld [vmem:[%s212 + $0x1dc] sm:$0xff]
      %v294 = vld [vmem:[%s212 + $0x1e4] sm:$0xff]
      %v295 = vld [vmem:[%s212 + $0x1ec] sm:$0xff]
      %v296 = vld [vmem:[%s212 + $0x1f4] sm:$0xf]
      %v297 = vld [vmem:[%s212 + $0x1f8] sm:$0xff]
      %v298 = vld [vmem:[%s212 + $0x200] sm:$0xff]
      %v299 = vld [vmem:[%s212 + $0x208] sm:$0xff]
      %v300 = vld [vmem:[%s212 + $0x210] sm:$0xff]
      %v301 = vld [vmem:[%s212 + $0x218] sm:$0xf]
      %v302 = vld [vmem:[%s212 + $0x21c] sm:$0xff]
      %v303 = vld [vmem:[%s212 + $0x224] sm:$0xff]
      %v304 = vld [vmem:[%s212 + $0x22c] sm:$0xff]
      %v305 = vld [vmem:[%s212 + $0x234] sm:$0xff]
      %v306 = vld [vmem:[%s212 + $0x23c] sm:$0xf]
      %v307 = vld [vmem:[%s212 + $0x240] sm:$0xff]
      %v308 = vld [vmem:[%s212 + $0x248] sm:$0xff]
      %v309 = vld [vmem:[%s212 + $0x250] sm:$0xff]
      %v310 = vld [vmem:[%s212 + $0x258] sm:$0xff]
      %v311 = vld [vmem:[%s212 + $0x260] sm:$0xf]
      %v312 = vld [vmem:[%s212 + $0x264] sm:$0xff]
      %v313 = vld [vmem:[%s212 + $0x26c] sm:$0xff]
      %v314 = vld [vmem:[%s212 + $0x274] sm:$0xff]
      %v315 = vld [vmem:[%s212 + $0x27c] sm:$0xff]
      %v316 = vld [vmem:[%s212 + $0x284] sm:$0xf]
      %v317 = vld [vmem:[%s212 + $0x288] sm:$0xff]
      %v318 = vld [vmem:[%s212 + $0x290] sm:$0xff]
      %v319 = vld [vmem:[%s212 + $0x298] sm:$0xff]
      %v320 = vld [vmem:[%s212 + $0x2a0] sm:$0xff]
      %v321 = vld [vmem:[%s212 + $0x2a8] sm:$0xf]
      %v322 = vld [vmem:[%s212 + $0x2ac] sm:$0xff]
      %v323 = vld [vmem:[%s212 + $0x2b4] sm:$0xff]
      %v324 = vld [vmem:[%s212 + $0x2bc] sm:$0xff]
      %v325 = vld [vmem:[%s212 + $0x2c4] sm:$0xff]
      %v326 = vld [vmem:[%s212 + $0x2cc] sm:$0xf]
      %v327 = vld [vmem:[%s212 + $0x2d0] sm:$0xff]
      %v328 = vld [vmem:[%s212 + $0x2d8] sm:$0xff]
      %v329 = vld [vmem:[%s212 + $0x2e0] sm:$0xff]
      %v330 = vld [vmem:[%s212 + $0x2e8] sm:$0xff]
      %v331 = vld [vmem:[%s212 + $0x2f0] sm:$0xf]
      %v332 = vld [vmem:[%s212 + $0x2f4] sm:$0xff]
      %v333 = vld [vmem:[%s212 + $0x2fc] sm:$0xff]
      %v334 = vld [vmem:[%s212 + $0x304] sm:$0xff]
      %v335 = vld [vmem:[%s212 + $0x30c] sm:$0xff]
      %v336 = vld [vmem:[%s212 + $0x314] sm:$0xf]
      %v337 = vld [vmem:[%s212 + $0x318] sm:$0xff]
      %v338 = vld [vmem:[%s212 + $0x320] sm:$0xff]
      %v339 = vld [vmem:[%s212 + $0x328] sm:$0xff]
      %v340 = vld [vmem:[%s212 + $0x330] sm:$0xff]
      %v341 = vld [vmem:[%s212 + $0x338] sm:$0xf]
      %v342 = vld [vmem:[%s212 + $0x33c] sm:$0xff]
      %v343 = vld [vmem:[%s212 + $0x344] sm:$0xff]
      %v344 = vld [vmem:[%s212 + $0x34c] sm:$0xff]
      %v345 = vld [vmem:[%s212 + $0x354] sm:$0xff]
      %v346 = vld [vmem:[%s212 + $0x35c] sm:$0xf]
      %v347 = vld [vmem:[%s212 + $0x360] sm:$0xff]
      %v348 = vld [vmem:[%s212 + $0x368] sm:$0xff]
      %v349 = vld [vmem:[%s212 + $0x370] sm:$0xff]
      %v350 = vld [vmem:[%s212 + $0x378] sm:$0xff]
      %v351 = vld [vmem:[%s212 + $0x380] sm:$0xf]
      %v352 = vld [vmem:[%s212 + $0x384] sm:$0xff]
      %v353 = vld [vmem:[%s212 + $0x38c] sm:$0xff]
      %v354 = vld [vmem:[%s212 + $0x394] sm:$0xff]
      %v355 = vld [vmem:[%s212 + $0x39c] sm:$0xff]
      %v356 = vld [vmem:[%s212 + $0x3a4] sm:$0xf]
      %v357 = vld [vmem:[%s212 + $0x3a8] sm:$0xff]
      %v358 = vld [vmem:[%s212 + $0x3b0] sm:$0xff]
      %v359 = vld [vmem:[%s212 + $0x3b8] sm:$0xff]
      %v360 = vld [vmem:[%s212 + $0x3c0] sm:$0xff]
      %v361 = vld [vmem:[%s212 + $0x3c8] sm:$0xf]
      %v362 = vld [vmem:[%s212 + $0x3cc] sm:$0xff]
      %v363 = vld [vmem:[%s212 + $0x3d4] sm:$0xff]
      %v364 = vld [vmem:[%s212 + $0x3dc] sm:$0xff]
      %v365 = vld [vmem:[%s212 + $0x3e4] sm:$0xff]
      %v366 = vld [vmem:[%s212 + $0x3ec] sm:$0xf]
      %v367 = vld [vmem:[%s212 + $0x3f0] sm:$0xff]
      %v368 = vld [vmem:[%s212 + $0x3f8] sm:$0xff]
      %v369 = vld [vmem:[%s212 + $0x400] sm:$0xff]
      %v370 = vld [vmem:[%s212 + $0x408] sm:$0xff]
      %v371 = vld [vmem:[%s212 + $0x410] sm:$0xf]
      %v372 = vld [vmem:[%s212 + $0x414] sm:$0xff]
      %v373 = vld [vmem:[%s212 + $0x41c] sm:$0xff]
      %v374 = vld [vmem:[%s212 + $0x424] sm:$0xff]
      %v375 = vld [vmem:[%s212 + $0x42c] sm:$0xff]
      %v376 = vld [vmem:[%s212 + $0x434] sm:$0xf]
      %v377 = vld [vmem:[%s212 + $0x438] sm:$0xff]
      %v378 = vld [vmem:[%s212 + $0x440] sm:$0xff]
      %v379 = vld [vmem:[%s212 + $0x448] sm:$0xff]
      %v380 = vld [vmem:[%s212 + $0x450] sm:$0xff]
      %v381 = vld [vmem:[%s212 + $0x458] sm:$0xf]
      %v382 = vld [vmem:[%s212 + $0x45c] sm:$0xff]
      %v383 = vld [vmem:[%s212 + $0x464] sm:$0xff]
      %v384 = vld [vmem:[%s212 + $0x46c] sm:$0xff]
      %v385 = vld [vmem:[%s212 + $0x474] sm:$0xff]
      %v386 = vld [vmem:[%s212 + $0x47c] sm:$0xf]
      %v387 = vld [vmem:[%s2] sm:$0xff]
      %v388 = vld [vmem:[%s2 + $0x8] sm:$0xff]
      %v389 = vld [vmem:[%s2 + $0x10] sm:$0xff]
      %v390 = vld [vmem:[%s2 + $0x18] sm:$0xff]
      %v391 = vld [vmem:[%s2 + $0x20] sm:$0xff]
      %v392 = vld [vmem:[%s2 + $0x28] sm:$0xff]
      %v393 = vld [vmem:[%s2 + $0x30] sm:$0xff]
      %v394 = vld [vmem:[%s2 + $0x38] sm:$0xff]
      %v395 = vld [vmem:[%s2 + $0x40] sm:$0xff]
      %v396 = vld [vmem:[%s2 + $0x48] sm:$0xff]
      %v397 = vld [vmem:[%s2 + $0x50] sm:$0xff]
      %v398 = vld [vmem:[%s2 + $0x58] sm:$0xff]
      %v399 = vld [vmem:[%s2 + $0x60] sm:$0xff]
      %v400 = vld [vmem:[%s2 + $0x68] sm:$0xff]
      %v401 = vld [vmem:[%s2 + $0x70] sm:$0xff]
      %v402 = vld [vmem:[%s2 + $0x78] sm:$0xff]
      %v403 = vld [vmem:[%s2 + $0x80] sm:$0xff]
      %v404 = vld [vmem:[%s2 + $0x88] sm:$0xff]
      %v405 = vld [vmem:[%s2 + $0x90] sm:$0xff]
      %v406 = vld [vmem:[%s2 + $0x98] sm:$0xff]
      %v407 = vld [vmem:[%s2 + $0xa0] sm:$0xff]
      %v408 = vld [vmem:[%s2 + $0xa8] sm:$0xff]
      %v409 = vld [vmem:[%s2 + $0xb0] sm:$0xff]
      %v410 = vld [vmem:[%s2 + $0xb8] sm:$0xff]
      %v411 = vld [vmem:[%s2 + $0xc0] sm:$0xff]
      %v412 = vld [vmem:[%s2 + $0xc8] sm:$0xff]
      %v413 = vld [vmem:[%s2 + $0xd0] sm:$0xff]
      %v414 = vld [vmem:[%s2 + $0xd8] sm:$0xff]
      %v415 = vld [vmem:[%s2 + $0xe0] sm:$0xff]
      %v416 = vld [vmem:[%s2 + $0xe8] sm:$0xff]
      %v417 = vld [vmem:[%s2 + $0xf0] sm:$0xff]
      %v418 = vld [vmem:[%s2 + $0xf8] sm:$0xff]
      %v419 = vld [vmem:[%s2 + $0x100] sm:$0xff]
      %v420 = vld [vmem:[%s2 + $0x108] sm:$0xff]
      %v421 = vld [vmem:[%s2 + $0x110] sm:$0xff]
      %v422 = vld [vmem:[%s2 + $0x118] sm:$0xff]
      %v423 = vld [vmem:[%s2 + $0x120] sm:$0xff]
      %v424 = vld [vmem:[%s2 + $0x128] sm:$0xff]
      %v425 = vld [vmem:[%s2 + $0x130] sm:$0xff]
      %v426 = vld [vmem:[%s2 + $0x138] sm:$0xff]
      %v427 = vld [vmem:[%s2 + $0x140] sm:$0xff]
      %v428 = vld [vmem:[%s2 + $0x148] sm:$0xff]
      %v429 = vld [vmem:[%s2 + $0x150] sm:$0xff]
      %v430 = vld [vmem:[%s2 + $0x158] sm:$0xff]
      %v431 = vld [vmem:[%s2 + $0x160] sm:$0xff]
      %v432 = vld [vmem:[%s2 + $0x168] sm:$0xff]
      %v433 = vld [vmem:[%s2 + $0x170] sm:$0xff]
      %v434 = vld [vmem:[%s2 + $0x178] sm:$0xff]
      %v435 = vld [vmem:[%s2 + $0x180] sm:$0xff]
      %v436 = vld [vmem:[%s2 + $0x188] sm:$0xff]
      %v437 = vld [vmem:[%s2 + $0x190] sm:$0xff]
      %v438 = vld [vmem:[%s2 + $0x198] sm:$0xff]
      %v439 = vld [vmem:[%s2 + $0x1a0] sm:$0xff]
      %v440 = vld [vmem:[%s2 + $0x1a8] sm:$0xff]
      %v441 = vld [vmem:[%s2 + $0x1b0] sm:$0xff]
      %v442 = vld [vmem:[%s2 + $0x1b8] sm:$0xff]
      %v443 = vld [vmem:[%s2 + $0x1c0] sm:$0xff]
      %v444 = vld [vmem:[%s2 + $0x1c8] sm:$0xff]
      %v445 = vld [vmem:[%s2 + $0x1d0] sm:$0xff]
      %v446 = vld [vmem:[%s2 + $0x1d8] sm:$0xff]
      %v447 = vld [vmem:[%s2 + $0x1e0] sm:$0xff]
      %v448 = vld [vmem:[%s2 + $0x1e8] sm:$0xff]
      %v449 = vld [vmem:[%s2 + $0x1f0] sm:$0xff]
      %v450 = vld [vmem:[%s2 + $0x1f8] sm:$0xff]
      %v451 = vld [vmem:[%s2 + $0x200] sm:$0xff]
      %v452 = vld [vmem:[%s2 + $0x208] sm:$0xff]
      %v453 = vld [vmem:[%s2 + $0x210] sm:$0xff]
      %v454 = vld [vmem:[%s2 + $0x218] sm:$0xff]
      %v455 = vld [vmem:[%s2 + $0x220] sm:$0xff]
      %v456 = vld [vmem:[%s2 + $0x228] sm:$0xff]
      %v457 = vld [vmem:[%s2 + $0x230] sm:$0xff]
      %v458 = vld [vmem:[%s2 + $0x238] sm:$0xff]
      %v459 = vld [vmem:[%s2 + $0x240] sm:$0xff]
      %v460 = vld [vmem:[%s2 + $0x248] sm:$0xff]
      %v461 = vld [vmem:[%s2 + $0x250] sm:$0xff]
      %v462 = vld [vmem:[%s2 + $0x258] sm:$0xff]
      %v463 = vld [vmem:[%s2 + $0x260] sm:$0xff]
      %v464 = vld [vmem:[%s2 + $0x268] sm:$0xff]
      %v465 = vld [vmem:[%s2 + $0x270] sm:$0xff]
      %v466 = vld [vmem:[%s2 + $0x278] sm:$0xff]
      %v467 = vld [vmem:[%s2 + $0x280] sm:$0xff]
      %v468 = vld [vmem:[%s2 + $0x288] sm:$0xff]
      %v469 = vld [vmem:[%s2 + $0x290] sm:$0xff]
      %v470 = vld [vmem:[%s2 + $0x298] sm:$0xff]
      %v471 = vld [vmem:[%s2 + $0x2a0] sm:$0xff]
      %v472 = vld [vmem:[%s2 + $0x2a8] sm:$0xff]
      %v473 = vld [vmem:[%s2 + $0x2b0] sm:$0xff]
      %v474 = vld [vmem:[%s2 + $0x2b8] sm:$0xff]
      %v475 = vld [vmem:[%s2 + $0x2c0] sm:$0xff]
      %v476 = vld [vmem:[%s2 + $0x2c8] sm:$0xff]
      %v477 = vld [vmem:[%s2 + $0x2d0] sm:$0xff]
      %v478 = vld [vmem:[%s2 + $0x2d8] sm:$0xff]
      %v479 = vld [vmem:[%s2 + $0x2e0] sm:$0xff]
      %v480 = vld [vmem:[%s2 + $0x2e8] sm:$0xff]
      %v481 = vld [vmem:[%s2 + $0x2f0] sm:$0xff]
      %v482 = vld [vmem:[%s2 + $0x2f8] sm:$0xff]
      %v483 = vld [vmem:[%s2 + $0x300] sm:$0xff]
      %v484 = vld [vmem:[%s2 + $0x308] sm:$0xff]
      %v485 = vld [vmem:[%s2 + $0x310] sm:$0xff]
      %v486 = vld [vmem:[%s2 + $0x318] sm:$0xff]
      %v487 = vld [vmem:[%s2 + $0x320] sm:$0xff]
      %v488 = vld [vmem:[%s2 + $0x328] sm:$0xff]
      %v489 = vld [vmem:[%s2 + $0x330] sm:$0xff]
      %v490 = vld [vmem:[%s2 + $0x338] sm:$0xff]
      %v491 = vld [vmem:[%s2 + $0x340] sm:$0xff]
      %v492 = vld [vmem:[%s2 + $0x348] sm:$0xff]
      %v493 = vld [vmem:[%s2 + $0x350] sm:$0xff]
      %v494 = vld [vmem:[%s2 + $0x358] sm:$0xff]
      %v495 = vld [vmem:[%s2 + $0x360] sm:$0xff]
      %v496 = vld [vmem:[%s2 + $0x368] sm:$0xff]
      %v497 = vld [vmem:[%s2 + $0x370] sm:$0xff]
      %v498 = vld [vmem:[%s2 + $0x378] sm:$0xff]
      %v499 = vld [vmem:[%s2 + $0x380] sm:$0xff]
      %v500 = vld [vmem:[%s2 + $0x388] sm:$0xff]
      %v501 = vld [vmem:[%s2 + $0x390] sm:$0xff]
      %v502 = vld [vmem:[%s2 + $0x398] sm:$0xff]
      %v503 = vld [vmem:[%s2 + $0x3a0] sm:$0xff]
      %v504 = vld [vmem:[%s2 + $0x3a8] sm:$0xff]
      %v505 = vld [vmem:[%s2 + $0x3b0] sm:$0xff]
      %v506 = vld [vmem:[%s2 + $0x3b8] sm:$0xff]
      %v507 = vld [vmem:[%s2 + $0x3c0] sm:$0xff]
      %v508 = vld [vmem:[%s2 + $0x3c8] sm:$0xff]
      %v509 = vld [vmem:[%s2 + $0x3d0] sm:$0xff]
      %v510 = vld [vmem:[%s2 + $0x3d8] sm:$0xff]
      %v511 = vld [vmem:[%s2 + $0x3e0] sm:$0xff]
      %v512 = vld [vmem:[%s2 + $0x3e8] sm:$0xff]
      %v513 = vld [vmem:[%s2 + $0x3f0] sm:$0xff]
      %v514 = vld [vmem:[%s2 + $0x3f8] sm:$0xff]
      %v515 = vld [vmem:[%s2 + $0x400] sm:$0xff]
      %v516 = vld [vmem:[%s2 + $0x408] sm:$0xff]
      %v517 = vld [vmem:[%s2 + $0x410] sm:$0xff]
      %v518 = vld [vmem:[%s2 + $0x418] sm:$0xff]
      %v519 = vld [vmem:[%s2 + $0x420] sm:$0xff]
      %v520 = vld [vmem:[%s2 + $0x428] sm:$0xff]
      %v521 = vld [vmem:[%s2 + $0x430] sm:$0xff]
      %v522 = vld [vmem:[%s2 + $0x438] sm:$0xff]
      %v523 = vld [vmem:[%s2 + $0x440] sm:$0xff]
      %v524 = vld [vmem:[%s2 + $0x448] sm:$0xff]
      %v525 = vld [vmem:[%s2 + $0x450] sm:$0xff]
      %v526 = vld [vmem:[%s2 + $0x458] sm:$0xff]
      %v527 = vld [vmem:[%s2 + $0x460] sm:$0xff]
      %v528 = vld [vmem:[%s2 + $0x468] sm:$0xff]
      %v529 = vld [vmem:[%s2 + $0x470] sm:$0xff]
      %v530 = vld [vmem:[%s2 + $0x478] sm:$0xff]
      %v531 = vld [vmem:[%s3] sm:$0x3]
      %v533 = vlaneseq
      %v534 = vshrl.u32 %v533, 7
      %v535 = vsub.s32 0, %v534
      %v536 = vrot.slane %v531, %v535
      %v537 = vlaneseq
      %v538 = vshrl.u32 %v537, 7
      %v539 = vsub.s32 1, %v538
      %v540 = vrot.slane %v531, %v539
      %v703 = vunpack.c.l.b16 %v227
      %v704 = vunpack.c.h.b16 %v227
      %v705 = vunpack.c.l.b16 %v228
      %v706 = vunpack.c.h.b16 %v228
      %v707 = vunpack.c.l.b16 %v229
      %v708 = vunpack.c.h.b16 %v229
      %v709 = vunpack.c.l.b16 %v230
      %v710 = vunpack.c.h.b16 %v230
      %v711 = vunpack.c.l.b16 %v231
      %v712 = vunpack.c.l.b16 %v232
      %v713 = vunpack.c.h.b16 %v232
      %v714 = vunpack.c.l.b16 %v233
      %v715 = vunpack.c.h.b16 %v233
      %v716 = vunpack.c.l.b16 %v234
      %v717 = vunpack.c.h.b16 %v234
      %v718 = vunpack.c.l.b16 %v235
      %v719 = vunpack.c.h.b16 %v235
      %v720 = vunpack.c.l.b16 %v236
      %v721 = vunpack.c.l.b16 %v237
      %v722 = vunpack.c.h.b16 %v237
      %v723 = vunpack.c.l.b16 %v238
      %v724 = vunpack.c.h.b16 %v238
      %v725 = vunpack.c.l.b16 %v239
      %v726 = vunpack.c.h.b16 %v239
      %v727 = vunpack.c.l.b16 %v240
      %v728 = vunpack.c.h.b16 %v240
      %v729 = vunpack.c.l.b16 %v241
      %v730 = vunpack.c.l.b16 %v242
      %v731 = vunpack.c.h.b16 %v242
      %v732 = vunpack.c.l.b16 %v243
      %v733 = vunpack.c.h.b16 %v243
      %v734 = vunpack.c.l.b16 %v244
      %v735 = vunpack.c.h.b16 %v244
      %v736 = vunpack.c.l.b16 %v245
      %v737 = vunpack.c.h.b16 %v245
      %v738 = vunpack.c.l.b16 %v246
      %v739 = vunpack.c.l.b16 %v247
      %v740 = vunpack.c.h.b16 %v247
      %v741 = vunpack.c.l.b16 %v248
      %v742 = vunpack.c.h.b16 %v248
      %v743 = vunpack.c.l.b16 %v249
      %v744 = vunpack.c.h.b16 %v249
      %v745 = vunpack.c.l.b16 %v250
      %v746 = vunpack.c.h.b16 %v250
      %v747 = vunpack.c.l.b16 %v251
      %v748 = vunpack.c.l.b16 %v252
      %v749 = vunpack.c.h.b16 %v252
      %v750 = vunpack.c.l.b16 %v253
      %v751 = vunpack.c.h.b16 %v253
      %v752 = vunpack.c.l.b16 %v254
      %v753 = vunpack.c.h.b16 %v254
      %v754 = vunpack.c.l.b16 %v255
      %v755 = vunpack.c.h.b16 %v255
      %v756 = vunpack.c.l.b16 %v256
      %v757 = vunpack.c.l.b16 %v257
      %v758 = vunpack.c.h.b16 %v257
      %v759 = vunpack.c.l.b16 %v258
      %v760 = vunpack.c.h.b16 %v258
      %v761 = vunpack.c.l.b16 %v259
      %v762 = vunpack.c.h.b16 %v259
      %v763 = vunpack.c.l.b16 %v260
      %v764 = vunpack.c.h.b16 %v260
      %v765 = vunpack.c.l.b16 %v261
      %v766 = vunpack.c.l.b16 %v262
      %v767 = vunpack.c.h.b16 %v262
      %v768 = vunpack.c.l.b16 %v263
      %v769 = vunpack.c.h.b16 %v263
      %v770 = vunpack.c.l.b16 %v264
      %v771 = vunpack.c.h.b16 %v264
      %v772 = vunpack.c.l.b16 %v265
      %v773 = vunpack.c.h.b16 %v265
      %v774 = vunpack.c.l.b16 %v266
      %v775 = vunpack.c.l.b16 %v267
      %v776 = vunpack.c.h.b16 %v267
      %v777 = vunpack.c.l.b16 %v268
      %v778 = vunpack.c.h.b16 %v268
      %v779 = vunpack.c.l.b16 %v269
      %v780 = vunpack.c.h.b16 %v269
      %v781 = vunpack.c.l.b16 %v270
      %v782 = vunpack.c.h.b16 %v270
      %v783 = vunpack.c.l.b16 %v271
      %v784 = vunpack.c.l.b16 %v272
      %v785 = vunpack.c.h.b16 %v272
      %v786 = vunpack.c.l.b16 %v273
      %v787 = vunpack.c.h.b16 %v273
      %v788 = vunpack.c.l.b16 %v274
      %v789 = vunpack.c.h.b16 %v274
      %v790 = vunpack.c.l.b16 %v275
      %v791 = vunpack.c.h.b16 %v275
      %v792 = vunpack.c.l.b16 %v276
      %v793 = vunpack.c.l.b16 %v277
      %v794 = vunpack.c.h.b16 %v277
      %v795 = vunpack.c.l.b16 %v278
      %v796 = vunpack.c.h.b16 %v278
      %v797 = vunpack.c.l.b16 %v279
      %v798 = vunpack.c.h.b16 %v279
      %v799 = vunpack.c.l.b16 %v280
      %v800 = vunpack.c.h.b16 %v280
      %v801 = vunpack.c.l.b16 %v281
      %v802 = vunpack.c.l.b16 %v282
      %v803 = vunpack.c.h.b16 %v282
      %v804 = vunpack.c.l.b16 %v283
      %v805 = vunpack.c.h.b16 %v283
      %v806 = vunpack.c.l.b16 %v284
      %v807 = vunpack.c.h.b16 %v284
      %v808 = vunpack.c.l.b16 %v285
      %v809 = vunpack.c.h.b16 %v285
      %v810 = vunpack.c.l.b16 %v286
      %v811 = vunpack.c.l.b16 %v287
      %v812 = vunpack.c.h.b16 %v287
      %v813 = vunpack.c.l.b16 %v288
      %v814 = vunpack.c.h.b16 %v288
      %v815 = vunpack.c.l.b16 %v289
      %v816 = vunpack.c.h.b16 %v289
      %v817 = vunpack.c.l.b16 %v290
      %v818 = vunpack.c.h.b16 %v290
      %v819 = vunpack.c.l.b16 %v291
      %v820 = vunpack.c.l.b16 %v292
      %v821 = vunpack.c.h.b16 %v292
      %v822 = vunpack.c.l.b16 %v293
      %v823 = vunpack.c.h.b16 %v293
      %v824 = vunpack.c.l.b16 %v294
      %v825 = vunpack.c.h.b16 %v294
      %v826 = vunpack.c.l.b16 %v295
      %v827 = vunpack.c.h.b16 %v295
      %v828 = vunpack.c.l.b16 %v296
      %v829 = vunpack.c.l.b16 %v297
      %v830 = vunpack.c.h.b16 %v297
      %v831 = vunpack.c.l.b16 %v298
      %v832 = vunpack.c.h.b16 %v298
      %v833 = vunpack.c.l.b16 %v299
      %v834 = vunpack.c.h.b16 %v299
      %v835 = vunpack.c.l.b16 %v300
      %v836 = vunpack.c.h.b16 %v300
      %v837 = vunpack.c.l.b16 %v301
      %v838 = vunpack.c.l.b16 %v302
      %v839 = vunpack.c.h.b16 %v302
      %v840 = vunpack.c.l.b16 %v303
      %v841 = vunpack.c.h.b16 %v303
      %v842 = vunpack.c.l.b16 %v304
      %v843 = vunpack.c.h.b16 %v304
      %v844 = vunpack.c.l.b16 %v305
      %v845 = vunpack.c.h.b16 %v305
      %v846 = vunpack.c.l.b16 %v306
      %v847 = vunpack.c.l.b16 %v307
      %v848 = vunpack.c.h.b16 %v307
      %v849 = vunpack.c.l.b16 %v308
      %v850 = vunpack.c.h.b16 %v308
      %v851 = vunpack.c.l.b16 %v309
      %v852 = vunpack.c.h.b16 %v309
      %v853 = vunpack.c.l.b16 %v310
      %v854 = vunpack.c.h.b16 %v310
      %v855 = vunpack.c.l.b16 %v311
      %v856 = vunpack.c.l.b16 %v312
      %v857 = vunpack.c.h.b16 %v312
      %v858 = vunpack.c.l.b16 %v313
      %v859 = vunpack.c.h.b16 %v313
      %v860 = vunpack.c.l.b16 %v314
      %v861 = vunpack.c.h.b16 %v314
      %v862 = vunpack.c.l.b16 %v315
      %v863 = vunpack.c.h.b16 %v315
      %v864 = vunpack.c.l.b16 %v316
      %v865 = vunpack.c.l.b16 %v317
      %v866 = vunpack.c.h.b16 %v317
      %v867 = vunpack.c.l.b16 %v318
      %v868 = vunpack.c.h.b16 %v318
      %v869 = vunpack.c.l.b16 %v319
      %v870 = vunpack.c.h.b16 %v319
      %v871 = vunpack.c.l.b16 %v320
      %v872 = vunpack.c.h.b16 %v320
      %v873 = vunpack.c.l.b16 %v321
      %v874 = vunpack.c.l.b16 %v322
      %v875 = vunpack.c.h.b16 %v322
      %v876 = vunpack.c.l.b16 %v323
      %v877 = vunpack.c.h.b16 %v323
      %v878 = vunpack.c.l.b16 %v324
      %v879 = vunpack.c.h.b16 %v324
      %v880 = vunpack.c.l.b16 %v325
      %v881 = vunpack.c.h.b16 %v325
      %v882 = vunpack.c.l.b16 %v326
      %v883 = vunpack.c.l.b16 %v327
      %v884 = vunpack.c.h.b16 %v327
      %v885 = vunpack.c.l.b16 %v328
      %v886 = vunpack.c.h.b16 %v328
      %v887 = vunpack.c.l.b16 %v329
      %v888 = vunpack.c.h.b16 %v329
      %v889 = vunpack.c.l.b16 %v330
      %v890 = vunpack.c.h.b16 %v330
      %v891 = vunpack.c.l.b16 %v331
      %v892 = vunpack.c.l.b16 %v332
      %v893 = vunpack.c.h.b16 %v332
      %v894 = vunpack.c.l.b16 %v333
      %v895 = vunpack.c.h.b16 %v333
      %v896 = vunpack.c.l.b16 %v334
      %v897 = vunpack.c.h.b16 %v334
      %v898 = vunpack.c.l.b16 %v335
      %v899 = vunpack.c.h.b16 %v335
      %v900 = vunpack.c.l.b16 %v336
      %v901 = vunpack.c.l.b16 %v337
      %v902 = vunpack.c.h.b16 %v337
      %v903 = vunpack.c.l.b16 %v338
      %v904 = vunpack.c.h.b16 %v338
      %v905 = vunpack.c.l.b16 %v339
      %v906 = vunpack.c.h.b16 %v339
      %v907 = vunpack.c.l.b16 %v340
      %v908 = vunpack.c.h.b16 %v340
      %v909 = vunpack.c.l.b16 %v341
      %v910 = vunpack.c.l.b16 %v342
      %v911 = vunpack.c.h.b16 %v342
      %v912 = vunpack.c.l.b16 %v343
      %v913 = vunpack.c.h.b16 %v343
      %v914 = vunpack.c.l.b16 %v344
      %v915 = vunpack.c.h.b16 %v344
      %v916 = vunpack.c.l.b16 %v345
      %v917 = vunpack.c.h.b16 %v345
      %v918 = vunpack.c.l.b16 %v346
      %v919 = vunpack.c.l.b16 %v347
      %v920 = vunpack.c.h.b16 %v347
      %v921 = vunpack.c.l.b16 %v348
      %v922 = vunpack.c.h.b16 %v348
      %v923 = vunpack.c.l.b16 %v349
      %v924 = vunpack.c.h.b16 %v349
      %v925 = vunpack.c.l.b16 %v350
      %v926 = vunpack.c.h.b16 %v350
      %v927 = vunpack.c.l.b16 %v351
      %v928 = vunpack.c.l.b16 %v352
      %v929 = vunpack.c.h.b16 %v352
      %v930 = vunpack.c.l.b16 %v353
      %v931 = vunpack.c.h.b16 %v353
      %v932 = vunpack.c.l.b16 %v354
      %v933 = vunpack.c.h.b16 %v354
      %v934 = vunpack.c.l.b16 %v355
      %v935 = vunpack.c.h.b16 %v355
      %v936 = vunpack.c.l.b16 %v356
      %v937 = vunpack.c.l.b16 %v357
      %v938 = vunpack.c.h.b16 %v357
      %v939 = vunpack.c.l.b16 %v358
      %v940 = vunpack.c.h.b16 %v358
      %v941 = vunpack.c.l.b16 %v359
      %v942 = vunpack.c.h.b16 %v359
      %v943 = vunpack.c.l.b16 %v360
      %v944 = vunpack.c.h.b16 %v360
      %v945 = vunpack.c.l.b16 %v361
      %v946 = vunpack.c.l.b16 %v362
      %v947 = vunpack.c.h.b16 %v362
      %v948 = vunpack.c.l.b16 %v363
      %v949 = vunpack.c.h.b16 %v363
      %v950 = vunpack.c.l.b16 %v364
      %v951 = vunpack.c.h.b16 %v364
      %v952 = vunpack.c.l.b16 %v365
      %v953 = vunpack.c.h.b16 %v365
      %v954 = vunpack.c.l.b16 %v366
      %v955 = vunpack.c.l.b16 %v367
      %v956 = vunpack.c.h.b16 %v367
      %v957 = vunpack.c.l.b16 %v368
      %v958 = vunpack.c.h.b16 %v368
      %v959 = vunpack.c.l.b16 %v369
      %v960 = vunpack.c.h.b16 %v369
      %v961 = vunpack.c.l.b16 %v370
      %v962 = vunpack.c.h.b16 %v370
      %v963 = vunpack.c.l.b16 %v371
      %v964 = vunpack.c.l.b16 %v372
      %v965 = vunpack.c.h.b16 %v372
      %v966 = vunpack.c.l.b16 %v373
      %v967 = vunpack.c.h.b16 %v373
      %v968 = vunpack.c.l.b16 %v374
      %v969 = vunpack.c.h.b16 %v374
      %v970 = vunpack.c.l.b16 %v375
      %v971 = vunpack.c.h.b16 %v375
      %v972 = vunpack.c.l.b16 %v376
      %v973 = vunpack.c.l.b16 %v377
      %v974 = vunpack.c.h.b16 %v377
      %v975 = vunpack.c.l.b16 %v378
      %v976 = vunpack.c.h.b16 %v378
      %v977 = vunpack.c.l.b16 %v379
      %v978 = vunpack.c.h.b16 %v379
      %v979 = vunpack.c.l.b16 %v380
      %v980 = vunpack.c.h.b16 %v380
      %v981 = vunpack.c.l.b16 %v381
      %v982 = vunpack.c.l.b16 %v382
      %v983 = vunpack.c.h.b16 %v382
      %v984 = vunpack.c.l.b16 %v383
      %v985 = vunpack.c.h.b16 %v383
      %v986 = vunpack.c.l.b16 %v384
      %v987 = vunpack.c.h.b16 %v384
      %v988 = vunpack.c.l.b16 %v385
      %v989 = vunpack.c.h.b16 %v385
      %v990 = vunpack.c.l.b16 %v386
      %v991 = vpack.c.b16 %v712, %v703
      %v992 = vpack.c.b16 %v713, %v704
      %v993 = vpack.c.b16 %v714, %v705
      %v994 = vpack.c.b16 %v715, %v706
      %v995 = vpack.c.b16 %v716, %v707
      %v996 = vpack.c.b16 %v717, %v708
      %v997 = vpack.c.b16 %v718, %v709
      %v998 = vpack.c.b16 %v719, %v710
      %v999 = vpack.c.b16 %v720, %v711
      %v1000 = vpack.c.b16 %v730, %v721
      %v1001 = vpack.c.b16 %v731, %v722
      %v1002 = vpack.c.b16 %v732, %v723
      %v1003 = vpack.c.b16 %v733, %v724
      %v1004 = vpack.c.b16 %v734, %v725
      %v1005 = vpack.c.b16 %v735, %v726
      %v1006 = vpack.c.b16 %v736, %v727
      %v1007 = vpack.c.b16 %v737, %v728
      %v1008 = vpack.c.b16 %v738, %v729
      %v1009 = vpack.c.b16 %v748, %v739
      %v1010 = vpack.c.b16 %v749, %v740
      %v1011 = vpack.c.b16 %v750, %v741
      %v1012 = vpack.c.b16 %v751, %v742
      %v1013 = vpack.c.b16 %v752, %v743
      %v1014 = vpack.c.b16 %v753, %v744
      %v1015 = vpack.c.b16 %v754, %v745
      %v1016 = vpack.c.b16 %v755, %v746
      %v1017 = vpack.c.b16 %v756, %v747
      %v1018 = vpack.c.b16 %v766, %v757
      %v1019 = vpack.c.b16 %v767, %v758
      %v1020 = vpack.c.b16 %v768, %v759
      %v1021 = vpack.c.b16 %v769, %v760
      %v1022 = vpack.c.b16 %v770, %v761
      %v1023 = vpack.c.b16 %v771, %v762
      %v1024 = vpack.c.b16 %v772, %v763
      %v1025 = vpack.c.b16 %v773, %v764
      %v1026 = vpack.c.b16 %v774, %v765
      %v1027 = vpack.c.b16 %v784, %v775
      %v1028 = vpack.c.b16 %v785, %v776
      %v1029 = vpack.c.b16 %v786, %v777
      %v1030 = vpack.c.b16 %v787, %v778
      %v1031 = vpack.c.b16 %v788, %v779
      %v1032 = vpack.c.b16 %v789, %v780
      %v1033 = vpack.c.b16 %v790, %v781
      %v1034 = vpack.c.b16 %v791, %v782
      %v1035 = vpack.c.b16 %v792, %v783
      %v1036 = vpack.c.b16 %v802, %v793
      %v1037 = vpack.c.b16 %v803, %v794
      %v1038 = vpack.c.b16 %v804, %v795
      %v1039 = vpack.c.b16 %v805, %v796
      %v1040 = vpack.c.b16 %v806, %v797
      %v1041 = vpack.c.b16 %v807, %v798
      %v1042 = vpack.c.b16 %v808, %v799
      %v1043 = vpack.c.b16 %v809, %v800
      %v1044 = vpack.c.b16 %v810, %v801
      %v1045 = vpack.c.b16 %v820, %v811
      %v1046 = vpack.c.b16 %v821, %v812
      %v1047 = vpack.c.b16 %v822, %v813
      %v1048 = vpack.c.b16 %v823, %v814
      %v1049 = vpack.c.b16 %v824, %v815
      %v1050 = vpack.c.b16 %v825, %v816
      %v1051 = vpack.c.b16 %v826, %v817
      %v1052 = vpack.c.b16 %v827, %v818
      %v1053 = vpack.c.b16 %v828, %v819
      %v1054 = vpack.c.b16 %v838, %v829
      %v1055 = vpack.c.b16 %v839, %v830
      %v1056 = vpack.c.b16 %v840, %v831
      %v1057 = vpack.c.b16 %v841, %v832
      %v1058 = vpack.c.b16 %v842, %v833
      %v1059 = vpack.c.b16 %v843, %v834
      %v1060 = vpack.c.b16 %v844, %v835
      %v1061 = vpack.c.b16 %v845, %v836
      %v1062 = vpack.c.b16 %v846, %v837
      %v1063 = vpack.c.b16 %v856, %v847
      %v1064 = vpack.c.b16 %v857, %v848
      %v1065 = vpack.c.b16 %v858, %v849
      %v1066 = vpack.c.b16 %v859, %v850
      %v1067 = vpack.c.b16 %v860, %v851
      %v1068 = vpack.c.b16 %v861, %v852
      %v1069 = vpack.c.b16 %v862, %v853
      %v1070 = vpack.c.b16 %v863, %v854
      %v1071 = vpack.c.b16 %v864, %v855
      %v1072 = vpack.c.b16 %v874, %v865
      %v1073 = vpack.c.b16 %v875, %v866
      %v1074 = vpack.c.b16 %v876, %v867
      %v1075 = vpack.c.b16 %v877, %v868
      %v1076 = vpack.c.b16 %v878, %v869
      %v1077 = vpack.c.b16 %v879, %v870
      %v1078 = vpack.c.b16 %v880, %v871
      %v1079 = vpack.c.b16 %v881, %v872
      %v1080 = vpack.c.b16 %v882, %v873
      %v1081 = vpack.c.b16 %v892, %v883
      %v1082 = vpack.c.b16 %v893, %v884
      %v1083 = vpack.c.b16 %v894, %v885
      %v1084 = vpack.c.b16 %v895, %v886
      %v1085 = vpack.c.b16 %v896, %v887
      %v1086 = vpack.c.b16 %v897, %v888
      %v1087 = vpack.c.b16 %v898, %v889
      %v1088 = vpack.c.b16 %v899, %v890
      %v1089 = vpack.c.b16 %v900, %v891
      %v1090 = vpack.c.b16 %v910, %v901
      %v1091 = vpack.c.b16 %v911, %v902
      %v1092 = vpack.c.b16 %v912, %v903
      %v1093 = vpack.c.b16 %v913, %v904
      %v1094 = vpack.c.b16 %v914, %v905
      %v1095 = vpack.c.b16 %v915, %v906
      %v1096 = vpack.c.b16 %v916, %v907
      %v1097 = vpack.c.b16 %v917, %v908
      %v1098 = vpack.c.b16 %v918, %v909
      %v1099 = vpack.c.b16 %v928, %v919
      %v1100 = vpack.c.b16 %v929, %v920
      %v1101 = vpack.c.b16 %v930, %v921
      %v1102 = vpack.c.b16 %v931, %v922
      %v1103 = vpack.c.b16 %v932, %v923
      %v1104 = vpack.c.b16 %v933, %v924
      %v1105 = vpack.c.b16 %v934, %v925
      %v1106 = vpack.c.b16 %v935, %v926
      %v1107 = vpack.c.b16 %v936, %v927
      %v1108 = vpack.c.b16 %v946, %v937
      %v1109 = vpack.c.b16 %v947, %v938
      %v1110 = vpack.c.b16 %v948, %v939
      %v1111 = vpack.c.b16 %v949, %v940
      %v1112 = vpack.c.b16 %v950, %v941
      %v1113 = vpack.c.b16 %v951, %v942
      %v1114 = vpack.c.b16 %v952, %v943
      %v1115 = vpack.c.b16 %v953, %v944
      %v1116 = vpack.c.b16 %v954, %v945
      %v1117 = vpack.c.b16 %v964, %v955
      %v1118 = vpack.c.b16 %v965, %v956
      %v1119 = vpack.c.b16 %v966, %v957
      %v1120 = vpack.c.b16 %v967, %v958
      %v1121 = vpack.c.b16 %v968, %v959
      %v1122 = vpack.c.b16 %v969, %v960
      %v1123 = vpack.c.b16 %v970, %v961
      %v1124 = vpack.c.b16 %v971, %v962
      %v1125 = vpack.c.b16 %v972, %v963
      %v1126 = vpack.c.b16 %v982, %v973
      %v1127 = vpack.c.b16 %v983, %v974
      %v1128 = vpack.c.b16 %v984, %v975
      %v1129 = vpack.c.b16 %v985, %v976
      %v1130 = vpack.c.b16 %v986, %v977
      %v1131 = vpack.c.b16 %v987, %v978
      %v1132 = vpack.c.b16 %v988, %v979
      %v1133 = vpack.c.b16 %v989, %v980
      %v1134 = vpack.c.b16 %v990, %v981
      %v1423 = vunpack.c.l.b16 %v387
      %v1424 = vunpack.c.h.b16 %v387
      %v1425 = vunpack.c.l.b16 %v388
      %v1426 = vunpack.c.h.b16 %v388
      %v1427 = vunpack.c.l.b16 %v389
      %v1428 = vunpack.c.h.b16 %v389
      %v1429 = vunpack.c.l.b16 %v390
      %v1430 = vunpack.c.h.b16 %v390
      %v1431 = vunpack.c.l.b16 %v391
      %v1432 = vunpack.c.h.b16 %v391
      %v1433 = vunpack.c.l.b16 %v392
      %v1434 = vunpack.c.h.b16 %v392
      %v1435 = vunpack.c.l.b16 %v393
      %v1436 = vunpack.c.h.b16 %v393
      %v1437 = vunpack.c.l.b16 %v394
      %v1438 = vunpack.c.h.b16 %v394
      %v1439 = vunpack.c.l.b16 %v395
      %v1440 = vunpack.c.h.b16 %v395
      %v1441 = vunpack.c.l.b16 %v396
      %v1442 = vunpack.c.h.b16 %v396
      %v1443 = vunpack.c.l.b16 %v397
      %v1444 = vunpack.c.h.b16 %v397
      %v1445 = vunpack.c.l.b16 %v398
      %v1446 = vunpack.c.h.b16 %v398
      %v1447 = vunpack.c.l.b16 %v399
      %v1448 = vunpack.c.h.b16 %v399
      %v1449 = vunpack.c.l.b16 %v400
      %v1450 = vunpack.c.h.b16 %v400
      %v1451 = vunpack.c.l.b16 %v401
      %v1452 = vunpack.c.h.b16 %v401
      %v1453 = vunpack.c.l.b16 %v402
      %v1454 = vunpack.c.h.b16 %v402
      %v1455 = vunpack.c.l.b16 %v403
      %v1456 = vunpack.c.h.b16 %v403
      %v1457 = vunpack.c.l.b16 %v404
      %v1458 = vunpack.c.h.b16 %v404
      %v1459 = vunpack.c.l.b16 %v405
      %v1460 = vunpack.c.h.b16 %v405
      %v1461 = vunpack.c.l.b16 %v406
      %v1462 = vunpack.c.h.b16 %v406
      %v1463 = vunpack.c.l.b16 %v407
      %v1464 = vunpack.c.h.b16 %v407
      %v1465 = vunpack.c.l.b16 %v408
      %v1466 = vunpack.c.h.b16 %v408
      %v1467 = vunpack.c.l.b16 %v409
      %v1468 = vunpack.c.h.b16 %v409
      %v1469 = vunpack.c.l.b16 %v410
      %v1470 = vunpack.c.h.b16 %v410
      %v1471 = vunpack.c.l.b16 %v411
      %v1472 = vunpack.c.h.b16 %v411
      %v1473 = vunpack.c.l.b16 %v412
      %v1474 = vunpack.c.h.b16 %v412
      %v1475 = vunpack.c.l.b16 %v413
      %v1476 = vunpack.c.h.b16 %v413
      %v1477 = vunpack.c.l.b16 %v414
      %v1478 = vunpack.c.h.b16 %v414
      %v1479 = vunpack.c.l.b16 %v415
      %v1480 = vunpack.c.h.b16 %v415
      %v1481 = vunpack.c.l.b16 %v416
      %v1482 = vunpack.c.h.b16 %v416
      %v1483 = vunpack.c.l.b16 %v417
      %v1484 = vunpack.c.h.b16 %v417
      %v1485 = vunpack.c.l.b16 %v418
      %v1486 = vunpack.c.h.b16 %v418
      %v1487 = vunpack.c.l.b16 %v419
      %v1488 = vunpack.c.h.b16 %v419
      %v1489 = vunpack.c.l.b16 %v420
      %v1490 = vunpack.c.h.b16 %v420
      %v1491 = vunpack.c.l.b16 %v421
      %v1492 = vunpack.c.h.b16 %v421
      %v1493 = vunpack.c.l.b16 %v422
      %v1494 = vunpack.c.h.b16 %v422
      %v1495 = vunpack.c.l.b16 %v423
      %v1496 = vunpack.c.h.b16 %v423
      %v1497 = vunpack.c.l.b16 %v424
      %v1498 = vunpack.c.h.b16 %v424
      %v1499 = vunpack.c.l.b16 %v425
      %v1500 = vunpack.c.h.b16 %v425
      %v1501 = vunpack.c.l.b16 %v426
      %v1502 = vunpack.c.h.b16 %v426
      %v1503 = vunpack.c.l.b16 %v427
      %v1504 = vunpack.c.h.b16 %v427
      %v1505 = vunpack.c.l.b16 %v428
      %v1506 = vunpack.c.h.b16 %v428
      %v1507 = vunpack.c.l.b16 %v429
      %v1508 = vunpack.c.h.b16 %v429
      %v1509 = vunpack.c.l.b16 %v430
      %v1510 = vunpack.c.h.b16 %v430
      %v1511 = vunpack.c.l.b16 %v431
      %v1512 = vunpack.c.h.b16 %v431
      %v1513 = vunpack.c.l.b16 %v432
      %v1514 = vunpack.c.h.b16 %v432
      %v1515 = vunpack.c.l.b16 %v433
      %v1516 = vunpack.c.h.b16 %v433
      %v1517 = vunpack.c.l.b16 %v434
      %v1518 = vunpack.c.h.b16 %v434
      %v1519 = vunpack.c.l.b16 %v435
      %v1520 = vunpack.c.h.b16 %v435
      %v1521 = vunpack.c.l.b16 %v436
      %v1522 = vunpack.c.h.b16 %v436
      %v1523 = vunpack.c.l.b16 %v437
      %v1524 = vunpack.c.h.b16 %v437
      %v1525 = vunpack.c.l.b16 %v438
      %v1526 = vunpack.c.h.b16 %v438
      %v1527 = vunpack.c.l.b16 %v439
      %v1528 = vunpack.c.h.b16 %v439
      %v1529 = vunpack.c.l.b16 %v440
      %v1530 = vunpack.c.h.b16 %v440
      %v1531 = vunpack.c.l.b16 %v441
      %v1532 = vunpack.c.h.b16 %v441
      %v1533 = vunpack.c.l.b16 %v442
      %v1534 = vunpack.c.h.b16 %v442
      %v1535 = vunpack.c.l.b16 %v443
      %v1536 = vunpack.c.h.b16 %v443
      %v1537 = vunpack.c.l.b16 %v444
      %v1538 = vunpack.c.h.b16 %v444
      %v1539 = vunpack.c.l.b16 %v445
      %v1540 = vunpack.c.h.b16 %v445
      %v1541 = vunpack.c.l.b16 %v446
      %v1542 = vunpack.c.h.b16 %v446
      %v1543 = vunpack.c.l.b16 %v447
      %v1544 = vunpack.c.h.b16 %v447
      %v1545 = vunpack.c.l.b16 %v448
      %v1546 = vunpack.c.h.b16 %v448
      %v1547 = vunpack.c.l.b16 %v449
      %v1548 = vunpack.c.h.b16 %v449
      %v1549 = vunpack.c.l.b16 %v450
      %v1550 = vunpack.c.h.b16 %v450
      %v1551 = vunpack.c.l.b16 %v451
      %v1552 = vunpack.c.h.b16 %v451
      %v1553 = vunpack.c.l.b16 %v452
      %v1554 = vunpack.c.h.b16 %v452
      %v1555 = vunpack.c.l.b16 %v453
      %v1556 = vunpack.c.h.b16 %v453
      %v1557 = vunpack.c.l.b16 %v454
      %v1558 = vunpack.c.h.b16 %v454
      %v1559 = vunpack.c.l.b16 %v455
      %v1560 = vunpack.c.h.b16 %v455
      %v1561 = vunpack.c.l.b16 %v456
      %v1562 = vunpack.c.h.b16 %v456
      %v1563 = vunpack.c.l.b16 %v457
      %v1564 = vunpack.c.h.b16 %v457
      %v1565 = vunpack.c.l.b16 %v458
      %v1566 = vunpack.c.h.b16 %v458
      %v1567 = vunpack.c.l.b16 %v459
      %v1568 = vunpack.c.h.b16 %v459
      %v1569 = vunpack.c.l.b16 %v460
      %v1570 = vunpack.c.h.b16 %v460
      %v1571 = vunpack.c.l.b16 %v461
      %v1572 = vunpack.c.h.b16 %v461
      %v1573 = vunpack.c.l.b16 %v462
      %v1574 = vunpack.c.h.b16 %v462
      %v1575 = vunpack.c.l.b16 %v463
      %v1576 = vunpack.c.h.b16 %v463
      %v1577 = vunpack.c.l.b16 %v464
      %v1578 = vunpack.c.h.b16 %v464
      %v1579 = vunpack.c.l.b16 %v465
      %v1580 = vunpack.c.h.b16 %v465
      %v1581 = vunpack.c.l.b16 %v466
      %v1582 = vunpack.c.h.b16 %v466
      %v1583 = vunpack.c.l.b16 %v467
      %v1584 = vunpack.c.h.b16 %v467
      %v1585 = vunpack.c.l.b16 %v468
      %v1586 = vunpack.c.h.b16 %v468
      %v1587 = vunpack.c.l.b16 %v469
      %v1588 = vunpack.c.h.b16 %v469
      %v1589 = vunpack.c.l.b16 %v470
      %v1590 = vunpack.c.h.b16 %v470
      %v1591 = vunpack.c.l.b16 %v471
      %v1592 = vunpack.c.h.b16 %v471
      %v1593 = vunpack.c.l.b16 %v472
      %v1594 = vunpack.c.h.b16 %v472
      %v1595 = vunpack.c.l.b16 %v473
      %v1596 = vunpack.c.h.b16 %v473
      %v1597 = vunpack.c.l.b16 %v474
      %v1598 = vunpack.c.h.b16 %v474
      %v1599 = vunpack.c.l.b16 %v475
      %v1600 = vunpack.c.h.b16 %v475
      %v1601 = vunpack.c.l.b16 %v476
      %v1602 = vunpack.c.h.b16 %v476
      %v1603 = vunpack.c.l.b16 %v477
      %v1604 = vunpack.c.h.b16 %v477
      %v1605 = vunpack.c.l.b16 %v478
      %v1606 = vunpack.c.h.b16 %v478
      %v1607 = vunpack.c.l.b16 %v479
      %v1608 = vunpack.c.h.b16 %v479
      %v1609 = vunpack.c.l.b16 %v480
      %v1610 = vunpack.c.h.b16 %v480
      %v1611 = vunpack.c.l.b16 %v481
      %v1612 = vunpack.c.h.b16 %v481
      %v1613 = vunpack.c.l.b16 %v482
      %v1614 = vunpack.c.h.b16 %v482
      %v1615 = vunpack.c.l.b16 %v483
      %v1616 = vunpack.c.h.b16 %v483
      %v1617 = vunpack.c.l.b16 %v484
      %v1618 = vunpack.c.h.b16 %v484
      %v1619 = vunpack.c.l.b16 %v485
      %v1620 = vunpack.c.h.b16 %v485
      %v1621 = vunpack.c.l.b16 %v486
      %v1622 = vunpack.c.h.b16 %v486
      %v1623 = vunpack.c.l.b16 %v487
      %v1624 = vunpack.c.h.b16 %v487
      %v1625 = vunpack.c.l.b16 %v488
      %v1626 = vunpack.c.h.b16 %v488
      %v1627 = vunpack.c.l.b16 %v489
      %v1628 = vunpack.c.h.b16 %v489
      %v1629 = vunpack.c.l.b16 %v490
      %v1630 = vunpack.c.h.b16 %v490
      %v1631 = vunpack.c.l.b16 %v491
      %v1632 = vunpack.c.h.b16 %v491
      %v1633 = vunpack.c.l.b16 %v492
      %v1634 = vunpack.c.h.b16 %v492
      %v1635 = vunpack.c.l.b16 %v493
      %v1636 = vunpack.c.h.b16 %v493
      %v1637 = vunpack.c.l.b16 %v494
      %v1638 = vunpack.c.h.b16 %v494
      %v1639 = vunpack.c.l.b16 %v495
      %v1640 = vunpack.c.h.b16 %v495
      %v1641 = vunpack.c.l.b16 %v496
      %v1642 = vunpack.c.h.b16 %v496
      %v1643 = vunpack.c.l.b16 %v497
      %v1644 = vunpack.c.h.b16 %v497
      %v1645 = vunpack.c.l.b16 %v498
      %v1646 = vunpack.c.h.b16 %v498
      %v1647 = vunpack.c.l.b16 %v499
      %v1648 = vunpack.c.h.b16 %v499
      %v1649 = vunpack.c.l.b16 %v500
      %v1650 = vunpack.c.h.b16 %v500
      %v1651 = vunpack.c.l.b16 %v501
      %v1652 = vunpack.c.h.b16 %v501
      %v1653 = vunpack.c.l.b16 %v502
      %v1654 = vunpack.c.h.b16 %v502
      %v1655 = vunpack.c.l.b16 %v503
      %v1656 = vunpack.c.h.b16 %v503
      %v1657 = vunpack.c.l.b16 %v504
      %v1658 = vunpack.c.h.b16 %v504
      %v1659 = vunpack.c.l.b16 %v505
      %v1660 = vunpack.c.h.b16 %v505
      %v1661 = vunpack.c.l.b16 %v506
      %v1662 = vunpack.c.h.b16 %v506
      %v1663 = vunpack.c.l.b16 %v507
      %v1664 = vunpack.c.h.b16 %v507
      %v1665 = vunpack.c.l.b16 %v508
      %v1666 = vunpack.c.h.b16 %v508
      %v1667 = vunpack.c.l.b16 %v509
      %v1668 = vunpack.c.h.b16 %v509
      %v1669 = vunpack.c.l.b16 %v510
      %v1670 = vunpack.c.h.b16 %v510
      %v1671 = vunpack.c.l.b16 %v511
      %v1672 = vunpack.c.h.b16 %v511
      %v1673 = vunpack.c.l.b16 %v512
      %v1674 = vunpack.c.h.b16 %v512
      %v1675 = vunpack.c.l.b16 %v513
      %v1676 = vunpack.c.h.b16 %v513
      %v1677 = vunpack.c.l.b16 %v514
      %v1678 = vunpack.c.h.b16 %v514
      %v1679 = vunpack.c.l.b16 %v515
      %v1680 = vunpack.c.h.b16 %v515
      %v1681 = vunpack.c.l.b16 %v516
      %v1682 = vunpack.c.h.b16 %v516
      %v1683 = vunpack.c.l.b16 %v517
      %v1684 = vunpack.c.h.b16 %v517
      %v1685 = vunpack.c.l.b16 %v518
      %v1686 = vunpack.c.h.b16 %v518
      %v1687 = vunpack.c.l.b16 %v519
      %v1688 = vunpack.c.h.b16 %v519
      %v1689 = vunpack.c.l.b16 %v520
      %v1690 = vunpack.c.h.b16 %v520
      %v1691 = vunpack.c.l.b16 %v521
      %v1692 = vunpack.c.h.b16 %v521
      %v1693 = vunpack.c.l.b16 %v522
      %v1694 = vunpack.c.h.b16 %v522
      %v1695 = vunpack.c.l.b16 %v523
      %v1696 = vunpack.c.h.b16 %v523
      %v1697 = vunpack.c.l.b16 %v524
      %v1698 = vunpack.c.h.b16 %v524
      %v1699 = vunpack.c.l.b16 %v525
      %v1700 = vunpack.c.h.b16 %v525
      %v1701 = vunpack.c.l.b16 %v526
      %v1702 = vunpack.c.h.b16 %v526
      %v1703 = vunpack.c.l.b16 %v527
      %v1704 = vunpack.c.h.b16 %v527
      %v1705 = vunpack.c.l.b16 %v528
      %v1706 = vunpack.c.h.b16 %v528
      %v1707 = vunpack.c.l.b16 %v529
      %v1708 = vunpack.c.h.b16 %v529
      %v1709 = vunpack.c.l.b16 %v530
      %v1710 = vunpack.c.h.b16 %v530
      %v1711 = vpack.c.b16 %v1425, %v1423
      %v1712 = vpack.c.b16 %v1426, %v1424
      %v1713 = vpack.c.b16 %v1429, %v1427
      %v1714 = vpack.c.b16 %v1430, %v1428
      %v1715 = vpack.c.b16 %v1433, %v1431
      %v1716 = vpack.c.b16 %v1434, %v1432
      %v1717 = vpack.c.b16 %v1437, %v1435
      %v1718 = vpack.c.b16 %v1438, %v1436
      %v1719 = vpack.c.b16 %v1441, %v1439
      %v1720 = vpack.c.b16 %v1442, %v1440
      %v1721 = vpack.c.b16 %v1445, %v1443
      %v1722 = vpack.c.b16 %v1446, %v1444
      %v1723 = vpack.c.b16 %v1449, %v1447
      %v1724 = vpack.c.b16 %v1450, %v1448
      %v1725 = vpack.c.b16 %v1453, %v1451
      %v1726 = vpack.c.b16 %v1454, %v1452
      %v1727 = vpack.c.b16 %v1457, %v1455
      %v1728 = vpack.c.b16 %v1458, %v1456
      %v1729 = vpack.c.b16 %v1461, %v1459
      %v1730 = vpack.c.b16 %v1462, %v1460
      %v1731 = vpack.c.b16 %v1465, %v1463
      %v1732 = vpack.c.b16 %v1466, %v1464
      %v1733 = vpack.c.b16 %v1469, %v1467
      %v1734 = vpack.c.b16 %v1470, %v1468
      %v1735 = vpack.c.b16 %v1473, %v1471
      %v1736 = vpack.c.b16 %v1474, %v1472
      %v1737 = vpack.c.b16 %v1477, %v1475
      %v1738 = vpack.c.b16 %v1478, %v1476
      %v1739 = vpack.c.b16 %v1481, %v1479
      %v1740 = vpack.c.b16 %v1482, %v1480
      %v1741 = vpack.c.b16 %v1485, %v1483
      %v1742 = vpack.c.b16 %v1486, %v1484
      %v1743 = vpack.c.b16 %v1489, %v1487
      %v1744 = vpack.c.b16 %v1490, %v1488
      %v1745 = vpack.c.b16 %v1493, %v1491
      %v1746 = vpack.c.b16 %v1494, %v1492
      %v1747 = vpack.c.b16 %v1497, %v1495
      %v1748 = vpack.c.b16 %v1498, %v1496
      %v1749 = vpack.c.b16 %v1501, %v1499
      %v1750 = vpack.c.b16 %v1502, %v1500
      %v1751 = vpack.c.b16 %v1505, %v1503
      %v1752 = vpack.c.b16 %v1506, %v1504
      %v1753 = vpack.c.b16 %v1509, %v1507
      %v1754 = vpack.c.b16 %v1510, %v1508
      %v1755 = vpack.c.b16 %v1513, %v1511
      %v1756 = vpack.c.b16 %v1514, %v1512
      %v1757 = vpack.c.b16 %v1517, %v1515
      %v1758 = vpack.c.b16 %v1518, %v1516
      %v1759 = vpack.c.b16 %v1521, %v1519
      %v1760 = vpack.c.b16 %v1522, %v1520
      %v1761 = vpack.c.b16 %v1525, %v1523
      %v1762 = vpack.c.b16 %v1526, %v1524
      %v1763 = vpack.c.b16 %v1529, %v1527
      %v1764 = vpack.c.b16 %v1530, %v1528
      %v1765 = vpack.c.b16 %v1533, %v1531
      %v1766 = vpack.c.b16 %v1534, %v1532
      %v1767 = vpack.c.b16 %v1537, %v1535
      %v1768 = vpack.c.b16 %v1538, %v1536
      %v1769 = vpack.c.b16 %v1541, %v1539
      %v1770 = vpack.c.b16 %v1542, %v1540
      %v1771 = vpack.c.b16 %v1545, %v1543
      %v1772 = vpack.c.b16 %v1546, %v1544
      %v1773 = vpack.c.b16 %v1549, %v1547
      %v1774 = vpack.c.b16 %v1550, %v1548
      %v1775 = vpack.c.b16 %v1553, %v1551
      %v1776 = vpack.c.b16 %v1554, %v1552
      %v1777 = vpack.c.b16 %v1557, %v1555
      %v1778 = vpack.c.b16 %v1558, %v1556
      %v1779 = vpack.c.b16 %v1561, %v1559
      %v1780 = vpack.c.b16 %v1562, %v1560
      %v1781 = vpack.c.b16 %v1565, %v1563
      %v1782 = vpack.c.b16 %v1566, %v1564
      %v1783 = vpack.c.b16 %v1569, %v1567
      %v1784 = vpack.c.b16 %v1570, %v1568
      %v1785 = vpack.c.b16 %v1573, %v1571
      %v1786 = vpack.c.b16 %v1574, %v1572
      %v1787 = vpack.c.b16 %v1577, %v1575
      %v1788 = vpack.c.b16 %v1578, %v1576
      %v1789 = vpack.c.b16 %v1581, %v1579
      %v1790 = vpack.c.b16 %v1582, %v1580
      %v1791 = vpack.c.b16 %v1585, %v1583
      %v1792 = vpack.c.b16 %v1586, %v1584
      %v1793 = vpack.c.b16 %v1589, %v1587
      %v1794 = vpack.c.b16 %v1590, %v1588
      %v1795 = vpack.c.b16 %v1593, %v1591
      %v1796 = vpack.c.b16 %v1594, %v1592
      %v1797 = vpack.c.b16 %v1597, %v1595
      %v1798 = vpack.c.b16 %v1598, %v1596
      %v1799 = vpack.c.b16 %v1601, %v1599
      %v1800 = vpack.c.b16 %v1602, %v1600
      %v1801 = vpack.c.b16 %v1605, %v1603
      %v1802 = vpack.c.b16 %v1606, %v1604
      %v1803 = vpack.c.b16 %v1609, %v1607
      %v1804 = vpack.c.b16 %v1610, %v1608
      %v1805 = vpack.c.b16 %v1613, %v1611
      %v1806 = vpack.c.b16 %v1614, %v1612
      %v1807 = vpack.c.b16 %v1617, %v1615
      %v1808 = vpack.c.b16 %v1618, %v1616
      %v1809 = vpack.c.b16 %v1621, %v1619
      %v1810 = vpack.c.b16 %v1622, %v1620
      %v1811 = vpack.c.b16 %v1625, %v1623
      %v1812 = vpack.c.b16 %v1626, %v1624
      %v1813 = vpack.c.b16 %v1629, %v1627
      %v1814 = vpack.c.b16 %v1630, %v1628
      %v1815 = vpack.c.b16 %v1633, %v1631
      %v1816 = vpack.c.b16 %v1634, %v1632
      %v1817 = vpack.c.b16 %v1637, %v1635
      %v1818 = vpack.c.b16 %v1638, %v1636
      %v1819 = vpack.c.b16 %v1641, %v1639
      %v1820 = vpack.c.b16 %v1642, %v1640
      %v1821 = vpack.c.b16 %v1645, %v1643
      %v1822 = vpack.c.b16 %v1646, %v1644
      %v1823 = vpack.c.b16 %v1649, %v1647
      %v1824 = vpack.c.b16 %v1650, %v1648
      %v1825 = vpack.c.b16 %v1653, %v1651
      %v1826 = vpack.c.b16 %v1654, %v1652
      %v1827 = vpack.c.b16 %v1657, %v1655
      %v1828 = vpack.c.b16 %v1658, %v1656
      %v1829 = vpack.c.b16 %v1661, %v1659
      %v1830 = vpack.c.b16 %v1662, %v1660
      %v1831 = vpack.c.b16 %v1665, %v1663
      %v1832 = vpack.c.b16 %v1666, %v1664
      %v1833 = vpack.c.b16 %v1669, %v1667
      %v1834 = vpack.c.b16 %v1670, %v1668
      %v1835 = vpack.c.b16 %v1673, %v1671
      %v1836 = vpack.c.b16 %v1674, %v1672
      %v1837 = vpack.c.b16 %v1677, %v1675
      %v1838 = vpack.c.b16 %v1678, %v1676
      %v1839 = vpack.c.b16 %v1681, %v1679
      %v1840 = vpack.c.b16 %v1682, %v1680
      %v1841 = vpack.c.b16 %v1685, %v1683
      %v1842 = vpack.c.b16 %v1686, %v1684
      %v1843 = vpack.c.b16 %v1689, %v1687
      %v1844 = vpack.c.b16 %v1690, %v1688
      %v1845 = vpack.c.b16 %v1693, %v1691
      %v1846 = vpack.c.b16 %v1694, %v1692
      %v1847 = vpack.c.b16 %v1697, %v1695
      %v1848 = vpack.c.b16 %v1698, %v1696
      %v1849 = vpack.c.b16 %v1701, %v1699
      %v1850 = vpack.c.b16 %v1702, %v1700
      %v1851 = vpack.c.b16 %v1705, %v1703
      %v1852 = vpack.c.b16 %v1706, %v1704
      %v1853 = vpack.c.b16 %v1709, %v1707
      %v1854 = vpack.c.b16 %v1710, %v1708
      %1999 = vmatprep.subr.bf16.mxu0 %v1712
      %2000 = vmatpush1.bf16.msra.mxu0 %v1711
      %2001 = vmatprep.subr.bf16.mxu0 %v1714
      %2002 = vmatpush1.bf16.msra.mxu0 %v1713
      %2003 = vmatprep.subr.bf16.mxu0 %v1716
      %2004 = vmatpush1.bf16.msra.mxu0 %v1715
      %2005 = vmatprep.subr.bf16.mxu0 %v1718
      %2006 = vmatpush1.bf16.msra.mxu0 %v1717
      %2007 = vmatprep.subr.bf16.mxu0 %v1720
      %2008 = vmatpush1.bf16.msra.mxu0 %v1719
      %2009 = vmatprep.subr.bf16.mxu0 %v1722
      %2010 = vmatpush1.bf16.msra.mxu0 %v1721
      %2011 = vmatprep.subr.bf16.mxu0 %v1724
      %2012 = vmatpush1.bf16.msra.mxu0 %v1723
      %2013 = vmatprep.subr.bf16.mxu0 %v1726
      %2014 = vmatpush1.bf16.msra.mxu0 %v1725
      %2015 = vmatprep.subr.bf16.mxu0 %v1728
      %2016 = vmatpush1.bf16.msra.mxu0 %v1727
      %2017 = vmatprep.subr.bf16.mxu0 %v1730
      %2018 = vmatpush1.bf16.msra.mxu0 %v1729
      %2019 = vmatprep.subr.bf16.mxu0 %v1732
      %2020 = vmatpush1.bf16.msra.mxu0 %v1731
      %2021 = vmatprep.subr.bf16.mxu0 %v1734
      %2022 = vmatpush1.bf16.msra.mxu0 %v1733
      %2023 = vmatprep.subr.bf16.mxu0 %v1736
      %2024 = vmatpush1.bf16.msra.mxu0 %v1735
      %2025 = vmatprep.subr.bf16.mxu0 %v1738
      %2026 = vmatpush1.bf16.msra.mxu0 %v1737
      %2027 = vmatprep.subr.bf16.mxu0 %v1740
      %2028 = vmatpush1.bf16.msra.mxu0 %v1739
      %2029 = vmatprep.subr.bf16.mxu0 %v1742
      %2030 = vmatpush1.bf16.msra.mxu0 %v1741
      %2031 = vmatprep.mubr.bf16.mxu0 %v992
      %2032 = vmatmul.mubr.bf16.gmra.mrb[0].mxu0 %v991
      %v2033 = vpop.f32.mrb[0].mxu0
      %v2034 = vadd.f32 %v536, %v2033
      %v2035 = vpop.f32.mrb[0].mxu0
      %v2036 = vadd.f32 %v540, %v2035
      %v2037 = vpop.f32.mrb[0].mxu0
      %v2038 = vadd.f32 %v536, %v2037
      %v2039 = vpop.f32.mrb[0].mxu0
      %v2040 = vadd.f32 %v540, %v2039
      %2041 = vmatprep.mubr.bf16.mxu0 %v1001
      %2042 = vmatmul.mubr.bf16.gmra.mrb[0].mxu0 %v1000
      %v2043 = vpop.f32.mrb[0].mxu0
      %v2044 = vadd.f32 %v536, %v2043
      %v2045 = vpop.f32.mrb[0].mxu0
      %v2046 = vadd.f32 %v540, %v2045
      %v2047 = vpop.f32.mrb[0].mxu0
      %v2048 = vadd.f32 %v536, %v2047
      %v2049 = vpop.f32.mrb[0].mxu0
      %v2050 = vadd.f32 %v540, %v2049
      %2051 = vmatprep.mubr.bf16.mxu0 %v1010
      %2052 = vmatmul.mubr.bf16.gmra.mrb[0].mxu0 %v1009
      %v2053 = vpop.f32.mrb[0].mxu0
      %v2054 = vadd.f32 %v536, %v2053
      %v2055 = vpop.f32.mrb[0].mxu0
      %v2056 = vadd.f32 %v540, %v2055
      %v2057 = vpop.f32.mrb[0].mxu0
      %v2058 = vadd.f32 %v536, %v2057
      %v2059 = vpop.f32.mrb[0].mxu0
      %v2060 = vadd.f32 %v540, %v2059
      %2061 = vmatprep.mubr.bf16.mxu0 %v1019
      %2062 = vmatmul.mubr.bf16.gmra.mrb[0].mxu0 %v1018
      %v2063 = vpop.f32.mrb[0].mxu0
      %v2064 = vadd.f32 %v536, %v2063
      %v2065 = vpop.f32.mrb[0].mxu0
      %v2066 = vadd.f32 %v540, %v2065
      %v2067 = vpop.f32.mrb[0].mxu0
      %v2068 = vadd.f32 %v536, %v2067
      %v2069 = vpop.f32.mrb[0].mxu0
      %v2070 = vadd.f32 %v540, %v2069
      %2071 = vmatprep.mubr.bf16.mxu0 %v1028
      %2072 = vmatmul.mubr.bf16.gmra.mrb[0].mxu0 %v1027
      %v2073 = vpop.f32.mrb[0].mxu0
      %v2074 = vadd.f32 %v536, %v2073
      %v2075 = vpop.f32.mrb[0].mxu0
      %v2076 = vadd.f32 %v540, %v2075
      %v2077 = vpop.f32.mrb[0].mxu0
      %v2078 = vadd.f32 %v536, %v2077
      %v2079 = vpop.f32.mrb[0].mxu0
      %v2080 = vadd.f32 %v540, %v2079
      %2081 = vmatprep.mubr.bf16.mxu0 %v1037
      %2082 = vmatmul.mubr.bf16.gmra.mrb[0].mxu0 %v1036
      %v2083 = vpop.f32.mrb[0].mxu0
      %v2084 = vadd.f32 %v536, %v2083
      %v2085 = vpop.f32.mrb[0].mxu0
      %v2086 = vadd.f32 %v540, %v2085
      %v2087 = vpop.f32.mrb[0].mxu0
      %v2088 = vadd.f32 %v536, %v2087
      %v2089 = vpop.f32.mrb[0].mxu0
      %v2090 = vadd.f32 %v540, %v2089
      %2091 = vmatprep.mubr.bf16.mxu0 %v1046
      %2092 = vmatmul.mubr.bf16.gmra.mrb[0].mxu0 %v1045
      %v2093 = vpop.f32.mrb[0].mxu0
      %v2094 = vadd.f32 %v536, %v2093
      %v2095 = vpop.f32.mrb[0].mxu0
      %v2096 = vadd.f32 %v540, %v2095
      %v2097 = vpop.f32.mrb[0].mxu0
      %v2098 = vadd.f32 %v536, %v2097
      %v2099 = vpop.f32.mrb[0].mxu0
      %v2100 = vadd.f32 %v540, %v2099
      %2101 = vmatprep.mubr.bf16.mxu0 %v1055
      %2102 = vmatmul.mubr.bf16.gmra.mrb[0].mxu0 %v1054
      %v2103 = vpop.f32.mrb[0].mxu0
      %v2104 = vadd.f32 %v536, %v2103
      %v2105 = vpop.f32.mrb[0].mxu0
      %v2106 = vadd.f32 %v540, %v2105
      %v2107 = vpop.f32.mrb[0].mxu0
      %v2108 = vadd.f32 %v536, %v2107
      %v2109 = vpop.f32.mrb[0].mxu0
      %v2110 = vadd.f32 %v540, %v2109
      %2111 = vmatprep.mubr.bf16.mxu0 %v1064
      %2112 = vmatmul.mubr.bf16.gmra.mrb[0].mxu0 %v1063
      %v2113 = vpop.f32.mrb[0].mxu0
      %v2114 = vadd.f32 %v536, %v2113
      %v2115 = vpop.f32.mrb[0].mxu0
      %v2116 = vadd.f32 %v540, %v2115
      %v2117 = vpop.f32.mrb[0].mxu0
      %v2118 = vadd.f32 %v536, %v2117
      %v2119 = vpop.f32.mrb[0].mxu0
      %v2120 = vadd.f32 %v540, %v2119
      %2121 = vmatprep.mubr.bf16.mxu0 %v1073
      %2122 = vmatmul.mubr.bf16.gmra.mrb[0].mxu0 %v1072
      %v2123 = vpop.f32.mrb[0].mxu0
      %v2124 = vadd.f32 %v536, %v2123
      %v2125 = vpop.f32.mrb[0].mxu0
      %v2126 = vadd.f32 %v540, %v2125
      %v2127 = vpop.f32.mrb[0].mxu0
      %v2128 = vadd.f32 %v536, %v2127
      %v2129 = vpop.f32.mrb[0].mxu0
      %v2130 = vadd.f32 %v540, %v2129
      %2131 = vmatprep.mubr.bf16.mxu0 %v1082
      %2132 = vmatmul.mubr.bf16.gmra.mrb[0].mxu0 %v1081
      %v2133 = vpop.f32.mrb[0].mxu0
      %v2134 = vadd.f32 %v536, %v2133
      %v2135 = vpop.f32.mrb[0].mxu0
      %v2136 = vadd.f32 %v540, %v2135
      %v2137 = vpop.f32.mrb[0].mxu0
      %v2138 = vadd.f32 %v536, %v2137
      %v2139 = vpop.f32.mrb[0].mxu0
      %v2140 = vadd.f32 %v540, %v2139
      %2141 = vmatprep.mubr.bf16.mxu0 %v1091
      %2142 = vmatmul.mubr.bf16.gmra.mrb[0].mxu0 %v1090
      %v2143 = vpop.f32.mrb[0].mxu0
      %v2144 = vadd.f32 %v536, %v2143
      %v2145 = vpop.f32.mrb[0].mxu0
      %v2146 = vadd.f32 %v540, %v2145
      %v2147 = vpop.f32.mrb[0].mxu0
      %v2148 = vadd.f32 %v536, %v2147
      %v2149 = vpop.f32.mrb[0].mxu0
      %v2150 = vadd.f32 %v540, %v2149
      %2151 = vmatprep.mubr.bf16.mxu0 %v1100
      %2152 = vmatmul.mubr.bf16.gmra.mrb[0].mxu0 %v1099
      %v2153 = vpop.f32.mrb[0].mxu0
      %v2154 = vadd.f32 %v536, %v2153
      %v2155 = vpop.f32.mrb[0].mxu0
      %v2156 = vadd.f32 %v540, %v2155
      %v2157 = vpop.f32.mrb[0].mxu0
      %v2158 = vadd.f32 %v536, %v2157
      %v2159 = vpop.f32.mrb[0].mxu0
      %v2160 = vadd.f32 %v540, %v2159
      %2161 = vmatprep.mubr.bf16.mxu0 %v1109
      %2162 = vmatmul.mubr.bf16.gmra.mrb[0].mxu0 %v1108
      %v2163 = vpop.f32.mrb[0].mxu0
      %v2164 = vadd.f32 %v536, %v2163
      %v2165 = vpop.f32.mrb[0].mxu0
      %v2166 = vadd.f32 %v540, %v2165
      %v2167 = vpop.f32.mrb[0].mxu0
      %v2168 = vadd.f32 %v536, %v2167
      %v2169 = vpop.f32.mrb[0].mxu0
      %v2170 = vadd.f32 %v540, %v2169
      %2171 = vmatprep.mubr.bf16.mxu0 %v1118
      %2172 = vmatmul.mubr.bf16.gmra.mrb[0].mxu0 %v1117
      %v2173 = vpop.f32.mrb[0].mxu0
      %v2174 = vadd.f32 %v536, %v2173
      %v2175 = vpop.f32.mrb[0].mxu0
      %v2176 = vadd.f32 %v540, %v2175
      %v2177 = vpop.f32.mrb[0].mxu0
      %v2178 = vadd.f32 %v536, %v2177
      %v2179 = vpop.f32.mrb[0].mxu0
      %v2180 = vadd.f32 %v540, %v2179
      %2181 = vmatprep.mubr.bf16.mxu0 %v1127
      %2182 = vmatmul.mubr.bf16.gmra.mrb[0].mxu0 %v1126
      %v2183 = vpop.f32.mrb[0].mxu0
      %v2184 = vadd.f32 %v536, %v2183
      %v2185 = vpop.f32.mrb[0].mxu0
      %v2186 = vadd.f32 %v540, %v2185
      %v2187 = vpop.f32.mrb[0].mxu0
      %v2188 = vadd.f32 %v536, %v2187
      %v2189 = vpop.f32.mrb[0].mxu0
      %v2190 = vadd.f32 %v540, %v2189
      %2191 = vdwg.mxu0
      %2192 = vmatprep.subr.bf16.mxu0 %v1744
      %2193 = vmatpush1.bf16.msra.mxu0 %v1743
      %2194 = vmatprep.subr.bf16.mxu0 %v1746
      %2195 = vmatpush1.bf16.msra.mxu0 %v1745
      %2196 = vmatprep.subr.bf16.mxu0 %v1748
      %2197 = vmatpush1.bf16.msra.mxu0 %v1747
      %2198 = vmatprep.subr.bf16.mxu0 %v1750
      %2199 = vmatpush1.bf16.msra.mxu0 %v1749
      %2200 = vmatprep.subr.bf16.mxu0 %v1752
      %2201 = vmatpush1.bf16.msra.mxu0 %v1751
      %2202 = vmatprep.subr.bf16.mxu0 %v1754
      %2203 = vmatpush1.bf16.msra.mxu0 %v1753
      %2204 = vmatprep.subr.bf16.mxu0 %v1756
      %2205 = vmatpush1.bf16.msra.mxu0 %v1755
      %2206 = vmatprep.subr.bf16.mxu0 %v1758
      %2207 = vmatpush1.bf16.msra.mxu0 %v1757
      %2208 = vmatprep.subr.bf16.mxu0 %v1760
      %2209 = vmatpush1.bf16.msra.mxu0 %v1759
      %2210 = vmatprep.subr.bf16.mxu0 %v1762
      %2211 = vmatpush1.bf16.msra.mxu0 %v1761
      %2212 = vmatprep.subr.bf16.mxu0 %v1764
      %2213 = vmatpush1.bf16.msra.mxu0 %v1763
      %2214 = vmatprep.subr.bf16.mxu0 %v1766
      %2215 = vmatpush1.bf16.msra.mxu0 %v1765
      %2216 = vmatprep.subr.bf16.mxu0 %v1768
      %2217 = vmatpush1.bf16.msra.mxu0 %v1767
      %2218 = vmatprep.subr.bf16.mxu0 %v1770
      %2219 = vmatpush1.bf16.msra.mxu0 %v1769
      %2220 = vmatprep.subr.bf16.mxu0 %v1772
      %2221 = vmatpush1.bf16.msra.mxu0 %v1771
      %2222 = vmatprep.subr.bf16.mxu0 %v1774
      %2223 = vmatpush1.bf16.msra.mxu0 %v1773
      %2224 = vmatprep.mubr.bf16.mxu0 %v994
      %2225 = vmatmul.mubr.bf16.gmra.mrb[0].mxu0 %v993
      %v2226 = vpop.f32.mrb[0].mxu0
      %v2227 = vadd.f32 %v2034, %v2226
      %v2228 = vpop.f32.mrb[0].mxu0
      %v2229 = vadd.f32 %v2036, %v2228
      %v2230 = vpop.f32.mrb[0].mxu0
      %v2231 = vadd.f32 %v2038, %v2230
      %v2232 = vpop.f32.mrb[0].mxu0
      %v2233 = vadd.f32 %v2040, %v2232
      %2234 = vmatprep.mubr.bf16.mxu0 %v1003
      %2235 = vmatmul.mubr.bf16.gmra.mrb[0].mxu0 %v1002
      %v2236 = vpop.f32.mrb[0].mxu0
      %v2237 = vadd.f32 %v2044, %v2236
      %v2238 = vpop.f32.mrb[0].mxu0
      %v2239 = vadd.f32 %v2046, %v2238
      %v2240 = vpop.f32.mrb[0].mxu0
      %v2241 = vadd.f32 %v2048, %v2240
      %v2242 = vpop.f32.mrb[0].mxu0
      %v2243 = vadd.f32 %v2050, %v2242
      %2244 = vmatprep.mubr.bf16.mxu0 %v1012
      %2245 = vmatmul.mubr.bf16.gmra.mrb[0].mxu0 %v1011
      %v2246 = vpop.f32.mrb[0].mxu0
      %v2247 = vadd.f32 %v2054, %v2246
      %v2248 = vpop.f32.mrb[0].mxu0
      %v2249 = vadd.f32 %v2056, %v2248
      %v2250 = vpop.f32.mrb[0].mxu0
      %v2251 = vadd.f32 %v2058, %v2250
      %v2252 = vpop.f32.mrb[0].mxu0
      %v2253 = vadd.f32 %v2060, %v2252
      %2254 = vmatprep.mubr.bf16.mxu0 %v1021
      %2255 = vmatmul.mubr.bf16.gmra.mrb[0].mxu0 %v1020
      %v2256 = vpop.f32.mrb[0].mxu0
      %v2257 = vadd.f32 %v2064, %v2256
      %v2258 = vpop.f32.mrb[0].mxu0
      %v2259 = vadd.f32 %v2066, %v2258
      %v2260 = vpop.f32.mrb[0].mxu0
      %v2261 = vadd.f32 %v2068, %v2260
      %v2262 = vpop.f32.mrb[0].mxu0
      %v2263 = vadd.f32 %v2070, %v2262
      %2264 = vmatprep.mubr.bf16.mxu0 %v1030
      %2265 = vmatmul.mubr.bf16.gmra.mrb[0].mxu0 %v1029
      %v2266 = vpop.f32.mrb[0].mxu0
      %v2267 = vadd.f32 %v2074, %v2266
      %v2268 = vpop.f32.mrb[0].mxu0
      %v2269 = vadd.f32 %v2076, %v2268
      %v2270 = vpop.f32.mrb[0].mxu0
      %v2271 = vadd.f32 %v2078, %v2270
      %v2272 = vpop.f32.mrb[0].mxu0
      %v2273 = vadd.f32 %v2080, %v2272
      %2274 = vmatprep.mubr.bf16.mxu0 %v1039
      %2275 = vmatmul.mubr.bf16.gmra.mrb[0].mxu0 %v1038
      %v2276 = vpop.f32.mrb[0].mxu0
      %v2277 = vadd.f32 %v2084, %v2276
      %v2278 = vpop.f32.mrb[0].mxu0
      %v2279 = vadd.f32 %v2086, %v2278
      %v2280 = vpop.f32.mrb[0].mxu0
      %v2281 = vadd.f32 %v2088, %v2280
      %v2282 = vpop.f32.mrb[0].mxu0
      %v2283 = vadd.f32 %v2090, %v2282
      %2284 = vmatprep.mubr.bf16.mxu0 %v1048
      %2285 = vmatmul.mubr.bf16.gmra.mrb[0].mxu0 %v1047
      %v2286 = vpop.f32.mrb[0].mxu0
      %v2287 = vadd.f32 %v2094, %v2286
      %v2288 = vpop.f32.mrb[0].mxu0
      %v2289 = vadd.f32 %v2096, %v2288
      %v2290 = vpop.f32.mrb[0].mxu0
      %v2291 = vadd.f32 %v2098, %v2290
      %v2292 = vpop.f32.mrb[0].mxu0
      %v2293 = vadd.f32 %v2100, %v2292
      %2294 = vmatprep.mubr.bf16.mxu0 %v1057
      %2295 = vmatmul.mubr.bf16.gmra.mrb[0].mxu0 %v1056
      %v2296 = vpop.f32.mrb[0].mxu0
      %v2297 = vadd.f32 %v2104, %v2296
      %v2298 = vpop.f32.mrb[0].mxu0
      %v2299 = vadd.f32 %v2106, %v2298
      %v2300 = vpop.f32.mrb[0].mxu0
      %v2301 = vadd.f32 %v2108, %v2300
      %v2302 = vpop.f32.mrb[0].mxu0
      %v2303 = vadd.f32 %v2110, %v2302
      %2304 = vmatprep.mubr.bf16.mxu0 %v1066
      %2305 = vmatmul.mubr.bf16.gmra.mrb[0].mxu0 %v1065
      %v2306 = vpop.f32.mrb[0].mxu0
      %v2307 = vadd.f32 %v2114, %v2306
      %v2308 = vpop.f32.mrb[0].mxu0
      %v2309 = vadd.f32 %v2116, %v2308
      %v2310 = vpop.f32.mrb[0].mxu0
      %v2311 = vadd.f32 %v2118, %v2310
      %v2312 = vpop.f32.mrb[0].mxu0
      %v2313 = vadd.f32 %v2120, %v2312
      %2314 = vmatprep.mubr.bf16.mxu0 %v1075
      %2315 = vmatmul.mubr.bf16.gmra.mrb[0].mxu0 %v1074
      %v2316 = vpop.f32.mrb[0].mxu0
      %v2317 = vadd.f32 %v2124, %v2316
      %v2318 = vpop.f32.mrb[0].mxu0
      %v2319 = vadd.f32 %v2126, %v2318
      %v2320 = vpop.f32.mrb[0].mxu0
      %v2321 = vadd.f32 %v2128, %v2320
      %v2322 = vpop.f32.mrb[0].mxu0
      %v2323 = vadd.f32 %v2130, %v2322
      %2324 = vmatprep.mubr.bf16.mxu0 %v1084
      %2325 = vmatmul.mubr.bf16.gmra.mrb[0].mxu0 %v1083
      %v2326 = vpop.f32.mrb[0].mxu0
      %v2327 = vadd.f32 %v2134, %v2326
      %v2328 = vpop.f32.mrb[0].mxu0
      %v2329 = vadd.f32 %v2136, %v2328
      %v2330 = vpop.f32.mrb[0].mxu0
      %v2331 = vadd.f32 %v2138, %v2330
      %v2332 = vpop.f32.mrb[0].mxu0
      %v2333 = vadd.f32 %v2140, %v2332
      %2334 = vmatprep.mubr.bf16.mxu0 %v1093
      %2335 = vmatmul.mubr.bf16.gmra.mrb[0].mxu0 %v1092
      %v2336 = vpop.f32.mrb[0].mxu0
      %v2337 = vadd.f32 %v2144, %v2336
      %v2338 = vpop.f32.mrb[0].mxu0
      %v2339 = vadd.f32 %v2146, %v2338
      %v2340 = vpop.f32.mrb[0].mxu0
      %v2341 = vadd.f32 %v2148, %v2340
      %v2342 = vpop.f32.mrb[0].mxu0
      %v2343 = vadd.f32 %v2150, %v2342
      %2344 = vmatprep.mubr.bf16.mxu0 %v1102
      %2345 = vmatmul.mubr.bf16.gmra.mrb[0].mxu0 %v1101
      %v2346 = vpop.f32.mrb[0].mxu0
      %v2347 = vadd.f32 %v2154, %v2346
      %v2348 = vpop.f32.mrb[0].mxu0
      %v2349 = vadd.f32 %v2156, %v2348
      %v2350 = vpop.f32.mrb[0].mxu0
      %v2351 = vadd.f32 %v2158, %v2350
      %v2352 = vpop.f32.mrb[0].mxu0
      %v2353 = vadd.f32 %v2160, %v2352
      %2354 = vmatprep.mubr.bf16.mxu0 %v1111
      %2355 = vmatmul.mubr.bf16.gmra.mrb[0].mxu0 %v1110
      %v2356 = vpop.f32.mrb[0].mxu0
      %v2357 = vadd.f32 %v2164, %v2356
      %v2358 = vpop.f32.mrb[0].mxu0
      %v2359 = vadd.f32 %v2166, %v2358
      %v2360 = vpop.f32.mrb[0].mxu0
      %v2361 = vadd.f32 %v2168, %v2360
      %v2362 = vpop.f32.mrb[0].mxu0
      %v2363 = vadd.f32 %v2170, %v2362
      %2364 = vmatprep.mubr.bf16.mxu0 %v1120
      %2365 = vmatmul.mubr.bf16.gmra.mrb[0].mxu0 %v1119
      %v2366 = vpop.f32.mrb[0].mxu0
      %v2367 = vadd.f32 %v2174, %v2366
      %v2368 = vpop.f32.mrb[0].mxu0
      %v2369 = vadd.f32 %v2176, %v2368
      %v2370 = vpop.f32.mrb[0].mxu0
      %v2371 = vadd.f32 %v2178, %v2370
      %v2372 = vpop.f32.mrb[0].mxu0
      %v2373 = vadd.f32 %v2180, %v2372
      %2374 = vmatprep.mubr.bf16.mxu0 %v1129
      %2375 = vmatmul.mubr.bf16.gmra.mrb[0].mxu0 %v1128
      %v2376 = vpop.f32.mrb[0].mxu0
      %v2377 = vadd.f32 %v2184, %v2376
      %v2378 = vpop.f32.mrb[0].mxu0
      %v2379 = vadd.f32 %v2186, %v2378
      %v2380 = vpop.f32.mrb[0].mxu0
      %v2381 = vadd.f32 %v2188, %v2380
      %v2382 = vpop.f32.mrb[0].mxu0
      %v2383 = vadd.f32 %v2190, %v2382
      %2384 = vdwg.mxu0
      %2385 = vmatprep.subr.bf16.mxu0 %v1776
      %2386 = vmatpush1.bf16.msra.mxu0 %v1775
      %2387 = vmatprep.subr.bf16.mxu0 %v1778
      %2388 = vmatpush1.bf16.msra.mxu0 %v1777
      %2389 = vmatprep.subr.bf16.mxu0 %v1780
      %2390 = vmatpush1.bf16.msra.mxu0 %v1779
      %2391 = vmatprep.subr.bf16.mxu0 %v1782
      %2392 = vmatpush1.bf16.msra.mxu0 %v1781
      %2393 = vmatprep.subr.bf16.mxu0 %v1784
      %2394 = vmatpush1.bf16.msra.mxu0 %v1783
      %2395 = vmatprep.subr.bf16.mxu0 %v1786
      %2396 = vmatpush1.bf16.msra.mxu0 %v1785
      %2397 = vmatprep.subr.bf16.mxu0 %v1788
      %2398 = vmatpush1.bf16.msra.mxu0 %v1787
      %2399 = vmatprep.subr.bf16.mxu0 %v1790
      %2400 = vmatpush1.bf16.msra.mxu0 %v1789
      %2401 = vmatprep.subr.bf16.mxu0 %v1792
      %2402 = vmatpush1.bf16.msra.mxu0 %v1791
      %2403 = vmatprep.subr.bf16.mxu0 %v1794
      %2404 = vmatpush1.bf16.msra.mxu0 %v1793
      %2405 = vmatprep.subr.bf16.mxu0 %v1796
      %2406 = vmatpush1.bf16.msra.mxu0 %v1795
      %2407 = vmatprep.subr.bf16.mxu0 %v1798
      %2408 = vmatpush1.bf16.msra.mxu0 %v1797
      %2409 = vmatprep.subr.bf16.mxu0 %v1800
      %2410 = vmatpush1.bf16.msra.mxu0 %v1799
      %2411 = vmatprep.subr.bf16.mxu0 %v1802
      %2412 = vmatpush1.bf16.msra.mxu0 %v1801
      %2413 = vmatprep.subr.bf16.mxu0 %v1804
      %2414 = vmatpush1.bf16.msra.mxu0 %v1803
      %2415 = vmatprep.subr.bf16.mxu0 %v1806
      %2416 = vmatpush1.bf16.msra.mxu0 %v1805
      %2417 = vmatprep.mubr.bf16.mxu0 %v996
      %2418 = vmatmul.mubr.bf16.gmra.mrb[0].mxu0 %v995
      %v2419 = vpop.f32.mrb[0].mxu0
      %v2420 = vadd.f32 %v2227, %v2419
      %v2421 = vpop.f32.mrb[0].mxu0
      %v2422 = vadd.f32 %v2229, %v2421
      %v2423 = vpop.f32.mrb[0].mxu0
      %v2424 = vadd.f32 %v2231, %v2423
      %v2425 = vpop.f32.mrb[0].mxu0
      %v2426 = vadd.f32 %v2233, %v2425
      %2427 = vmatprep.mubr.bf16.mxu0 %v1005
      %2428 = vmatmul.mubr.bf16.gmra.mrb[0].mxu0 %v1004
      %v2429 = vpop.f32.mrb[0].mxu0
      %v2430 = vadd.f32 %v2237, %v2429
      %v2431 = vpop.f32.mrb[0].mxu0
      %v2432 = vadd.f32 %v2239, %v2431
      %v2433 = vpop.f32.mrb[0].mxu0
      %v2434 = vadd.f32 %v2241, %v2433
      %v2435 = vpop.f32.mrb[0].mxu0
      %v2436 = vadd.f32 %v2243, %v2435
      %2437 = vmatprep.mubr.bf16.mxu0 %v1014
      %2438 = vmatmul.mubr.bf16.gmra.mrb[0].mxu0 %v1013
      %v2439 = vpop.f32.mrb[0].mxu0
      %v2440 = vadd.f32 %v2247, %v2439
      %v2441 = vpop.f32.mrb[0].mxu0
      %v2442 = vadd.f32 %v2249, %v2441
      %v2443 = vpop.f32.mrb[0].mxu0
      %v2444 = vadd.f32 %v2251, %v2443
      %v2445 = vpop.f32.mrb[0].mxu0
      %v2446 = vadd.f32 %v2253, %v2445
      %2447 = vmatprep.mubr.bf16.mxu0 %v1023
      %2448 = vmatmul.mubr.bf16.gmra.mrb[0].mxu0 %v1022
      %v2449 = vpop.f32.mrb[0].mxu0
      %v2450 = vadd.f32 %v2257, %v2449
      %v2451 = vpop.f32.mrb[0].mxu0
      %v2452 = vadd.f32 %v2259, %v2451
      %v2453 = vpop.f32.mrb[0].mxu0
      %v2454 = vadd.f32 %v2261, %v2453
      %v2455 = vpop.f32.mrb[0].mxu0
      %v2456 = vadd.f32 %v2263, %v2455
      %2457 = vmatprep.mubr.bf16.mxu0 %v1032
      %2458 = vmatmul.mubr.bf16.gmra.mrb[0].mxu0 %v1031
      %v2459 = vpop.f32.mrb[0].mxu0
      %v2460 = vadd.f32 %v2267, %v2459
      %v2461 = vpop.f32.mrb[0].mxu0
      %v2462 = vadd.f32 %v2269, %v2461
      %v2463 = vpop.f32.mrb[0].mxu0
      %v2464 = vadd.f32 %v2271, %v2463
      %v2465 = vpop.f32.mrb[0].mxu0
      %v2466 = vadd.f32 %v2273, %v2465
      %2467 = vmatprep.mubr.bf16.mxu0 %v1041
      %2468 = vmatmul.mubr.bf16.gmra.mrb[0].mxu0 %v1040
      %v2469 = vpop.f32.mrb[0].mxu0
      %v2470 = vadd.f32 %v2277, %v2469
      %v2471 = vpop.f32.mrb[0].mxu0
      %v2472 = vadd.f32 %v2279, %v2471
      %v2473 = vpop.f32.mrb[0].mxu0
      %v2474 = vadd.f32 %v2281, %v2473
      %v2475 = vpop.f32.mrb[0].mxu0
      %v2476 = vadd.f32 %v2283, %v2475
      %2477 = vmatprep.mubr.bf16.mxu0 %v1050
      %2478 = vmatmul.mubr.bf16.gmra.mrb[0].mxu0 %v1049
      %v2479 = vpop.f32.mrb[0].mxu0
      %v2480 = vadd.f32 %v2287, %v2479
      %v2481 = vpop.f32.mrb[0].mxu0
      %v2482 = vadd.f32 %v2289, %v2481
      %v2483 = vpop.f32.mrb[0].mxu0
      %v2484 = vadd.f32 %v2291, %v2483
      %v2485 = vpop.f32.mrb[0].mxu0
      %v2486 = vadd.f32 %v2293, %v2485
      %2487 = vmatprep.mubr.bf16.mxu0 %v1059
      %2488 = vmatmul.mubr.bf16.gmra.mrb[0].mxu0 %v1058
      %v2489 = vpop.f32.mrb[0].mxu0
      %v2490 = vadd.f32 %v2297, %v2489
      %v2491 = vpop.f32.mrb[0].mxu0
      %v2492 = vadd.f32 %v2299, %v2491
      %v2493 = vpop.f32.mrb[0].mxu0
      %v2494 = vadd.f32 %v2301, %v2493
      %v2495 = vpop.f32.mrb[0].mxu0
      %v2496 = vadd.f32 %v2303, %v2495
      %2497 = vmatprep.mubr.bf16.mxu0 %v1068
      %2498 = vmatmul.mubr.bf16.gmra.mrb[0].mxu0 %v1067
      %v2499 = vpop.f32.mrb[0].mxu0
      %v2500 = vadd.f32 %v2307, %v2499
      %v2501 = vpop.f32.mrb[0].mxu0
      %v2502 = vadd.f32 %v2309, %v2501
      %v2503 = vpop.f32.mrb[0].mxu0
      %v2504 = vadd.f32 %v2311, %v2503
      %v2505 = vpop.f32.mrb[0].mxu0
      %v2506 = vadd.f32 %v2313, %v2505
      %2507 = vmatprep.mubr.bf16.mxu0 %v1077
      %2508 = vmatmul.mubr.bf16.gmra.mrb[0].mxu0 %v1076
      %v2509 = vpop.f32.mrb[0].mxu0
      %v2510 = vadd.f32 %v2317, %v2509
      %v2511 = vpop.f32.mrb[0].mxu0
      %v2512 = vadd.f32 %v2319, %v2511
      %v2513 = vpop.f32.mrb[0].mxu0
      %v2514 = vadd.f32 %v2321, %v2513
      %v2515 = vpop.f32.mrb[0].mxu0
      %v2516 = vadd.f32 %v2323, %v2515
      %2517 = vmatprep.mubr.bf16.mxu0 %v1086
      %2518 = vmatmul.mubr.bf16.gmra.mrb[0].mxu0 %v1085
      %v2519 = vpop.f32.mrb[0].mxu0
      %v2520 = vadd.f32 %v2327, %v2519
      %v2521 = vpop.f32.mrb[0].mxu0
      %v2522 = vadd.f32 %v2329, %v2521
      %v2523 = vpop.f32.mrb[0].mxu0
      %v2524 = vadd.f32 %v2331, %v2523
      %v2525 = vpop.f32.mrb[0].mxu0
      %v2526 = vadd.f32 %v2333, %v2525
      %2527 = vmatprep.mubr.bf16.mxu0 %v1095
      %2528 = vmatmul.mubr.bf16.gmra.mrb[0].mxu0 %v1094
      %v2529 = vpop.f32.mrb[0].mxu0
      %v2530 = vadd.f32 %v2337, %v2529
      %v2531 = vpop.f32.mrb[0].mxu0
      %v2532 = vadd.f32 %v2339, %v2531
      %v2533 = vpop.f32.mrb[0].mxu0
      %v2534 = vadd.f32 %v2341, %v2533
      %v2535 = vpop.f32.mrb[0].mxu0
      %v2536 = vadd.f32 %v2343, %v2535
      %2537 = vmatprep.mubr.bf16.mxu0 %v1104
      %2538 = vmatmul.mubr.bf16.gmra.mrb[0].mxu0 %v1103
      %v2539 = vpop.f32.mrb[0].mxu0
      %v2540 = vadd.f32 %v2347, %v2539
      %v2541 = vpop.f32.mrb[0].mxu0
      %v2542 = vadd.f32 %v2349, %v2541
      %v2543 = vpop.f32.mrb[0].mxu0
      %v2544 = vadd.f32 %v2351, %v2543
      %v2545 = vpop.f32.mrb[0].mxu0
      %v2546 = vadd.f32 %v2353, %v2545
      %2547 = vmatprep.mubr.bf16.mxu0 %v1113
      %2548 = vmatmul.mubr.bf16.gmra.mrb[0].mxu0 %v1112
      %v2549 = vpop.f32.mrb[0].mxu0
      %v2550 = vadd.f32 %v2357, %v2549
      %v2551 = vpop.f32.mrb[0].mxu0
      %v2552 = vadd.f32 %v2359, %v2551
      %v2553 = vpop.f32.mrb[0].mxu0
      %v2554 = vadd.f32 %v2361, %v2553
      %v2555 = vpop.f32.mrb[0].mxu0
      %v2556 = vadd.f32 %v2363, %v2555
      %2557 = vmatprep.mubr.bf16.mxu0 %v1122
      %2558 = vmatmul.mubr.bf16.gmra.mrb[0].mxu0 %v1121
      %v2559 = vpop.f32.mrb[0].mxu0
      %v2560 = vadd.f32 %v2367, %v2559
      %v2561 = vpop.f32.mrb[0].mxu0
      %v2562 = vadd.f32 %v2369, %v2561
      %v2563 = vpop.f32.mrb[0].mxu0
      %v2564 = vadd.f32 %v2371, %v2563
      %v2565 = vpop.f32.mrb[0].mxu0
      %v2566 = vadd.f32 %v2373, %v2565
      %2567 = vmatprep.mubr.bf16.mxu0 %v1131
      %2568 = vmatmul.mubr.bf16.gmra.mrb[0].mxu0 %v1130
      %v2569 = vpop.f32.mrb[0].mxu0
      %v2570 = vadd.f32 %v2377, %v2569
      %v2571 = vpop.f32.mrb[0].mxu0
      %v2572 = vadd.f32 %v2379, %v2571
      %v2573 = vpop.f32.mrb[0].mxu0
      %v2574 = vadd.f32 %v2381, %v2573
      %v2575 = vpop.f32.mrb[0].mxu0
      %v2576 = vadd.f32 %v2383, %v2575
      %2577 = vdwg.mxu0
      %2578 = vmatprep.subr.bf16.mxu0 %v1808
      %2579 = vmatpush1.bf16.msra.mxu0 %v1807
      %2580 = vmatprep.subr.bf16.mxu0 %v1810
      %2581 = vmatpush1.bf16.msra.mxu0 %v1809
      %2582 = vmatprep.subr.bf16.mxu0 %v1812
      %2583 = vmatpush1.bf16.msra.mxu0 %v1811
      %2584 = vmatprep.subr.bf16.mxu0 %v1814
      %2585 = vmatpush1.bf16.msra.mxu0 %v1813
      %2586 = vmatprep.subr.bf16.mxu0 %v1816
      %2587 = vmatpush1.bf16.msra.mxu0 %v1815
      %2588 = vmatprep.subr.bf16.mxu0 %v1818
      %2589 = vmatpush1.bf16.msra.mxu0 %v1817
      %2590 = vmatprep.subr.bf16.mxu0 %v1820
      %2591 = vmatpush1.bf16.msra.mxu0 %v1819
      %2592 = vmatprep.subr.bf16.mxu0 %v1822
      %2593 = vmatpush1.bf16.msra.mxu0 %v1821
      %2594 = vmatprep.subr.bf16.mxu0 %v1824
      %2595 = vmatpush1.bf16.msra.mxu0 %v1823
      %2596 = vmatprep.subr.bf16.mxu0 %v1826
      %2597 = vmatpush1.bf16.msra.mxu0 %v1825
      %2598 = vmatprep.subr.bf16.mxu0 %v1828
      %2599 = vmatpush1.bf16.msra.mxu0 %v1827
      %2600 = vmatprep.subr.bf16.mxu0 %v1830
      %2601 = vmatpush1.bf16.msra.mxu0 %v1829
      %2602 = vmatprep.subr.bf16.mxu0 %v1832
      %2603 = vmatpush1.bf16.msra.mxu0 %v1831
      %2604 = vmatprep.subr.bf16.mxu0 %v1834
      %2605 = vmatpush1.bf16.msra.mxu0 %v1833
      %2606 = vmatprep.subr.bf16.mxu0 %v1836
      %2607 = vmatpush1.bf16.msra.mxu0 %v1835
      %2608 = vmatprep.subr.bf16.mxu0 %v1838
      %2609 = vmatpush1.bf16.msra.mxu0 %v1837
      %2610 = vmatprep.mubr.bf16.mxu0 %v998
      %2611 = vmatmul.mubr.bf16.gmra.mrb[0].mxu0 %v997
      %v2612 = vpop.f32.mrb[0].mxu0
      %v2613 = vadd.f32 %v2420, %v2612
      %v2614 = vpop.f32.mrb[0].mxu0
      %v2615 = vadd.f32 %v2422, %v2614
      %v2616 = vpop.f32.mrb[0].mxu0
      %v2617 = vadd.f32 %v2424, %v2616
      %v2618 = vpop.f32.mrb[0].mxu0
      %v2619 = vadd.f32 %v2426, %v2618
      %2620 = vmatprep.mubr.bf16.mxu0 %v1007
      %2621 = vmatmul.mubr.bf16.gmra.mrb[0].mxu0 %v1006
      %v2622 = vpop.f32.mrb[0].mxu0
      %v2623 = vadd.f32 %v2430, %v2622
      %v2624 = vpop.f32.mrb[0].mxu0
      %v2625 = vadd.f32 %v2432, %v2624
      %v2626 = vpop.f32.mrb[0].mxu0
      %v2627 = vadd.f32 %v2434, %v2626
      %v2628 = vpop.f32.mrb[0].mxu0
      %v2629 = vadd.f32 %v2436, %v2628
      %2630 = vmatprep.mubr.bf16.mxu0 %v1016
      %2631 = vmatmul.mubr.bf16.gmra.mrb[0].mxu0 %v1015
      %v2632 = vpop.f32.mrb[0].mxu0
      %v2633 = vadd.f32 %v2440, %v2632
      %v2634 = vpop.f32.mrb[0].mxu0
      %v2635 = vadd.f32 %v2442, %v2634
      %v2636 = vpop.f32.mrb[0].mxu0
      %v2637 = vadd.f32 %v2444, %v2636
      %v2638 = vpop.f32.mrb[0].mxu0
      %v2639 = vadd.f32 %v2446, %v2638
      %2640 = vmatprep.mubr.bf16.mxu0 %v1025
      %2641 = vmatmul.mubr.bf16.gmra.mrb[0].mxu0 %v1024
      %v2642 = vpop.f32.mrb[0].mxu0
      %v2643 = vadd.f32 %v2450, %v2642
      %v2644 = vpop.f32.mrb[0].mxu0
      %v2645 = vadd.f32 %v2452, %v2644
      %v2646 = vpop.f32.mrb[0].mxu0
      %v2647 = vadd.f32 %v2454, %v2646
      %v2648 = vpop.f32.mrb[0].mxu0
      %v2649 = vadd.f32 %v2456, %v2648
      %2650 = vmatprep.mubr.bf16.mxu0 %v1034
      %2651 = vmatmul.mubr.bf16.gmra.mrb[0].mxu0 %v1033
      %v2652 = vpop.f32.mrb[0].mxu0
      %v2653 = vadd.f32 %v2460, %v2652
      %v2654 = vpop.f32.mrb[0].mxu0
      %v2655 = vadd.f32 %v2462, %v2654
      %v2656 = vpop.f32.mrb[0].mxu0
      %v2657 = vadd.f32 %v2464, %v2656
      %v2658 = vpop.f32.mrb[0].mxu0
      %v2659 = vadd.f32 %v2466, %v2658
      %2660 = vmatprep.mubr.bf16.mxu0 %v1043
      %2661 = vmatmul.mubr.bf16.gmra.mrb[0].mxu0 %v1042
      %v2662 = vpop.f32.mrb[0].mxu0
      %v2663 = vadd.f32 %v2470, %v2662
      %v2664 = vpop.f32.mrb[0].mxu0
      %v2665 = vadd.f32 %v2472, %v2664
      %v2666 = vpop.f32.mrb[0].mxu0
      %v2667 = vadd.f32 %v2474, %v2666
      %v2668 = vpop.f32.mrb[0].mxu0
      %v2669 = vadd.f32 %v2476, %v2668
      %2670 = vmatprep.mubr.bf16.mxu0 %v1052
      %2671 = vmatmul.mubr.bf16.gmra.mrb[0].mxu0 %v1051
      %v2672 = vpop.f32.mrb[0].mxu0
      %v2673 = vadd.f32 %v2480, %v2672
      %v2674 = vpop.f32.mrb[0].mxu0
      %v2675 = vadd.f32 %v2482, %v2674
      %v2676 = vpop.f32.mrb[0].mxu0
      %v2677 = vadd.f32 %v2484, %v2676
      %v2678 = vpop.f32.mrb[0].mxu0
      %v2679 = vadd.f32 %v2486, %v2678
      %2680 = vmatprep.mubr.bf16.mxu0 %v1061
      %2681 = vmatmul.mubr.bf16.gmra.mrb[0].mxu0 %v1060
      %v2682 = vpop.f32.mrb[0].mxu0
      %v2683 = vadd.f32 %v2490, %v2682
      %v2684 = vpop.f32.mrb[0].mxu0
      %v2685 = vadd.f32 %v2492, %v2684
      %v2686 = vpop.f32.mrb[0].mxu0
      %v2687 = vadd.f32 %v2494, %v2686
      %v2688 = vpop.f32.mrb[0].mxu0
      %v2689 = vadd.f32 %v2496, %v2688
      %2690 = vmatprep.mubr.bf16.mxu0 %v1070
      %2691 = vmatmul.mubr.bf16.gmra.mrb[0].mxu0 %v1069
      %v2692 = vpop.f32.mrb[0].mxu0
      %v2693 = vadd.f32 %v2500, %v2692
      %v2694 = vpop.f32.mrb[0].mxu0
      %v2695 = vadd.f32 %v2502, %v2694
      %v2696 = vpop.f32.mrb[0].mxu0
      %v2697 = vadd.f32 %v2504, %v2696
      %v2698 = vpop.f32.mrb[0].mxu0
      %v2699 = vadd.f32 %v2506, %v2698
      %2700 = vmatprep.mubr.bf16.mxu0 %v1079
      %2701 = vmatmul.mubr.bf16.gmra.mrb[0].mxu0 %v1078
      %v2702 = vpop.f32.mrb[0].mxu0
      %v2703 = vadd.f32 %v2510, %v2702
      %v2704 = vpop.f32.mrb[0].mxu0
      %v2705 = vadd.f32 %v2512, %v2704
      %v2706 = vpop.f32.mrb[0].mxu0
      %v2707 = vadd.f32 %v2514, %v2706
      %v2708 = vpop.f32.mrb[0].mxu0
      %v2709 = vadd.f32 %v2516, %v2708
      %2710 = vmatprep.mubr.bf16.mxu0 %v1088
      %2711 = vmatmul.mubr.bf16.gmra.mrb[0].mxu0 %v1087
      %v2712 = vpop.f32.mrb[0].mxu0
      %v2713 = vadd.f32 %v2520, %v2712
      %v2714 = vpop.f32.mrb[0].mxu0
      %v2715 = vadd.f32 %v2522, %v2714
      %v2716 = vpop.f32.mrb[0].mxu0
      %v2717 = vadd.f32 %v2524, %v2716
      %v2718 = vpop.f32.mrb[0].mxu0
      %v2719 = vadd.f32 %v2526, %v2718
      %2720 = vmatprep.mubr.bf16.mxu0 %v1097
      %2721 = vmatmul.mubr.bf16.gmra.mrb[0].mxu0 %v1096
      %v2722 = vpop.f32.mrb[0].mxu0
      %v2723 = vadd.f32 %v2530, %v2722
      %v2724 = vpop.f32.mrb[0].mxu0
      %v2725 = vadd.f32 %v2532, %v2724
      %v2726 = vpop.f32.mrb[0].mxu0
      %v2727 = vadd.f32 %v2534, %v2726
      %v2728 = vpop.f32.mrb[0].mxu0
      %v2729 = vadd.f32 %v2536, %v2728
      %2730 = vmatprep.mubr.bf16.mxu0 %v1106
      %2731 = vmatmul.mubr.bf16.gmra.mrb[0].mxu0 %v1105
      %v2732 = vpop.f32.mrb[0].mxu0
      %v2733 = vadd.f32 %v2540, %v2732
      %v2734 = vpop.f32.mrb[0].mxu0
      %v2735 = vadd.f32 %v2542, %v2734
      %v2736 = vpop.f32.mrb[0].mxu0
      %v2737 = vadd.f32 %v2544, %v2736
      %v2738 = vpop.f32.mrb[0].mxu0
      %v2739 = vadd.f32 %v2546, %v2738
      %2740 = vmatprep.mubr.bf16.mxu0 %v1115
      %2741 = vmatmul.mubr.bf16.gmra.mrb[0].mxu0 %v1114
      %v2742 = vpop.f32.mrb[0].mxu0
      %v2743 = vadd.f32 %v2550, %v2742
      %v2744 = vpop.f32.mrb[0].mxu0
      %v2745 = vadd.f32 %v2552, %v2744
      %v2746 = vpop.f32.mrb[0].mxu0
      %v2747 = vadd.f32 %v2554, %v2746
      %v2748 = vpop.f32.mrb[0].mxu0
      %v2749 = vadd.f32 %v2556, %v2748
      %2750 = vmatprep.mubr.bf16.mxu0 %v1124
      %2751 = vmatmul.mubr.bf16.gmra.mrb[0].mxu0 %v1123
      %v2752 = vpop.f32.mrb[0].mxu0
      %v2753 = vadd.f32 %v2560, %v2752
      %v2754 = vpop.f32.mrb[0].mxu0
      %v2755 = vadd.f32 %v2562, %v2754
      %v2756 = vpop.f32.mrb[0].mxu0
      %v2757 = vadd.f32 %v2564, %v2756
      %v2758 = vpop.f32.mrb[0].mxu0
      %v2759 = vadd.f32 %v2566, %v2758
      %2760 = vmatprep.mubr.bf16.mxu0 %v1133
      %2761 = vmatmul.mubr.bf16.gmra.mrb[0].mxu0 %v1132
      %v2762 = vpop.f32.mrb[0].mxu0
      %v2763 = vadd.f32 %v2570, %v2762
      %v2764 = vpop.f32.mrb[0].mxu0
      %v2765 = vadd.f32 %v2572, %v2764
      %v2766 = vpop.f32.mrb[0].mxu0
      %v2767 = vadd.f32 %v2574, %v2766
      %v2768 = vpop.f32.mrb[0].mxu0
      %v2769 = vadd.f32 %v2576, %v2768
      %2770 = vdwg.mxu0
      %2771 = vmatprep.subr.bf16.mxu0 %v1840
      %2772 = vmatpush1.bf16.msra.mxu0 %v1839
      %2773 = vmatprep.subr.bf16.mxu0 %v1842
      %2774 = vmatpush1.bf16.msra.mxu0 %v1841
      %2775 = vmatprep.subr.bf16.mxu0 %v1844
      %2776 = vmatpush1.bf16.msra.mxu0 %v1843
      %2777 = vmatprep.subr.bf16.mxu0 %v1846
      %2778 = vmatpush1.bf16.msra.mxu0 %v1845
      %2779 = vmatprep.subr.bf16.mxu0 %v1848
      %2780 = vmatpush1.bf16.msra.mxu0 %v1847
      %2781 = vmatprep.subr.bf16.mxu0 %v1850
      %2782 = vmatpush1.bf16.msra.mxu0 %v1849
      %2783 = vmatprep.subr.bf16.mxu0 %v1852
      %2784 = vmatpush1.bf16.msra.mxu0 %v1851
      %2785 = vmatprep.subr.bf16.mxu0 %v1854
      %2786 = vmatpush1.bf16.msra.mxu0 %v1853
      %2787 = vmatprep.subr.bf16.mxu0 0
      %2788 = vmatpush1.bf16.msra.mxu0 0
      %2789 = vmatprep.subr.bf16.mxu0 0
      %2790 = vmatpush1.bf16.msra.mxu0 0
      %2791 = vmatprep.subr.bf16.mxu0 0
      %2792 = vmatpush1.bf16.msra.mxu0 0
      %2793 = vmatprep.subr.bf16.mxu0 0
      %2794 = vmatpush1.bf16.msra.mxu0 0
      %2795 = vmatprep.subr.bf16.mxu0 0
      %2796 = vmatpush1.bf16.msra.mxu0 0
      %2797 = vmatprep.subr.bf16.mxu0 0
      %2798 = vmatpush1.bf16.msra.mxu0 0
      %2799 = vmatprep.subr.bf16.mxu0 0
      %2800 = vmatpush1.bf16.msra.mxu0 0
      %2801 = vmatprep.subr.bf16.mxu0 0
      %2802 = vmatpush1.bf16.msra.mxu0 0
      %2803 = vmatprep.mubr.bf16.mxu0 0
      %2804 = vmatmul.mubr.bf16.gmra.mrb[0].mxu0 %v999
      %v2805 = vpop.f32.mrb[0].mxu0
      %v2806 = vadd.f32 %v2613, %v2805
      %v2807 = vpop.f32.mrb[0].mxu0
      %v2808 = vadd.f32 %v2615, %v2807
      %v2809 = vpop.f32.mrb[0].mxu0
      %v2810 = vadd.f32 %v2617, %v2809
      %v2811 = vpop.f32.mrb[0].mxu0
      %v2812 = vadd.f32 %v2619, %v2811
      %2813 = vmatprep.mubr.bf16.mxu0 0
      %2814 = vmatmul.mubr.bf16.gmra.mrb[0].mxu0 %v1008
      %v2815 = vpop.f32.mrb[0].mxu0
      %v2816 = vadd.f32 %v2623, %v2815
      %v2817 = vpop.f32.mrb[0].mxu0
      %v2818 = vadd.f32 %v2625, %v2817
      %v2819 = vpop.f32.mrb[0].mxu0
      %v2820 = vadd.f32 %v2627, %v2819
      %v2821 = vpop.f32.mrb[0].mxu0
      %v2822 = vadd.f32 %v2629, %v2821
      %2823 = vmatprep.mubr.bf16.mxu0 0
      %2824 = vmatmul.mubr.bf16.gmra.mrb[0].mxu0 %v1017
      %v2825 = vpop.f32.mrb[0].mxu0
      %v2826 = vadd.f32 %v2633, %v2825
      %v2827 = vpop.f32.mrb[0].mxu0
      %v2828 = vadd.f32 %v2635, %v2827
      %v2829 = vpop.f32.mrb[0].mxu0
      %v2830 = vadd.f32 %v2637, %v2829
      %v2831 = vpop.f32.mrb[0].mxu0
      %v2832 = vadd.f32 %v2639, %v2831
      %2833 = vmatprep.mubr.bf16.mxu0 0
      %2834 = vmatmul.mubr.bf16.gmra.mrb[0].mxu0 %v1026
      %v2835 = vpop.f32.mrb[0].mxu0
      %v2836 = vadd.f32 %v2643, %v2835
      %v2837 = vpop.f32.mrb[0].mxu0
      %v2838 = vadd.f32 %v2645, %v2837
      %v2839 = vpop.f32.mrb[0].mxu0
      %v2840 = vadd.f32 %v2647, %v2839
      %v2841 = vpop.f32.mrb[0].mxu0
      %v2842 = vadd.f32 %v2649, %v2841
      %2843 = vmatprep.mubr.bf16.mxu0 0
      %2844 = vmatmul.mubr.bf16.gmra.mrb[0].mxu0 %v1035
      %v2845 = vpop.f32.mrb[0].mxu0
      %v2846 = vadd.f32 %v2653, %v2845
      %v2847 = vpop.f32.mrb[0].mxu0
      %v2848 = vadd.f32 %v2655, %v2847
      %v2849 = vpop.f32.mrb[0].mxu0
      %v2850 = vadd.f32 %v2657, %v2849
      %v2851 = vpop.f32.mrb[0].mxu0
      %v2852 = vadd.f32 %v2659, %v2851
      %2853 = vmatprep.mubr.bf16.mxu0 0
      %2854 = vmatmul.mubr.bf16.gmra.mrb[0].mxu0 %v1044
      %v2855 = vpop.f32.mrb[0].mxu0
      %v2856 = vadd.f32 %v2663, %v2855
      %v2857 = vpop.f32.mrb[0].mxu0
      %v2858 = vadd.f32 %v2665, %v2857
      %v2859 = vpop.f32.mrb[0].mxu0
      %v2860 = vadd.f32 %v2667, %v2859
      %v2861 = vpop.f32.mrb[0].mxu0
      %v2862 = vadd.f32 %v2669, %v2861
      %2863 = vmatprep.mubr.bf16.mxu0 0
      %2864 = vmatmul.mubr.bf16.gmra.mrb[0].mxu0 %v1053
      %v2865 = vpop.f32.mrb[0].mxu0
      %v2866 = vadd.f32 %v2673, %v2865
      %v2867 = vpop.f32.mrb[0].mxu0
      %v2868 = vadd.f32 %v2675, %v2867
      %v2869 = vpop.f32.mrb[0].mxu0
      %v2870 = vadd.f32 %v2677, %v2869
      %v2871 = vpop.f32.mrb[0].mxu0
      %v2872 = vadd.f32 %v2679, %v2871
      %2873 = vmatprep.mubr.bf16.mxu0 0
      %2874 = vmatmul.mubr.bf16.gmra.mrb[0].mxu0 %v1062
      %v2875 = vpop.f32.mrb[0].mxu0
      %v2876 = vadd.f32 %v2683, %v2875
      %v2877 = vpop.f32.mrb[0].mxu0
      %v2878 = vadd.f32 %v2685, %v2877
      %v2879 = vpop.f32.mrb[0].mxu0
      %v2880 = vadd.f32 %v2687, %v2879
      %v2881 = vpop.f32.mrb[0].mxu0
      %v2882 = vadd.f32 %v2689, %v2881
      %2883 = vmatprep.mubr.bf16.mxu0 0
      %2884 = vmatmul.mubr.bf16.gmra.mrb[0].mxu0 %v1071
      %v2885 = vpop.f32.mrb[0].mxu0
      %v2886 = vadd.f32 %v2693, %v2885
      %v2887 = vpop.f32.mrb[0].mxu0
      %v2888 = vadd.f32 %v2695, %v2887
      %v2889 = vpop.f32.mrb[0].mxu0
      %v2890 = vadd.f32 %v2697, %v2889
      %v2891 = vpop.f32.mrb[0].mxu0
      %v2892 = vadd.f32 %v2699, %v2891
      %2893 = vmatprep.mubr.bf16.mxu0 0
      %2894 = vmatmul.mubr.bf16.gmra.mrb[0].mxu0 %v1080
      %v2895 = vpop.f32.mrb[0].mxu0
      %v2896 = vadd.f32 %v2703, %v2895
      %v2897 = vpop.f32.mrb[0].mxu0
      %v2898 = vadd.f32 %v2705, %v2897
      %v2899 = vpop.f32.mrb[0].mxu0
      %v2900 = vadd.f32 %v2707, %v2899
      %v2901 = vpop.f32.mrb[0].mxu0
      %v2902 = vadd.f32 %v2709, %v2901
      %2903 = vmatprep.mubr.bf16.mxu0 0
      %2904 = vmatmul.mubr.bf16.gmra.mrb[0].mxu0 %v1089
      %v2905 = vpop.f32.mrb[0].mxu0
      %v2906 = vadd.f32 %v2713, %v2905
      %v2907 = vpop.f32.mrb[0].mxu0
      %v2908 = vadd.f32 %v2715, %v2907
      %v2909 = vpop.f32.mrb[0].mxu0
      %v2910 = vadd.f32 %v2717, %v2909
      %v2911 = vpop.f32.mrb[0].mxu0
      %v2912 = vadd.f32 %v2719, %v2911
      %2913 = vmatprep.mubr.bf16.mxu0 0
      %2914 = vmatmul.mubr.bf16.gmra.mrb[0].mxu0 %v1098
      %v2915 = vpop.f32.mrb[0].mxu0
      %v2916 = vadd.f32 %v2723, %v2915
      %v2917 = vpop.f32.mrb[0].mxu0
      %v2918 = vadd.f32 %v2725, %v2917
      %v2919 = vpop.f32.mrb[0].mxu0
      %v2920 = vadd.f32 %v2727, %v2919
      %v2921 = vpop.f32.mrb[0].mxu0
      %v2922 = vadd.f32 %v2729, %v2921
      %2923 = vmatprep.mubr.bf16.mxu0 0
      %2924 = vmatmul.mubr.bf16.gmra.mrb[0].mxu0 %v1107
      %v2925 = vpop.f32.mrb[0].mxu0
      %v2926 = vadd.f32 %v2733, %v2925
      %v2927 = vpop.f32.mrb[0].mxu0
      %v2928 = vadd.f32 %v2735, %v2927
      %v2929 = vpop.f32.mrb[0].mxu0
      %v2930 = vadd.f32 %v2737, %v2929
      %v2931 = vpop.f32.mrb[0].mxu0
      %v2932 = vadd.f32 %v2739, %v2931
      %2933 = vmatprep.mubr.bf16.mxu0 0
      %2934 = vmatmul.mubr.bf16.gmra.mrb[0].mxu0 %v1116
      %v2935 = vpop.f32.mrb[0].mxu0
      %v2936 = vadd.f32 %v2743, %v2935
      %v2937 = vpop.f32.mrb[0].mxu0
      %v2938 = vadd.f32 %v2745, %v2937
      %v2939 = vpop.f32.mrb[0].mxu0
      %v2940 = vadd.f32 %v2747, %v2939
      %v2941 = vpop.f32.mrb[0].mxu0
      %v2942 = vadd.f32 %v2749, %v2941
      %2943 = vmatprep.mubr.bf16.mxu0 0
      %2944 = vmatmul.mubr.bf16.gmra.mrb[0].mxu0 %v1125
      %v2945 = vpop.f32.mrb[0].mxu0
      %v2946 = vadd.f32 %v2753, %v2945
      %v2947 = vpop.f32.mrb[0].mxu0
      %v2948 = vadd.f32 %v2755, %v2947
      %v2949 = vpop.f32.mrb[0].mxu0
      %v2950 = vadd.f32 %v2757, %v2949
      %v2951 = vpop.f32.mrb[0].mxu0
      %v2952 = vadd.f32 %v2759, %v2951
      %2953 = vmatprep.mubr.bf16.mxu0 0
      %2954 = vmatmul.mubr.bf16.gmra.mrb[0].mxu0 %v1134
      %v2955 = vpop.f32.mrb[0].mxu0
      %v2956 = vadd.f32 %v2763, %v2955
      %v2957 = vpop.f32.mrb[0].mxu0
      %v2958 = vadd.f32 %v2765, %v2957
      %v2959 = vpop.f32.mrb[0].mxu0
      %v2960 = vadd.f32 %v2767, %v2959
      %v2961 = vpop.f32.mrb[0].mxu0
      %v2962 = vadd.f32 %v2769, %v2961
      %2963 = vdwg.mxu0
      %v2964 = vld [vmem:[%s218] sm:$0xff]
      %v2965 = vld [vmem:[%s218 + $0x8] sm:$0xff]
      %v2966 = vld [vmem:[%s218 + $0x10] sm:$0xff]
      %v2967 = vld [vmem:[%s218 + $0x18] sm:$0xff]
      %v2968 = vld [vmem:[%s218 + $0x20] sm:$0xff]
      %v2969 = vld [vmem:[%s218 + $0x28] sm:$0xff]
      %v2970 = vld [vmem:[%s218 + $0x30] sm:$0xff]
      %v2971 = vld [vmem:[%s218 + $0x38] sm:$0xff]
      %v2972 = vld [vmem:[%s218 + $0x40] sm:$0xff]
      %v2973 = vld [vmem:[%s218 + $0x48] sm:$0xff]
      %v2974 = vld [vmem:[%s218 + $0x50] sm:$0xff]
      %v2975 = vld [vmem:[%s218 + $0x58] sm:$0xff]
      %v2976 = vld [vmem:[%s218 + $0x60] sm:$0xff]
      %v2977 = vld [vmem:[%s218 + $0x68] sm:$0xff]
      %v2978 = vld [vmem:[%s218 + $0x70] sm:$0xff]
      %v2979 = vld [vmem:[%s218 + $0x78] sm:$0xff]
      %v2980 = vld [vmem:[%s218 + $0x80] sm:$0xff]
      %v2981 = vld [vmem:[%s218 + $0x88] sm:$0xff]
      %v2982 = vld [vmem:[%s218 + $0x90] sm:$0xff]
      %v2983 = vld [vmem:[%s218 + $0x98] sm:$0xff]
      %v2984 = vld [vmem:[%s218 + $0xa0] sm:$0xff]
      %v2985 = vld [vmem:[%s218 + $0xa8] sm:$0xff]
      %v2986 = vld [vmem:[%s218 + $0xb0] sm:$0xff]
      %v2987 = vld [vmem:[%s218 + $0xb8] sm:$0xff]
      %v2988 = vld [vmem:[%s218 + $0xc0] sm:$0xff]
      %v2989 = vld [vmem:[%s218 + $0xc8] sm:$0xff]
      %v2990 = vld [vmem:[%s218 + $0xd0] sm:$0xff]
      %v2991 = vld [vmem:[%s218 + $0xd8] sm:$0xff]
      %v2992 = vld [vmem:[%s218 + $0xe0] sm:$0xff]
      %v2993 = vld [vmem:[%s218 + $0xe8] sm:$0xff]
      %v2994 = vld [vmem:[%s218 + $0xf0] sm:$0xff]
      %v2995 = vld [vmem:[%s218 + $0xf8] sm:$0xff]
      %v2996 = vadd.f32 %v2806, 1.0
      %v2997 = vadd.f32 %v2810, 1.0
      %v2998 = vadd.f32 %v2816, 1.0
      %v2999 = vadd.f32 %v2820, 1.0
      %v3000 = vadd.f32 %v2826, 1.0
      %v3001 = vadd.f32 %v2830, 1.0
      %v3002 = vadd.f32 %v2836, 1.0
      %v3003 = vadd.f32 %v2840, 1.0
      %v3004 = vadd.f32 %v2846, 1.0
      %v3005 = vadd.f32 %v2850, 1.0
      %v3006 = vadd.f32 %v2856, 1.0
      %v3007 = vadd.f32 %v2860, 1.0
      %v3008 = vadd.f32 %v2866, 1.0
      %v3009 = vadd.f32 %v2870, 1.0
      %v3010 = vadd.f32 %v2876, 1.0
      %v3011 = vadd.f32 %v2880, 1.0
      %v3012 = vadd.f32 %v2886, 1.0
      %v3013 = vadd.f32 %v2890, 1.0
      %v3014 = vadd.f32 %v2896, 1.0
      %v3015 = vadd.f32 %v2900, 1.0
      %v3016 = vadd.f32 %v2906, 1.0
      %v3017 = vadd.f32 %v2910, 1.0
      %v3018 = vadd.f32 %v2916, 1.0
      %v3019 = vadd.f32 %v2920, 1.0
      %v3020 = vadd.f32 %v2926, 1.0
      %v3021 = vadd.f32 %v2930, 1.0
      %v3022 = vadd.f32 %v2936, 1.0
      %v3023 = vadd.f32 %v2940, 1.0
      %v3024 = vadd.f32 %v2946, 1.0
      %v3025 = vadd.f32 %v2950, 1.0
      %v3026 = vadd.f32 %v2956, 1.0
      %v3027 = vadd.f32 %v2960, 1.0
      %v3028 = vmul.f32 %v2964, %v2996
      %v3029 = vmul.f32 %v2965, %v2997
      %v3030 = vmul.f32 %v2966, %v2998
      %v3031 = vmul.f32 %v2967, %v2999
      %v3032 = vmul.f32 %v2968, %v3000
      %v3033 = vmul.f32 %v2969, %v3001
      %v3034 = vmul.f32 %v2970, %v3002
      %v3035 = vmul.f32 %v2971, %v3003
      %v3036 = vmul.f32 %v2972, %v3004
      %v3037 = vmul.f32 %v2973, %v3005
      %v3038 = vmul.f32 %v2974, %v3006
      %v3039 = vmul.f32 %v2975, %v3007
      %v3040 = vmul.f32 %v2976, %v3008
      %v3041 = vmul.f32 %v2977, %v3009
      %v3042 = vmul.f32 %v2978, %v3010
      %v3043 = vmul.f32 %v2979, %v3011
      %v3044 = vmul.f32 %v2980, %v3012
      %v3045 = vmul.f32 %v2981, %v3013
      %v3046 = vmul.f32 %v2982, %v3014
      %v3047 = vmul.f32 %v2983, %v3015
      %v3048 = vmul.f32 %v2984, %v3016
      %v3049 = vmul.f32 %v2985, %v3017
      %v3050 = vmul.f32 %v2986, %v3018
      %v3051 = vmul.f32 %v2987, %v3019
      %v3052 = vmul.f32 %v2988, %v3020
      %v3053 = vmul.f32 %v2989, %v3021
      %v3054 = vmul.f32 %v2990, %v3022
      %v3055 = vmul.f32 %v2991, %v3023
      %v3056 = vmul.f32 %v2992, %v3024
      %v3057 = vmul.f32 %v2993, %v3025
      %v3058 = vmul.f32 %v2994, %v3026
      %v3059 = vmul.f32 %v2995, %v3027
      %v3060 = vadd.f32 %v3028, %v2808
      %v3061 = vadd.f32 %v3029, %v2812
      %v3062 = vadd.f32 %v3030, %v2818
      %v3063 = vadd.f32 %v3031, %v2822
      %v3064 = vadd.f32 %v3032, %v2828
      %v3065 = vadd.f32 %v3033, %v2832
      %v3066 = vadd.f32 %v3034, %v2838
      %v3067 = vadd.f32 %v3035, %v2842
      %v3068 = vadd.f32 %v3036, %v2848
      %v3069 = vadd.f32 %v3037, %v2852
      %v3070 = vadd.f32 %v3038, %v2858
      %v3071 = vadd.f32 %v3039, %v2862
      %v3072 = vadd.f32 %v3040, %v2868
      %v3073 = vadd.f32 %v3041, %v2872
      %v3074 = vadd.f32 %v3042, %v2878
      %v3075 = vadd.f32 %v3043, %v2882
      %v3076 = vadd.f32 %v3044, %v2888
      %v3077 = vadd.f32 %v3045, %v2892
      %v3078 = vadd.f32 %v3046, %v2898
      %v3079 = vadd.f32 %v3047, %v2902
      %v3080 = vadd.f32 %v3048, %v2908
      %v3081 = vadd.f32 %v3049, %v2912
      %v3082 = vadd.f32 %v3050, %v2918
      %v3083 = vadd.f32 %v3051, %v2922
      %v3084 = vadd.f32 %v3052, %v2928
      %v3085 = vadd.f32 %v3053, %v2932
      %v3086 = vadd.f32 %v3054, %v2938
      %v3087 = vadd.f32 %v3055, %v2942
      %v3088 = vadd.f32 %v3056, %v2948
      %v3089 = vadd.f32 %v3057, %v2952
      %v3090 = vadd.f32 %v3058, %v2958
      %v3091 = vadd.f32 %v3059, %v2962
      %vm3092 = vcmp.gt.f32.partialorder %v3060, 0.0
      %vm3093 = vcmp.gt.f32.partialorder %v3061, 0.0
      %vm3094 = vcmp.gt.f32.partialorder %v3062, 0.0
      %vm3095 = vcmp.gt.f32.partialorder %v3063, 0.0
      %vm3096 = vcmp.gt.f32.partialorder %v3064, 0.0
      %vm3097 = vcmp.gt.f32.partialorder %v3065, 0.0
      %vm3098 = vcmp.gt.f32.partialorder %v3066, 0.0
      %vm3099 = vcmp.gt.f32.partialorder %v3067, 0.0
      %vm3100 = vcmp.gt.f32.partialorder %v3068, 0.0
      %vm3101 = vcmp.gt.f32.partialorder %v3069, 0.0
      %vm3102 = vcmp.gt.f32.partialorder %v3070, 0.0
      %vm3103 = vcmp.gt.f32.partialorder %v3071, 0.0
      %vm3104 = vcmp.gt.f32.partialorder %v3072, 0.0
      %vm3105 = vcmp.gt.f32.partialorder %v3073, 0.0
      %vm3106 = vcmp.gt.f32.partialorder %v3074, 0.0
      %vm3107 = vcmp.gt.f32.partialorder %v3075, 0.0
      %vm3108 = vcmp.gt.f32.partialorder %v3076, 0.0
      %vm3109 = vcmp.gt.f32.partialorder %v3077, 0.0
      %vm3110 = vcmp.gt.f32.partialorder %v3078, 0.0
      %vm3111 = vcmp.gt.f32.partialorder %v3079, 0.0
      %vm3112 = vcmp.gt.f32.partialorder %v3080, 0.0
      %vm3113 = vcmp.gt.f32.partialorder %v3081, 0.0
      %vm3114 = vcmp.gt.f32.partialorder %v3082, 0.0
      %vm3115 = vcmp.gt.f32.partialorder %v3083, 0.0
      %vm3116 = vcmp.gt.f32.partialorder %v3084, 0.0
      %vm3117 = vcmp.gt.f32.partialorder %v3085, 0.0
      %vm3118 = vcmp.gt.f32.partialorder %v3086, 0.0
      %vm3119 = vcmp.gt.f32.partialorder %v3087, 0.0
      %vm3120 = vcmp.gt.f32.partialorder %v3088, 0.0
      %vm3121 = vcmp.gt.f32.partialorder %v3089, 0.0
      %vm3122 = vcmp.gt.f32.partialorder %v3090, 0.0
      %vm3123 = vcmp.gt.f32.partialorder %v3091, 0.0
      %v3124 = vmul.f32 %v3060, 0.2
      %v3125 = vmul.f32 %v3061, 0.2
      %v3126 = vmul.f32 %v3062, 0.2
      %v3127 = vmul.f32 %v3063, 0.2
      %v3128 = vmul.f32 %v3064, 0.2
      %v3129 = vmul.f32 %v3065, 0.2
      %v3130 = vmul.f32 %v3066, 0.2
      %v3131 = vmul.f32 %v3067, 0.2
      %v3132 = vmul.f32 %v3068, 0.2
      %v3133 = vmul.f32 %v3069, 0.2
      %v3134 = vmul.f32 %v3070, 0.2
      %v3135 = vmul.f32 %v3071, 0.2
      %v3136 = vmul.f32 %v3072, 0.2
      %v3137 = vmul.f32 %v3073, 0.2
      %v3138 = vmul.f32 %v3074, 0.2
      %v3139 = vmul.f32 %v3075, 0.2
      %v3140 = vmul.f32 %v3076, 0.2
      %v3141 = vmul.f32 %v3077, 0.2
      %v3142 = vmul.f32 %v3078, 0.2
      %v3143 = vmul.f32 %v3079, 0.2
      %v3144 = vmul.f32 %v3080, 0.2
      %v3145 = vmul.f32 %v3081, 0.2
      %v3146 = vmul.f32 %v3082, 0.2
      %v3147 = vmul.f32 %v3083, 0.2
      %v3148 = vmul.f32 %v3084, 0.2
      %v3149 = vmul.f32 %v3085, 0.2
      %v3150 = vmul.f32 %v3086, 0.2
      %v3151 = vmul.f32 %v3087, 0.2
      %v3152 = vmul.f32 %v3088, 0.2
      %v3153 = vmul.f32 %v3089, 0.2
      %v3154 = vmul.f32 %v3090, 0.2
      %v3155 = vmul.f32 %v3091, 0.2
      %v3156 = vsel %vm3092, %v3060, %v3124
      %v3157 = vsel %vm3093, %v3061, %v3125
      %v3158 = vsel %vm3094, %v3062, %v3126
      %v3159 = vsel %vm3095, %v3063, %v3127
      %v3160 = vsel %vm3096, %v3064, %v3128
      %v3161 = vsel %vm3097, %v3065, %v3129
      %v3162 = vsel %vm3098, %v3066, %v3130
      %v3163 = vsel %vm3099, %v3067, %v3131
      %v3164 = vsel %vm3100, %v3068, %v3132
      %v3165 = vsel %vm3101, %v3069, %v3133
      %v3166 = vsel %vm3102, %v3070, %v3134
      %v3167 = vsel %vm3103, %v3071, %v3135
      %v3168 = vsel %vm3104, %v3072, %v3136
      %v3169 = vsel %vm3105, %v3073, %v3137
      %v3170 = vsel %vm3106, %v3074, %v3138
      %v3171 = vsel %vm3107, %v3075, %v3139
      %v3172 = vsel %vm3108, %v3076, %v3140
      %v3173 = vsel %vm3109, %v3077, %v3141
      %v3174 = vsel %vm3110, %v3078, %v3142
      %v3175 = vsel %vm3111, %v3079, %v3143
      %v3176 = vsel %vm3112, %v3080, %v3144
      %v3177 = vsel %vm3113, %v3081, %v3145
      %v3178 = vsel %vm3114, %v3082, %v3146
      %v3179 = vsel %vm3115, %v3083, %v3147
      %v3180 = vsel %vm3116, %v3084, %v3148
      %v3181 = vsel %vm3117, %v3085, %v3149
      %v3182 = vsel %vm3118, %v3086, %v3150
      %v3183 = vsel %vm3119, %v3087, %v3151
      %v3184 = vsel %vm3120, %v3088, %v3152
      %v3185 = vsel %vm3121, %v3089, %v3153
      %v3186 = vsel %vm3122, %v3090, %v3154
      %v3187 = vsel %vm3123, %v3091, %v3155
      %3188 = vst [vmem:[%s224] sm:$0xff] %v3156
      %3189 = vst [vmem:[%s224 + $0x8] sm:$0xff] %v3157
      %3190 = vst [vmem:[%s224 + $0x10] sm:$0xff] %v3158
      %3191 = vst [vmem:[%s224 + $0x18] sm:$0xff] %v3159
      %3192 = vst [vmem:[%s224 + $0x20] sm:$0xff] %v3160
      %3193 = vst [vmem:[%s224 + $0x28] sm:$0xff] %v3161
      %3194 = vst [vmem:[%s224 + $0x30] sm:$0xff] %v3162
      %3195 = vst [vmem:[%s224 + $0x38] sm:$0xff] %v3163
      %3196 = vst [vmem:[%s224 + $0x40] sm:$0xff] %v3164
      %3197 = vst [vmem:[%s224 + $0x48] sm:$0xff] %v3165
      %3198 = vst [vmem:[%s224 + $0x50] sm:$0xff] %v3166
      %3199 = vst [vmem:[%s224 + $0x58] sm:$0xff] %v3167
      %3200 = vst [vmem:[%s224 + $0x60] sm:$0xff] %v3168
      %3201 = vst [vmem:[%s224 + $0x68] sm:$0xff] %v3169
      %3202 = vst [vmem:[%s224 + $0x70] sm:$0xff] %v3170
      %3203 = vst [vmem:[%s224 + $0x78] sm:$0xff] %v3171
      %3204 = vst [vmem:[%s224 + $0x80] sm:$0xff] %v3172
      %3205 = vst [vmem:[%s224 + $0x88] sm:$0xff] %v3173
      %3206 = vst [vmem:[%s224 + $0x90] sm:$0xff] %v3174
      %3207 = vst [vmem:[%s224 + $0x98] sm:$0xff] %v3175
      %3208 = vst [vmem:[%s224 + $0xa0] sm:$0xff] %v3176
      %3209 = vst [vmem:[%s224 + $0xa8] sm:$0xff] %v3177
      %3210 = vst [vmem:[%s224 + $0xb0] sm:$0xff] %v3178
      %3211 = vst [vmem:[%s224 + $0xb8] sm:$0xff] %v3179
      %3212 = vst [vmem:[%s224 + $0xc0] sm:$0xff] %v3180
      %3213 = vst [vmem:[%s224 + $0xc8] sm:$0xff] %v3181
      %3214 = vst [vmem:[%s224 + $0xd0] sm:$0xff] %v3182
      %3215 = vst [vmem:[%s224 + $0xd8] sm:$0xff] %v3183
      %3216 = vst [vmem:[%s224 + $0xe0] sm:$0xff] %v3184
      %3217 = vst [vmem:[%s224 + $0xe8] sm:$0xff] %v3185
      %3218 = vst [vmem:[%s224 + $0xf0] sm:$0xff] %v3186
      %3219 = vst [vmem:[%s224 + $0xf8] sm:$0xff] %v3187
      %s3220 = smul.u32 32, %s15
      %p3221 = scmp.lt.s32.totalorder %s3220, 63
      %s3222 = scalar_select %p3221, %s3220, 63
      %s3223 = smul.addr %s3222, 8
      %s3224 = scalar_lea.vmem %s4, %s3223
      // Predicated region
      $region37: #{_lambda_.13} parent=35 // pred_check
        %p3225 = pneg %p127
      $region38: #{_lambda_.13} parent=35 // pred_check_branch
        %3227 = sbr.rel (%p3225) target = $region40
      $region39: #{_lambda_.13} parent=35 // pred_region
        %s3228 = smul.u32 32, %s15
      $region40: #{_lambda_.13} parent=35 // pred_fallthru
        _
    $region36: #{_lambda_.13} parent=5 // pred_fallthru
      _
    %p3229 = scmp.le.s32.totalorder 2, %s10
    // Predicated region
    $region41: #{_lambda_.13} parent=5 // pred_check
      %p3230 = pneg %p3229
    $region42: #{_lambda_.13} parent=5 // pred_check_branch
      %3232 = sbr.rel (%p3230) target = $region44
    $region43: #{_lambda_.13} parent=5 // pred_region
      %s3233 = ssub.s32 %s10, 2
      // Predicated region
      $region45: #{_lambda_.13} parent=43 // pred_check
        %p3234 = pneg %p133
      $region46: #{_lambda_.13} parent=43 // pred_check_branch
        %3236 = sbr.rel (%p3234) target = $region48
      $region47: #{_lambda_.13} parent=43 // pred_region
        %s3237 = smul.u32 32, %s16
        %p3238 = scmp.lt.s32.totalorder %s3237, 63
        %s3239 = scalar_select %p3238, %s3237, 63
        %s3240 = smul.addr %s3239, 8
        %s3241 = scalar_lea.vmem %s4, %s3240
      $region48: #{_lambda_.13} parent=43 // pred_fallthru
        _
    $region44: #{_lambda_.13} parent=5 // pred_fallthru
      _
  $region6: #{_lambda_.13} parent=0 // loop_footer
    %s14 = sadd.s32 1, %s10
  $region7: #{_lambda_.13} parent=0 // loop_footer_branch
    %9 = sbr.rel target = $region3
  $region8: #{_lambda_.13} parent=0 // loop_exit
    _

// kernel: _lambda_.15
$region0: #{_lambda_.15}
  #allocation0 [shape = 'u32[]', space=smem, size = 0x4, offset = 0x4, fixed_abs, tag = 'smem constant byte address 0x4 - core index']
  #allocation1 [shape = 'u32[144,128]{1,0:T(1,128)}', space=vmem, size = 0x12000, scoped, tag = 'internal scratch']
  %s0 = inlined_call_operand.vmem [shape: bf16[512,9], index: 0, kind: input, shape index: {}]
  %s1 = inlined_call_operand.vmem [shape: bf16[9,128], index: 1, kind: input, shape index: {}]
  %s2 = inlined_call_operand.vmem [shape: f32[1,128], index: 2, kind: input, shape index: {}]
  %s3 = inlined_call_operand.vmem [shape: f32[512,128], index: 3, kind: output, shape index: {}]
  %s4 = sld [smem:[#allocation0]]
  $region45: #{_lambda_.15} parent=0
    _
  %s6 = ssub.s32 1, %s4
  %s7 = scalar_select 0, %s6, %s4
  loop: start=0, step=1, limit=4
  $region2: #{_lambda_.15} parent=0 // loop_pre_header
    _
  $region3: #{_lambda_.15} parent=0 // loop_header
    %s9 = sphi 0, %s13
    %p10 = scmp.ge.s32.totalorder %s9, 4
    %s19 = sphi 0, %s21
    %s22 = sphi 0, %s19
    %s23 = sphi 0, %s22
    %s39 = sphi 0, %s23
    %s43 = sphi 0, %s43
    %s45 = sphi 0, %s43
    %s46 = sphi 0, %s45
    %s60 = sphi 0, %s46
    %s64 = sphi 0, %s64
    %s66 = sphi 0, %s64
    %s67 = sphi 0, %s66
    %s81 = sphi 0, %s67
    %s87 = sphi 0, %s89
    %s90 = sphi 0, %s87
    %s91 = sphi 0, %s90
    %s107 = sphi 0, %s91
  $region4: #{_lambda_.15} parent=0 // loop_header_branch
    %12 = sbr.rel (%p10) target = $region8
  $region5: #{_lambda_.15} parent=0 // loop_body
    %s14 = ssub.s32 %s9, 1
    %s15 = ssub.s32 %s9, 2
    %s16 = sadd.s32 %s9, 1
    %s17 = ssub.s32 %s9, %s16
    %p18 = scmp.eq.s32.totalorder %s17, 0
    %s20 = sadd.s32 %s19, 1
    %s21 = scalar_select %p18, %s19, %s20
    %p24 = pneg %p18
    %p25 = scmp.eq.s32.totalorder %s9, 1
    %p26 = por %p24, %p25
    %p27 = scmp.ne.s32.totalorder %s19, %s22
    %p28 = scmp.eq.s32.totalorder %s9, 0
    %p29 = por %p27, %p28
    %p30 = scmp.ne.s32.totalorder %s19, %s22
    %p31 = scmp.eq.s32.totalorder %s14, 1
    %p32 = por %p30, %p31
    %p33 = scmp.ne.s32.totalorder %s22, %s23
    %p34 = scmp.eq.s32.totalorder %s14, 0
    %p35 = por %p33, %p34
    %p36 = scmp.ne.s32.totalorder %s22, %s23
    %p37 = scmp.eq.s32.totalorder %s15, 1
    %p38 = por %p36, %p37
    %p40 = scmp.ne.s32.totalorder %s23, %s39
    %p41 = scmp.eq.s32.totalorder %s15, 0
    %p42 = por %p40, %p41
    %s44 = sadd.s32 %s43, 1
    %p47 = scmp.eq.s32.totalorder %s9, 1
    %p48 = scmp.ne.s32.totalorder %s43, %s45
    %p49 = scmp.eq.s32.totalorder %s9, 0
    %p50 = por %p48, %p49
    %p51 = scmp.ne.s32.totalorder %s43, %s45
    %p52 = scmp.eq.s32.totalorder %s14, 1
    %p53 = por %p51, %p52
    %p54 = scmp.ne.s32.totalorder %s45, %s46
    %p55 = scmp.eq.s32.totalorder %s14, 0
    %p56 = por %p54, %p55
    %p57 = scmp.ne.s32.totalorder %s45, %s46
    %p58 = scmp.eq.s32.totalorder %s15, 1
    %p59 = por %p57, %p58
    %p61 = scmp.ne.s32.totalorder %s46, %s60
    %p62 = scmp.eq.s32.totalorder %s15, 0
    %p63 = por %p61, %p62
    %s65 = sadd.s32 %s64, 1
    %p68 = scmp.eq.s32.totalorder %s9, 1
    %p69 = scmp.ne.s32.totalorder %s64, %s66
    %p70 = scmp.eq.s32.totalorder %s9, 0
    %p71 = por %p69, %p70
    %p72 = scmp.ne.s32.totalorder %s64, %s66
    %p73 = scmp.eq.s32.totalorder %s14, 1
    %p74 = por %p72, %p73
    %p75 = scmp.ne.s32.totalorder %s66, %s67
    %p76 = scmp.eq.s32.totalorder %s14, 0
    %p77 = por %p75, %p76
    %p78 = scmp.ne.s32.totalorder %s66, %s67
    %p79 = scmp.eq.s32.totalorder %s15, 1
    %p80 = por %p78, %p79
    %p82 = scmp.ne.s32.totalorder %s67, %s81
    %p83 = scmp.eq.s32.totalorder %s15, 0
    %p84 = por %p82, %p83
    %s85 = ssub.s32 %s9, %s16
    %p86 = scmp.eq.s32.totalorder %s85, 0
    %s88 = sadd.s32 %s87, 1
    %s89 = scalar_select %p86, %s87, %s88
    %p92 = pneg %p86
    %p93 = scmp.eq.s32.totalorder %s9, 1
    %p94 = por %p92, %p93
    %p95 = scmp.ne.s32.totalorder %s87, %s90
    %p96 = scmp.eq.s32.totalorder %s9, 0
    %p97 = por %p95, %p96
    %p98 = scmp.ne.s32.totalorder %s87, %s90
    %p99 = scmp.eq.s32.totalorder %s14, 1
    %p100 = por %p98, %p99
    %p101 = scmp.ne.s32.totalorder %s90, %s91
    %p102 = scmp.eq.s32.totalorder %s14, 0
    %p103 = por %p101, %p102
    %p104 = scmp.ne.s32.totalorder %s90, %s91
    %p105 = scmp.eq.s32.totalorder %s15, 1
    %p106 = por %p104, %p105
    %p108 = scmp.ne.s32.totalorder %s91, %s107
    %p109 = scmp.eq.s32.totalorder %s15, 0
    %p110 = por %p108, %p109
    %p111 = scmp.le.s32.totalorder 1, %s9
    %p112 = scmp.lt.s32.totalorder %s9, 3
    %p113 = pnand %p111, %p112
    %p114 = pneg %p113
    // Predicated region
    $region9: #{_lambda_.15} parent=5 // pred_check
      _
    $region10: #{_lambda_.15} parent=5 // pred_check_branch
      %116 = sbr.rel (%p113) target = $region12
    $region11: #{_lambda_.15} parent=5 // pred_region
      %s117 = ssub.s32 %s9, 1
      // Predicated region
      $region13: #{_lambda_.15} parent=11 // pred_check
        %p118 = pneg %p56
      $region14: #{_lambda_.15} parent=11 // pred_check_branch
        %120 = sbr.rel (%p118) target = $region16
      $region15: #{_lambda_.15} parent=11 // pred_region
        _
      $region16: #{_lambda_.15} parent=11 // pred_fallthru
        _
      // Predicated region
      $region17: #{_lambda_.15} parent=11 // pred_check
        %p121 = pneg %p77
      $region18: #{_lambda_.15} parent=11 // pred_check_branch
        %123 = sbr.rel (%p121) target = $region20
      $region19: #{_lambda_.15} parent=11 // pred_region
        _
      $region20: #{_lambda_.15} parent=11 // pred_fallthru
        _
    $region12: #{_lambda_.15} parent=5 // pred_fallthru
      _
    %p124 = scmp.lt.s32.totalorder %s9, 2
    // Predicated region
    $region21: #{_lambda_.15} parent=5 // pred_check
      %p125 = pneg %p124
    $region22: #{_lambda_.15} parent=5 // pred_check_branch
      %127 = sbr.rel (%p125) target = $region24
    $region23: #{_lambda_.15} parent=5 // pred_region
      // Predicated region
      $region25: #{_lambda_.15} parent=23 // pred_check
        %p128 = pneg %p29
      $region26: #{_lambda_.15} parent=23 // pred_check_branch
        %130 = sbr.rel (%p128) target = $region28
      $region27: #{_lambda_.15} parent=23 // pred_region
        %s131 = smul.u32 32, %s9
        %p132 = scmp.lt.s32.totalorder %s131, 63
        %s133 = scalar_select %p132, %s131, 63
        %s134 = smul.addr %s133, 4
        %s135 = scalar_lea.vmem %s0, %s134
        %s136 = smul.u32 32, %s9
      $region28: #{_lambda_.15} parent=23 // pred_fallthru
        _
    $region24: #{_lambda_.15} parent=5 // pred_fallthru
      _
    %p137 = scmp.le.s32.totalorder 1, %s9
    %p138 = scmp.lt.s32.totalorder %s9, 3
    %p139 = pnand %p137, %p138
    %p140 = pneg %p139
    // Predicated region
    $region29: #{_lambda_.15} parent=5 // pred_check
      _
    $region30: #{_lambda_.15} parent=5 // pred_check_branch
      %142 = sbr.rel (%p139) target = $region32
    $region31: #{_lambda_.15} parent=5 // pred_region
      %s143 = ssub.s32 %s9, 1
      %s144 = smul.u32 32, %s14
      %p145 = scmp.lt.s32.totalorder %s144, 63
      %s146 = scalar_select %p145, %s144, 63
      %s147 = smul.addr %s146, 4
      %s148 = scalar_lea.vmem %s0, %s147
      %p149 = pneg %p35
      %p150 = pneg %p32
      %p151 = pneg %p56
      %p152 = pneg %p53
      %p153 = pneg %p77
      %p154 = pneg %p74
      %p155 = pneg %p103
      %p156 = pneg %p100
      %s157 = smul.u32 32, %s14
      %p158 = scmp.lt.s32.totalorder %s157, 63
      %s159 = scalar_select %p158, %s157, 63
      %s160 = smul.addr %s159, 8
      %s161 = scalar_lea.vmem %s3, %s160
      %s162 = smul.u32 32, %s14
      %p163 = scmp.lt.s32.totalorder %s162, 63
      %s164 = scalar_select %p163, %s162, 63
      %s165 = smul.addr %s164, 4
      %s166 = scalar_lea.vmem %s0, %s165
      %s167 = smul.u32 32, %s14
      %s168 = smul.u32 32, %s14
      %p169 = scmp.lt.s32.totalorder %s168, 63
      %s170 = scalar_select %p169, %s168, 63
      %s171 = smul.addr %s170, 8
      %s172 = scalar_lea.vmem %s3, %s171
      %s173 = smul.u32 32, %s14
      %v175 = vld [vmem:[%s166] sm:$0xf]
      %v176 = vld [vmem:[%s166 + $0x4] sm:$0xf]
      %v177 = vld [vmem:[%s166 + $0x8] sm:$0xf]
      %v178 = vld [vmem:[%s166 + $0xc] sm:$0xf]
      %v179 = vld [vmem:[%s166 + $0x10] sm:$0xf]
      %v180 = vld [vmem:[%s166 + $0x14] sm:$0xf]
      %v181 = vld [vmem:[%s166 + $0x18] sm:$0xf]
      %v182 = vld [vmem:[%s166 + $0x1c] sm:$0xf]
      %v183 = vld [vmem:[%s166 + $0x20] sm:$0xf]
      %v184 = vld [vmem:[%s166 + $0x24] sm:$0xf]
      %v185 = vld [vmem:[%s166 + $0x28] sm:$0xf]
      %v186 = vld [vmem:[%s166 + $0x2c] sm:$0xf]
      %v187 = vld [vmem:[%s166 + $0x30] sm:$0xf]
      %v188 = vld [vmem:[%s166 + $0x34] sm:$0xf]
      %v189 = vld [vmem:[%s166 + $0x38] sm:$0xf]
      %v190 = vld [vmem:[%s166 + $0x3c] sm:$0xf]
      %v191 = vld [vmem:[%s166 + $0x40] sm:$0xf]
      %v192 = vld [vmem:[%s166 + $0x44] sm:$0xf]
      %v193 = vld [vmem:[%s166 + $0x48] sm:$0xf]
      %v194 = vld [vmem:[%s166 + $0x4c] sm:$0xf]
      %v195 = vld [vmem:[%s166 + $0x50] sm:$0xf]
      %v196 = vld [vmem:[%s166 + $0x54] sm:$0xf]
      %v197 = vld [vmem:[%s166 + $0x58] sm:$0xf]
      %v198 = vld [vmem:[%s166 + $0x5c] sm:$0xf]
      %v199 = vld [vmem:[%s166 + $0x60] sm:$0xf]
      %v200 = vld [vmem:[%s166 + $0x64] sm:$0xf]
      %v201 = vld [vmem:[%s166 + $0x68] sm:$0xf]
      %v202 = vld [vmem:[%s166 + $0x6c] sm:$0xf]
      %v203 = vld [vmem:[%s166 + $0x70] sm:$0xf]
      %v204 = vld [vmem:[%s166 + $0x74] sm:$0xf]
      %v205 = vld [vmem:[%s166 + $0x78] sm:$0xf]
      %v206 = vld [vmem:[%s166 + $0x7c] sm:$0xf]
      %v207 = vld [vmem:[%s1] sm:$0xf]
      %v208 = vld [vmem:[%s1 + $0x4] sm:$0x1]
      %v209 = vld [vmem:[%s2] sm:$0x1]
      %v211 = vlaneseq
      %v212 = vshrl.u32 %v211, 7
      %v213 = vsub.s32 0, %v212
      %v214 = vrot.slane %v209, %v213
      %v248 = vunpack.c.l.b16 %v175
      %v249 = vunpack.c.l.b16 %v176
      %v250 = vunpack.c.l.b16 %v177
      %v251 = vunpack.c.l.b16 %v178
      %v252 = vunpack.c.l.b16 %v179
      %v253 = vunpack.c.l.b16 %v180
      %v254 = vunpack.c.l.b16 %v181
      %v255 = vunpack.c.l.b16 %v182
      %v256 = vunpack.c.l.b16 %v183
      %v257 = vunpack.c.l.b16 %v184
      %v258 = vunpack.c.l.b16 %v185
      %v259 = vunpack.c.l.b16 %v186
      %v260 = vunpack.c.l.b16 %v187
      %v261 = vunpack.c.l.b16 %v188
      %v262 = vunpack.c.l.b16 %v189
      %v263 = vunpack.c.l.b16 %v190
      %v264 = vunpack.c.l.b16 %v191
      %v265 = vunpack.c.l.b16 %v192
      %v266 = vunpack.c.l.b16 %v193
      %v267 = vunpack.c.l.b16 %v194
      %v268 = vunpack.c.l.b16 %v195
      %v269 = vunpack.c.l.b16 %v196
      %v270 = vunpack.c.l.b16 %v197
      %v271 = vunpack.c.l.b16 %v198
      %v272 = vunpack.c.l.b16 %v199
      %v273 = vunpack.c.l.b16 %v200
      %v274 = vunpack.c.l.b16 %v201
      %v275 = vunpack.c.l.b16 %v202
      %v276 = vunpack.c.l.b16 %v203
      %v277 = vunpack.c.l.b16 %v204
      %v278 = vunpack.c.l.b16 %v205
      %v279 = vunpack.c.l.b16 %v206
      %v280 = vpack.c.b16 %v249, %v248
      %v281 = vpack.c.b16 %v251, %v250
      %v282 = vpack.c.b16 %v253, %v252
      %v283 = vpack.c.b16 %v255, %v254
      %v284 = vpack.c.b16 %v257, %v256
      %v285 = vpack.c.b16 %v259, %v258
      %v286 = vpack.c.b16 %v261, %v260
      %v287 = vpack.c.b16 %v263, %v262
      %v288 = vpack.c.b16 %v265, %v264
      %v289 = vpack.c.b16 %v267, %v266
      %v290 = vpack.c.b16 %v269, %v268
      %v291 = vpack.c.b16 %v271, %v270
      %v292 = vpack.c.b16 %v273, %v272
      %v293 = vpack.c.b16 %v275, %v274
      %v294 = vpack.c.b16 %v277, %v276
      %v295 = vpack.c.b16 %v279, %v278
      %v298 = vunpack.c.l.b16 %v207
      %v299 = vunpack.c.l.b16 %v208
      %v300 = vpack.c.b16 %v299, %v298
      %vm301 = vcmask 72704
      %v303 = vsel %vm301, %v280, 0
      %v306 = vsel %vm301, %v281, 0
      %v309 = vsel %vm301, %v282, 0
      %v312 = vsel %vm301, %v283, 0
      %v315 = vsel %vm301, %v284, 0
      %v318 = vsel %vm301, %v285, 0
      %v321 = vsel %vm301, %v286, 0
      %v324 = vsel %vm301, %v287, 0
      %v327 = vsel %vm301, %v288, 0
      %v330 = vsel %vm301, %v289, 0
      %v333 = vsel %vm301, %v290, 0
      %v336 = vsel %vm301, %v291, 0
      %v339 = vsel %vm301, %v292, 0
      %v342 = vsel %vm301, %v293, 0
      %v345 = vsel %vm301, %v294, 0
      %v348 = vsel %vm301, %v295, 0
      %vm350 = vcmask 1043456
      %vm351 = vcmask 1044480
      %v352 = vsel %vm350, 4294967295, 65535
      %v353 = vsel %vm351, %v352, 0
      %v355 = vand.u32 %v300, %v353
      %357 = vmatprep.subr.bf16.mxu0 0
      %358 = vmatpush1.bf16.msra.mxu0 %v355
      %359 = vmatprep.subr.bf16.mxu0 0
      %360 = vmatpush1.bf16.msra.mxu0 0
      %361 = vmatprep.subr.bf16.mxu0 0
      %362 = vmatpush1.bf16.msra.mxu0 0
      %363 = vmatprep.subr.bf16.mxu0 0
      %364 = vmatpush1.bf16.msra.mxu0 0
      %365 = vmatprep.subr.bf16.mxu0 0
      %366 = vmatpush1.bf16.msra.mxu0 0
      %367 = vmatprep.subr.bf16.mxu0 0
      %368 = vmatpush1.bf16.msra.mxu0 0
      %369 = vmatprep.subr.bf16.mxu0 0
      %370 = vmatpush1.bf16.msra.mxu0 0
      %371 = vmatprep.subr.bf16.mxu0 0
      %372 = vmatpush1.bf16.msra.mxu0 0
      %373 = vmatprep.subr.bf16.mxu0 0
      %374 = vmatpush1.bf16.msra.mxu0 0
      %375 = vmatprep.subr.bf16.mxu0 0
      %376 = vmatpush1.bf16.msra.mxu0 0
      %377 = vmatprep.subr.bf16.mxu0 0
      %378 = vmatpush1.bf16.msra.mxu0 0
      %379 = vmatprep.subr.bf16.mxu0 0
      %380 = vmatpush1.bf16.msra.mxu0 0
      %381 = vmatprep.subr.bf16.mxu0 0
      %382 = vmatpush1.bf16.msra.mxu0 0
      %383 = vmatprep.subr.bf16.mxu0 0
      %384 = vmatpush1.bf16.msra.mxu0 0
      %385 = vmatprep.subr.bf16.mxu0 0
      %386 = vmatpush1.bf16.msra.mxu0 0
      %387 = vmatprep.subr.bf16.mxu0 0
      %388 = vmatpush1.bf16.msra.mxu0 0
      %389 = vmatprep.mubr.bf16.mxu0 0
      %390 = vmatmul.mubr.bf16.gmra.mrb[0].mxu0 %v303
      %v391 = vpop.f32.mrb[0].mxu0
      %v392 = vadd.f32 %v214, %v391
      %v393 = vpop.f32.mrb[0].mxu0
      %v394 = vpop.f32.mrb[0].mxu0
      %v395 = vadd.f32 %v214, %v394
      %v396 = vpop.f32.mrb[0].mxu0
      %397 = vmatprep.mubr.bf16.mxu0 0
      %398 = vmatmul.mubr.bf16.gmra.mrb[0].mxu0 %v306
      %v399 = vpop.f32.mrb[0].mxu0
      %v400 = vadd.f32 %v214, %v399
      %v401 = vpop.f32.mrb[0].mxu0
      %v402 = vpop.f32.mrb[0].mxu0
      %v403 = vadd.f32 %v214, %v402
      %v404 = vpop.f32.mrb[0].mxu0
      %405 = vmatprep.mubr.bf16.mxu0 0
      %406 = vmatmul.mubr.bf16.gmra.mrb[0].mxu0 %v309
      %v407 = vpop.f32.mrb[0].mxu0
      %v408 = vadd.f32 %v214, %v407
      %v409 = vpop.f32.mrb[0].mxu0
      %v410 = vpop.f32.mrb[0].mxu0
      %v411 = vadd.f32 %v214, %v410
      %v412 = vpop.f32.mrb[0].mxu0
      %413 = vmatprep.mubr.bf16.mxu0 0
      %414 = vmatmul.mubr.bf16.gmra.mrb[0].mxu0 %v312
      %v415 = vpop.f32.mrb[0].mxu0
      %v416 = vadd.f32 %v214, %v415
      %v417 = vpop.f32.mrb[0].mxu0
      %v418 = vpop.f32.mrb[0].mxu0
      %v419 = vadd.f32 %v214, %v418
      %v420 = vpop.f32.mrb[0].mxu0
      %421 = vmatprep.mubr.bf16.mxu0 0
      %422 = vmatmul.mubr.bf16.gmra.mrb[0].mxu0 %v315
      %v423 = vpop.f32.mrb[0].mxu0
      %v424 = vadd.f32 %v214, %v423
      %v425 = vpop.f32.mrb[0].mxu0
      %v426 = vpop.f32.mrb[0].mxu0
      %v427 = vadd.f32 %v214, %v426
      %v428 = vpop.f32.mrb[0].mxu0
      %429 = vmatprep.mubr.bf16.mxu0 0
      %430 = vmatmul.mubr.bf16.gmra.mrb[0].mxu0 %v318
      %v431 = vpop.f32.mrb[0].mxu0
      %v432 = vadd.f32 %v214, %v431
      %v433 = vpop.f32.mrb[0].mxu0
      %v434 = vpop.f32.mrb[0].mxu0
      %v435 = vadd.f32 %v214, %v434
      %v436 = vpop.f32.mrb[0].mxu0
      %437 = vmatprep.mubr.bf16.mxu0 0
      %438 = vmatmul.mubr.bf16.gmra.mrb[0].mxu0 %v321
      %v439 = vpop.f32.mrb[0].mxu0
      %v440 = vadd.f32 %v214, %v439
      %v441 = vpop.f32.mrb[0].mxu0
      %v442 = vpop.f32.mrb[0].mxu0
      %v443 = vadd.f32 %v214, %v442
      %v444 = vpop.f32.mrb[0].mxu0
      %445 = vmatprep.mubr.bf16.mxu0 0
      %446 = vmatmul.mubr.bf16.gmra.mrb[0].mxu0 %v324
      %v447 = vpop.f32.mrb[0].mxu0
      %v448 = vadd.f32 %v214, %v447
      %v449 = vpop.f32.mrb[0].mxu0
      %v450 = vpop.f32.mrb[0].mxu0
      %v451 = vadd.f32 %v214, %v450
      %v452 = vpop.f32.mrb[0].mxu0
      %453 = vmatprep.mubr.bf16.mxu0 0
      %454 = vmatmul.mubr.bf16.gmra.mrb[0].mxu0 %v327
      %v455 = vpop.f32.mrb[0].mxu0
      %v456 = vadd.f32 %v214, %v455
      %v457 = vpop.f32.mrb[0].mxu0
      %v458 = vpop.f32.mrb[0].mxu0
      %v459 = vadd.f32 %v214, %v458
      %v460 = vpop.f32.mrb[0].mxu0
      %461 = vmatprep.mubr.bf16.mxu0 0
      %462 = vmatmul.mubr.bf16.gmra.mrb[0].mxu0 %v330
      %v463 = vpop.f32.mrb[0].mxu0
      %v464 = vadd.f32 %v214, %v463
      %v465 = vpop.f32.mrb[0].mxu0
      %v466 = vpop.f32.mrb[0].mxu0
      %v467 = vadd.f32 %v214, %v466
      %v468 = vpop.f32.mrb[0].mxu0
      %469 = vmatprep.mubr.bf16.mxu0 0
      %470 = vmatmul.mubr.bf16.gmra.mrb[0].mxu0 %v333
      %v471 = vpop.f32.mrb[0].mxu0
      %v472 = vadd.f32 %v214, %v471
      %v473 = vpop.f32.mrb[0].mxu0
      %v474 = vpop.f32.mrb[0].mxu0
      %v475 = vadd.f32 %v214, %v474
      %v476 = vpop.f32.mrb[0].mxu0
      %477 = vmatprep.mubr.bf16.mxu0 0
      %478 = vmatmul.mubr.bf16.gmra.mrb[0].mxu0 %v336
      %v479 = vpop.f32.mrb[0].mxu0
      %v480 = vadd.f32 %v214, %v479
      %v481 = vpop.f32.mrb[0].mxu0
      %v482 = vpop.f32.mrb[0].mxu0
      %v483 = vadd.f32 %v214, %v482
      %v484 = vpop.f32.mrb[0].mxu0
      %485 = vmatprep.mubr.bf16.mxu0 0
      %486 = vmatmul.mubr.bf16.gmra.mrb[0].mxu0 %v339
      %v487 = vpop.f32.mrb[0].mxu0
      %v488 = vadd.f32 %v214, %v487
      %v489 = vpop.f32.mrb[0].mxu0
      %v490 = vpop.f32.mrb[0].mxu0
      %v491 = vadd.f32 %v214, %v490
      %v492 = vpop.f32.mrb[0].mxu0
      %493 = vmatprep.mubr.bf16.mxu0 0
      %494 = vmatmul.mubr.bf16.gmra.mrb[0].mxu0 %v342
      %v495 = vpop.f32.mrb[0].mxu0
      %v496 = vadd.f32 %v214, %v495
      %v497 = vpop.f32.mrb[0].mxu0
      %v498 = vpop.f32.mrb[0].mxu0
      %v499 = vadd.f32 %v214, %v498
      %v500 = vpop.f32.mrb[0].mxu0
      %501 = vmatprep.mubr.bf16.mxu0 0
      %502 = vmatmul.mubr.bf16.gmra.mrb[0].mxu0 %v345
      %v503 = vpop.f32.mrb[0].mxu0
      %v504 = vadd.f32 %v214, %v503
      %v505 = vpop.f32.mrb[0].mxu0
      %v506 = vpop.f32.mrb[0].mxu0
      %v507 = vadd.f32 %v214, %v506
      %v508 = vpop.f32.mrb[0].mxu0
      %509 = vmatprep.mubr.bf16.mxu0 0
      %510 = vmatmul.mubr.bf16.gmra.mrb[0].mxu0 %v348
      %v511 = vpop.f32.mrb[0].mxu0
      %v512 = vadd.f32 %v214, %v511
      %v513 = vpop.f32.mrb[0].mxu0
      %v514 = vpop.f32.mrb[0].mxu0
      %v515 = vadd.f32 %v214, %v514
      %v516 = vpop.f32.mrb[0].mxu0
      %517 = vdwg.mxu0
      %v518 = vmax.f32 %v392, 0.0
      %v519 = vmax.f32 %v395, 0.0
      %v520 = vmax.f32 %v400, 0.0
      %v521 = vmax.f32 %v403, 0.0
      %v522 = vmax.f32 %v408, 0.0
      %v523 = vmax.f32 %v411, 0.0
      %v524 = vmax.f32 %v416, 0.0
      %v525 = vmax.f32 %v419, 0.0
      %v526 = vmax.f32 %v424, 0.0
      %v527 = vmax.f32 %v427, 0.0
      %v528 = vmax.f32 %v432, 0.0
      %v529 = vmax.f32 %v435, 0.0
      %v530 = vmax.f32 %v440, 0.0
      %v531 = vmax.f32 %v443, 0.0
      %v532 = vmax.f32 %v448, 0.0
      %v533 = vmax.f32 %v451, 0.0
      %v534 = vmax.f32 %v456, 0.0
      %v535 = vmax.f32 %v459, 0.0
      %v536 = vmax.f32 %v464, 0.0
      %v537 = vmax.f32 %v467, 0.0
      %v538 = vmax.f32 %v472, 0.0
      %v539 = vmax.f32 %v475, 0.0
      %v540 = vmax.f32 %v480, 0.0
      %v541 = vmax.f32 %v483, 0.0
      %v542 = vmax.f32 %v488, 0.0
      %v543 = vmax.f32 %v491, 0.0
      %v544 = vmax.f32 %v496, 0.0
      %v545 = vmax.f32 %v499, 0.0
      %v546 = vmax.f32 %v504, 0.0
      %v547 = vmax.f32 %v507, 0.0
      %v548 = vmax.f32 %v512, 0.0
      %v549 = vmax.f32 %v515, 0.0
      %550 = vst [vmem:[%s172] sm:$0xff] %v518
      %551 = vst [vmem:[%s172 + $0x8] sm:$0xff] %v519
      %552 = vst [vmem:[%s172 + $0x10] sm:$0xff] %v520
      %553 = vst [vmem:[%s172 + $0x18] sm:$0xff] %v521
      %554 = vst [vmem:[%s172 + $0x20] sm:$0xff] %v522
      %555 = vst [vmem:[%s172 + $0x28] sm:$0xff] %v523
      %556 = vst [vmem:[%s172 + $0x30] sm:$0xff] %v524
      %557 = vst [vmem:[%s172 + $0x38] sm:$0xff] %v525
      %558 = vst [vmem:[%s172 + $0x40] sm:$0xff] %v526
      %559 = vst [vmem:[%s172 + $0x48] sm:$0xff] %v527
      %560 = vst [vmem:[%s172 + $0x50] sm:$0xff] %v528
      %561 = vst [vmem:[%s172 + $0x58] sm:$0xff] %v529
      %562 = vst [vmem:[%s172 + $0x60] sm:$0xff] %v530
      %563 = vst [vmem:[%s172 + $0x68] sm:$0xff] %v531
      %564 = vst [vmem:[%s172 + $0x70] sm:$0xff] %v532
      %565 = vst [vmem:[%s172 + $0x78] sm:$0xff] %v533
      %566 = vst [vmem:[%s172 + $0x80] sm:$0xff] %v534
      %567 = vst [vmem:[%s172 + $0x88] sm:$0xff] %v535
      %568 = vst [vmem:[%s172 + $0x90] sm:$0xff] %v536
      %569 = vst [vmem:[%s172 + $0x98] sm:$0xff] %v537
      %570 = vst [vmem:[%s172 + $0xa0] sm:$0xff] %v538
      %571 = vst [vmem:[%s172 + $0xa8] sm:$0xff] %v539
      %572 = vst [vmem:[%s172 + $0xb0] sm:$0xff] %v540
      %573 = vst [vmem:[%s172 + $0xb8] sm:$0xff] %v541
      %574 = vst [vmem:[%s172 + $0xc0] sm:$0xff] %v542
      %575 = vst [vmem:[%s172 + $0xc8] sm:$0xff] %v543
      %576 = vst [vmem:[%s172 + $0xd0] sm:$0xff] %v544
      %577 = vst [vmem:[%s172 + $0xd8] sm:$0xff] %v545
      %578 = vst [vmem:[%s172 + $0xe0] sm:$0xff] %v546
      %579 = vst [vmem:[%s172 + $0xe8] sm:$0xff] %v547
      %580 = vst [vmem:[%s172 + $0xf0] sm:$0xff] %v548
      %581 = vst [vmem:[%s172 + $0xf8] sm:$0xff] %v549
      %s582 = smul.u32 32, %s14
      %p583 = scmp.lt.s32.totalorder %s582, 63
      %s584 = scalar_select %p583, %s582, 63
      %s585 = smul.addr %s584, 8
      %s586 = scalar_lea.vmem %s3, %s585
      // Predicated region
      $region33: #{_lambda_.15} parent=31 // pred_check
        %p587 = pneg %p100
      $region34: #{_lambda_.15} parent=31 // pred_check_branch
        %589 = sbr.rel (%p587) target = $region36
      $region35: #{_lambda_.15} parent=31 // pred_region
        %s590 = smul.u32 32, %s14
      $region36: #{_lambda_.15} parent=31 // pred_fallthru
        _
    $region32: #{_lambda_.15} parent=5 // pred_fallthru
      _
    %p591 = scmp.le.s32.totalorder 2, %s9
    // Predicated region
    $region37: #{_lambda_.15} parent=5 // pred_check
      %p592 = pneg %p591
    $region38: #{_lambda_.15} parent=5 // pred_check_branch
      %594 = sbr.rel (%p592) target = $region40
    $region39: #{_lambda_.15} parent=5 // pred_region
      %s595 = ssub.s32 %s9, 2
      // Predicated region
      $region41: #{_lambda_.15} parent=39 // pred_check
        %p596 = pneg %p106
      $region42: #{_lambda_.15} parent=39 // pred_check_branch
        %598 = sbr.rel (%p596) target = $region44
      $region43: #{_lambda_.15} parent=39 // pred_region
        %s599 = smul.u32 32, %s15
        %p600 = scmp.lt.s32.totalorder %s599, 63
        %s601 = scalar_select %p600, %s599, 63
        %s602 = smul.addr %s601, 8
        %s603 = scalar_lea.vmem %s3, %s602
      $region44: #{_lambda_.15} parent=39 // pred_fallthru
        _
    $region40: #{_lambda_.15} parent=5 // pred_fallthru
      _
  $region6: #{_lambda_.15} parent=0 // loop_footer
    %s13 = sadd.s32 1, %s9
  $region7: #{_lambda_.15} parent=0 // loop_footer_branch
    %8 = sbr.rel target = $region3
  $region8: #{_lambda_.15} parent=0 // loop_exit
    _

// kernel: _lambda_.11
$region0: #{_lambda_.11}
  #allocation0 [shape = 'u32[]', space=smem, size = 0x4, offset = 0x4, fixed_abs, tag = 'smem constant byte address 0x4 - core index']
  #allocation1 [shape = 'u32[144,128]{1,0:T(1,128)}', space=vmem, size = 0x12000, scoped, tag = 'internal scratch']
  %s0 = inlined_call_operand.vmem [shape: bf16[512,32], index: 0, kind: input, shape index: {}]
  %s1 = inlined_call_operand.vmem [shape: bf16[32,128], index: 1, kind: input, shape index: {}]
  %s2 = inlined_call_operand.vmem [shape: f32[1,128], index: 2, kind: input, shape index: {}]
  %s3 = inlined_call_operand.vmem [shape: f32[512,128], index: 3, kind: output, shape index: {}]
  %s4 = sld [smem:[#allocation0]]
  $region45: #{_lambda_.11} parent=0
    _
  %s6 = ssub.s32 1, %s4
  %s7 = scalar_select 0, %s6, %s4
  loop: start=0, step=1, limit=4
  $region2: #{_lambda_.11} parent=0 // loop_pre_header
    _
  $region3: #{_lambda_.11} parent=0 // loop_header
    %s9 = sphi 0, %s13
    %p10 = scmp.ge.s32.totalorder %s9, 4
    %s19 = sphi 0, %s21
    %s22 = sphi 0, %s19
    %s23 = sphi 0, %s22
    %s39 = sphi 0, %s23
    %s43 = sphi 0, %s43
    %s45 = sphi 0, %s43
    %s46 = sphi 0, %s45
    %s60 = sphi 0, %s46
    %s64 = sphi 0, %s64
    %s66 = sphi 0, %s64
    %s67 = sphi 0, %s66
    %s81 = sphi 0, %s67
    %s87 = sphi 0, %s89
    %s90 = sphi 0, %s87
    %s91 = sphi 0, %s90
    %s107 = sphi 0, %s91
  $region4: #{_lambda_.11} parent=0 // loop_header_branch
    %12 = sbr.rel (%p10) target = $region8
  $region5: #{_lambda_.11} parent=0 // loop_body
    %s14 = ssub.s32 %s9, 1
    %s15 = ssub.s32 %s9, 2
    %s16 = sadd.s32 %s9, 1
    %s17 = ssub.s32 %s9, %s16
    %p18 = scmp.eq.s32.totalorder %s17, 0
    %s20 = sadd.s32 %s19, 1
    %s21 = scalar_select %p18, %s19, %s20
    %p24 = pneg %p18
    %p25 = scmp.eq.s32.totalorder %s9, 1
    %p26 = por %p24, %p25
    %p27 = scmp.ne.s32.totalorder %s19, %s22
    %p28 = scmp.eq.s32.totalorder %s9, 0
    %p29 = por %p27, %p28
    %p30 = scmp.ne.s32.totalorder %s19, %s22
    %p31 = scmp.eq.s32.totalorder %s14, 1
    %p32 = por %p30, %p31
    %p33 = scmp.ne.s32.totalorder %s22, %s23
    %p34 = scmp.eq.s32.totalorder %s14, 0
    %p35 = por %p33, %p34
    %p36 = scmp.ne.s32.totalorder %s22, %s23
    %p37 = scmp.eq.s32.totalorder %s15, 1
    %p38 = por %p36, %p37
    %p40 = scmp.ne.s32.totalorder %s23, %s39
    %p41 = scmp.eq.s32.totalorder %s15, 0
    %p42 = por %p40, %p41
    %s44 = sadd.s32 %s43, 1
    %p47 = scmp.eq.s32.totalorder %s9, 1
    %p48 = scmp.ne.s32.totalorder %s43, %s45
    %p49 = scmp.eq.s32.totalorder %s9, 0
    %p50 = por %p48, %p49
    %p51 = scmp.ne.s32.totalorder %s43, %s45
    %p52 = scmp.eq.s32.totalorder %s14, 1
    %p53 = por %p51, %p52
    %p54 = scmp.ne.s32.totalorder %s45, %s46
    %p55 = scmp.eq.s32.totalorder %s14, 0
    %p56 = por %p54, %p55
    %p57 = scmp.ne.s32.totalorder %s45, %s46
    %p58 = scmp.eq.s32.totalorder %s15, 1
    %p59 = por %p57, %p58
    %p61 = scmp.ne.s32.totalorder %s46, %s60
    %p62 = scmp.eq.s32.totalorder %s15, 0
    %p63 = por %p61, %p62
    %s65 = sadd.s32 %s64, 1
    %p68 = scmp.eq.s32.totalorder %s9, 1
    %p69 = scmp.ne.s32.totalorder %s64, %s66
    %p70 = scmp.eq.s32.totalorder %s9, 0
    %p71 = por %p69, %p70
    %p72 = scmp.ne.s32.totalorder %s64, %s66
    %p73 = scmp.eq.s32.totalorder %s14, 1
    %p74 = por %p72, %p73
    %p75 = scmp.ne.s32.totalorder %s66, %s67
    %p76 = scmp.eq.s32.totalorder %s14, 0
    %p77 = por %p75, %p76
    %p78 = scmp.ne.s32.totalorder %s66, %s67
    %p79 = scmp.eq.s32.totalorder %s15, 1
    %p80 = por %p78, %p79
    %p82 = scmp.ne.s32.totalorder %s67, %s81
    %p83 = scmp.eq.s32.totalorder %s15, 0
    %p84 = por %p82, %p83
    %s85 = ssub.s32 %s9, %s16
    %p86 = scmp.eq.s32.totalorder %s85, 0
    %s88 = sadd.s32 %s87, 1
    %s89 = scalar_select %p86, %s87, %s88
    %p92 = pneg %p86
    %p93 = scmp.eq.s32.totalorder %s9, 1
    %p94 = por %p92, %p93
    %p95 = scmp.ne.s32.totalorder %s87, %s90
    %p96 = scmp.eq.s32.totalorder %s9, 0
    %p97 = por %p95, %p96
    %p98 = scmp.ne.s32.totalorder %s87, %s90
    %p99 = scmp.eq.s32.totalorder %s14, 1
    %p100 = por %p98, %p99
    %p101 = scmp.ne.s32.totalorder %s90, %s91
    %p102 = scmp.eq.s32.totalorder %s14, 0
    %p103 = por %p101, %p102
    %p104 = scmp.ne.s32.totalorder %s90, %s91
    %p105 = scmp.eq.s32.totalorder %s15, 1
    %p106 = por %p104, %p105
    %p108 = scmp.ne.s32.totalorder %s91, %s107
    %p109 = scmp.eq.s32.totalorder %s15, 0
    %p110 = por %p108, %p109
    %p111 = scmp.le.s32.totalorder 1, %s9
    %p112 = scmp.lt.s32.totalorder %s9, 3
    %p113 = pnand %p111, %p112
    %p114 = pneg %p113
    // Predicated region
    $region9: #{_lambda_.11} parent=5 // pred_check
      _
    $region10: #{_lambda_.11} parent=5 // pred_check_branch
      %116 = sbr.rel (%p113) target = $region12
    $region11: #{_lambda_.11} parent=5 // pred_region
      %s117 = ssub.s32 %s9, 1
      // Predicated region
      $region13: #{_lambda_.11} parent=11 // pred_check
        %p118 = pneg %p56
      $region14: #{_lambda_.11} parent=11 // pred_check_branch
        %120 = sbr.rel (%p118) target = $region16
      $region15: #{_lambda_.11} parent=11 // pred_region
        _
      $region16: #{_lambda_.11} parent=11 // pred_fallthru
        _
      // Predicated region
      $region17: #{_lambda_.11} parent=11 // pred_check
        %p121 = pneg %p77
      $region18: #{_lambda_.11} parent=11 // pred_check_branch
        %123 = sbr.rel (%p121) target = $region20
      $region19: #{_lambda_.11} parent=11 // pred_region
        _
      $region20: #{_lambda_.11} parent=11 // pred_fallthru
        _
    $region12: #{_lambda_.11} parent=5 // pred_fallthru
      _
    %p124 = scmp.lt.s32.totalorder %s9, 2
    // Predicated region
    $region21: #{_lambda_.11} parent=5 // pred_check
      %p125 = pneg %p124
    $region22: #{_lambda_.11} parent=5 // pred_check_branch
      %127 = sbr.rel (%p125) target = $region24
    $region23: #{_lambda_.11} parent=5 // pred_region
      // Predicated region
      $region25: #{_lambda_.11} parent=23 // pred_check
        %p128 = pneg %p29
      $region26: #{_lambda_.11} parent=23 // pred_check_branch
        %130 = sbr.rel (%p128) target = $region28
      $region27: #{_lambda_.11} parent=23 // pred_region
        %s131 = smul.u32 32, %s9
        %p132 = scmp.lt.s32.totalorder %s131, 63
        %s133 = scalar_select %p132, %s131, 63
        %s134 = smul.addr %s133, 4
        %s135 = scalar_lea.vmem %s0, %s134
        %s136 = smul.u32 32, %s9
      $region28: #{_lambda_.11} parent=23 // pred_fallthru
        _
    $region24: #{_lambda_.11} parent=5 // pred_fallthru
      _
    %p137 = scmp.le.s32.totalorder 1, %s9
    %p138 = scmp.lt.s32.totalorder %s9, 3
    %p139 = pnand %p137, %p138
    %p140 = pneg %p139
    // Predicated region
    $region29: #{_lambda_.11} parent=5 // pred_check
      _
    $region30: #{_lambda_.11} parent=5 // pred_check_branch
      %142 = sbr.rel (%p139) target = $region32
    $region31: #{_lambda_.11} parent=5 // pred_region
      %s143 = ssub.s32 %s9, 1
      %s144 = smul.u32 32, %s14
      %p145 = scmp.lt.s32.totalorder %s144, 63
      %s146 = scalar_select %p145, %s144, 63
      %s147 = smul.addr %s146, 4
      %s148 = scalar_lea.vmem %s0, %s147
      %p149 = pneg %p35
      %p150 = pneg %p32
      %p151 = pneg %p56
      %p152 = pneg %p53
      %p153 = pneg %p77
      %p154 = pneg %p74
      %p155 = pneg %p103
      %p156 = pneg %p100
      %s157 = smul.u32 32, %s14
      %p158 = scmp.lt.s32.totalorder %s157, 63
      %s159 = scalar_select %p158, %s157, 63
      %s160 = smul.addr %s159, 8
      %s161 = scalar_lea.vmem %s3, %s160
      %s162 = smul.u32 32, %s14
      %p163 = scmp.lt.s32.totalorder %s162, 63
      %s164 = scalar_select %p163, %s162, 63
      %s165 = smul.addr %s164, 4
      %s166 = scalar_lea.vmem %s0, %s165
      %s167 = smul.u32 32, %s14
      %s168 = smul.u32 32, %s14
      %p169 = scmp.lt.s32.totalorder %s168, 63
      %s170 = scalar_select %p169, %s168, 63
      %s171 = smul.addr %s170, 8
      %s172 = scalar_lea.vmem %s3, %s171
      %s173 = smul.u32 32, %s14
      %v175 = vld [vmem:[%s166] sm:$0xf]
      %v176 = vld [vmem:[%s166 + $0x4] sm:$0xf]
      %v177 = vld [vmem:[%s166 + $0x8] sm:$0xf]
      %v178 = vld [vmem:[%s166 + $0xc] sm:$0xf]
      %v179 = vld [vmem:[%s166 + $0x10] sm:$0xf]
      %v180 = vld [vmem:[%s166 + $0x14] sm:$0xf]
      %v181 = vld [vmem:[%s166 + $0x18] sm:$0xf]
      %v182 = vld [vmem:[%s166 + $0x1c] sm:$0xf]
      %v183 = vld [vmem:[%s166 + $0x20] sm:$0xf]
      %v184 = vld [vmem:[%s166 + $0x24] sm:$0xf]
      %v185 = vld [vmem:[%s166 + $0x28] sm:$0xf]
      %v186 = vld [vmem:[%s166 + $0x2c] sm:$0xf]
      %v187 = vld [vmem:[%s166 + $0x30] sm:$0xf]
      %v188 = vld [vmem:[%s166 + $0x34] sm:$0xf]
      %v189 = vld [vmem:[%s166 + $0x38] sm:$0xf]
      %v190 = vld [vmem:[%s166 + $0x3c] sm:$0xf]
      %v191 = vld [vmem:[%s166 + $0x40] sm:$0xf]
      %v192 = vld [vmem:[%s166 + $0x44] sm:$0xf]
      %v193 = vld [vmem:[%s166 + $0x48] sm:$0xf]
      %v194 = vld [vmem:[%s166 + $0x4c] sm:$0xf]
      %v195 = vld [vmem:[%s166 + $0x50] sm:$0xf]
      %v196 = vld [vmem:[%s166 + $0x54] sm:$0xf]
      %v197 = vld [vmem:[%s166 + $0x58] sm:$0xf]
      %v198 = vld [vmem:[%s166 + $0x5c] sm:$0xf]
      %v199 = vld [vmem:[%s166 + $0x60] sm:$0xf]
      %v200 = vld [vmem:[%s166 + $0x64] sm:$0xf]
      %v201 = vld [vmem:[%s166 + $0x68] sm:$0xf]
      %v202 = vld [vmem:[%s166 + $0x6c] sm:$0xf]
      %v203 = vld [vmem:[%s166 + $0x70] sm:$0xf]
      %v204 = vld [vmem:[%s166 + $0x74] sm:$0xf]
      %v205 = vld [vmem:[%s166 + $0x78] sm:$0xf]
      %v206 = vld [vmem:[%s166 + $0x7c] sm:$0xf]
      %v207 = vld [vmem:[%s1] sm:$0xf]
      %v208 = vld [vmem:[%s1 + $0x4] sm:$0xf]
      %v209 = vld [vmem:[%s1 + $0x8] sm:$0xf]
      %v210 = vld [vmem:[%s1 + $0xc] sm:$0xf]
      %v211 = vld [vmem:[%s2] sm:$0x1]
      %v213 = vlaneseq
      %v214 = vshrl.u32 %v213, 7
      %v215 = vsub.s32 0, %v214
      %v216 = vrot.slane %v211, %v215
      %v250 = vunpack.c.l.b16 %v175
      %v251 = vunpack.c.l.b16 %v176
      %v252 = vunpack.c.l.b16 %v177
      %v253 = vunpack.c.l.b16 %v178
      %v254 = vunpack.c.l.b16 %v179
      %v255 = vunpack.c.l.b16 %v180
      %v256 = vunpack.c.l.b16 %v181
      %v257 = vunpack.c.l.b16 %v182
      %v258 = vunpack.c.l.b16 %v183
      %v259 = vunpack.c.l.b16 %v184
      %v260 = vunpack.c.l.b16 %v185
      %v261 = vunpack.c.l.b16 %v186
      %v262 = vunpack.c.l.b16 %v187
      %v263 = vunpack.c.l.b16 %v188
      %v264 = vunpack.c.l.b16 %v189
      %v265 = vunpack.c.l.b16 %v190
      %v266 = vunpack.c.l.b16 %v191
      %v267 = vunpack.c.l.b16 %v192
      %v268 = vunpack.c.l.b16 %v193
      %v269 = vunpack.c.l.b16 %v194
      %v270 = vunpack.c.l.b16 %v195
      %v271 = vunpack.c.l.b16 %v196
      %v272 = vunpack.c.l.b16 %v197
      %v273 = vunpack.c.l.b16 %v198
      %v274 = vunpack.c.l.b16 %v199
      %v275 = vunpack.c.l.b16 %v200
      %v276 = vunpack.c.l.b16 %v201
      %v277 = vunpack.c.l.b16 %v202
      %v278 = vunpack.c.l.b16 %v203
      %v279 = vunpack.c.l.b16 %v204
      %v280 = vunpack.c.l.b16 %v205
      %v281 = vunpack.c.l.b16 %v206
      %v282 = vpack.c.b16 %v251, %v250
      %v283 = vpack.c.b16 %v253, %v252
      %v284 = vpack.c.b16 %v255, %v254
      %v285 = vpack.c.b16 %v257, %v256
      %v286 = vpack.c.b16 %v259, %v258
      %v287 = vpack.c.b16 %v261, %v260
      %v288 = vpack.c.b16 %v263, %v262
      %v289 = vpack.c.b16 %v265, %v264
      %v290 = vpack.c.b16 %v267, %v266
      %v291 = vpack.c.b16 %v269, %v268
      %v292 = vpack.c.b16 %v271, %v270
      %v293 = vpack.c.b16 %v273, %v272
      %v294 = vpack.c.b16 %v275, %v274
      %v295 = vpack.c.b16 %v277, %v276
      %v296 = vpack.c.b16 %v279, %v278
      %v297 = vpack.c.b16 %v281, %v280
      %v302 = vunpack.c.l.b16 %v207
      %v303 = vunpack.c.l.b16 %v208
      %v304 = vunpack.c.l.b16 %v209
      %v305 = vunpack.c.l.b16 %v210
      %v306 = vpack.c.b16 %v303, %v302
      %v307 = vpack.c.b16 %v305, %v304
      %vm310 = vcmask 261120
      %v312 = vsel %vm310, %v282, 0
      %v315 = vsel %vm310, %v283, 0
      %v318 = vsel %vm310, %v284, 0
      %v321 = vsel %vm310, %v285, 0
      %v324 = vsel %vm310, %v286, 0
      %v327 = vsel %vm310, %v287, 0
      %v330 = vsel %vm310, %v288, 0
      %v333 = vsel %vm310, %v289, 0
      %v336 = vsel %vm310, %v290, 0
      %v339 = vsel %vm310, %v291, 0
      %v342 = vsel %vm310, %v292, 0
      %v345 = vsel %vm310, %v293, 0
      %v348 = vsel %vm310, %v294, 0
      %v351 = vsel %vm310, %v295, 0
      %v354 = vsel %vm310, %v296, 0
      %v357 = vsel %vm310, %v297, 0
      %359 = vmatprep.subr.bf16.mxu0 0
      %360 = vmatpush1.bf16.msra.mxu0 %v306
      %361 = vmatprep.subr.bf16.mxu0 0
      %362 = vmatpush1.bf16.msra.mxu0 %v307
      %363 = vmatprep.subr.bf16.mxu0 0
      %364 = vmatpush1.bf16.msra.mxu0 0
      %365 = vmatprep.subr.bf16.mxu0 0
      %366 = vmatpush1.bf16.msra.mxu0 0
      %367 = vmatprep.subr.bf16.mxu0 0
      %368 = vmatpush1.bf16.msra.mxu0 0
      %369 = vmatprep.subr.bf16.mxu0 0
      %370 = vmatpush1.bf16.msra.mxu0 0
      %371 = vmatprep.subr.bf16.mxu0 0
      %372 = vmatpush1.bf16.msra.mxu0 0
      %373 = vmatprep.subr.bf16.mxu0 0
      %374 = vmatpush1.bf16.msra.mxu0 0
      %375 = vmatprep.subr.bf16.mxu0 0
      %376 = vmatpush1.bf16.msra.mxu0 0
      %377 = vmatprep.subr.bf16.mxu0 0
      %378 = vmatpush1.bf16.msra.mxu0 0
      %379 = vmatprep.subr.bf16.mxu0 0
      %380 = vmatpush1.bf16.msra.mxu0 0
      %381 = vmatprep.subr.bf16.mxu0 0
      %382 = vmatpush1.bf16.msra.mxu0 0
      %383 = vmatprep.subr.bf16.mxu0 0
      %384 = vmatpush1.bf16.msra.mxu0 0
      %385 = vmatprep.subr.bf16.mxu0 0
      %386 = vmatpush1.bf16.msra.mxu0 0
      %387 = vmatprep.subr.bf16.mxu0 0
      %388 = vmatpush1.bf16.msra.mxu0 0
      %389 = vmatprep.subr.bf16.mxu0 0
      %390 = vmatpush1.bf16.msra.mxu0 0
      %391 = vmatprep.mubr.bf16.mxu0 0
      %392 = vmatmul.mubr.bf16.gmra.mrb[0].mxu0 %v312
      %v393 = vpop.f32.mrb[0].mxu0
      %v394 = vadd.f32 %v216, %v393
      %v395 = vpop.f32.mrb[0].mxu0
      %v396 = vpop.f32.mrb[0].mxu0
      %v397 = vadd.f32 %v216, %v396
      %v398 = vpop.f32.mrb[0].mxu0
      %399 = vmatprep.mubr.bf16.mxu0 0
      %400 = vmatmul.mubr.bf16.gmra.mrb[0].mxu0 %v315
      %v401 = vpop.f32.mrb[0].mxu0
      %v402 = vadd.f32 %v216, %v401
      %v403 = vpop.f32.mrb[0].mxu0
      %v404 = vpop.f32.mrb[0].mxu0
      %v405 = vadd.f32 %v216, %v404
      %v406 = vpop.f32.mrb[0].mxu0
      %407 = vmatprep.mubr.bf16.mxu0 0
      %408 = vmatmul.mubr.bf16.gmra.mrb[0].mxu0 %v318
      %v409 = vpop.f32.mrb[0].mxu0
      %v410 = vadd.f32 %v216, %v409
      %v411 = vpop.f32.mrb[0].mxu0
      %v412 = vpop.f32.mrb[0].mxu0
      %v413 = vadd.f32 %v216, %v412
      %v414 = vpop.f32.mrb[0].mxu0
      %415 = vmatprep.mubr.bf16.mxu0 0
      %416 = vmatmul.mubr.bf16.gmra.mrb[0].mxu0 %v321
      %v417 = vpop.f32.mrb[0].mxu0
      %v418 = vadd.f32 %v216, %v417
      %v419 = vpop.f32.mrb[0].mxu0
      %v420 = vpop.f32.mrb[0].mxu0
      %v421 = vadd.f32 %v216, %v420
      %v422 = vpop.f32.mrb[0].mxu0
      %423 = vmatprep.mubr.bf16.mxu0 0
      %424 = vmatmul.mubr.bf16.gmra.mrb[0].mxu0 %v324
      %v425 = vpop.f32.mrb[0].mxu0
      %v426 = vadd.f32 %v216, %v425
      %v427 = vpop.f32.mrb[0].mxu0
      %v428 = vpop.f32.mrb[0].mxu0
      %v429 = vadd.f32 %v216, %v428
      %v430 = vpop.f32.mrb[0].mxu0
      %431 = vmatprep.mubr.bf16.mxu0 0
      %432 = vmatmul.mubr.bf16.gmra.mrb[0].mxu0 %v327
      %v433 = vpop.f32.mrb[0].mxu0
      %v434 = vadd.f32 %v216, %v433
      %v435 = vpop.f32.mrb[0].mxu0
      %v436 = vpop.f32.mrb[0].mxu0
      %v437 = vadd.f32 %v216, %v436
      %v438 = vpop.f32.mrb[0].mxu0
      %439 = vmatprep.mubr.bf16.mxu0 0
      %440 = vmatmul.mubr.bf16.gmra.mrb[0].mxu0 %v330
      %v441 = vpop.f32.mrb[0].mxu0
      %v442 = vadd.f32 %v216, %v441
      %v443 = vpop.f32.mrb[0].mxu0
      %v444 = vpop.f32.mrb[0].mxu0
      %v445 = vadd.f32 %v216, %v444
      %v446 = vpop.f32.mrb[0].mxu0
      %447 = vmatprep.mubr.bf16.mxu0 0
      %448 = vmatmul.mubr.bf16.gmra.mrb[0].mxu0 %v333
      %v449 = vpop.f32.mrb[0].mxu0
      %v450 = vadd.f32 %v216, %v449
      %v451 = vpop.f32.mrb[0].mxu0
      %v452 = vpop.f32.mrb[0].mxu0
      %v453 = vadd.f32 %v216, %v452
      %v454 = vpop.f32.mrb[0].mxu0
      %455 = vmatprep.mubr.bf16.mxu0 0
      %456 = vmatmul.mubr.bf16.gmra.mrb[0].mxu0 %v336
      %v457 = vpop.f32.mrb[0].mxu0
      %v458 = vadd.f32 %v216, %v457
      %v459 = vpop.f32.mrb[0].mxu0
      %v460 = vpop.f32.mrb[0].mxu0
      %v461 = vadd.f32 %v216, %v460
      %v462 = vpop.f32.mrb[0].mxu0
      %463 = vmatprep.mubr.bf16.mxu0 0
      %464 = vmatmul.mubr.bf16.gmra.mrb[0].mxu0 %v339
      %v465 = vpop.f32.mrb[0].mxu0
      %v466 = vadd.f32 %v216, %v465
      %v467 = vpop.f32.mrb[0].mxu0
      %v468 = vpop.f32.mrb[0].mxu0
      %v469 = vadd.f32 %v216, %v468
      %v470 = vpop.f32.mrb[0].mxu0
      %471 = vmatprep.mubr.bf16.mxu0 0
      %472 = vmatmul.mubr.bf16.gmra.mrb[0].mxu0 %v342
      %v473 = vpop.f32.mrb[0].mxu0
      %v474 = vadd.f32 %v216, %v473
      %v475 = vpop.f32.mrb[0].mxu0
      %v476 = vpop.f32.mrb[0].mxu0
      %v477 = vadd.f32 %v216, %v476
      %v478 = vpop.f32.mrb[0].mxu0
      %479 = vmatprep.mubr.bf16.mxu0 0
      %480 = vmatmul.mubr.bf16.gmra.mrb[0].mxu0 %v345
      %v481 = vpop.f32.mrb[0].mxu0
      %v482 = vadd.f32 %v216, %v481
      %v483 = vpop.f32.mrb[0].mxu0
      %v484 = vpop.f32.mrb[0].mxu0
      %v485 = vadd.f32 %v216, %v484
      %v486 = vpop.f32.mrb[0].mxu0
      %487 = vmatprep.mubr.bf16.mxu0 0
      %488 = vmatmul.mubr.bf16.gmra.mrb[0].mxu0 %v348
      %v489 = vpop.f32.mrb[0].mxu0
      %v490 = vadd.f32 %v216, %v489
      %v491 = vpop.f32.mrb[0].mxu0
      %v492 = vpop.f32.mrb[0].mxu0
      %v493 = vadd.f32 %v216, %v492
      %v494 = vpop.f32.mrb[0].mxu0
      %495 = vmatprep.mubr.bf16.mxu0 0
      %496 = vmatmul.mubr.bf16.gmra.mrb[0].mxu0 %v351
      %v497 = vpop.f32.mrb[0].mxu0
      %v498 = vadd.f32 %v216, %v497
      %v499 = vpop.f32.mrb[0].mxu0
      %v500 = vpop.f32.mrb[0].mxu0
      %v501 = vadd.f32 %v216, %v500
      %v502 = vpop.f32.mrb[0].mxu0
      %503 = vmatprep.mubr.bf16.mxu0 0
      %504 = vmatmul.mubr.bf16.gmra.mrb[0].mxu0 %v354
      %v505 = vpop.f32.mrb[0].mxu0
      %v506 = vadd.f32 %v216, %v505
      %v507 = vpop.f32.mrb[0].mxu0
      %v508 = vpop.f32.mrb[0].mxu0
      %v509 = vadd.f32 %v216, %v508
      %v510 = vpop.f32.mrb[0].mxu0
      %511 = vmatprep.mubr.bf16.mxu0 0
      %512 = vmatmul.mubr.bf16.gmra.mrb[0].mxu0 %v357
      %v513 = vpop.f32.mrb[0].mxu0
      %v514 = vadd.f32 %v216, %v513
      %v515 = vpop.f32.mrb[0].mxu0
      %v516 = vpop.f32.mrb[0].mxu0
      %v517 = vadd.f32 %v216, %v516
      %v518 = vpop.f32.mrb[0].mxu0
      %519 = vdwg.mxu0
      %520 = vst [vmem:[%s172] sm:$0xff] %v394
      %521 = vst [vmem:[%s172 + $0x8] sm:$0xff] %v397
      %522 = vst [vmem:[%s172 + $0x10] sm:$0xff] %v402
      %523 = vst [vmem:[%s172 + $0x18] sm:$0xff] %v405
      %524 = vst [vmem:[%s172 + $0x20] sm:$0xff] %v410
      %525 = vst [vmem:[%s172 + $0x28] sm:$0xff] %v413
      %526 = vst [vmem:[%s172 + $0x30] sm:$0xff] %v418
      %527 = vst [vmem:[%s172 + $0x38] sm:$0xff] %v421
      %528 = vst [vmem:[%s172 + $0x40] sm:$0xff] %v426
      %529 = vst [vmem:[%s172 + $0x48] sm:$0xff] %v429
      %530 = vst [vmem:[%s172 + $0x50] sm:$0xff] %v434
      %531 = vst [vmem:[%s172 + $0x58] sm:$0xff] %v437
      %532 = vst [vmem:[%s172 + $0x60] sm:$0xff] %v442
      %533 = vst [vmem:[%s172 + $0x68] sm:$0xff] %v445
      %534 = vst [vmem:[%s172 + $0x70] sm:$0xff] %v450
      %535 = vst [vmem:[%s172 + $0x78] sm:$0xff] %v453
      %536 = vst [vmem:[%s172 + $0x80] sm:$0xff] %v458
      %537 = vst [vmem:[%s172 + $0x88] sm:$0xff] %v461
      %538 = vst [vmem:[%s172 + $0x90] sm:$0xff] %v466
      %539 = vst [vmem:[%s172 + $0x98] sm:$0xff] %v469
      %540 = vst [vmem:[%s172 + $0xa0] sm:$0xff] %v474
      %541 = vst [vmem:[%s172 + $0xa8] sm:$0xff] %v477
      %542 = vst [vmem:[%s172 + $0xb0] sm:$0xff] %v482
      %543 = vst [vmem:[%s172 + $0xb8] sm:$0xff] %v485
      %544 = vst [vmem:[%s172 + $0xc0] sm:$0xff] %v490
      %545 = vst [vmem:[%s172 + $0xc8] sm:$0xff] %v493
      %546 = vst [vmem:[%s172 + $0xd0] sm:$0xff] %v498
      %547 = vst [vmem:[%s172 + $0xd8] sm:$0xff] %v501
      %548 = vst [vmem:[%s172 + $0xe0] sm:$0xff] %v506
      %549 = vst [vmem:[%s172 + $0xe8] sm:$0xff] %v509
      %550 = vst [vmem:[%s172 + $0xf0] sm:$0xff] %v514
      %551 = vst [vmem:[%s172 + $0xf8] sm:$0xff] %v517
      %s552 = smul.u32 32, %s14
      %p553 = scmp.lt.s32.totalorder %s552, 63
      %s554 = scalar_select %p553, %s552, 63
      %s555 = smul.addr %s554, 8
      %s556 = scalar_lea.vmem %s3, %s555
      // Predicated region
      $region33: #{_lambda_.11} parent=31 // pred_check
        %p557 = pneg %p100
      $region34: #{_lambda_.11} parent=31 // pred_check_branch
        %559 = sbr.rel (%p557) target = $region36
      $region35: #{_lambda_.11} parent=31 // pred_region
        %s560 = smul.u32 32, %s14
      $region36: #{_lambda_.11} parent=31 // pred_fallthru
        _
    $region32: #{_lambda_.11} parent=5 // pred_fallthru
      _
    %p561 = scmp.le.s32.totalorder 2, %s9
    // Predicated region
    $region37: #{_lambda_.11} parent=5 // pred_check
      %p562 = pneg %p561
    $region38: #{_lambda_.11} parent=5 // pred_check_branch
      %564 = sbr.rel (%p562) target = $region40
    $region39: #{_lambda_.11} parent=5 // pred_region
      %s565 = ssub.s32 %s9, 2
      // Predicated region
      $region41: #{_lambda_.11} parent=39 // pred_check
        %p566 = pneg %p106
      $region42: #{_lambda_.11} parent=39 // pred_check_branch
        %568 = sbr.rel (%p566) target = $region44
      $region43: #{_lambda_.11} parent=39 // pred_region
        %s569 = smul.u32 32, %s15
        %p570 = scmp.lt.s32.totalorder %s569, 63
        %s571 = scalar_select %p570, %s569, 63
        %s572 = smul.addr %s571, 8
        %s573 = scalar_lea.vmem %s3, %s572
      $region44: #{_lambda_.11} parent=39 // pred_fallthru
        _
    $region40: #{_lambda_.11} parent=5 // pred_fallthru
      _
  $region6: #{_lambda_.11} parent=0 // loop_footer
    %s13 = sadd.s32 1, %s9
  $region7: #{_lambda_.11} parent=0 // loop_footer_branch
    %8 = sbr.rel target = $region3
  $region8: #{_lambda_.11} parent=0 // loop_exit
    _

// kernel: _lambda_.17
$region0: #{_lambda_.17}
  #allocation0 [shape = 'u32[]', space=smem, size = 0x4, offset = 0x4, fixed_abs, tag = 'smem constant byte address 0x4 - core index']
  #allocation1 [shape = 'u32[144,128]{1,0:T(1,128)}', space=vmem, size = 0x12000, scoped, tag = 'internal scratch']
  %s0 = inlined_call_operand.vmem [shape: bf16[512,288], index: 0, kind: input, shape index: {}]
  %s1 = inlined_call_operand.vmem [shape: bf16[288,128], index: 1, kind: input, shape index: {}]
  %s2 = inlined_call_operand.vmem [shape: f32[1,128], index: 2, kind: input, shape index: {}]
  %s3 = inlined_call_operand.vmem [shape: f32[512,128], index: 3, kind: input, shape index: {}]
  %s4 = inlined_call_operand.hbm [shape: f32[512,128], index: 4, kind: output, shape index: {}]
  %s5 = sld [smem:[#allocation0]]
  $region49: #{_lambda_.17} parent=0
    _
  %s7 = ssub.s32 1, %s5
  %s8 = scalar_select 0, %s7, %s5
  $region1: #{_lambda_.17} parent=0
    #allocation2 [shape = 'u8[262144]{0}', space=vmem, size = 0x40000, scoped, tag = 'output window, operand 0']
    #allocation3 [shape = 's32[2]{0}', space=sflag, size = 0x8, scoped, tag = 'scoped memory for _lambda_.17']
    %9 = vsyncpa [#allocation3], 0
    %s10 = scalar_lea.sflag [#allocation3], 1
    %11 = vsyncpa %s10, 0
    loop: start=0, step=1, limit=4
    $region2: #{_lambda_.17} parent=1 // loop_pre_header
      _
    $region3: #{_lambda_.17} parent=1 // loop_header
      %s13 = sphi 0, %s17
      %p14 = scmp.ge.s32.totalorder %s13, 4
      %s23 = sphi 0, %s25
      %s26 = sphi 0, %s23
      %s27 = sphi 0, %s26
      %s43 = sphi 0, %s27
      %s47 = sphi 0, %s47
      %s49 = sphi 0, %s47
      %s50 = sphi 0, %s49
      %s64 = sphi 0, %s50
      %s68 = sphi 0, %s68
      %s70 = sphi 0, %s68
      %s71 = sphi 0, %s70
      %s85 = sphi 0, %s71
      %s91 = sphi 0, %s93
      %s94 = sphi 0, %s91
      %s95 = sphi 0, %s94
      %s111 = sphi 0, %s95
      %s117 = sphi 0, %s119
      %s120 = sphi 0, %s117
      %s121 = sphi 0, %s120
      %s137 = sphi 0, %s121
    $region4: #{_lambda_.17} parent=1 // loop_header_branch
      %16 = sbr.rel (%p14) target = $region8
    $region5: #{_lambda_.17} parent=1 // loop_body
      %s18 = ssub.s32 %s13, 1
      %s19 = ssub.s32 %s13, 2
      %s20 = sadd.s32 %s13, 1
      %s21 = ssub.s32 %s13, %s20
      %p22 = scmp.eq.s32.totalorder %s21, 0
      %s24 = sadd.s32 %s23, 1
      %s25 = scalar_select %p22, %s23, %s24
      %p28 = pneg %p22
      %p29 = scmp.eq.s32.totalorder %s13, 1
      %p30 = por %p28, %p29
      %p31 = scmp.ne.s32.totalorder %s23, %s26
      %p32 = scmp.eq.s32.totalorder %s13, 0
      %p33 = por %p31, %p32
      %p34 = scmp.ne.s32.totalorder %s23, %s26
      %p35 = scmp.eq.s32.totalorder %s18, 1
      %p36 = por %p34, %p35
      %p37 = scmp.ne.s32.totalorder %s26, %s27
      %p38 = scmp.eq.s32.totalorder %s18, 0
      %p39 = por %p37, %p38
      %p40 = scmp.ne.s32.totalorder %s26, %s27
      %p41 = scmp.eq.s32.totalorder %s19, 1
      %p42 = por %p40, %p41
      %p44 = scmp.ne.s32.totalorder %s27, %s43
      %p45 = scmp.eq.s32.totalorder %s19, 0
      %p46 = por %p44, %p45
      %s48 = sadd.s32 %s47, 1
      %p51 = scmp.eq.s32.totalorder %s13, 1
      %p52 = scmp.ne.s32.totalorder %s47, %s49
      %p53 = scmp.eq.s32.totalorder %s13, 0
      %p54 = por %p52, %p53
      %p55 = scmp.ne.s32.totalorder %s47, %s49
      %p56 = scmp.eq.s32.totalorder %s18, 1
      %p57 = por %p55, %p56
      %p58 = scmp.ne.s32.totalorder %s49, %s50
      %p59 = scmp.eq.s32.totalorder %s18, 0
      %p60 = por %p58, %p59
      %p61 = scmp.ne.s32.totalorder %s49, %s50
      %p62 = scmp.eq.s32.totalorder %s19, 1
      %p63 = por %p61, %p62
      %p65 = scmp.ne.s32.totalorder %s50, %s64
      %p66 = scmp.eq.s32.totalorder %s19, 0
      %p67 = por %p65, %p66
      %s69 = sadd.s32 %s68, 1
      %p72 = scmp.eq.s32.totalorder %s13, 1
      %p73 = scmp.ne.s32.totalorder %s68, %s70
      %p74 = scmp.eq.s32.totalorder %s13, 0
      %p75 = por %p73, %p74
      %p76 = scmp.ne.s32.totalorder %s68, %s70
      %p77 = scmp.eq.s32.totalorder %s18, 1
      %p78 = por %p76, %p77
      %p79 = scmp.ne.s32.totalorder %s70, %s71
      %p80 = scmp.eq.s32.totalorder %s18, 0
      %p81 = por %p79, %p80
      %p82 = scmp.ne.s32.totalorder %s70, %s71
      %p83 = scmp.eq.s32.totalorder %s19, 1
      %p84 = por %p82, %p83
      %p86 = scmp.ne.s32.totalorder %s71, %s85
      %p87 = scmp.eq.s32.totalorder %s19, 0
      %p88 = por %p86, %p87
      %s89 = ssub.s32 %s13, %s20
      %p90 = scmp.eq.s32.totalorder %s89, 0
      %s92 = sadd.s32 %s91, 1
      %s93 = scalar_select %p90, %s91, %s92
      %p96 = pneg %p90
      %p97 = scmp.eq.s32.totalorder %s13, 1
      %p98 = por %p96, %p97
      %p99 = scmp.ne.s32.totalorder %s91, %s94
      %p100 = scmp.eq.s32.totalorder %s13, 0
      %p101 = por %p99, %p100
      %p102 = scmp.ne.s32.totalorder %s91, %s94
      %p103 = scmp.eq.s32.totalorder %s18, 1
      %p104 = por %p102, %p103
      %p105 = scmp.ne.s32.totalorder %s94, %s95
      %p106 = scmp.eq.s32.totalorder %s18, 0
      %p107 = por %p105, %p106
      %p108 = scmp.ne.s32.totalorder %s94, %s95
      %p109 = scmp.eq.s32.totalorder %s19, 1
      %p110 = por %p108, %p109
      %p112 = scmp.ne.s32.totalorder %s95, %s111
      %p113 = scmp.eq.s32.totalorder %s19, 0
      %p114 = por %p112, %p113
      %s115 = ssub.s32 %s13, %s20
      %p116 = scmp.eq.s32.totalorder %s115, 0
      %s118 = sadd.s32 %s117, 1
      %s119 = scalar_select %p116, %s117, %s118
      %p122 = pneg %p116
      %p123 = scmp.eq.s32.totalorder %s13, 1
      %p124 = por %p122, %p123
      %p125 = scmp.ne.s32.totalorder %s117, %s120
      %p126 = scmp.eq.s32.totalorder %s13, 0
      %p127 = por %p125, %p126
      %p128 = scmp.ne.s32.totalorder %s117, %s120
      %p129 = scmp.eq.s32.totalorder %s18, 1
      %p130 = por %p128, %p129
      %p131 = scmp.ne.s32.totalorder %s120, %s121
      %p132 = scmp.eq.s32.totalorder %s18, 0
      %p133 = por %p131, %p132
      %p134 = scmp.ne.s32.totalorder %s120, %s121
      %p135 = scmp.eq.s32.totalorder %s19, 1
      %p136 = por %p134, %p135
      %p138 = scmp.ne.s32.totalorder %s121, %s137
      %p139 = scmp.eq.s32.totalorder %s19, 0
      %p140 = por %p138, %p139
      %p141 = scmp.le.s32.totalorder 1, %s13
      %p142 = scmp.lt.s32.totalorder %s13, 3
      %p143 = pnand %p141, %p142
      %p144 = pneg %p143
      // Predicated region
      $region9: #{_lambda_.17} parent=5 // pred_check
        _
      $region10: #{_lambda_.17} parent=5 // pred_check_branch
        %146 = sbr.rel (%p143) target = $region12
      $region11: #{_lambda_.17} parent=5 // pred_region
        %s147 = ssub.s32 %s13, 1
        // Predicated region
        $region13: #{_lambda_.17} parent=11 // pred_check
          %p148 = pneg %p60
        $region14: #{_lambda_.17} parent=11 // pred_check_branch
          %150 = sbr.rel (%p148) target = $region16
        $region15: #{_lambda_.17} parent=11 // pred_region
          _
        $region16: #{_lambda_.17} parent=11 // pred_fallthru
          _
        // Predicated region
        $region17: #{_lambda_.17} parent=11 // pred_check
          %p151 = pneg %p81
        $region18: #{_lambda_.17} parent=11 // pred_check_branch
          %153 = sbr.rel (%p151) target = $region20
        $region19: #{_lambda_.17} parent=11 // pred_region
          _
        $region20: #{_lambda_.17} parent=11 // pred_fallthru
          _
      $region12: #{_lambda_.17} parent=5 // pred_fallthru
        _
      %p154 = scmp.lt.s32.totalorder %s13, 2
      // Predicated region
      $region21: #{_lambda_.17} parent=5 // pred_check
        %p155 = pneg %p154
      $region22: #{_lambda_.17} parent=5 // pred_check_branch
        %157 = sbr.rel (%p155) target = $region24
      $region23: #{_lambda_.17} parent=5 // pred_region
        // Predicated region
        $region25: #{_lambda_.17} parent=23 // pred_check
          %p158 = pneg %p33
        $region26: #{_lambda_.17} parent=23 // pred_check_branch
          %160 = sbr.rel (%p158) target = $region28
        $region27: #{_lambda_.17} parent=23 // pred_region
          %s161 = smul.u32 32, %s13
          %p162 = scmp.lt.s32.totalorder %s161, 63
          %s163 = scalar_select %p162, %s161, 63
          %s164 = smul.addr %s163, 3
          %s165 = smul.addr %s164, 4
          %s166 = scalar_lea.vmem %s0, %s165
          %s167 = smul.u32 32, %s13
        $region28: #{_lambda_.17} parent=23 // pred_fallthru
          _
        // Predicated region
        $region29: #{_lambda_.17} parent=23 // pred_check
          %p168 = pneg %p101
        $region30: #{_lambda_.17} parent=23 // pred_check_branch
          %170 = sbr.rel (%p168) target = $region32
        $region31: #{_lambda_.17} parent=23 // pred_region
          %s171 = smul.u32 32, %s13
          %p172 = scmp.lt.s32.totalorder %s171, 63
          %s173 = scalar_select %p172, %s171, 63
          %s174 = smul.addr %s173, 8
          %s175 = scalar_lea.vmem %s3, %s174
          %s176 = smul.u32 32, %s13
        $region32: #{_lambda_.17} parent=23 // pred_fallthru
          _
      $region24: #{_lambda_.17} parent=5 // pred_fallthru
        _
      %p177 = scmp.le.s32.totalorder 1, %s13
      %p178 = scmp.lt.s32.totalorder %s13, 3
      %p179 = pnand %p177, %p178
      %p180 = pneg %p179
      // Predicated region
      $region33: #{_lambda_.17} parent=5 // pred_check
        _
      $region34: #{_lambda_.17} parent=5 // pred_check_branch
        %182 = sbr.rel (%p179) target = $region36
      $region35: #{_lambda_.17} parent=5 // pred_region
        %s183 = ssub.s32 %s13, 1
        %s184 = smul.u32 32, %s18
        %p185 = scmp.lt.s32.totalorder %s184, 63
        %s186 = scalar_select %p185, %s184, 63
        %s187 = smul.addr %s186, 3
        %s188 = smul.addr %s187, 4
        %s189 = scalar_lea.vmem %s0, %s188
        %p190 = pneg %p39
        %p191 = pneg %p36
        %p192 = pneg %p60
        %p193 = pneg %p57
        %p194 = pneg %p81
        %p195 = pneg %p78
        %s196 = smul.u32 32, %s18
        %p197 = scmp.lt.s32.totalorder %s196, 63
        %s198 = scalar_select %p197, %s196, 63
        %s199 = smul.addr %s198, 8
        %s200 = scalar_lea.vmem %s3, %s199
        %p201 = pneg %p107
        %p202 = pneg %p104
        %p203 = pneg %p133
        %p204 = pneg %p130
        %s205 = sand.u32 %s120, 1
        %s206 = scalar_lea.sflag [#allocation3], %s205
        %s207 = sand.u32 %s120, 1
        %s208 = smul.addr %s207, 256
        %s209 = scalar_lea.vmem [#allocation2], %s208
        %s210 = smul.u32 32, %s18
        %p211 = scmp.lt.s32.totalorder %s210, 63
        %s212 = scalar_select %p211, %s210, 63
        %s213 = smul.addr %s212, 3
        %s214 = smul.addr %s213, 4
        %s215 = scalar_lea.vmem %s0, %s214
        %s216 = smul.u32 32, %s18
        %s217 = smul.u32 32, %s18
        %p218 = scmp.lt.s32.totalorder %s217, 63
        %s219 = scalar_select %p218, %s217, 63
        %s220 = smul.addr %s219, 8
        %s221 = scalar_lea.vmem %s3, %s220
        %s222 = smul.u32 32, %s18
        %s223 = smul.u32 32, %s18
        %v225 = vld [vmem:[%s215] sm:$0xff]
        %v226 = vld [vmem:[%s215 + $0x8] sm:$0xf]
        %v227 = vld [vmem:[%s215 + $0xc] sm:$0xff]
        %v228 = vld [vmem:[%s215 + $0x14] sm:$0xf]
        %v229 = vld [vmem:[%s215 + $0x18] sm:$0xff]
        %v230 = vld [vmem:[%s215 + $0x20] sm:$0xf]
        %v231 = vld [vmem:[%s215 + $0x24] sm:$0xff]
        %v232 = vld [vmem:[%s215 + $0x2c] sm:$0xf]
        %v233 = vld [vmem:[%s215 + $0x30] sm:$0xff]
        %v234 = vld [vmem:[%s215 + $0x38] sm:$0xf]
        %v235 = vld [vmem:[%s215 + $0x3c] sm:$0xff]
        %v236 = vld [vmem:[%s215 + $0x44] sm:$0xf]
        %v237 = vld [vmem:[%s215 + $0x48] sm:$0xff]
        %v238 = vld [vmem:[%s215 + $0x50] sm:$0xf]
        %v239 = vld [vmem:[%s215 + $0x54] sm:$0xff]
        %v240 = vld [vmem:[%s215 + $0x5c] sm:$0xf]
        %v241 = vld [vmem:[%s215 + $0x60] sm:$0xff]
        %v242 = vld [vmem:[%s215 + $0x68] sm:$0xf]
        %v243 = vld [vmem:[%s215 + $0x6c] sm:$0xff]
        %v244 = vld [vmem:[%s215 + $0x74] sm:$0xf]
        %v245 = vld [vmem:[%s215 + $0x78] sm:$0xff]
        %v246 = vld [vmem:[%s215 + $0x80] sm:$0xf]
        %v247 = vld [vmem:[%s215 + $0x84] sm:$0xff]
        %v248 = vld [vmem:[%s215 + $0x8c] sm:$0xf]
        %v249 = vld [vmem:[%s215 + $0x90] sm:$0xff]
        %v250 = vld [vmem:[%s215 + $0x98] sm:$0xf]
        %v251 = vld [vmem:[%s215 + $0x9c] sm:$0xff]
        %v252 = vld [vmem:[%s215 + $0xa4] sm:$0xf]
        %v253 = vld [vmem:[%s215 + $0xa8] sm:$0xff]
        %v254 = vld [vmem:[%s215 + $0xb0] sm:$0xf]
        %v255 = vld [vmem:[%s215 + $0xb4] sm:$0xff]
        %v256 = vld [vmem:[%s215 + $0xbc] sm:$0xf]
        %v257 = vld [vmem:[%s215 + $0xc0] sm:$0xff]
        %v258 = vld [vmem:[%s215 + $0xc8] sm:$0xf]
        %v259 = vld [vmem:[%s215 + $0xcc] sm:$0xff]
        %v260 = vld [vmem:[%s215 + $0xd4] sm:$0xf]
        %v261 = vld [vmem:[%s215 + $0xd8] sm:$0xff]
        %v262 = vld [vmem:[%s215 + $0xe0] sm:$0xf]
        %v263 = vld [vmem:[%s215 + $0xe4] sm:$0xff]
        %v264 = vld [vmem:[%s215 + $0xec] sm:$0xf]
        %v265 = vld [vmem:[%s215 + $0xf0] sm:$0xff]
        %v266 = vld [vmem:[%s215 + $0xf8] sm:$0xf]
        %v267 = vld [vmem:[%s215 + $0xfc] sm:$0xff]
        %v268 = vld [vmem:[%s215 + $0x104] sm:$0xf]
        %v269 = vld [vmem:[%s215 + $0x108] sm:$0xff]
        %v270 = vld [vmem:[%s215 + $0x110] sm:$0xf]
        %v271 = vld [vmem:[%s215 + $0x114] sm:$0xff]
        %v272 = vld [vmem:[%s215 + $0x11c] sm:$0xf]
        %v273 = vld [vmem:[%s215 + $0x120] sm:$0xff]
        %v274 = vld [vmem:[%s215 + $0x128] sm:$0xf]
        %v275 = vld [vmem:[%s215 + $0x12c] sm:$0xff]
        %v276 = vld [vmem:[%s215 + $0x134] sm:$0xf]
        %v277 = vld [vmem:[%s215 + $0x138] sm:$0xff]
        %v278 = vld [vmem:[%s215 + $0x140] sm:$0xf]
        %v279 = vld [vmem:[%s215 + $0x144] sm:$0xff]
        %v280 = vld [vmem:[%s215 + $0x14c] sm:$0xf]
        %v281 = vld [vmem:[%s215 + $0x150] sm:$0xff]
        %v282 = vld [vmem:[%s215 + $0x158] sm:$0xf]
        %v283 = vld [vmem:[%s215 + $0x15c] sm:$0xff]
        %v284 = vld [vmem:[%s215 + $0x164] sm:$0xf]
        %v285 = vld [vmem:[%s215 + $0x168] sm:$0xff]
        %v286 = vld [vmem:[%s215 + $0x170] sm:$0xf]
        %v287 = vld [vmem:[%s215 + $0x174] sm:$0xff]
        %v288 = vld [vmem:[%s215 + $0x17c] sm:$0xf]
        %v289 = vld [vmem:[%s1] sm:$0xf]
        %v290 = vld [vmem:[%s1 + $0x4] sm:$0xf]
        %v291 = vld [vmem:[%s1 + $0x8] sm:$0xf]
        %v292 = vld [vmem:[%s1 + $0xc] sm:$0xf]
        %v293 = vld [vmem:[%s1 + $0x10] sm:$0xf]
        %v294 = vld [vmem:[%s1 + $0x14] sm:$0xf]
        %v295 = vld [vmem:[%s1 + $0x18] sm:$0xf]
        %v296 = vld [vmem:[%s1 + $0x1c] sm:$0xf]
        %v297 = vld [vmem:[%s1 + $0x20] sm:$0xf]
        %v298 = vld [vmem:[%s1 + $0x24] sm:$0xf]
        %v299 = vld [vmem:[%s1 + $0x28] sm:$0xf]
        %v300 = vld [vmem:[%s1 + $0x2c] sm:$0xf]
        %v301 = vld [vmem:[%s1 + $0x30] sm:$0xf]
        %v302 = vld [vmem:[%s1 + $0x34] sm:$0xf]
        %v303 = vld [vmem:[%s1 + $0x38] sm:$0xf]
        %v304 = vld [vmem:[%s1 + $0x3c] sm:$0xf]
        %v305 = vld [vmem:[%s1 + $0x40] sm:$0xf]
        %v306 = vld [vmem:[%s1 + $0x44] sm:$0xf]
        %v307 = vld [vmem:[%s1 + $0x48] sm:$0xf]
        %v308 = vld [vmem:[%s1 + $0x4c] sm:$0xf]
        %v309 = vld [vmem:[%s1 + $0x50] sm:$0xf]
        %v310 = vld [vmem:[%s1 + $0x54] sm:$0xf]
        %v311 = vld [vmem:[%s1 + $0x58] sm:$0xf]
        %v312 = vld [vmem:[%s1 + $0x5c] sm:$0xf]
        %v313 = vld [vmem:[%s1 + $0x60] sm:$0xf]
        %v314 = vld [vmem:[%s1 + $0x64] sm:$0xf]
        %v315 = vld [vmem:[%s1 + $0x68] sm:$0xf]
        %v316 = vld [vmem:[%s1 + $0x6c] sm:$0xf]
        %v317 = vld [vmem:[%s1 + $0x70] sm:$0xf]
        %v318 = vld [vmem:[%s1 + $0x74] sm:$0xf]
        %v319 = vld [vmem:[%s1 + $0x78] sm:$0xf]
        %v320 = vld [vmem:[%s1 + $0x7c] sm:$0xf]
        %v321 = vld [vmem:[%s1 + $0x80] sm:$0xf]
        %v322 = vld [vmem:[%s1 + $0x84] sm:$0xf]
        %v323 = vld [vmem:[%s1 + $0x88] sm:$0xf]
        %v324 = vld [vmem:[%s1 + $0x8c] sm:$0xf]
        %v325 = vld [vmem:[%s2] sm:$0x1]
        %v327 = vlaneseq
        %v328 = vshrl.u32 %v327, 7
        %v329 = vsub.s32 0, %v328
        %v330 = vrot.slane %v325, %v329
        %v396 = vunpack.c.l.b16 %v225
        %v397 = vunpack.c.h.b16 %v225
        %v398 = vunpack.c.l.b16 %v226
        %v399 = vunpack.c.l.b16 %v227
        %v400 = vunpack.c.h.b16 %v227
        %v401 = vunpack.c.l.b16 %v228
        %v402 = vunpack.c.l.b16 %v229
        %v403 = vunpack.c.h.b16 %v229
        %v404 = vunpack.c.l.b16 %v230
        %v405 = vunpack.c.l.b16 %v231
        %v406 = vunpack.c.h.b16 %v231
        %v407 = vunpack.c.l.b16 %v232
        %v408 = vunpack.c.l.b16 %v233
        %v409 = vunpack.c.h.b16 %v233
        %v410 = vunpack.c.l.b16 %v234
        %v411 = vunpack.c.l.b16 %v235
        %v412 = vunpack.c.h.b16 %v235
        %v413 = vunpack.c.l.b16 %v236
        %v414 = vunpack.c.l.b16 %v237
        %v415 = vunpack.c.h.b16 %v237
        %v416 = vunpack.c.l.b16 %v238
        %v417 = vunpack.c.l.b16 %v239
        %v418 = vunpack.c.h.b16 %v239
        %v419 = vunpack.c.l.b16 %v240
        %v420 = vunpack.c.l.b16 %v241
        %v421 = vunpack.c.h.b16 %v241
        %v422 = vunpack.c.l.b16 %v242
        %v423 = vunpack.c.l.b16 %v243
        %v424 = vunpack.c.h.b16 %v243
        %v425 = vunpack.c.l.b16 %v244
        %v426 = vunpack.c.l.b16 %v245
        %v427 = vunpack.c.h.b16 %v245
        %v428 = vunpack.c.l.b16 %v246
        %v429 = vunpack.c.l.b16 %v247
        %v430 = vunpack.c.h.b16 %v247
        %v431 = vunpack.c.l.b16 %v248
        %v432 = vunpack.c.l.b16 %v249
        %v433 = vunpack.c.h.b16 %v249
        %v434 = vunpack.c.l.b16 %v250
        %v435 = vunpack.c.l.b16 %v251
        %v436 = vunpack.c.h.b16 %v251
        %v437 = vunpack.c.l.b16 %v252
        %v438 = vunpack.c.l.b16 %v253
        %v439 = vunpack.c.h.b16 %v253
        %v440 = vunpack.c.l.b16 %v254
        %v441 = vunpack.c.l.b16 %v255
        %v442 = vunpack.c.h.b16 %v255
        %v443 = vunpack.c.l.b16 %v256
        %v444 = vunpack.c.l.b16 %v257
        %v445 = vunpack.c.h.b16 %v257
        %v446 = vunpack.c.l.b16 %v258
        %v447 = vunpack.c.l.b16 %v259
        %v448 = vunpack.c.h.b16 %v259
        %v449 = vunpack.c.l.b16 %v260
        %v450 = vunpack.c.l.b16 %v261
        %v451 = vunpack.c.h.b16 %v261
        %v452 = vunpack.c.l.b16 %v262
        %v453 = vunpack.c.l.b16 %v263
        %v454 = vunpack.c.h.b16 %v263
        %v455 = vunpack.c.l.b16 %v264
        %v456 = vunpack.c.l.b16 %v265
        %v457 = vunpack.c.h.b16 %v265
        %v458 = vunpack.c.l.b16 %v266
        %v459 = vunpack.c.l.b16 %v267
        %v460 = vunpack.c.h.b16 %v267
        %v461 = vunpack.c.l.b16 %v268
        %v462 = vunpack.c.l.b16 %v269
        %v463 = vunpack.c.h.b16 %v269
        %v464 = vunpack.c.l.b16 %v270
        %v465 = vunpack.c.l.b16 %v271
        %v466 = vunpack.c.h.b16 %v271
        %v467 = vunpack.c.l.b16 %v272
        %v468 = vunpack.c.l.b16 %v273
        %v469 = vunpack.c.h.b16 %v273
        %v470 = vunpack.c.l.b16 %v274
        %v471 = vunpack.c.l.b16 %v275
        %v472 = vunpack.c.h.b16 %v275
        %v473 = vunpack.c.l.b16 %v276
        %v474 = vunpack.c.l.b16 %v277
        %v475 = vunpack.c.h.b16 %v277
        %v476 = vunpack.c.l.b16 %v278
        %v477 = vunpack.c.l.b16 %v279
        %v478 = vunpack.c.h.b16 %v279
        %v479 = vunpack.c.l.b16 %v280
        %v480 = vunpack.c.l.b16 %v281
        %v481 = vunpack.c.h.b16 %v281
        %v482 = vunpack.c.l.b16 %v282
        %v483 = vunpack.c.l.b16 %v283
        %v484 = vunpack.c.h.b16 %v283
        %v485 = vunpack.c.l.b16 %v284
        %v486 = vunpack.c.l.b16 %v285
        %v487 = vunpack.c.h.b16 %v285
        %v488 = vunpack.c.l.b16 %v286
        %v489 = vunpack.c.l.b16 %v287
        %v490 = vunpack.c.h.b16 %v287
        %v491 = vunpack.c.l.b16 %v288
        %v492 = vpack.c.b16 %v399, %v396
        %v493 = vpack.c.b16 %v400, %v397
        %v494 = vpack.c.b16 %v401, %v398
        %v495 = vpack.c.b16 %v405, %v402
        %v496 = vpack.c.b16 %v406, %v403
        %v497 = vpack.c.b16 %v407, %v404
        %v498 = vpack.c.b16 %v411, %v408
        %v499 = vpack.c.b16 %v412, %v409
        %v500 = vpack.c.b16 %v413, %v410
        %v501 = vpack.c.b16 %v417, %v414
        %v502 = vpack.c.b16 %v418, %v415
        %v503 = vpack.c.b16 %v419, %v416
        %v504 = vpack.c.b16 %v423, %v420
        %v505 = vpack.c.b16 %v424, %v421
        %v506 = vpack.c.b16 %v425, %v422
        %v507 = vpack.c.b16 %v429, %v426
        %v508 = vpack.c.b16 %v430, %v427
        %v509 = vpack.c.b16 %v431, %v428
        %v510 = vpack.c.b16 %v435, %v432
        %v511 = vpack.c.b16 %v436, %v433
        %v512 = vpack.c.b16 %v437, %v434
        %v513 = vpack.c.b16 %v441, %v438
        %v514 = vpack.c.b16 %v442, %v439
        %v515 = vpack.c.b16 %v443, %v440
        %v516 = vpack.c.b16 %v447, %v444
        %v517 = vpack.c.b16 %v448, %v445
        %v518 = vpack.c.b16 %v449, %v446
        %v519 = vpack.c.b16 %v453, %v450
        %v520 = vpack.c.b16 %v454, %v451
        %v521 = vpack.c.b16 %v455, %v452
        %v522 = vpack.c.b16 %v459, %v456
        %v523 = vpack.c.b16 %v460, %v457
        %v524 = vpack.c.b16 %v461, %v458
        %v525 = vpack.c.b16 %v465, %v462
        %v526 = vpack.c.b16 %v466, %v463
        %v527 = vpack.c.b16 %v467, %v464
        %v528 = vpack.c.b16 %v471, %v468
        %v529 = vpack.c.b16 %v472, %v469
        %v530 = vpack.c.b16 %v473, %v470
        %v531 = vpack.c.b16 %v477, %v474
        %v532 = vpack.c.b16 %v478, %v475
        %v533 = vpack.c.b16 %v479, %v476
        %v534 = vpack.c.b16 %v483, %v480
        %v535 = vpack.c.b16 %v484, %v481
        %v536 = vpack.c.b16 %v485, %v482
        %v537 = vpack.c.b16 %v489, %v486
        %v538 = vpack.c.b16 %v490, %v487
        %v539 = vpack.c.b16 %v491, %v488
        %v608 = vunpack.c.l.b16 %v289
        %v609 = vunpack.c.l.b16 %v290
        %v610 = vunpack.c.l.b16 %v291
        %v611 = vunpack.c.l.b16 %v292
        %v612 = vunpack.c.l.b16 %v293
        %v613 = vunpack.c.l.b16 %v294
        %v614 = vunpack.c.l.b16 %v295
        %v615 = vunpack.c.l.b16 %v296
        %v616 = vunpack.c.l.b16 %v297
        %v617 = vunpack.c.l.b16 %v298
        %v618 = vunpack.c.l.b16 %v299
        %v619 = vunpack.c.l.b16 %v300
        %v620 = vunpack.c.l.b16 %v301
        %v621 = vunpack.c.l.b16 %v302
        %v622 = vunpack.c.l.b16 %v303
        %v623 = vunpack.c.l.b16 %v304
        %v624 = vunpack.c.l.b16 %v305
        %v625 = vunpack.c.l.b16 %v306
        %v626 = vunpack.c.l.b16 %v307
        %v627 = vunpack.c.l.b16 %v308
        %v628 = vunpack.c.l.b16 %v309
        %v629 = vunpack.c.l.b16 %v310
        %v630 = vunpack.c.l.b16 %v311
        %v631 = vunpack.c.l.b16 %v312
        %v632 = vunpack.c.l.b16 %v313
        %v633 = vunpack.c.l.b16 %v314
        %v634 = vunpack.c.l.b16 %v315
        %v635 = vunpack.c.l.b16 %v316
        %v636 = vunpack.c.l.b16 %v317
        %v637 = vunpack.c.l.b16 %v318
        %v638 = vunpack.c.l.b16 %v319
        %v639 = vunpack.c.l.b16 %v320
        %v640 = vunpack.c.l.b16 %v321
        %v641 = vunpack.c.l.b16 %v322
        %v642 = vunpack.c.l.b16 %v323
        %v643 = vunpack.c.l.b16 %v324
        %v644 = vpack.c.b16 %v609, %v608
        %v645 = vpack.c.b16 %v611, %v610
        %v646 = vpack.c.b16 %v613, %v612
        %v647 = vpack.c.b16 %v615, %v614
        %v648 = vpack.c.b16 %v617, %v616
        %v649 = vpack.c.b16 %v619, %v618
        %v650 = vpack.c.b16 %v621, %v620
        %v651 = vpack.c.b16 %v623, %v622
        %v652 = vpack.c.b16 %v625, %v624
        %v653 = vpack.c.b16 %v627, %v626
        %v654 = vpack.c.b16 %v629, %v628
        %v655 = vpack.c.b16 %v631, %v630
        %v656 = vpack.c.b16 %v633, %v632
        %v657 = vpack.c.b16 %v635, %v634
        %v658 = vpack.c.b16 %v637, %v636
        %v659 = vpack.c.b16 %v639, %v638
        %v660 = vpack.c.b16 %v641, %v640
        %v661 = vpack.c.b16 %v643, %v642
        %vm680 = vcmask 261120
        %v682 = vsel %vm680, %v494, 0
        %v685 = vsel %vm680, %v497, 0
        %v688 = vsel %vm680, %v500, 0
        %v691 = vsel %vm680, %v503, 0
        %v694 = vsel %vm680, %v506, 0
        %v697 = vsel %vm680, %v509, 0
        %v700 = vsel %vm680, %v512, 0
        %v703 = vsel %vm680, %v515, 0
        %v706 = vsel %vm680, %v518, 0
        %v709 = vsel %vm680, %v521, 0
        %v712 = vsel %vm680, %v524, 0
        %v715 = vsel %vm680, %v527, 0
        %v718 = vsel %vm680, %v530, 0
        %v721 = vsel %vm680, %v533, 0
        %v724 = vsel %vm680, %v536, 0
        %v727 = vsel %vm680, %v539, 0
        %729 = vmatprep.subr.bf16.mxu0 0
        %730 = vmatpush1.bf16.msra.mxu0 %v644
        %731 = vmatprep.subr.bf16.mxu0 0
        %732 = vmatpush1.bf16.msra.mxu0 %v645
        %733 = vmatprep.subr.bf16.mxu0 0
        %734 = vmatpush1.bf16.msra.mxu0 %v646
        %735 = vmatprep.subr.bf16.mxu0 0
        %736 = vmatpush1.bf16.msra.mxu0 %v647
        %737 = vmatprep.subr.bf16.mxu0 0
        %738 = vmatpush1.bf16.msra.mxu0 %v648
        %739 = vmatprep.subr.bf16.mxu0 0
        %740 = vmatpush1.bf16.msra.mxu0 %v649
        %741 = vmatprep.subr.bf16.mxu0 0
        %742 = vmatpush1.bf16.msra.mxu0 %v650
        %743 = vmatprep.subr.bf16.mxu0 0
        %744 = vmatpush1.bf16.msra.mxu0 %v651
        %745 = vmatprep.subr.bf16.mxu0 0
        %746 = vmatpush1.bf16.msra.mxu0 %v652
        %747 = vmatprep.subr.bf16.mxu0 0
        %748 = vmatpush1.bf16.msra.mxu0 %v653
        %749 = vmatprep.subr.bf16.mxu0 0
        %750 = vmatpush1.bf16.msra.mxu0 %v654
        %751 = vmatprep.subr.bf16.mxu0 0
        %752 = vmatpush1.bf16.msra.mxu0 %v655
        %753 = vmatprep.subr.bf16.mxu0 0
        %754 = vmatpush1.bf16.msra.mxu0 %v656
        %755 = vmatprep.subr.bf16.mxu0 0
        %756 = vmatpush1.bf16.msra.mxu0 %v657
        %757 = vmatprep.subr.bf16.mxu0 0
        %758 = vmatpush1.bf16.msra.mxu0 %v658
        %759 = vmatprep.subr.bf16.mxu0 0
        %760 = vmatpush1.bf16.msra.mxu0 %v659
        %761 = vmatprep.mubr.bf16.mxu0 %v493
        %762 = vmatmul.mubr.bf16.gmra.mrb[0].mxu0 %v492
        %v763 = vpop.f32.mrb[0].mxu0
        %v764 = vadd.f32 %v330, %v763
        %v765 = vpop.f32.mrb[0].mxu0
        %v766 = vpop.f32.mrb[0].mxu0
        %v767 = vadd.f32 %v330, %v766
        %v768 = vpop.f32.mrb[0].mxu0
        %769 = vmatprep.mubr.bf16.mxu0 %v496
        %770 = vmatmul.mubr.bf16.gmra.mrb[0].mxu0 %v495
        %v771 = vpop.f32.mrb[0].mxu0
        %v772 = vadd.f32 %v330, %v771
        %v773 = vpop.f32.mrb[0].mxu0
        %v774 = vpop.f32.mrb[0].mxu0
        %v775 = vadd.f32 %v330, %v774
        %v776 = vpop.f32.mrb[0].mxu0
        %777 = vmatprep.mubr.bf16.mxu0 %v499
        %778 = vmatmul.mubr.bf16.gmra.mrb[0].mxu0 %v498
        %v779 = vpop.f32.mrb[0].mxu0
        %v780 = vadd.f32 %v330, %v779
        %v781 = vpop.f32.mrb[0].mxu0
        %v782 = vpop.f32.mrb[0].mxu0
        %v783 = vadd.f32 %v330, %v782
        %v784 = vpop.f32.mrb[0].mxu0
        %785 = vmatprep.mubr.bf16.mxu0 %v502
        %786 = vmatmul.mubr.bf16.gmra.mrb[0].mxu0 %v501
        %v787 = vpop.f32.mrb[0].mxu0
        %v788 = vadd.f32 %v330, %v787
        %v789 = vpop.f32.mrb[0].mxu0
        %v790 = vpop.f32.mrb[0].mxu0
        %v791 = vadd.f32 %v330, %v790
        %v792 = vpop.f32.mrb[0].mxu0
        %793 = vmatprep.mubr.bf16.mxu0 %v505
        %794 = vmatmul.mubr.bf16.gmra.mrb[0].mxu0 %v504
        %v795 = vpop.f32.mrb[0].mxu0
        %v796 = vadd.f32 %v330, %v795
        %v797 = vpop.f32.mrb[0].mxu0
        %v798 = vpop.f32.mrb[0].mxu0
        %v799 = vadd.f32 %v330, %v798
        %v800 = vpop.f32.mrb[0].mxu0
        %801 = vmatprep.mubr.bf16.mxu0 %v508
        %802 = vmatmul.mubr.bf16.gmra.mrb[0].mxu0 %v507
        %v803 = vpop.f32.mrb[0].mxu0
        %v804 = vadd.f32 %v330, %v803
        %v805 = vpop.f32.mrb[0].mxu0
        %v806 = vpop.f32.mrb[0].mxu0
        %v807 = vadd.f32 %v330, %v806
        %v808 = vpop.f32.mrb[0].mxu0
        %809 = vmatprep.mubr.bf16.mxu0 %v511
        %810 = vmatmul.mubr.bf16.gmra.mrb[0].mxu0 %v510
        %v811 = vpop.f32.mrb[0].mxu0
        %v812 = vadd.f32 %v330, %v811
        %v813 = vpop.f32.mrb[0].mxu0
        %v814 = vpop.f32.mrb[0].mxu0
        %v815 = vadd.f32 %v330, %v814
        %v816 = vpop.f32.mrb[0].mxu0
        %817 = vmatprep.mubr.bf16.mxu0 %v514
        %818 = vmatmul.mubr.bf16.gmra.mrb[0].mxu0 %v513
        %v819 = vpop.f32.mrb[0].mxu0
        %v820 = vadd.f32 %v330, %v819
        %v821 = vpop.f32.mrb[0].mxu0
        %v822 = vpop.f32.mrb[0].mxu0
        %v823 = vadd.f32 %v330, %v822
        %v824 = vpop.f32.mrb[0].mxu0
        %825 = vmatprep.mubr.bf16.mxu0 %v517
        %826 = vmatmul.mubr.bf16.gmra.mrb[0].mxu0 %v516
        %v827 = vpop.f32.mrb[0].mxu0
        %v828 = vadd.f32 %v330, %v827
        %v829 = vpop.f32.mrb[0].mxu0
        %v830 = vpop.f32.mrb[0].mxu0
        %v831 = vadd.f32 %v330, %v830
        %v832 = vpop.f32.mrb[0].mxu0
        %833 = vmatprep.mubr.bf16.mxu0 %v520
        %834 = vmatmul.mubr.bf16.gmra.mrb[0].mxu0 %v519
        %v835 = vpop.f32.mrb[0].mxu0
        %v836 = vadd.f32 %v330, %v835
        %v837 = vpop.f32.mrb[0].mxu0
        %v838 = vpop.f32.mrb[0].mxu0
        %v839 = vadd.f32 %v330, %v838
        %v840 = vpop.f32.mrb[0].mxu0
        %841 = vmatprep.mubr.bf16.mxu0 %v523
        %842 = vmatmul.mubr.bf16.gmra.mrb[0].mxu0 %v522
        %v843 = vpop.f32.mrb[0].mxu0
        %v844 = vadd.f32 %v330, %v843
        %v845 = vpop.f32.mrb[0].mxu0
        %v846 = vpop.f32.mrb[0].mxu0
        %v847 = vadd.f32 %v330, %v846
        %v848 = vpop.f32.mrb[0].mxu0
        %849 = vmatprep.mubr.bf16.mxu0 %v526
        %850 = vmatmul.mubr.bf16.gmra.mrb[0].mxu0 %v525
        %v851 = vpop.f32.mrb[0].mxu0
        %v852 = vadd.f32 %v330, %v851
        %v853 = vpop.f32.mrb[0].mxu0
        %v854 = vpop.f32.mrb[0].mxu0
        %v855 = vadd.f32 %v330, %v854
        %v856 = vpop.f32.mrb[0].mxu0
        %857 = vmatprep.mubr.bf16.mxu0 %v529
        %858 = vmatmul.mubr.bf16.gmra.mrb[0].mxu0 %v528
        %v859 = vpop.f32.mrb[0].mxu0
        %v860 = vadd.f32 %v330, %v859
        %v861 = vpop.f32.mrb[0].mxu0
        %v862 = vpop.f32.mrb[0].mxu0
        %v863 = vadd.f32 %v330, %v862
        %v864 = vpop.f32.mrb[0].mxu0
        %865 = vmatprep.mubr.bf16.mxu0 %v532
        %866 = vmatmul.mubr.bf16.gmra.mrb[0].mxu0 %v531
        %v867 = vpop.f32.mrb[0].mxu0
        %v868 = vadd.f32 %v330, %v867
        %v869 = vpop.f32.mrb[0].mxu0
        %v870 = vpop.f32.mrb[0].mxu0
        %v871 = vadd.f32 %v330, %v870
        %v872 = vpop.f32.mrb[0].mxu0
        %873 = vmatprep.mubr.bf16.mxu0 %v535
        %874 = vmatmul.mubr.bf16.gmra.mrb[0].mxu0 %v534
        %v875 = vpop.f32.mrb[0].mxu0
        %v876 = vadd.f32 %v330, %v875
        %v877 = vpop.f32.mrb[0].mxu0
        %v878 = vpop.f32.mrb[0].mxu0
        %v879 = vadd.f32 %v330, %v878
        %v880 = vpop.f32.mrb[0].mxu0
        %881 = vmatprep.mubr.bf16.mxu0 %v538
        %882 = vmatmul.mubr.bf16.gmra.mrb[0].mxu0 %v537
        %v883 = vpop.f32.mrb[0].mxu0
        %v884 = vadd.f32 %v330, %v883
        %v885 = vpop.f32.mrb[0].mxu0
        %v886 = vpop.f32.mrb[0].mxu0
        %v887 = vadd.f32 %v330, %v886
        %v888 = vpop.f32.mrb[0].mxu0
        %889 = vdwg.mxu0
        %890 = vmatprep.subr.bf16.mxu0 0
        %891 = vmatpush1.bf16.msra.mxu0 %v660
        %892 = vmatprep.subr.bf16.mxu0 0
        %893 = vmatpush1.bf16.msra.mxu0 %v661
        %894 = vmatprep.subr.bf16.mxu0 0
        %895 = vmatpush1.bf16.msra.mxu0 0
        %896 = vmatprep.subr.bf16.mxu0 0
        %897 = vmatpush1.bf16.msra.mxu0 0
        %898 = vmatprep.subr.bf16.mxu0 0
        %899 = vmatpush1.bf16.msra.mxu0 0
        %900 = vmatprep.subr.bf16.mxu0 0
        %901 = vmatpush1.bf16.msra.mxu0 0
        %902 = vmatprep.subr.bf16.mxu0 0
        %903 = vmatpush1.bf16.msra.mxu0 0
        %904 = vmatprep.subr.bf16.mxu0 0
        %905 = vmatpush1.bf16.msra.mxu0 0
        %906 = vmatprep.subr.bf16.mxu0 0
        %907 = vmatpush1.bf16.msra.mxu0 0
        %908 = vmatprep.subr.bf16.mxu0 0
        %909 = vmatpush1.bf16.msra.mxu0 0
        %910 = vmatprep.subr.bf16.mxu0 0
        %911 = vmatpush1.bf16.msra.mxu0 0
        %912 = vmatprep.subr.bf16.mxu0 0
        %913 = vmatpush1.bf16.msra.mxu0 0
        %914 = vmatprep.subr.bf16.mxu0 0
        %915 = vmatpush1.bf16.msra.mxu0 0
        %916 = vmatprep.subr.bf16.mxu0 0
        %917 = vmatpush1.bf16.msra.mxu0 0
        %918 = vmatprep.subr.bf16.mxu0 0
        %919 = vmatpush1.bf16.msra.mxu0 0
        %920 = vmatprep.subr.bf16.mxu0 0
        %921 = vmatpush1.bf16.msra.mxu0 0
        %922 = vmatprep.mubr.bf16.mxu0 0
        %923 = vmatmul.mubr.bf16.gmra.mrb[0].mxu0 %v682
        %v924 = vpop.f32.mrb[0].mxu0
        %v925 = vadd.f32 %v764, %v924
        %v926 = vpop.f32.mrb[0].mxu0
        %v927 = vpop.f32.mrb[0].mxu0
        %v928 = vadd.f32 %v767, %v927
        %v929 = vpop.f32.mrb[0].mxu0
        %930 = vmatprep.mubr.bf16.mxu0 0
        %931 = vmatmul.mubr.bf16.gmra.mrb[0].mxu0 %v685
        %v932 = vpop.f32.mrb[0].mxu0
        %v933 = vadd.f32 %v772, %v932
        %v934 = vpop.f32.mrb[0].mxu0
        %v935 = vpop.f32.mrb[0].mxu0
        %v936 = vadd.f32 %v775, %v935
        %v937 = vpop.f32.mrb[0].mxu0
        %938 = vmatprep.mubr.bf16.mxu0 0
        %939 = vmatmul.mubr.bf16.gmra.mrb[0].mxu0 %v688
        %v940 = vpop.f32.mrb[0].mxu0
        %v941 = vadd.f32 %v780, %v940
        %v942 = vpop.f32.mrb[0].mxu0
        %v943 = vpop.f32.mrb[0].mxu0
        %v944 = vadd.f32 %v783, %v943
        %v945 = vpop.f32.mrb[0].mxu0
        %946 = vmatprep.mubr.bf16.mxu0 0
        %947 = vmatmul.mubr.bf16.gmra.mrb[0].mxu0 %v691
        %v948 = vpop.f32.mrb[0].mxu0
        %v949 = vadd.f32 %v788, %v948
        %v950 = vpop.f32.mrb[0].mxu0
        %v951 = vpop.f32.mrb[0].mxu0
        %v952 = vadd.f32 %v791, %v951
        %v953 = vpop.f32.mrb[0].mxu0
        %954 = vmatprep.mubr.bf16.mxu0 0
        %955 = vmatmul.mubr.bf16.gmra.mrb[0].mxu0 %v694
        %v956 = vpop.f32.mrb[0].mxu0
        %v957 = vadd.f32 %v796, %v956
        %v958 = vpop.f32.mrb[0].mxu0
        %v959 = vpop.f32.mrb[0].mxu0
        %v960 = vadd.f32 %v799, %v959
        %v961 = vpop.f32.mrb[0].mxu0
        %962 = vmatprep.mubr.bf16.mxu0 0
        %963 = vmatmul.mubr.bf16.gmra.mrb[0].mxu0 %v697
        %v964 = vpop.f32.mrb[0].mxu0
        %v965 = vadd.f32 %v804, %v964
        %v966 = vpop.f32.mrb[0].mxu0
        %v967 = vpop.f32.mrb[0].mxu0
        %v968 = vadd.f32 %v807, %v967
        %v969 = vpop.f32.mrb[0].mxu0
        %970 = vmatprep.mubr.bf16.mxu0 0
        %971 = vmatmul.mubr.bf16.gmra.mrb[0].mxu0 %v700
        %v972 = vpop.f32.mrb[0].mxu0
        %v973 = vadd.f32 %v812, %v972
        %v974 = vpop.f32.mrb[0].mxu0
        %v975 = vpop.f32.mrb[0].mxu0
        %v976 = vadd.f32 %v815, %v975
        %v977 = vpop.f32.mrb[0].mxu0
        %978 = vmatprep.mubr.bf16.mxu0 0
        %979 = vmatmul.mubr.bf16.gmra.mrb[0].mxu0 %v703
        %v980 = vpop.f32.mrb[0].mxu0
        %v981 = vadd.f32 %v820, %v980
        %v982 = vpop.f32.mrb[0].mxu0
        %v983 = vpop.f32.mrb[0].mxu0
        %v984 = vadd.f32 %v823, %v983
        %v985 = vpop.f32.mrb[0].mxu0
        %986 = vmatprep.mubr.bf16.mxu0 0
        %987 = vmatmul.mubr.bf16.gmra.mrb[0].mxu0 %v706
        %v988 = vpop.f32.mrb[0].mxu0
        %v989 = vadd.f32 %v828, %v988
        %v990 = vpop.f32.mrb[0].mxu0
        %v991 = vpop.f32.mrb[0].mxu0
        %v992 = vadd.f32 %v831, %v991
        %v993 = vpop.f32.mrb[0].mxu0
        %994 = vmatprep.mubr.bf16.mxu0 0
        %995 = vmatmul.mubr.bf16.gmra.mrb[0].mxu0 %v709
        %v996 = vpop.f32.mrb[0].mxu0
        %v997 = vadd.f32 %v836, %v996
        %v998 = vpop.f32.mrb[0].mxu0
        %v999 = vpop.f32.mrb[0].mxu0
        %v1000 = vadd.f32 %v839, %v999
        %v1001 = vpop.f32.mrb[0].mxu0
        %1002 = vmatprep.mubr.bf16.mxu0 0
        %1003 = vmatmul.mubr.bf16.gmra.mrb[0].mxu0 %v712
        %v1004 = vpop.f32.mrb[0].mxu0
        %v1005 = vadd.f32 %v844, %v1004
        %v1006 = vpop.f32.mrb[0].mxu0
        %v1007 = vpop.f32.mrb[0].mxu0
        %v1008 = vadd.f32 %v847, %v1007
        %v1009 = vpop.f32.mrb[0].mxu0
        %1010 = vmatprep.mubr.bf16.mxu0 0
        %1011 = vmatmul.mubr.bf16.gmra.mrb[0].mxu0 %v715
        %v1012 = vpop.f32.mrb[0].mxu0
        %v1013 = vadd.f32 %v852, %v1012
        %v1014 = vpop.f32.mrb[0].mxu0
        %v1015 = vpop.f32.mrb[0].mxu0
        %v1016 = vadd.f32 %v855, %v1015
        %v1017 = vpop.f32.mrb[0].mxu0
        %1018 = vmatprep.mubr.bf16.mxu0 0
        %1019 = vmatmul.mubr.bf16.gmra.mrb[0].mxu0 %v718
        %v1020 = vpop.f32.mrb[0].mxu0
        %v1021 = vadd.f32 %v860, %v1020
        %v1022 = vpop.f32.mrb[0].mxu0
        %v1023 = vpop.f32.mrb[0].mxu0
        %v1024 = vadd.f32 %v863, %v1023
        %v1025 = vpop.f32.mrb[0].mxu0
        %1026 = vmatprep.mubr.bf16.mxu0 0
        %1027 = vmatmul.mubr.bf16.gmra.mrb[0].mxu0 %v721
        %v1028 = vpop.f32.mrb[0].mxu0
        %v1029 = vadd.f32 %v868, %v1028
        %v1030 = vpop.f32.mrb[0].mxu0
        %v1031 = vpop.f32.mrb[0].mxu0
        %v1032 = vadd.f32 %v871, %v1031
        %v1033 = vpop.f32.mrb[0].mxu0
        %1034 = vmatprep.mubr.bf16.mxu0 0
        %1035 = vmatmul.mubr.bf16.gmra.mrb[0].mxu0 %v724
        %v1036 = vpop.f32.mrb[0].mxu0
        %v1037 = vadd.f32 %v876, %v1036
        %v1038 = vpop.f32.mrb[0].mxu0
        %v1039 = vpop.f32.mrb[0].mxu0
        %v1040 = vadd.f32 %v879, %v1039
        %v1041 = vpop.f32.mrb[0].mxu0
        %1042 = vmatprep.mubr.bf16.mxu0 0
        %1043 = vmatmul.mubr.bf16.gmra.mrb[0].mxu0 %v727
        %v1044 = vpop.f32.mrb[0].mxu0
        %v1045 = vadd.f32 %v884, %v1044
        %v1046 = vpop.f32.mrb[0].mxu0
        %v1047 = vpop.f32.mrb[0].mxu0
        %v1048 = vadd.f32 %v887, %v1047
        %v1049 = vpop.f32.mrb[0].mxu0
        %1050 = vdwg.mxu0
        %v1051 = vld [vmem:[%s221] sm:$0xff]
        %v1052 = vld [vmem:[%s221 + $0x8] sm:$0xff]
        %v1053 = vld [vmem:[%s221 + $0x10] sm:$0xff]
        %v1054 = vld [vmem:[%s221 + $0x18] sm:$0xff]
        %v1055 = vld [vmem:[%s221 + $0x20] sm:$0xff]
        %v1056 = vld [vmem:[%s221 + $0x28] sm:$0xff]
        %v1057 = vld [vmem:[%s221 + $0x30] sm:$0xff]
        %v1058 = vld [vmem:[%s221 + $0x38] sm:$0xff]
        %v1059 = vld [vmem:[%s221 + $0x40] sm:$0xff]
        %v1060 = vld [vmem:[%s221 + $0x48] sm:$0xff]
        %v1061 = vld [vmem:[%s221 + $0x50] sm:$0xff]
        %v1062 = vld [vmem:[%s221 + $0x58] sm:$0xff]
        %v1063 = vld [vmem:[%s221 + $0x60] sm:$0xff]
        %v1064 = vld [vmem:[%s221 + $0x68] sm:$0xff]
        %v1065 = vld [vmem:[%s221 + $0x70] sm:$0xff]
        %v1066 = vld [vmem:[%s221 + $0x78] sm:$0xff]
        %v1067 = vld [vmem:[%s221 + $0x80] sm:$0xff]
        %v1068 = vld [vmem:[%s221 + $0x88] sm:$0xff]
        %v1069 = vld [vmem:[%s221 + $0x90] sm:$0xff]
        %v1070 = vld [vmem:[%s221 + $0x98] sm:$0xff]
        %v1071 = vld [vmem:[%s221 + $0xa0] sm:$0xff]
        %v1072 = vld [vmem:[%s221 + $0xa8] sm:$0xff]
        %v1073 = vld [vmem:[%s221 + $0xb0] sm:$0xff]
        %v1074 = vld [vmem:[%s221 + $0xb8] sm:$0xff]
        %v1075 = vld [vmem:[%s221 + $0xc0] sm:$0xff]
        %v1076 = vld [vmem:[%s221 + $0xc8] sm:$0xff]
        %v1077 = vld [vmem:[%s221 + $0xd0] sm:$0xff]
        %v1078 = vld [vmem:[%s221 + $0xd8] sm:$0xff]
        %v1079 = vld [vmem:[%s221 + $0xe0] sm:$0xff]
        %v1080 = vld [vmem:[%s221 + $0xe8] sm:$0xff]
        %v1081 = vld [vmem:[%s221 + $0xf0] sm:$0xff]
        %v1082 = vld [vmem:[%s221 + $0xf8] sm:$0xff]
        %v1083 = vadd.f32 %v925, %v1051
        %v1084 = vadd.f32 %v928, %v1052
        %v1085 = vadd.f32 %v933, %v1053
        %v1086 = vadd.f32 %v936, %v1054
        %v1087 = vadd.f32 %v941, %v1055
        %v1088 = vadd.f32 %v944, %v1056
        %v1089 = vadd.f32 %v949, %v1057
        %v1090 = vadd.f32 %v952, %v1058
        %v1091 = vadd.f32 %v957, %v1059
        %v1092 = vadd.f32 %v960, %v1060
        %v1093 = vadd.f32 %v965, %v1061
        %v1094 = vadd.f32 %v968, %v1062
        %v1095 = vadd.f32 %v973, %v1063
        %v1096 = vadd.f32 %v976, %v1064
        %v1097 = vadd.f32 %v981, %v1065
        %v1098 = vadd.f32 %v984, %v1066
        %v1099 = vadd.f32 %v989, %v1067
        %v1100 = vadd.f32 %v992, %v1068
        %v1101 = vadd.f32 %v997, %v1069
        %v1102 = vadd.f32 %v1000, %v1070
        %v1103 = vadd.f32 %v1005, %v1071
        %v1104 = vadd.f32 %v1008, %v1072
        %v1105 = vadd.f32 %v1013, %v1073
        %v1106 = vadd.f32 %v1016, %v1074
        %v1107 = vadd.f32 %v1021, %v1075
        %v1108 = vadd.f32 %v1024, %v1076
        %v1109 = vadd.f32 %v1029, %v1077
        %v1110 = vadd.f32 %v1032, %v1078
        %v1111 = vadd.f32 %v1037, %v1079
        %v1112 = vadd.f32 %v1040, %v1080
        %v1113 = vadd.f32 %v1045, %v1081
        %v1114 = vadd.f32 %v1048, %v1082
        %1115 = vst [vmem:[%s209] sm:$0xff] %v1083
        %1116 = vst [vmem:[%s209 + $0x8] sm:$0xff] %v1084
        %1117 = vst [vmem:[%s209 + $0x10] sm:$0xff] %v1085
        %1118 = vst [vmem:[%s209 + $0x18] sm:$0xff] %v1086
        %1119 = vst [vmem:[%s209 + $0x20] sm:$0xff] %v1087
        %1120 = vst [vmem:[%s209 + $0x28] sm:$0xff] %v1088
        %1121 = vst [vmem:[%s209 + $0x30] sm:$0xff] %v1089
        %1122 = vst [vmem:[%s209 + $0x38] sm:$0xff] %v1090
        %1123 = vst [vmem:[%s209 + $0x40] sm:$0xff] %v1091
        %1124 = vst [vmem:[%s209 + $0x48] sm:$0xff] %v1092
        %1125 = vst [vmem:[%s209 + $0x50] sm:$0xff] %v1093
        %1126 = vst [vmem:[%s209 + $0x58] sm:$0xff] %v1094
        %1127 = vst [vmem:[%s209 + $0x60] sm:$0xff] %v1095
        %1128 = vst [vmem:[%s209 + $0x68] sm:$0xff] %v1096
        %1129 = vst [vmem:[%s209 + $0x70] sm:$0xff] %v1097
        %1130 = vst [vmem:[%s209 + $0x78] sm:$0xff] %v1098
        %1131 = vst [vmem:[%s209 + $0x80] sm:$0xff] %v1099
        %1132 = vst [vmem:[%s209 + $0x88] sm:$0xff] %v1100
        %1133 = vst [vmem:[%s209 + $0x90] sm:$0xff] %v1101
        %1134 = vst [vmem:[%s209 + $0x98] sm:$0xff] %v1102
        %1135 = vst [vmem:[%s209 + $0xa0] sm:$0xff] %v1103
        %1136 = vst [vmem:[%s209 + $0xa8] sm:$0xff] %v1104
        %1137 = vst [vmem:[%s209 + $0xb0] sm:$0xff] %v1105
        %1138 = vst [vmem:[%s209 + $0xb8] sm:$0xff] %v1106
        %1139 = vst [vmem:[%s209 + $0xc0] sm:$0xff] %v1107
        %1140 = vst [vmem:[%s209 + $0xc8] sm:$0xff] %v1108
        %1141 = vst [vmem:[%s209 + $0xd0] sm:$0xff] %v1109
        %1142 = vst [vmem:[%s209 + $0xd8] sm:$0xff] %v1110
        %1143 = vst [vmem:[%s209 + $0xe0] sm:$0xff] %v1111
        %1144 = vst [vmem:[%s209 + $0xe8] sm:$0xff] %v1112
        %1145 = vst [vmem:[%s209 + $0xf0] sm:$0xff] %v1113
        %1146 = vst [vmem:[%s209 + $0xf8] sm:$0xff] %v1114
        %s1147 = sand.u32 %s120, 1
        %s1148 = scalar_lea.sflag [#allocation3], %s1147
        %s1149 = sand.u32 %s120, 1
        %s1150 = smul.addr %s1149, 256
        %s1151 = scalar_lea.vmem [#allocation2], %s1150
        // Predicated region
        $region37: #{_lambda_.17} parent=35 // pred_check
          %p1152 = pneg %p130
        $region38: #{_lambda_.17} parent=35 // pred_check_branch
          %1154 = sbr.rel (%p1152) target = $region40
        $region39: #{_lambda_.17} parent=35 // pred_region
          %s1155 = smul.u32 32, %s18
          %s1157 = ssub.s32 4096, 4096
          %1158 = vsyncadd %s1148, %s1157
          %s1159 = smul.addr %s1155, 128
          %s1160 = scalar_lea.hbm %s4, %s1159
          %s1161 = sshll.u32 %s1151, 4
          %s1162 = int_to_ptr.vmem [resolvable:$true] %s1161
          %1167 = dma.vmem_to_hbm [thread:$0]  %s1162, 4096, %s1160, %s1148, 128, 128, 8
        $region40: #{_lambda_.17} parent=35 // pred_fallthru
          _
      $region36: #{_lambda_.17} parent=5 // pred_fallthru
        _
      %p1168 = scmp.le.s32.totalorder 2, %s13
      // Predicated region
      $region41: #{_lambda_.17} parent=5 // pred_check
        %p1169 = pneg %p1168
      $region42: #{_lambda_.17} parent=5 // pred_check_branch
        %1171 = sbr.rel (%p1169) target = $region44
      $region43: #{_lambda_.17} parent=5 // pred_region
        %s1172 = ssub.s32 %s13, 2
        // Predicated region
        $region45: #{_lambda_.17} parent=43 // pred_check
          %p1173 = pneg %p136
        $region46: #{_lambda_.17} parent=43 // pred_check_branch
          %1175 = sbr.rel (%p1173) target = $region48
        $region47: #{_lambda_.17} parent=43 // pred_region
          %s1176 = sand.u32 %s121, 1
          %s1177 = scalar_lea.sflag [#allocation3], %s1176
          %s1178 = sand.u32 %s121, 1
          %s1179 = smul.addr %s1178, 256
          %s1180 = scalar_lea.vmem [#allocation2], %s1179
          %1181 = dma.done %s1177, 4096
        $region48: #{_lambda_.17} parent=43 // pred_fallthru
          _
      $region44: #{_lambda_.17} parent=5 // pred_fallthru
        _
    $region6: #{_lambda_.17} parent=1 // loop_footer
      %s17 = sadd.s32 1, %s13
    $region7: #{_lambda_.17} parent=1 // loop_footer_branch
      %12 = sbr.rel target = $region3
    $region8: #{_lambda_.17} parent=1 // loop_exit
      _
    %1182 = vsyncpa [#allocation3], 1
    %s1183 = scalar_lea.sflag [#allocation3], 1
    %1184 = vsyncpa %s1183, 1

// kernel: _lambda_.10
$region0: #{_lambda_.10}
  #allocation0 [shape = 'u32[]', space=smem, size = 0x4, offset = 0x4, fixed_abs, tag = 'smem constant byte address 0x4 - core index']
  #allocation1 [shape = 'u32[144,128]{1,0:T(1,128)}', space=vmem, size = 0x12000, scoped, tag = 'internal scratch']
  %s0 = inlined_call_operand.vmem [shape: bf16[512,1152], index: 0, kind: input, shape index: {}]
  %s1 = inlined_call_operand.vmem [shape: f32[512,128], index: 1, kind: input, shape index: {}]
  %s2 = inlined_call_operand.vmem [shape: bf16[1152,256], index: 2, kind: input, shape index: {}]
  %s3 = inlined_call_operand.vmem [shape: f32[1,256], index: 3, kind: input, shape index: {}]
  %s4 = inlined_call_operand.vmem [shape: f32[512,128], index: 4, kind: output, shape index: {}]
  %s5 = sld [smem:[#allocation0]]
  $region49: #{_lambda_.10} parent=0
    _
  %s7 = ssub.s32 1, %s5
  %s8 = scalar_select 0, %s7, %s5
  loop: start=0, step=1, limit=4
  $region2: #{_lambda_.10} parent=0 // loop_pre_header
    _
  $region3: #{_lambda_.10} parent=0 // loop_header
    %s10 = sphi 0, %s14
    %p11 = scmp.ge.s32.totalorder %s10, 4
    %s20 = sphi 0, %s22
    %s23 = sphi 0, %s20
    %s24 = sphi 0, %s23
    %s40 = sphi 0, %s24
    %s46 = sphi 0, %s48
    %s49 = sphi 0, %s46
    %s50 = sphi 0, %s49
    %s66 = sphi 0, %s50
    %s70 = sphi 0, %s70
    %s72 = sphi 0, %s70
    %s73 = sphi 0, %s72
    %s87 = sphi 0, %s73
    %s91 = sphi 0, %s91
    %s93 = sphi 0, %s91
    %s94 = sphi 0, %s93
    %s108 = sphi 0, %s94
    %s114 = sphi 0, %s116
    %s117 = sphi 0, %s114
    %s118 = sphi 0, %s117
    %s134 = sphi 0, %s118
  $region4: #{_lambda_.10} parent=0 // loop_header_branch
    %13 = sbr.rel (%p11) target = $region8
  $region5: #{_lambda_.10} parent=0 // loop_body
    %s15 = ssub.s32 %s10, 1
    %s16 = ssub.s32 %s10, 2
    %s17 = sadd.s32 %s10, 1
    %s18 = ssub.s32 %s10, %s17
    %p19 = scmp.eq.s32.totalorder %s18, 0
    %s21 = sadd.s32 %s20, 1
    %s22 = scalar_select %p19, %s20, %s21
    %p25 = pneg %p19
    %p26 = scmp.eq.s32.totalorder %s10, 1
    %p27 = por %p25, %p26
    %p28 = scmp.ne.s32.totalorder %s20, %s23
    %p29 = scmp.eq.s32.totalorder %s10, 0
    %p30 = por %p28, %p29
    %p31 = scmp.ne.s32.totalorder %s20, %s23
    %p32 = scmp.eq.s32.totalorder %s15, 1
    %p33 = por %p31, %p32
    %p34 = scmp.ne.s32.totalorder %s23, %s24
    %p35 = scmp.eq.s32.totalorder %s15, 0
    %p36 = por %p34, %p35
    %p37 = scmp.ne.s32.totalorder %s23, %s24
    %p38 = scmp.eq.s32.totalorder %s16, 1
    %p39 = por %p37, %p38
    %p41 = scmp.ne.s32.totalorder %s24, %s40
    %p42 = scmp.eq.s32.totalorder %s16, 0
    %p43 = por %p41, %p42
    %s44 = ssub.s32 %s10, %s17
    %p45 = scmp.eq.s32.totalorder %s44, 0
    %s47 = sadd.s32 %s46, 1
    %s48 = scalar_select %p45, %s46, %s47
    %p51 = pneg %p45
    %p52 = scmp.eq.s32.totalorder %s10, 1
    %p53 = por %p51, %p52
    %p54 = scmp.ne.s32.totalorder %s46, %s49
    %p55 = scmp.eq.s32.totalorder %s10, 0
    %p56 = por %p54, %p55
    %p57 = scmp.ne.s32.totalorder %s46, %s49
    %p58 = scmp.eq.s32.totalorder %s15, 1
    %p59 = por %p57, %p58
    %p60 = scmp.ne.s32.totalorder %s49, %s50
    %p61 = scmp.eq.s32.totalorder %s15, 0
    %p62 = por %p60, %p61
    %p63 = scmp.ne.s32.totalorder %s49, %s50
    %p64 = scmp.eq.s32.totalorder %s16, 1
    %p65 = por %p63, %p64
    %p67 = scmp.ne.s32.totalorder %s50, %s66
    %p68 = scmp.eq.s32.totalorder %s16, 0
    %p69 = por %p67, %p68
    %s71 = sadd.s32 %s70, 1
    %p74 = scmp.eq.s32.totalorder %s10, 1
    %p75 = scmp.ne.s32.totalorder %s70, %s72
    %p76 = scmp.eq.s32.totalorder %s10, 0
    %p77 = por %p75, %p76
    %p78 = scmp.ne.s32.totalorder %s70, %s72
    %p79 = scmp.eq.s32.totalorder %s15, 1
    %p80 = por %p78, %p79
    %p81 = scmp.ne.s32.totalorder %s72, %s73
    %p82 = scmp.eq.s32.totalorder %s15, 0
    %p83 = por %p81, %p82
    %p84 = scmp.ne.s32.totalorder %s72, %s73
    %p85 = scmp.eq.s32.totalorder %s16, 1
    %p86 = por %p84, %p85
    %p88 = scmp.ne.s32.totalorder %s73, %s87
    %p89 = scmp.eq.s32.totalorder %s16, 0
    %p90 = por %p88, %p89
    %s92 = sadd.s32 %s91, 1
    %p95 = scmp.eq.s32.totalorder %s10, 1
    %p96 = scmp.ne.s32.totalorder %s91, %s93
    %p97 = scmp.eq.s32.totalorder %s10, 0
    %p98 = por %p96, %p97
    %p99 = scmp.ne.s32.totalorder %s91, %s93
    %p100 = scmp.eq.s32.totalorder %s15, 1
    %p101 = por %p99, %p100
    %p102 = scmp.ne.s32.totalorder %s93, %s94
    %p103 = scmp.eq.s32.totalorder %s15, 0
    %p104 = por %p102, %p103
    %p105 = scmp.ne.s32.totalorder %s93, %s94
    %p106 = scmp.eq.s32.totalorder %s16, 1
    %p107 = por %p105, %p106
    %p109 = scmp.ne.s32.totalorder %s94, %s108
    %p110 = scmp.eq.s32.totalorder %s16, 0
    %p111 = por %p109, %p110
    %s112 = ssub.s32 %s10, %s17
    %p113 = scmp.eq.s32.totalorder %s112, 0
    %s115 = sadd.s32 %s114, 1
    %s116 = scalar_select %p113, %s114, %s115
    %p119 = pneg %p113
    %p120 = scmp.eq.s32.totalorder %s10, 1
    %p121 = por %p119, %p120
    %p122 = scmp.ne.s32.totalorder %s114, %s117
    %p123 = scmp.eq.s32.totalorder %s10, 0
    %p124 = por %p122, %p123
    %p125 = scmp.ne.s32.totalorder %s114, %s117
    %p126 = scmp.eq.s32.totalorder %s15, 1
    %p127 = por %p125, %p126
    %p128 = scmp.ne.s32.totalorder %s117, %s118
    %p129 = scmp.eq.s32.totalorder %s15, 0
    %p130 = por %p128, %p129
    %p131 = scmp.ne.s32.totalorder %s117, %s118
    %p132 = scmp.eq.s32.totalorder %s16, 1
    %p133 = por %p131, %p132
    %p135 = scmp.ne.s32.totalorder %s118, %s134
    %p136 = scmp.eq.s32.totalorder %s16, 0
    %p137 = por %p135, %p136
    %p138 = scmp.le.s32.totalorder 1, %s10
    %p139 = scmp.lt.s32.totalorder %s10, 3
    %p140 = pnand %p138, %p139
    %p141 = pneg %p140
    // Predicated region
    $region9: #{_lambda_.10} parent=5 // pred_check
      _
    $region10: #{_lambda_.10} parent=5 // pred_check_branch
      %143 = sbr.rel (%p140) target = $region12
    $region11: #{_lambda_.10} parent=5 // pred_region
      %s144 = ssub.s32 %s10, 1
      // Predicated region
      $region13: #{_lambda_.10} parent=11 // pred_check
        %p145 = pneg %p83
      $region14: #{_lambda_.10} parent=11 // pred_check_branch
        %147 = sbr.rel (%p145) target = $region16
      $region15: #{_lambda_.10} parent=11 // pred_region
        _
      $region16: #{_lambda_.10} parent=11 // pred_fallthru
        _
      // Predicated region
      $region17: #{_lambda_.10} parent=11 // pred_check
        %p148 = pneg %p104
      $region18: #{_lambda_.10} parent=11 // pred_check_branch
        %150 = sbr.rel (%p148) target = $region20
      $region19: #{_lambda_.10} parent=11 // pred_region
        _
      $region20: #{_lambda_.10} parent=11 // pred_fallthru
        _
    $region12: #{_lambda_.10} parent=5 // pred_fallthru
      _
    %p151 = scmp.lt.s32.totalorder %s10, 2
    // Predicated region
    $region21: #{_lambda_.10} parent=5 // pred_check
      %p152 = pneg %p151
    $region22: #{_lambda_.10} parent=5 // pred_check_branch
      %154 = sbr.rel (%p152) target = $region24
    $region23: #{_lambda_.10} parent=5 // pred_region
      // Predicated region
      $region25: #{_lambda_.10} parent=23 // pred_check
        %p155 = pneg %p30
      $region26: #{_lambda_.10} parent=23 // pred_check_branch
        %157 = sbr.rel (%p155) target = $region28
      $region27: #{_lambda_.10} parent=23 // pred_region
        %s158 = smul.u32 32, %s10
        %p159 = scmp.lt.s32.totalorder %s158, 63
        %s160 = scalar_select %p159, %s158, 63
        %s161 = smul.addr %s160, 9
        %s162 = smul.addr %s161, 4
        %s163 = scalar_lea.vmem %s0, %s162
        %s164 = smul.u32 32, %s10
      $region28: #{_lambda_.10} parent=23 // pred_fallthru
        _
      // Predicated region
      $region29: #{_lambda_.10} parent=23 // pred_check
        %p165 = pneg %p56
      $region30: #{_lambda_.10} parent=23 // pred_check_branch
        %167 = sbr.rel (%p165) target = $region32
      $region31: #{_lambda_.10} parent=23 // pred_region
        %s168 = smul.u32 32, %s10
        %p169 = scmp.lt.s32.totalorder %s168, 63
        %s170 = scalar_select %p169, %s168, 63
        %s171 = smul.addr %s170, 8
        %s172 = scalar_lea.vmem %s1, %s171
        %s173 = smul.u32 32, %s10
      $region32: #{_lambda_.10} parent=23 // pred_fallthru
        _
    $region24: #{_lambda_.10} parent=5 // pred_fallthru
      _
    %p174 = scmp.le.s32.totalorder 1, %s10
    %p175 = scmp.lt.s32.totalorder %s10, 3
    %p176 = pnand %p174, %p175
    %p177 = pneg %p176
    // Predicated region
    $region33: #{_lambda_.10} parent=5 // pred_check
      _
    $region34: #{_lambda_.10} parent=5 // pred_check_branch
      %179 = sbr.rel (%p176) target = $region36
    $region35: #{_lambda_.10} parent=5 // pred_region
      %s180 = ssub.s32 %s10, 1
      %s181 = smul.u32 32, %s15
      %p182 = scmp.lt.s32.totalorder %s181, 63
      %s183 = scalar_select %p182, %s181, 63
      %s184 = smul.addr %s183, 9
      %s185 = smul.addr %s184, 4
      %s186 = scalar_lea.vmem %s0, %s185
      %p187 = pneg %p36
      %p188 = pneg %p33
      %s189 = smul.u32 32, %s15
      %p190 = scmp.lt.s32.totalorder %s189, 63
      %s191 = scalar_select %p190, %s189, 63
      %s192 = smul.addr %s191, 8
      %s193 = scalar_lea.vmem %s1, %s192
      %p194 = pneg %p62
      %p195 = pneg %p59
      %p196 = pneg %p83
      %p197 = pneg %p80
      %p198 = pneg %p104
      %p199 = pneg %p101
      %p200 = pneg %p130
      %p201 = pneg %p127
      %s202 = smul.u32 32, %s15
      %p203 = scmp.lt.s32.totalorder %s202, 63
      %s204 = scalar_select %p203, %s202, 63
      %s205 = smul.addr %s204, 8
      %s206 = scalar_lea.vmem %s4, %s205
      %s207 = smul.u32 32, %s15
      %p208 = scmp.lt.s32.totalorder %s207, 63
      %s209 = scalar_select %p208, %s207, 63
      %s210 = smul.addr %s209, 9
      %s211 = smul.addr %s210, 4
      %s212 = scalar_lea.vmem %s0, %s211
      %s213 = smul.u32 32, %s15
      %s214 = smul.u32 32, %s15
      %p215 = scmp.lt.s32.totalorder %s214, 63
      %s216 = scalar_select %p215, %s214, 63
      %s217 = smul.addr %s216, 8
      %s218 = scalar_lea.vmem %s1, %s217
      %s219 = smul.u32 32, %s15
      %s220 = smul.u32 32, %s15
      %p221 = scmp.lt.s32.totalorder %s220, 63
      %s222 = scalar_select %p221, %s220, 63
      %s223 = smul.addr %s222, 8
      %s224 = scalar_lea.vmem %s4, %s223
      %s225 = smul.u32 32, %s15
      %v227 = vld [vmem:[%s212] sm:$0xff]
      %v228 = vld [vmem:[%s212 + $0x8] sm:$0xff]
      %v229 = vld [vmem:[%s212 + $0x10] sm:$0xff]
      %v230 = vld [vmem:[%s212 + $0x18] sm:$0xff]
      %v231 = vld [vmem:[%s212 + $0x20] sm:$0xf]
      %v232 = vld [vmem:[%s212 + $0x24] sm:$0xff]
      %v233 = vld [vmem:[%s212 + $0x2c] sm:$0xff]
      %v234 = vld [vmem:[%s212 + $0x34] sm:$0xff]
      %v235 = vld [vmem:[%s212 + $0x3c] sm:$0xff]
      %v236 = vld [vmem:[%s212 + $0x44] sm:$0xf]
      %v237 = vld [vmem:[%s212 + $0x48] sm:$0xff]
      %v238 = vld [vmem:[%s212 + $0x50] sm:$0xff]
      %v239 = vld [vmem:[%s212 + $0x58] sm:$0xff]
      %v240 = vld [vmem:[%s212 + $0x60] sm:$0xff]
      %v241 = vld [vmem:[%s212 + $0x68] sm:$0xf]
      %v242 = vld [vmem:[%s212 + $0x6c] sm:$0xff]
      %v243 = vld [vmem:[%s212 + $0x74] sm:$0xff]
      %v244 = vld [vmem:[%s212 + $0x7c] sm:$0xff]
      %v245 = vld [vmem:[%s212 + $0x84] sm:$0xff]
      %v246 = vld [vmem:[%s212 + $0x8c] sm:$0xf]
      %v247 = vld [vmem:[%s212 + $0x90] sm:$0xff]
      %v248 = vld [vmem:[%s212 + $0x98] sm:$0xff]
      %v249 = vld [vmem:[%s212 + $0xa0] sm:$0xff]
      %v250 = vld [vmem:[%s212 + $0xa8] sm:$0xff]
      %v251 = vld [vmem:[%s212 + $0xb0] sm:$0xf]
      %v252 = vld [vmem:[%s212 + $0xb4] sm:$0xff]
      %v253 = vld [vmem:[%s212 + $0xbc] sm:$0xff]
      %v254 = vld [vmem:[%s212 + $0xc4] sm:$0xff]
      %v255 = vld [vmem:[%s212 + $0xcc] sm:$0xff]
      %v256 = vld [vmem:[%s212 + $0xd4] sm:$0xf]
      %v257 = vld [vmem:[%s212 + $0xd8] sm:$0xff]
      %v258 = vld [vmem:[%s212 + $0xe0] sm:$0xff]
      %v259 = vld [vmem:[%s212 + $0xe8] sm:$0xff]
      %v260 = vld [vmem:[%s212 + $0xf0] sm:$0xff]
      %v261 = vld [vmem:[%s212 + $0xf8] sm:$0xf]
      %v262 = vld [vmem:[%s212 + $0xfc] sm:$0xff]
      %v263 = vld [vmem:[%s212 + $0x104] sm:$0xff]
      %v264 = vld [vmem:[%s212 + $0x10c] sm:$0xff]
      %v265 = vld [vmem:[%s212 + $0x114] sm:$0xff]
      %v266 = vld [vmem:[%s212 + $0x11c] sm:$0xf]
      %v267 = vld [vmem:[%s212 + $0x120] sm:$0xff]
      %v268 = vld [vmem:[%s212 + $0x128] sm:$0xff]
      %v269 = vld [vmem:[%s212 + $0x130] sm:$0xff]
      %v270 = vld [vmem:[%s212 + $0x138] sm:$0xff]
      %v271 = vld [vmem:[%s212 + $0x140] sm:$0xf]
      %v272 = vld [vmem:[%s212 + $0x144] sm:$0xff]
      %v273 = vld [vmem:[%s212 + $0x14c] sm:$0xff]
      %v274 = vld [vmem:[%s212 + $0x154] sm:$0xff]
      %v275 = vld [vmem:[%s212 + $0x15c] sm:$0xff]
      %v276 = vld [vmem:[%s212 + $0x164] sm:$0xf]
      %v277 = vld [vmem:[%s212 + $0x168] sm:$0xff]
      %v278 = vld [vmem:[%s212 + $0x170] sm:$0xff]
      %v279 = vld [vmem:[%s212 + $0x178] sm:$0xff]
      %v280 = vld [vmem:[%s212 + $0x180] sm:$0xff]
      %v281 = vld [vmem:[%s212 + $0x188] sm:$0xf]
      %v282 = vld [vmem:[%s212 + $0x18c] sm:$0xff]
      %v283 = vld [vmem:[%s212 + $0x194] sm:$0xff]
      %v284 = vld [vmem:[%s212 + $0x19c] sm:$0xff]
      %v285 = vld [vmem:[%s212 + $0x1a4] sm:$0xff]
      %v286 = vld [vmem:[%s212 + $0x1ac] sm:$0xf]
      %v287 = vld [vmem:[%s212 + $0x1b0] sm:$0xff]
      %v288 = vld [vmem:[%s212 + $0x1b8] sm:$0xff]
      %v289 = vld [vmem:[%s212 + $0x1c0] sm:$0xff]
      %v290 = vld [vmem:[%s212 + $0x1c8] sm:$0xff]
      %v291 = vld [vmem:[%s212 + $0x1d0] sm:$0xf]
      %v292 = vld [vmem:[%s212 + $0x1d4] sm:$0xff]
      %v293 = vld [vmem:[%s212 + $0x1dc] sm:$0xff]
      %v294 = vld [vmem:[%s212 + $0x1e4] sm:$0xff]
      %v295 = vld [vmem:[%s212 + $0x1ec] sm:$0xff]
      %v296 = vld [vmem:[%s212 + $0x1f4] sm:$0xf]
      %v297 = vld [vmem:[%s212 + $0x1f8] sm:$0xff]
      %v298 = vld [vmem:[%s212 + $0x200] sm:$0xff]
      %v299 = vld [vmem:[%s212 + $0x208] sm:$0xff]
      %v300 = vld [vmem:[%s212 + $0x210] sm:$0xff]
      %v301 = vld [vmem:[%s212 + $0x218] sm:$0xf]
      %v302 = vld [vmem:[%s212 + $0x21c] sm:$0xff]
      %v303 = vld [vmem:[%s212 + $0x224] sm:$0xff]
      %v304 = vld [vmem:[%s212 + $0x22c] sm:$0xff]
      %v305 = vld [vmem:[%s212 + $0x234] sm:$0xff]
      %v306 = vld [vmem:[%s212 + $0x23c] sm:$0xf]
      %v307 = vld [vmem:[%s212 + $0x240] sm:$0xff]
      %v308 = vld [vmem:[%s212 + $0x248] sm:$0xff]
      %v309 = vld [vmem:[%s212 + $0x250] sm:$0xff]
      %v310 = vld [vmem:[%s212 + $0x258] sm:$0xff]
      %v311 = vld [vmem:[%s212 + $0x260] sm:$0xf]
      %v312 = vld [vmem:[%s212 + $0x264] sm:$0xff]
      %v313 = vld [vmem:[%s212 + $0x26c] sm:$0xff]
      %v314 = vld [vmem:[%s212 + $0x274] sm:$0xff]
      %v315 = vld [vmem:[%s212 + $0x27c] sm:$0xff]
      %v316 = vld [vmem:[%s212 + $0x284] sm:$0xf]
      %v317 = vld [vmem:[%s212 + $0x288] sm:$0xff]
      %v318 = vld [vmem:[%s212 + $0x290] sm:$0xff]
      %v319 = vld [vmem:[%s212 + $0x298] sm:$0xff]
      %v320 = vld [vmem:[%s212 + $0x2a0] sm:$0xff]
      %v321 = vld [vmem:[%s212 + $0x2a8] sm:$0xf]
      %v322 = vld [vmem:[%s212 + $0x2ac] sm:$0xff]
      %v323 = vld [vmem:[%s212 + $0x2b4] sm:$0xff]
      %v324 = vld [vmem:[%s212 + $0x2bc] sm:$0xff]
      %v325 = vld [vmem:[%s212 + $0x2c4] sm:$0xff]
      %v326 = vld [vmem:[%s212 + $0x2cc] sm:$0xf]
      %v327 = vld [vmem:[%s212 + $0x2d0] sm:$0xff]
      %v328 = vld [vmem:[%s212 + $0x2d8] sm:$0xff]
      %v329 = vld [vmem:[%s212 + $0x2e0] sm:$0xff]
      %v330 = vld [vmem:[%s212 + $0x2e8] sm:$0xff]
      %v331 = vld [vmem:[%s212 + $0x2f0] sm:$0xf]
      %v332 = vld [vmem:[%s212 + $0x2f4] sm:$0xff]
      %v333 = vld [vmem:[%s212 + $0x2fc] sm:$0xff]
      %v334 = vld [vmem:[%s212 + $0x304] sm:$0xff]
      %v335 = vld [vmem:[%s212 + $0x30c] sm:$0xff]
      %v336 = vld [vmem:[%s212 + $0x314] sm:$0xf]
      %v337 = vld [vmem:[%s212 + $0x318] sm:$0xff]
      %v338 = vld [vmem:[%s212 + $0x320] sm:$0xff]
      %v339 = vld [vmem:[%s212 + $0x328] sm:$0xff]
      %v340 = vld [vmem:[%s212 + $0x330] sm:$0xff]
      %v341 = vld [vmem:[%s212 + $0x338] sm:$0xf]
      %v342 = vld [vmem:[%s212 + $0x33c] sm:$0xff]
      %v343 = vld [vmem:[%s212 + $0x344] sm:$0xff]
      %v344 = vld [vmem:[%s212 + $0x34c] sm:$0xff]
      %v345 = vld [vmem:[%s212 + $0x354] sm:$0xff]
      %v346 = vld [vmem:[%s212 + $0x35c] sm:$0xf]
      %v347 = vld [vmem:[%s212 + $0x360] sm:$0xff]
      %v348 = vld [vmem:[%s212 + $0x368] sm:$0xff]
      %v349 = vld [vmem:[%s212 + $0x370] sm:$0xff]
      %v350 = vld [vmem:[%s212 + $0x378] sm:$0xff]
      %v351 = vld [vmem:[%s212 + $0x380] sm:$0xf]
      %v352 = vld [vmem:[%s212 + $0x384] sm:$0xff]
      %v353 = vld [vmem:[%s212 + $0x38c] sm:$0xff]
      %v354 = vld [vmem:[%s212 + $0x394] sm:$0xff]
      %v355 = vld [vmem:[%s212 + $0x39c] sm:$0xff]
      %v356 = vld [vmem:[%s212 + $0x3a4] sm:$0xf]
      %v357 = vld [vmem:[%s212 + $0x3a8] sm:$0xff]
      %v358 = vld [vmem:[%s212 + $0x3b0] sm:$0xff]
      %v359 = vld [vmem:[%s212 + $0x3b8] sm:$0xff]
      %v360 = vld [vmem:[%s212 + $0x3c0] sm:$0xff]
      %v361 = vld [vmem:[%s212 + $0x3c8] sm:$0xf]
      %v362 = vld [vmem:[%s212 + $0x3cc] sm:$0xff]
      %v363 = vld [vmem:[%s212 + $0x3d4] sm:$0xff]
      %v364 = vld [vmem:[%s212 + $0x3dc] sm:$0xff]
      %v365 = vld [vmem:[%s212 + $0x3e4] sm:$0xff]
      %v366 = vld [vmem:[%s212 + $0x3ec] sm:$0xf]
      %v367 = vld [vmem:[%s212 + $0x3f0] sm:$0xff]
      %v368 = vld [vmem:[%s212 + $0x3f8] sm:$0xff]
      %v369 = vld [vmem:[%s212 + $0x400] sm:$0xff]
      %v370 = vld [vmem:[%s212 + $0x408] sm:$0xff]
      %v371 = vld [vmem:[%s212 + $0x410] sm:$0xf]
      %v372 = vld [vmem:[%s212 + $0x414] sm:$0xff]
      %v373 = vld [vmem:[%s212 + $0x41c] sm:$0xff]
      %v374 = vld [vmem:[%s212 + $0x424] sm:$0xff]
      %v375 = vld [vmem:[%s212 + $0x42c] sm:$0xff]
      %v376 = vld [vmem:[%s212 + $0x434] sm:$0xf]
      %v377 = vld [vmem:[%s212 + $0x438] sm:$0xff]
      %v378 = vld [vmem:[%s212 + $0x440] sm:$0xff]
      %v379 = vld [vmem:[%s212 + $0x448] sm:$0xff]
      %v380 = vld [vmem:[%s212 + $0x450] sm:$0xff]
      %v381 = vld [vmem:[%s212 + $0x458] sm:$0xf]
      %v382 = vld [vmem:[%s212 + $0x45c] sm:$0xff]
      %v383 = vld [vmem:[%s212 + $0x464] sm:$0xff]
      %v384 = vld [vmem:[%s212 + $0x46c] sm:$0xff]
      %v385 = vld [vmem:[%s212 + $0x474] sm:$0xff]
      %v386 = vld [vmem:[%s212 + $0x47c] sm:$0xf]
      %v387 = vld [vmem:[%s2] sm:$0xff]
      %v388 = vld [vmem:[%s2 + $0x8] sm:$0xff]
      %v389 = vld [vmem:[%s2 + $0x10] sm:$0xff]
      %v390 = vld [vmem:[%s2 + $0x18] sm:$0xff]
      %v391 = vld [vmem:[%s2 + $0x20] sm:$0xff]
      %v392 = vld [vmem:[%s2 + $0x28] sm:$0xff]
      %v393 = vld [vmem:[%s2 + $0x30] sm:$0xff]
      %v394 = vld [vmem:[%s2 + $0x38] sm:$0xff]
      %v395 = vld [vmem:[%s2 + $0x40] sm:$0xff]
      %v396 = vld [vmem:[%s2 + $0x48] sm:$0xff]
      %v397 = vld [vmem:[%s2 + $0x50] sm:$0xff]
      %v398 = vld [vmem:[%s2 + $0x58] sm:$0xff]
      %v399 = vld [vmem:[%s2 + $0x60] sm:$0xff]
      %v400 = vld [vmem:[%s2 + $0x68] sm:$0xff]
      %v401 = vld [vmem:[%s2 + $0x70] sm:$0xff]
      %v402 = vld [vmem:[%s2 + $0x78] sm:$0xff]
      %v403 = vld [vmem:[%s2 + $0x80] sm:$0xff]
      %v404 = vld [vmem:[%s2 + $0x88] sm:$0xff]
      %v405 = vld [vmem:[%s2 + $0x90] sm:$0xff]
      %v406 = vld [vmem:[%s2 + $0x98] sm:$0xff]
      %v407 = vld [vmem:[%s2 + $0xa0] sm:$0xff]
      %v408 = vld [vmem:[%s2 + $0xa8] sm:$0xff]
      %v409 = vld [vmem:[%s2 + $0xb0] sm:$0xff]
      %v410 = vld [vmem:[%s2 + $0xb8] sm:$0xff]
      %v411 = vld [vmem:[%s2 + $0xc0] sm:$0xff]
      %v412 = vld [vmem:[%s2 + $0xc8] sm:$0xff]
      %v413 = vld [vmem:[%s2 + $0xd0] sm:$0xff]
      %v414 = vld [vmem:[%s2 + $0xd8] sm:$0xff]
      %v415 = vld [vmem:[%s2 + $0xe0] sm:$0xff]
      %v416 = vld [vmem:[%s2 + $0xe8] sm:$0xff]
      %v417 = vld [vmem:[%s2 + $0xf0] sm:$0xff]
      %v418 = vld [vmem:[%s2 + $0xf8] sm:$0xff]
      %v419 = vld [vmem:[%s2 + $0x100] sm:$0xff]
      %v420 = vld [vmem:[%s2 + $0x108] sm:$0xff]
      %v421 = vld [vmem:[%s2 + $0x110] sm:$0xff]
      %v422 = vld [vmem:[%s2 + $0x118] sm:$0xff]
      %v423 = vld [vmem:[%s2 + $0x120] sm:$0xff]
      %v424 = vld [vmem:[%s2 + $0x128] sm:$0xff]
      %v425 = vld [vmem:[%s2 + $0x130] sm:$0xff]
      %v426 = vld [vmem:[%s2 + $0x138] sm:$0xff]
      %v427 = vld [vmem:[%s2 + $0x140] sm:$0xff]
      %v428 = vld [vmem:[%s2 + $0x148] sm:$0xff]
      %v429 = vld [vmem:[%s2 + $0x150] sm:$0xff]
      %v430 = vld [vmem:[%s2 + $0x158] sm:$0xff]
      %v431 = vld [vmem:[%s2 + $0x160] sm:$0xff]
      %v432 = vld [vmem:[%s2 + $0x168] sm:$0xff]
      %v433 = vld [vmem:[%s2 + $0x170] sm:$0xff]
      %v434 = vld [vmem:[%s2 + $0x178] sm:$0xff]
      %v435 = vld [vmem:[%s2 + $0x180] sm:$0xff]
      %v436 = vld [vmem:[%s2 + $0x188] sm:$0xff]
      %v437 = vld [vmem:[%s2 + $0x190] sm:$0xff]
      %v438 = vld [vmem:[%s2 + $0x198] sm:$0xff]
      %v439 = vld [vmem:[%s2 + $0x1a0] sm:$0xff]
      %v440 = vld [vmem:[%s2 + $0x1a8] sm:$0xff]
      %v441 = vld [vmem:[%s2 + $0x1b0] sm:$0xff]
      %v442 = vld [vmem:[%s2 + $0x1b8] sm:$0xff]
      %v443 = vld [vmem:[%s2 + $0x1c0] sm:$0xff]
      %v444 = vld [vmem:[%s2 + $0x1c8] sm:$0xff]
      %v445 = vld [vmem:[%s2 + $0x1d0] sm:$0xff]
      %v446 = vld [vmem:[%s2 + $0x1d8] sm:$0xff]
      %v447 = vld [vmem:[%s2 + $0x1e0] sm:$0xff]
      %v448 = vld [vmem:[%s2 + $0x1e8] sm:$0xff]
      %v449 = vld [vmem:[%s2 + $0x1f0] sm:$0xff]
      %v450 = vld [vmem:[%s2 + $0x1f8] sm:$0xff]
      %v451 = vld [vmem:[%s2 + $0x200] sm:$0xff]
      %v452 = vld [vmem:[%s2 + $0x208] sm:$0xff]
      %v453 = vld [vmem:[%s2 + $0x210] sm:$0xff]
      %v454 = vld [vmem:[%s2 + $0x218] sm:$0xff]
      %v455 = vld [vmem:[%s2 + $0x220] sm:$0xff]
      %v456 = vld [vmem:[%s2 + $0x228] sm:$0xff]
      %v457 = vld [vmem:[%s2 + $0x230] sm:$0xff]
      %v458 = vld [vmem:[%s2 + $0x238] sm:$0xff]
      %v459 = vld [vmem:[%s2 + $0x240] sm:$0xff]
      %v460 = vld [vmem:[%s2 + $0x248] sm:$0xff]
      %v461 = vld [vmem:[%s2 + $0x250] sm:$0xff]
      %v462 = vld [vmem:[%s2 + $0x258] sm:$0xff]
      %v463 = vld [vmem:[%s2 + $0x260] sm:$0xff]
      %v464 = vld [vmem:[%s2 + $0x268] sm:$0xff]
      %v465 = vld [vmem:[%s2 + $0x270] sm:$0xff]
      %v466 = vld [vmem:[%s2 + $0x278] sm:$0xff]
      %v467 = vld [vmem:[%s2 + $0x280] sm:$0xff]
      %v468 = vld [vmem:[%s2 + $0x288] sm:$0xff]
      %v469 = vld [vmem:[%s2 + $0x290] sm:$0xff]
      %v470 = vld [vmem:[%s2 + $0x298] sm:$0xff]
      %v471 = vld [vmem:[%s2 + $0x2a0] sm:$0xff]
      %v472 = vld [vmem:[%s2 + $0x2a8] sm:$0xff]
      %v473 = vld [vmem:[%s2 + $0x2b0] sm:$0xff]
      %v474 = vld [vmem:[%s2 + $0x2b8] sm:$0xff]
      %v475 = vld [vmem:[%s2 + $0x2c0] sm:$0xff]
      %v476 = vld [vmem:[%s2 + $0x2c8] sm:$0xff]
      %v477 = vld [vmem:[%s2 + $0x2d0] sm:$0xff]
      %v478 = vld [vmem:[%s2 + $0x2d8] sm:$0xff]
      %v479 = vld [vmem:[%s2 + $0x2e0] sm:$0xff]
      %v480 = vld [vmem:[%s2 + $0x2e8] sm:$0xff]
      %v481 = vld [vmem:[%s2 + $0x2f0] sm:$0xff]
      %v482 = vld [vmem:[%s2 + $0x2f8] sm:$0xff]
      %v483 = vld [vmem:[%s2 + $0x300] sm:$0xff]
      %v484 = vld [vmem:[%s2 + $0x308] sm:$0xff]
      %v485 = vld [vmem:[%s2 + $0x310] sm:$0xff]
      %v486 = vld [vmem:[%s2 + $0x318] sm:$0xff]
      %v487 = vld [vmem:[%s2 + $0x320] sm:$0xff]
      %v488 = vld [vmem:[%s2 + $0x328] sm:$0xff]
      %v489 = vld [vmem:[%s2 + $0x330] sm:$0xff]
      %v490 = vld [vmem:[%s2 + $0x338] sm:$0xff]
      %v491 = vld [vmem:[%s2 + $0x340] sm:$0xff]
      %v492 = vld [vmem:[%s2 + $0x348] sm:$0xff]
      %v493 = vld [vmem:[%s2 + $0x350] sm:$0xff]
      %v494 = vld [vmem:[%s2 + $0x358] sm:$0xff]
      %v495 = vld [vmem:[%s2 + $0x360] sm:$0xff]
      %v496 = vld [vmem:[%s2 + $0x368] sm:$0xff]
      %v497 = vld [vmem:[%s2 + $0x370] sm:$0xff]
      %v498 = vld [vmem:[%s2 + $0x378] sm:$0xff]
      %v499 = vld [vmem:[%s2 + $0x380] sm:$0xff]
      %v500 = vld [vmem:[%s2 + $0x388] sm:$0xff]
      %v501 = vld [vmem:[%s2 + $0x390] sm:$0xff]
      %v502 = vld [vmem:[%s2 + $0x398] sm:$0xff]
      %v503 = vld [vmem:[%s2 + $0x3a0] sm:$0xff]
      %v504 = vld [vmem:[%s2 + $0x3a8] sm:$0xff]
      %v505 = vld [vmem:[%s2 + $0x3b0] sm:$0xff]
      %v506 = vld [vmem:[%s2 + $0x3b8] sm:$0xff]
      %v507 = vld [vmem:[%s2 + $0x3c0] sm:$0xff]
      %v508 = vld [vmem:[%s2 + $0x3c8] sm:$0xff]
      %v509 = vld [vmem:[%s2 + $0x3d0] sm:$0xff]
      %v510 = vld [vmem:[%s2 + $0x3d8] sm:$0xff]
      %v511 = vld [vmem:[%s2 + $0x3e0] sm:$0xff]
      %v512 = vld [vmem:[%s2 + $0x3e8] sm:$0xff]
      %v513 = vld [vmem:[%s2 + $0x3f0] sm:$0xff]
      %v514 = vld [vmem:[%s2 + $0x3f8] sm:$0xff]
      %v515 = vld [vmem:[%s2 + $0x400] sm:$0xff]
      %v516 = vld [vmem:[%s2 + $0x408] sm:$0xff]
      %v517 = vld [vmem:[%s2 + $0x410] sm:$0xff]
      %v518 = vld [vmem:[%s2 + $0x418] sm:$0xff]
      %v519 = vld [vmem:[%s2 + $0x420] sm:$0xff]
      %v520 = vld [vmem:[%s2 + $0x428] sm:$0xff]
      %v521 = vld [vmem:[%s2 + $0x430] sm:$0xff]
      %v522 = vld [vmem:[%s2 + $0x438] sm:$0xff]
      %v523 = vld [vmem:[%s2 + $0x440] sm:$0xff]
      %v524 = vld [vmem:[%s2 + $0x448] sm:$0xff]
      %v525 = vld [vmem:[%s2 + $0x450] sm:$0xff]
      %v526 = vld [vmem:[%s2 + $0x458] sm:$0xff]
      %v527 = vld [vmem:[%s2 + $0x460] sm:$0xff]
      %v528 = vld [vmem:[%s2 + $0x468] sm:$0xff]
      %v529 = vld [vmem:[%s2 + $0x470] sm:$0xff]
      %v530 = vld [vmem:[%s2 + $0x478] sm:$0xff]
      %v531 = vld [vmem:[%s3] sm:$0x3]
      %v533 = vlaneseq
      %v534 = vshrl.u32 %v533, 7
      %v535 = vsub.s32 0, %v534
      %v536 = vrot.slane %v531, %v535
      %v537 = vlaneseq
      %v538 = vshrl.u32 %v537, 7
      %v539 = vsub.s32 1, %v538
      %v540 = vrot.slane %v531, %v539
      %v703 = vunpack.c.l.b16 %v227
      %v704 = vunpack.c.h.b16 %v227
      %v705 = vunpack.c.l.b16 %v228
      %v706 = vunpack.c.h.b16 %v228
      %v707 = vunpack.c.l.b16 %v229
      %v708 = vunpack.c.h.b16 %v229
      %v709 = vunpack.c.l.b16 %v230
      %v710 = vunpack.c.h.b16 %v230
      %v711 = vunpack.c.l.b16 %v231
      %v712 = vunpack.c.l.b16 %v232
      %v713 = vunpack.c.h.b16 %v232
      %v714 = vunpack.c.l.b16 %v233
      %v715 = vunpack.c.h.b16 %v233
      %v716 = vunpack.c.l.b16 %v234
      %v717 = vunpack.c.h.b16 %v234
      %v718 = vunpack.c.l.b16 %v235
      %v719 = vunpack.c.h.b16 %v235
      %v720 = vunpack.c.l.b16 %v236
      %v721 = vunpack.c.l.b16 %v237
      %v722 = vunpack.c.h.b16 %v237
      %v723 = vunpack.c.l.b16 %v238
      %v724 = vunpack.c.h.b16 %v238
      %v725 = vunpack.c.l.b16 %v239
      %v726 = vunpack.c.h.b16 %v239
      %v727 = vunpack.c.l.b16 %v240
      %v728 = vunpack.c.h.b16 %v240
      %v729 = vunpack.c.l.b16 %v241
      %v730 = vunpack.c.l.b16 %v242
      %v731 = vunpack.c.h.b16 %v242
      %v732 = vunpack.c.l.b16 %v243
      %v733 = vunpack.c.h.b16 %v243
      %v734 = vunpack.c.l.b16 %v244
      %v735 = vunpack.c.h.b16 %v244
      %v736 = vunpack.c.l.b16 %v245
      %v737 = vunpack.c.h.b16 %v245
      %v738 = vunpack.c.l.b16 %v246
      %v739 = vunpack.c.l.b16 %v247
      %v740 = vunpack.c.h.b16 %v247
      %v741 = vunpack.c.l.b16 %v248
      %v742 = vunpack.c.h.b16 %v248
      %v743 = vunpack.c.l.b16 %v249
      %v744 = vunpack.c.h.b16 %v249
      %v745 = vunpack.c.l.b16 %v250
      %v746 = vunpack.c.h.b16 %v250
      %v747 = vunpack.c.l.b16 %v251
      %v748 = vunpack.c.l.b16 %v252
      %v749 = vunpack.c.h.b16 %v252
      %v750 = vunpack.c.l.b16 %v253
      %v751 = vunpack.c.h.b16 %v253
      %v752 = vunpack.c.l.b16 %v254
      %v753 = vunpack.c.h.b16 %v254
      %v754 = vunpack.c.l.b16 %v255
      %v755 = vunpack.c.h.b16 %v255
      %v756 = vunpack.c.l.b16 %v256
      %v757 = vunpack.c.l.b16 %v257
      %v758 = vunpack.c.h.b16 %v257
      %v759 = vunpack.c.l.b16 %v258
      %v760 = vunpack.c.h.b16 %v258
      %v761 = vunpack.c.l.b16 %v259
      %v762 = vunpack.c.h.b16 %v259
      %v763 = vunpack.c.l.b16 %v260
      %v764 = vunpack.c.h.b16 %v260
      %v765 = vunpack.c.l.b16 %v261
      %v766 = vunpack.c.l.b16 %v262
      %v767 = vunpack.c.h.b16 %v262
      %v768 = vunpack.c.l.b16 %v263
      %v769 = vunpack.c.h.b16 %v263
      %v770 = vunpack.c.l.b16 %v264
      %v771 = vunpack.c.h.b16 %v264
      %v772 = vunpack.c.l.b16 %v265
      %v773 = vunpack.c.h.b16 %v265
      %v774 = vunpack.c.l.b16 %v266
      %v775 = vunpack.c.l.b16 %v267
      %v776 = vunpack.c.h.b16 %v267
      %v777 = vunpack.c.l.b16 %v268
      %v778 = vunpack.c.h.b16 %v268
      %v779 = vunpack.c.l.b16 %v269
      %v780 = vunpack.c.h.b16 %v269
      %v781 = vunpack.c.l.b16 %v270
      %v782 = vunpack.c.h.b16 %v270
      %v783 = vunpack.c.l.b16 %v271
      %v784 = vunpack.c.l.b16 %v272
      %v785 = vunpack.c.h.b16 %v272
      %v786 = vunpack.c.l.b16 %v273
      %v787 = vunpack.c.h.b16 %v273
      %v788 = vunpack.c.l.b16 %v274
      %v789 = vunpack.c.h.b16 %v274
      %v790 = vunpack.c.l.b16 %v275
      %v791 = vunpack.c.h.b16 %v275
      %v792 = vunpack.c.l.b16 %v276
      %v793 = vunpack.c.l.b16 %v277
      %v794 = vunpack.c.h.b16 %v277
      %v795 = vunpack.c.l.b16 %v278
      %v796 = vunpack.c.h.b16 %v278
      %v797 = vunpack.c.l.b16 %v279
      %v798 = vunpack.c.h.b16 %v279
      %v799 = vunpack.c.l.b16 %v280
      %v800 = vunpack.c.h.b16 %v280
      %v801 = vunpack.c.l.b16 %v281
      %v802 = vunpack.c.l.b16 %v282
      %v803 = vunpack.c.h.b16 %v282
      %v804 = vunpack.c.l.b16 %v283
      %v805 = vunpack.c.h.b16 %v283
      %v806 = vunpack.c.l.b16 %v284
      %v807 = vunpack.c.h.b16 %v284
      %v808 = vunpack.c.l.b16 %v285
      %v809 = vunpack.c.h.b16 %v285
      %v810 = vunpack.c.l.b16 %v286
      %v811 = vunpack.c.l.b16 %v287
      %v812 = vunpack.c.h.b16 %v287
      %v813 = vunpack.c.l.b16 %v288
      %v814 = vunpack.c.h.b16 %v288
      %v815 = vunpack.c.l.b16 %v289
      %v816 = vunpack.c.h.b16 %v289
      %v817 = vunpack.c.l.b16 %v290
      %v818 = vunpack.c.h.b16 %v290
      %v819 = vunpack.c.l.b16 %v291
      %v820 = vunpack.c.l.b16 %v292
      %v821 = vunpack.c.h.b16 %v292
      %v822 = vunpack.c.l.b16 %v293
      %v823 = vunpack.c.h.b16 %v293
      %v824 = vunpack.c.l.b16 %v294
      %v825 = vunpack.c.h.b16 %v294
      %v826 = vunpack.c.l.b16 %v295
      %v827 = vunpack.c.h.b16 %v295
      %v828 = vunpack.c.l.b16 %v296
      %v829 = vunpack.c.l.b16 %v297
      %v830 = vunpack.c.h.b16 %v297
      %v831 = vunpack.c.l.b16 %v298
      %v832 = vunpack.c.h.b16 %v298
      %v833 = vunpack.c.l.b16 %v299
      %v834 = vunpack.c.h.b16 %v299
      %v835 = vunpack.c.l.b16 %v300
      %v836 = vunpack.c.h.b16 %v300
      %v837 = vunpack.c.l.b16 %v301
      %v838 = vunpack.c.l.b16 %v302
      %v839 = vunpack.c.h.b16 %v302
      %v840 = vunpack.c.l.b16 %v303
      %v841 = vunpack.c.h.b16 %v303
      %v842 = vunpack.c.l.b16 %v304
      %v843 = vunpack.c.h.b16 %v304
      %v844 = vunpack.c.l.b16 %v305
      %v845 = vunpack.c.h.b16 %v305
      %v846 = vunpack.c.l.b16 %v306
      %v847 = vunpack.c.l.b16 %v307
      %v848 = vunpack.c.h.b16 %v307
      %v849 = vunpack.c.l.b16 %v308
      %v850 = vunpack.c.h.b16 %v308
      %v851 = vunpack.c.l.b16 %v309
      %v852 = vunpack.c.h.b16 %v309
      %v853 = vunpack.c.l.b16 %v310
      %v854 = vunpack.c.h.b16 %v310
      %v855 = vunpack.c.l.b16 %v311
      %v856 = vunpack.c.l.b16 %v312
      %v857 = vunpack.c.h.b16 %v312
      %v858 = vunpack.c.l.b16 %v313
      %v859 = vunpack.c.h.b16 %v313
      %v860 = vunpack.c.l.b16 %v314
      %v861 = vunpack.c.h.b16 %v314
      %v862 = vunpack.c.l.b16 %v315
      %v863 = vunpack.c.h.b16 %v315
      %v864 = vunpack.c.l.b16 %v316
      %v865 = vunpack.c.l.b16 %v317
      %v866 = vunpack.c.h.b16 %v317
      %v867 = vunpack.c.l.b16 %v318
      %v868 = vunpack.c.h.b16 %v318
      %v869 = vunpack.c.l.b16 %v319
      %v870 = vunpack.c.h.b16 %v319
      %v871 = vunpack.c.l.b16 %v320
      %v872 = vunpack.c.h.b16 %v320
      %v873 = vunpack.c.l.b16 %v321
      %v874 = vunpack.c.l.b16 %v322
      %v875 = vunpack.c.h.b16 %v322
      %v876 = vunpack.c.l.b16 %v323
      %v877 = vunpack.c.h.b16 %v323
      %v878 = vunpack.c.l.b16 %v324
      %v879 = vunpack.c.h.b16 %v324
      %v880 = vunpack.c.l.b16 %v325
      %v881 = vunpack.c.h.b16 %v325
      %v882 = vunpack.c.l.b16 %v326
      %v883 = vunpack.c.l.b16 %v327
      %v884 = vunpack.c.h.b16 %v327
      %v885 = vunpack.c.l.b16 %v328
      %v886 = vunpack.c.h.b16 %v328
      %v887 = vunpack.c.l.b16 %v329
      %v888 = vunpack.c.h.b16 %v329
      %v889 = vunpack.c.l.b16 %v330
      %v890 = vunpack.c.h.b16 %v330
      %v891 = vunpack.c.l.b16 %v331
      %v892 = vunpack.c.l.b16 %v332
      %v893 = vunpack.c.h.b16 %v332
      %v894 = vunpack.c.l.b16 %v333
      %v895 = vunpack.c.h.b16 %v333
      %v896 = vunpack.c.l.b16 %v334
      %v897 = vunpack.c.h.b16 %v334
      %v898 = vunpack.c.l.b16 %v335
      %v899 = vunpack.c.h.b16 %v335
      %v900 = vunpack.c.l.b16 %v336
      %v901 = vunpack.c.l.b16 %v337
      %v902 = vunpack.c.h.b16 %v337
      %v903 = vunpack.c.l.b16 %v338
      %v904 = vunpack.c.h.b16 %v338
      %v905 = vunpack.c.l.b16 %v339
      %v906 = vunpack.c.h.b16 %v339
      %v907 = vunpack.c.l.b16 %v340
      %v908 = vunpack.c.h.b16 %v340
      %v909 = vunpack.c.l.b16 %v341
      %v910 = vunpack.c.l.b16 %v342
      %v911 = vunpack.c.h.b16 %v342
      %v912 = vunpack.c.l.b16 %v343
      %v913 = vunpack.c.h.b16 %v343
      %v914 = vunpack.c.l.b16 %v344
      %v915 = vunpack.c.h.b16 %v344
      %v916 = vunpack.c.l.b16 %v345
      %v917 = vunpack.c.h.b16 %v345
      %v918 = vunpack.c.l.b16 %v346
      %v919 = vunpack.c.l.b16 %v347
      %v920 = vunpack.c.h.b16 %v347
      %v921 = vunpack.c.l.b16 %v348
      %v922 = vunpack.c.h.b16 %v348
      %v923 = vunpack.c.l.b16 %v349
      %v924 = vunpack.c.h.b16 %v349
      %v925 = vunpack.c.l.b16 %v350
      %v926 = vunpack.c.h.b16 %v350
      %v927 = vunpack.c.l.b16 %v351
      %v928 = vunpack.c.l.b16 %v352
      %v929 = vunpack.c.h.b16 %v352
      %v930 = vunpack.c.l.b16 %v353
      %v931 = vunpack.c.h.b16 %v353
      %v932 = vunpack.c.l.b16 %v354
      %v933 = vunpack.c.h.b16 %v354
      %v934 = vunpack.c.l.b16 %v355
      %v935 = vunpack.c.h.b16 %v355
      %v936 = vunpack.c.l.b16 %v356
      %v937 = vunpack.c.l.b16 %v357
      %v938 = vunpack.c.h.b16 %v357
      %v939 = vunpack.c.l.b16 %v358
      %v940 = vunpack.c.h.b16 %v358
      %v941 = vunpack.c.l.b16 %v359
      %v942 = vunpack.c.h.b16 %v359
      %v943 = vunpack.c.l.b16 %v360
      %v944 = vunpack.c.h.b16 %v360
      %v945 = vunpack.c.l.b16 %v361
      %v946 = vunpack.c.l.b16 %v362
      %v947 = vunpack.c.h.b16 %v362
      %v948 = vunpack.c.l.b16 %v363
      %v949 = vunpack.c.h.b16 %v363
      %v950 = vunpack.c.l.b16 %v364
      %v951 = vunpack.c.h.b16 %v364
      %v952 = vunpack.c.l.b16 %v365
      %v953 = vunpack.c.h.b16 %v365
      %v954 = vunpack.c.l.b16 %v366
      %v955 = vunpack.c.l.b16 %v367
      %v956 = vunpack.c.h.b16 %v367
      %v957 = vunpack.c.l.b16 %v368
      %v958 = vunpack.c.h.b16 %v368
      %v959 = vunpack.c.l.b16 %v369
      %v960 = vunpack.c.h.b16 %v369
      %v961 = vunpack.c.l.b16 %v370
      %v962 = vunpack.c.h.b16 %v370
      %v963 = vunpack.c.l.b16 %v371
      %v964 = vunpack.c.l.b16 %v372
      %v965 = vunpack.c.h.b16 %v372
      %v966 = vunpack.c.l.b16 %v373
      %v967 = vunpack.c.h.b16 %v373
      %v968 = vunpack.c.l.b16 %v374
      %v969 = vunpack.c.h.b16 %v374
      %v970 = vunpack.c.l.b16 %v375
      %v971 = vunpack.c.h.b16 %v375
      %v972 = vunpack.c.l.b16 %v376
      %v973 = vunpack.c.l.b16 %v377
      %v974 = vunpack.c.h.b16 %v377
      %v975 = vunpack.c.l.b16 %v378
      %v976 = vunpack.c.h.b16 %v378
      %v977 = vunpack.c.l.b16 %v379
      %v978 = vunpack.c.h.b16 %v379
      %v979 = vunpack.c.l.b16 %v380
      %v980 = vunpack.c.h.b16 %v380
      %v981 = vunpack.c.l.b16 %v381
      %v982 = vunpack.c.l.b16 %v382
      %v983 = vunpack.c.h.b16 %v382
      %v984 = vunpack.c.l.b16 %v383
      %v985 = vunpack.c.h.b16 %v383
      %v986 = vunpack.c.l.b16 %v384
      %v987 = vunpack.c.h.b16 %v384
      %v988 = vunpack.c.l.b16 %v385
      %v989 = vunpack.c.h.b16 %v385
      %v990 = vunpack.c.l.b16 %v386
      %v991 = vpack.c.b16 %v712, %v703
      %v992 = vpack.c.b16 %v713, %v704
      %v993 = vpack.c.b16 %v714, %v705
      %v994 = vpack.c.b16 %v715, %v706
      %v995 = vpack.c.b16 %v716, %v707
      %v996 = vpack.c.b16 %v717, %v708
      %v997 = vpack.c.b16 %v718, %v709
      %v998 = vpack.c.b16 %v719, %v710
      %v999 = vpack.c.b16 %v720, %v711
      %v1000 = vpack.c.b16 %v730, %v721
      %v1001 = vpack.c.b16 %v731, %v722
      %v1002 = vpack.c.b16 %v732, %v723
      %v1003 = vpack.c.b16 %v733, %v724
      %v1004 = vpack.c.b16 %v734, %v725
      %v1005 = vpack.c.b16 %v735, %v726
      %v1006 = vpack.c.b16 %v736, %v727
      %v1007 = vpack.c.b16 %v737, %v728
      %v1008 = vpack.c.b16 %v738, %v729
      %v1009 = vpack.c.b16 %v748, %v739
      %v1010 = vpack.c.b16 %v749, %v740
      %v1011 = vpack.c.b16 %v750, %v741
      %v1012 = vpack.c.b16 %v751, %v742
      %v1013 = vpack.c.b16 %v752, %v743
      %v1014 = vpack.c.b16 %v753, %v744
      %v1015 = vpack.c.b16 %v754, %v745
      %v1016 = vpack.c.b16 %v755, %v746
      %v1017 = vpack.c.b16 %v756, %v747
      %v1018 = vpack.c.b16 %v766, %v757
      %v1019 = vpack.c.b16 %v767, %v758
      %v1020 = vpack.c.b16 %v768, %v759
      %v1021 = vpack.c.b16 %v769, %v760
      %v1022 = vpack.c.b16 %v770, %v761
      %v1023 = vpack.c.b16 %v771, %v762
      %v1024 = vpack.c.b16 %v772, %v763
      %v1025 = vpack.c.b16 %v773, %v764
      %v1026 = vpack.c.b16 %v774, %v765
      %v1027 = vpack.c.b16 %v784, %v775
      %v1028 = vpack.c.b16 %v785, %v776
      %v1029 = vpack.c.b16 %v786, %v777
      %v1030 = vpack.c.b16 %v787, %v778
      %v1031 = vpack.c.b16 %v788, %v779
      %v1032 = vpack.c.b16 %v789, %v780
      %v1033 = vpack.c.b16 %v790, %v781
      %v1034 = vpack.c.b16 %v791, %v782
      %v1035 = vpack.c.b16 %v792, %v783
      %v1036 = vpack.c.b16 %v802, %v793
      %v1037 = vpack.c.b16 %v803, %v794
      %v1038 = vpack.c.b16 %v804, %v795
      %v1039 = vpack.c.b16 %v805, %v796
      %v1040 = vpack.c.b16 %v806, %v797
      %v1041 = vpack.c.b16 %v807, %v798
      %v1042 = vpack.c.b16 %v808, %v799
      %v1043 = vpack.c.b16 %v809, %v800
      %v1044 = vpack.c.b16 %v810, %v801
      %v1045 = vpack.c.b16 %v820, %v811
      %v1046 = vpack.c.b16 %v821, %v812
      %v1047 = vpack.c.b16 %v822, %v813
      %v1048 = vpack.c.b16 %v823, %v814
      %v1049 = vpack.c.b16 %v824, %v815
      %v1050 = vpack.c.b16 %v825, %v816
      %v1051 = vpack.c.b16 %v826, %v817
      %v1052 = vpack.c.b16 %v827, %v818
      %v1053 = vpack.c.b16 %v828, %v819
      %v1054 = vpack.c.b16 %v838, %v829
      %v1055 = vpack.c.b16 %v839, %v830
      %v1056 = vpack.c.b16 %v840, %v831
      %v1057 = vpack.c.b16 %v841, %v832
      %v1058 = vpack.c.b16 %v842, %v833
      %v1059 = vpack.c.b16 %v843, %v834
      %v1060 = vpack.c.b16 %v844, %v835
      %v1061 = vpack.c.b16 %v845, %v836
      %v1062 = vpack.c.b16 %v846, %v837
      %v1063 = vpack.c.b16 %v856, %v847
      %v1064 = vpack.c.b16 %v857, %v848
      %v1065 = vpack.c.b16 %v858, %v849
      %v1066 = vpack.c.b16 %v859, %v850
      %v1067 = vpack.c.b16 %v860, %v851
      %v1068 = vpack.c.b16 %v861, %v852
      %v1069 = vpack.c.b16 %v862, %v853
      %v1070 = vpack.c.b16 %v863, %v854
      %v1071 = vpack.c.b16 %v864, %v855
      %v1072 = vpack.c.b16 %v874, %v865
      %v1073 = vpack.c.b16 %v875, %v866
      %v1074 = vpack.c.b16 %v876, %v867
      %v1075 = vpack.c.b16 %v877, %v868
      %v1076 = vpack.c.b16 %v878, %v869
      %v1077 = vpack.c.b16 %v879, %v870
      %v1078 = vpack.c.b16 %v880, %v871
      %v1079 = vpack.c.b16 %v881, %v872
      %v1080 = vpack.c.b16 %v882, %v873
      %v1081 = vpack.c.b16 %v892, %v883
      %v1082 = vpack.c.b16 %v893, %v884
      %v1083 = vpack.c.b16 %v894, %v885
      %v1084 = vpack.c.b16 %v895, %v886
      %v1085 = vpack.c.b16 %v896, %v887
      %v1086 = vpack.c.b16 %v897, %v888
      %v1087 = vpack.c.b16 %v898, %v889
      %v1088 = vpack.c.b16 %v899, %v890
      %v1089 = vpack.c.b16 %v900, %v891
      %v1090 = vpack.c.b16 %v910, %v901
      %v1091 = vpack.c.b16 %v911, %v902
      %v1092 = vpack.c.b16 %v912, %v903
      %v1093 = vpack.c.b16 %v913, %v904
      %v1094 = vpack.c.b16 %v914, %v905
      %v1095 = vpack.c.b16 %v915, %v906
      %v1096 = vpack.c.b16 %v916, %v907
      %v1097 = vpack.c.b16 %v917, %v908
      %v1098 = vpack.c.b16 %v918, %v909
      %v1099 = vpack.c.b16 %v928, %v919
      %v1100 = vpack.c.b16 %v929, %v920
      %v1101 = vpack.c.b16 %v930, %v921
      %v1102 = vpack.c.b16 %v931, %v922
      %v1103 = vpack.c.b16 %v932, %v923
      %v1104 = vpack.c.b16 %v933, %v924
      %v1105 = vpack.c.b16 %v934, %v925
      %v1106 = vpack.c.b16 %v935, %v926
      %v1107 = vpack.c.b16 %v936, %v927
      %v1108 = vpack.c.b16 %v946, %v937
      %v1109 = vpack.c.b16 %v947, %v938
      %v1110 = vpack.c.b16 %v948, %v939
      %v1111 = vpack.c.b16 %v949, %v940
      %v1112 = vpack.c.b16 %v950, %v941
      %v1113 = vpack.c.b16 %v951, %v942
      %v1114 = vpack.c.b16 %v952, %v943
      %v1115 = vpack.c.b16 %v953, %v944
      %v1116 = vpack.c.b16 %v954, %v945
      %v1117 = vpack.c.b16 %v964, %v955
      %v1118 = vpack.c.b16 %v965, %v956
      %v1119 = vpack.c.b16 %v966, %v957
      %v1120 = vpack.c.b16 %v967, %v958
      %v1121 = vpack.c.b16 %v968, %v959
      %v1122 = vpack.c.b16 %v969, %v960
      %v1123 = vpack.c.b16 %v970, %v961
      %v1124 = vpack.c.b16 %v971, %v962
      %v1125 = vpack.c.b16 %v972, %v963
      %v1126 = vpack.c.b16 %v982, %v973
      %v1127 = vpack.c.b16 %v983, %v974
      %v1128 = vpack.c.b16 %v984, %v975
      %v1129 = vpack.c.b16 %v985, %v976
      %v1130 = vpack.c.b16 %v986, %v977
      %v1131 = vpack.c.b16 %v987, %v978
      %v1132 = vpack.c.b16 %v988, %v979
      %v1133 = vpack.c.b16 %v989, %v980
      %v1134 = vpack.c.b16 %v990, %v981
      %v1423 = vunpack.c.l.b16 %v387
      %v1424 = vunpack.c.h.b16 %v387
      %v1425 = vunpack.c.l.b16 %v388
      %v1426 = vunpack.c.h.b16 %v388
      %v1427 = vunpack.c.l.b16 %v389
      %v1428 = vunpack.c.h.b16 %v389
      %v1429 = vunpack.c.l.b16 %v390
      %v1430 = vunpack.c.h.b16 %v390
      %v1431 = vunpack.c.l.b16 %v391
      %v1432 = vunpack.c.h.b16 %v391
      %v1433 = vunpack.c.l.b16 %v392
      %v1434 = vunpack.c.h.b16 %v392
      %v1435 = vunpack.c.l.b16 %v393
      %v1436 = vunpack.c.h.b16 %v393
      %v1437 = vunpack.c.l.b16 %v394
      %v1438 = vunpack.c.h.b16 %v394
      %v1439 = vunpack.c.l.b16 %v395
      %v1440 = vunpack.c.h.b16 %v395
      %v1441 = vunpack.c.l.b16 %v396
      %v1442 = vunpack.c.h.b16 %v396
      %v1443 = vunpack.c.l.b16 %v397
      %v1444 = vunpack.c.h.b16 %v397
      %v1445 = vunpack.c.l.b16 %v398
      %v1446 = vunpack.c.h.b16 %v398
      %v1447 = vunpack.c.l.b16 %v399
      %v1448 = vunpack.c.h.b16 %v399
      %v1449 = vunpack.c.l.b16 %v400
      %v1450 = vunpack.c.h.b16 %v400
      %v1451 = vunpack.c.l.b16 %v401
      %v1452 = vunpack.c.h.b16 %v401
      %v1453 = vunpack.c.l.b16 %v402
      %v1454 = vunpack.c.h.b16 %v402
      %v1455 = vunpack.c.l.b16 %v403
      %v1456 = vunpack.c.h.b16 %v403
      %v1457 = vunpack.c.l.b16 %v404
      %v1458 = vunpack.c.h.b16 %v404
      %v1459 = vunpack.c.l.b16 %v405
      %v1460 = vunpack.c.h.b16 %v405
      %v1461 = vunpack.c.l.b16 %v406
      %v1462 = vunpack.c.h.b16 %v406
      %v1463 = vunpack.c.l.b16 %v407
      %v1464 = vunpack.c.h.b16 %v407
      %v1465 = vunpack.c.l.b16 %v408
      %v1466 = vunpack.c.h.b16 %v408
      %v1467 = vunpack.c.l.b16 %v409
      %v1468 = vunpack.c.h.b16 %v409
      %v1469 = vunpack.c.l.b16 %v410
      %v1470 = vunpack.c.h.b16 %v410
      %v1471 = vunpack.c.l.b16 %v411
      %v1472 = vunpack.c.h.b16 %v411
      %v1473 = vunpack.c.l.b16 %v412
      %v1474 = vunpack.c.h.b16 %v412
      %v1475 = vunpack.c.l.b16 %v413
      %v1476 = vunpack.c.h.b16 %v413
      %v1477 = vunpack.c.l.b16 %v414
      %v1478 = vunpack.c.h.b16 %v414
      %v1479 = vunpack.c.l.b16 %v415
      %v1480 = vunpack.c.h.b16 %v415
      %v1481 = vunpack.c.l.b16 %v416
      %v1482 = vunpack.c.h.b16 %v416
      %v1483 = vunpack.c.l.b16 %v417
      %v1484 = vunpack.c.h.b16 %v417
      %v1485 = vunpack.c.l.b16 %v418
      %v1486 = vunpack.c.h.b16 %v418
      %v1487 = vunpack.c.l.b16 %v419
      %v1488 = vunpack.c.h.b16 %v419
      %v1489 = vunpack.c.l.b16 %v420
      %v1490 = vunpack.c.h.b16 %v420
      %v1491 = vunpack.c.l.b16 %v421
      %v1492 = vunpack.c.h.b16 %v421
      %v1493 = vunpack.c.l.b16 %v422
      %v1494 = vunpack.c.h.b16 %v422
      %v1495 = vunpack.c.l.b16 %v423
      %v1496 = vunpack.c.h.b16 %v423
      %v1497 = vunpack.c.l.b16 %v424
      %v1498 = vunpack.c.h.b16 %v424
      %v1499 = vunpack.c.l.b16 %v425
      %v1500 = vunpack.c.h.b16 %v425
      %v1501 = vunpack.c.l.b16 %v426
      %v1502 = vunpack.c.h.b16 %v426
      %v1503 = vunpack.c.l.b16 %v427
      %v1504 = vunpack.c.h.b16 %v427
      %v1505 = vunpack.c.l.b16 %v428
      %v1506 = vunpack.c.h.b16 %v428
      %v1507 = vunpack.c.l.b16 %v429
      %v1508 = vunpack.c.h.b16 %v429
      %v1509 = vunpack.c.l.b16 %v430
      %v1510 = vunpack.c.h.b16 %v430
      %v1511 = vunpack.c.l.b16 %v431
      %v1512 = vunpack.c.h.b16 %v431
      %v1513 = vunpack.c.l.b16 %v432
      %v1514 = vunpack.c.h.b16 %v432
      %v1515 = vunpack.c.l.b16 %v433
      %v1516 = vunpack.c.h.b16 %v433
      %v1517 = vunpack.c.l.b16 %v434
      %v1518 = vunpack.c.h.b16 %v434
      %v1519 = vunpack.c.l.b16 %v435
      %v1520 = vunpack.c.h.b16 %v435
      %v1521 = vunpack.c.l.b16 %v436
      %v1522 = vunpack.c.h.b16 %v436
      %v1523 = vunpack.c.l.b16 %v437
      %v1524 = vunpack.c.h.b16 %v437
      %v1525 = vunpack.c.l.b16 %v438
      %v1526 = vunpack.c.h.b16 %v438
      %v1527 = vunpack.c.l.b16 %v439
      %v1528 = vunpack.c.h.b16 %v439
      %v1529 = vunpack.c.l.b16 %v440
      %v1530 = vunpack.c.h.b16 %v440
      %v1531 = vunpack.c.l.b16 %v441
      %v1532 = vunpack.c.h.b16 %v441
      %v1533 = vunpack.c.l.b16 %v442
      %v1534 = vunpack.c.h.b16 %v442
      %v1535 = vunpack.c.l.b16 %v443
      %v1536 = vunpack.c.h.b16 %v443
      %v1537 = vunpack.c.l.b16 %v444
      %v1538 = vunpack.c.h.b16 %v444
      %v1539 = vunpack.c.l.b16 %v445
      %v1540 = vunpack.c.h.b16 %v445
      %v1541 = vunpack.c.l.b16 %v446
      %v1542 = vunpack.c.h.b16 %v446
      %v1543 = vunpack.c.l.b16 %v447
      %v1544 = vunpack.c.h.b16 %v447
      %v1545 = vunpack.c.l.b16 %v448
      %v1546 = vunpack.c.h.b16 %v448
      %v1547 = vunpack.c.l.b16 %v449
      %v1548 = vunpack.c.h.b16 %v449
      %v1549 = vunpack.c.l.b16 %v450
      %v1550 = vunpack.c.h.b16 %v450
      %v1551 = vunpack.c.l.b16 %v451
      %v1552 = vunpack.c.h.b16 %v451
      %v1553 = vunpack.c.l.b16 %v452
      %v1554 = vunpack.c.h.b16 %v452
      %v1555 = vunpack.c.l.b16 %v453
      %v1556 = vunpack.c.h.b16 %v453
      %v1557 = vunpack.c.l.b16 %v454
      %v1558 = vunpack.c.h.b16 %v454
      %v1559 = vunpack.c.l.b16 %v455
      %v1560 = vunpack.c.h.b16 %v455
      %v1561 = vunpack.c.l.b16 %v456
      %v1562 = vunpack.c.h.b16 %v456
      %v1563 = vunpack.c.l.b16 %v457
      %v1564 = vunpack.c.h.b16 %v457
      %v1565 = vunpack.c.l.b16 %v458
      %v1566 = vunpack.c.h.b16 %v458
      %v1567 = vunpack.c.l.b16 %v459
      %v1568 = vunpack.c.h.b16 %v459
      %v1569 = vunpack.c.l.b16 %v460
      %v1570 = vunpack.c.h.b16 %v460
      %v1571 = vunpack.c.l.b16 %v461
      %v1572 = vunpack.c.h.b16 %v461
      %v1573 = vunpack.c.l.b16 %v462
      %v1574 = vunpack.c.h.b16 %v462
      %v1575 = vunpack.c.l.b16 %v463
      %v1576 = vunpack.c.h.b16 %v463
      %v1577 = vunpack.c.l.b16 %v464
      %v1578 = vunpack.c.h.b16 %v464
      %v1579 = vunpack.c.l.b16 %v465
      %v1580 = vunpack.c.h.b16 %v465
      %v1581 = vunpack.c.l.b16 %v466
      %v1582 = vunpack.c.h.b16 %v466
      %v1583 = vunpack.c.l.b16 %v467
      %v1584 = vunpack.c.h.b16 %v467
      %v1585 = vunpack.c.l.b16 %v468
      %v1586 = vunpack.c.h.b16 %v468
      %v1587 = vunpack.c.l.b16 %v469
      %v1588 = vunpack.c.h.b16 %v469
      %v1589 = vunpack.c.l.b16 %v470
      %v1590 = vunpack.c.h.b16 %v470
      %v1591 = vunpack.c.l.b16 %v471
      %v1592 = vunpack.c.h.b16 %v471
      %v1593 = vunpack.c.l.b16 %v472
      %v1594 = vunpack.c.h.b16 %v472
      %v1595 = vunpack.c.l.b16 %v473
      %v1596 = vunpack.c.h.b16 %v473
      %v1597 = vunpack.c.l.b16 %v474
      %v1598 = vunpack.c.h.b16 %v474
      %v1599 = vunpack.c.l.b16 %v475
      %v1600 = vunpack.c.h.b16 %v475
      %v1601 = vunpack.c.l.b16 %v476
      %v1602 = vunpack.c.h.b16 %v476
      %v1603 = vunpack.c.l.b16 %v477
      %v1604 = vunpack.c.h.b16 %v477
      %v1605 = vunpack.c.l.b16 %v478
      %v1606 = vunpack.c.h.b16 %v478
      %v1607 = vunpack.c.l.b16 %v479
      %v1608 = vunpack.c.h.b16 %v479
      %v1609 = vunpack.c.l.b16 %v480
      %v1610 = vunpack.c.h.b16 %v480
      %v1611 = vunpack.c.l.b16 %v481
      %v1612 = vunpack.c.h.b16 %v481
      %v1613 = vunpack.c.l.b16 %v482
      %v1614 = vunpack.c.h.b16 %v482
      %v1615 = vunpack.c.l.b16 %v483
      %v1616 = vunpack.c.h.b16 %v483
      %v1617 = vunpack.c.l.b16 %v484
      %v1618 = vunpack.c.h.b16 %v484
      %v1619 = vunpack.c.l.b16 %v485
      %v1620 = vunpack.c.h.b16 %v485
      %v1621 = vunpack.c.l.b16 %v486
      %v1622 = vunpack.c.h.b16 %v486
      %v1623 = vunpack.c.l.b16 %v487
      %v1624 = vunpack.c.h.b16 %v487
      %v1625 = vunpack.c.l.b16 %v488
      %v1626 = vunpack.c.h.b16 %v488
      %v1627 = vunpack.c.l.b16 %v489
      %v1628 = vunpack.c.h.b16 %v489
      %v1629 = vunpack.c.l.b16 %v490
      %v1630 = vunpack.c.h.b16 %v490
      %v1631 = vunpack.c.l.b16 %v491
      %v1632 = vunpack.c.h.b16 %v491
      %v1633 = vunpack.c.l.b16 %v492
      %v1634 = vunpack.c.h.b16 %v492
      %v1635 = vunpack.c.l.b16 %v493
      %v1636 = vunpack.c.h.b16 %v493
      %v1637 = vunpack.c.l.b16 %v494
      %v1638 = vunpack.c.h.b16 %v494
      %v1639 = vunpack.c.l.b16 %v495
      %v1640 = vunpack.c.h.b16 %v495
      %v1641 = vunpack.c.l.b16 %v496
      %v1642 = vunpack.c.h.b16 %v496
      %v1643 = vunpack.c.l.b16 %v497
      %v1644 = vunpack.c.h.b16 %v497
      %v1645 = vunpack.c.l.b16 %v498
      %v1646 = vunpack.c.h.b16 %v498
      %v1647 = vunpack.c.l.b16 %v499
      %v1648 = vunpack.c.h.b16 %v499
      %v1649 = vunpack.c.l.b16 %v500
      %v1650 = vunpack.c.h.b16 %v500
      %v1651 = vunpack.c.l.b16 %v501
      %v1652 = vunpack.c.h.b16 %v501
      %v1653 = vunpack.c.l.b16 %v502
      %v1654 = vunpack.c.h.b16 %v502
      %v1655 = vunpack.c.l.b16 %v503
      %v1656 = vunpack.c.h.b16 %v503
      %v1657 = vunpack.c.l.b16 %v504
      %v1658 = vunpack.c.h.b16 %v504
      %v1659 = vunpack.c.l.b16 %v505
      %v1660 = vunpack.c.h.b16 %v505
      %v1661 = vunpack.c.l.b16 %v506
      %v1662 = vunpack.c.h.b16 %v506
      %v1663 = vunpack.c.l.b16 %v507
      %v1664 = vunpack.c.h.b16 %v507
      %v1665 = vunpack.c.l.b16 %v508
      %v1666 = vunpack.c.h.b16 %v508
      %v1667 = vunpack.c.l.b16 %v509
      %v1668 = vunpack.c.h.b16 %v509
      %v1669 = vunpack.c.l.b16 %v510
      %v1670 = vunpack.c.h.b16 %v510
      %v1671 = vunpack.c.l.b16 %v511
      %v1672 = vunpack.c.h.b16 %v511
      %v1673 = vunpack.c.l.b16 %v512
      %v1674 = vunpack.c.h.b16 %v512
      %v1675 = vunpack.c.l.b16 %v513
      %v1676 = vunpack.c.h.b16 %v513
      %v1677 = vunpack.c.l.b16 %v514
      %v1678 = vunpack.c.h.b16 %v514
      %v1679 = vunpack.c.l.b16 %v515
      %v1680 = vunpack.c.h.b16 %v515
      %v1681 = vunpack.c.l.b16 %v516
      %v1682 = vunpack.c.h.b16 %v516
      %v1683 = vunpack.c.l.b16 %v517
      %v1684 = vunpack.c.h.b16 %v517
      %v1685 = vunpack.c.l.b16 %v518
      %v1686 = vunpack.c.h.b16 %v518
      %v1687 = vunpack.c.l.b16 %v519
      %v1688 = vunpack.c.h.b16 %v519
      %v1689 = vunpack.c.l.b16 %v520
      %v1690 = vunpack.c.h.b16 %v520
      %v1691 = vunpack.c.l.b16 %v521
      %v1692 = vunpack.c.h.b16 %v521
      %v1693 = vunpack.c.l.b16 %v522
      %v1694 = vunpack.c.h.b16 %v522
      %v1695 = vunpack.c.l.b16 %v523
      %v1696 = vunpack.c.h.b16 %v523
      %v1697 = vunpack.c.l.b16 %v524
      %v1698 = vunpack.c.h.b16 %v524
      %v1699 = vunpack.c.l.b16 %v525
      %v1700 = vunpack.c.h.b16 %v525
      %v1701 = vunpack.c.l.b16 %v526
      %v1702 = vunpack.c.h.b16 %v526
      %v1703 = vunpack.c.l.b16 %v527
      %v1704 = vunpack.c.h.b16 %v527
      %v1705 = vunpack.c.l.b16 %v528
      %v1706 = vunpack.c.h.b16 %v528
      %v1707 = vunpack.c.l.b16 %v529
      %v1708 = vunpack.c.h.b16 %v529
      %v1709 = vunpack.c.l.b16 %v530
      %v1710 = vunpack.c.h.b16 %v530
      %v1711 = vpack.c.b16 %v1425, %v1423
      %v1712 = vpack.c.b16 %v1426, %v1424
      %v1713 = vpack.c.b16 %v1429, %v1427
      %v1714 = vpack.c.b16 %v1430, %v1428
      %v1715 = vpack.c.b16 %v1433, %v1431
      %v1716 = vpack.c.b16 %v1434, %v1432
      %v1717 = vpack.c.b16 %v1437, %v1435
      %v1718 = vpack.c.b16 %v1438, %v1436
      %v1719 = vpack.c.b16 %v1441, %v1439
      %v1720 = vpack.c.b16 %v1442, %v1440
      %v1721 = vpack.c.b16 %v1445, %v1443
      %v1722 = vpack.c.b16 %v1446, %v1444
      %v1723 = vpack.c.b16 %v1449, %v1447
      %v1724 = vpack.c.b16 %v1450, %v1448
      %v1725 = vpack.c.b16 %v1453, %v1451
      %v1726 = vpack.c.b16 %v1454, %v1452
      %v1727 = vpack.c.b16 %v1457, %v1455
      %v1728 = vpack.c.b16 %v1458, %v1456
      %v1729 = vpack.c.b16 %v1461, %v1459
      %v1730 = vpack.c.b16 %v1462, %v1460
      %v1731 = vpack.c.b16 %v1465, %v1463
      %v1732 = vpack.c.b16 %v1466, %v1464
      %v1733 = vpack.c.b16 %v1469, %v1467
      %v1734 = vpack.c.b16 %v1470, %v1468
      %v1735 = vpack.c.b16 %v1473, %v1471
      %v1736 = vpack.c.b16 %v1474, %v1472
      %v1737 = vpack.c.b16 %v1477, %v1475
      %v1738 = vpack.c.b16 %v1478, %v1476
      %v1739 = vpack.c.b16 %v1481, %v1479
      %v1740 = vpack.c.b16 %v1482, %v1480
      %v1741 = vpack.c.b16 %v1485, %v1483
      %v1742 = vpack.c.b16 %v1486, %v1484
      %v1743 = vpack.c.b16 %v1489, %v1487
      %v1744 = vpack.c.b16 %v1490, %v1488
      %v1745 = vpack.c.b16 %v1493, %v1491
      %v1746 = vpack.c.b16 %v1494, %v1492
      %v1747 = vpack.c.b16 %v1497, %v1495
      %v1748 = vpack.c.b16 %v1498, %v1496
      %v1749 = vpack.c.b16 %v1501, %v1499
      %v1750 = vpack.c.b16 %v1502, %v1500
      %v1751 = vpack.c.b16 %v1505, %v1503
      %v1752 = vpack.c.b16 %v1506, %v1504
      %v1753 = vpack.c.b16 %v1509, %v1507
      %v1754 = vpack.c.b16 %v1510, %v1508
      %v1755 = vpack.c.b16 %v1513, %v1511
      %v1756 = vpack.c.b16 %v1514, %v1512
      %v1757 = vpack.c.b16 %v1517, %v1515
      %v1758 = vpack.c.b16 %v1518, %v1516
      %v1759 = vpack.c.b16 %v1521, %v1519
      %v1760 = vpack.c.b16 %v1522, %v1520
      %v1761 = vpack.c.b16 %v1525, %v1523
      %v1762 = vpack.c.b16 %v1526, %v1524
      %v1763 = vpack.c.b16 %v1529, %v1527
      %v1764 = vpack.c.b16 %v1530, %v1528
      %v1765 = vpack.c.b16 %v1533, %v1531
      %v1766 = vpack.c.b16 %v1534, %v1532
      %v1767 = vpack.c.b16 %v1537, %v1535
      %v1768 = vpack.c.b16 %v1538, %v1536
      %v1769 = vpack.c.b16 %v1541, %v1539
      %v1770 = vpack.c.b16 %v1542, %v1540
      %v1771 = vpack.c.b16 %v1545, %v1543
      %v1772 = vpack.c.b16 %v1546, %v1544
      %v1773 = vpack.c.b16 %v1549, %v1547
      %v1774 = vpack.c.b16 %v1550, %v1548
      %v1775 = vpack.c.b16 %v1553, %v1551
      %v1776 = vpack.c.b16 %v1554, %v1552
      %v1777 = vpack.c.b16 %v1557, %v1555
      %v1778 = vpack.c.b16 %v1558, %v1556
      %v1779 = vpack.c.b16 %v1561, %v1559
      %v1780 = vpack.c.b16 %v1562, %v1560
      %v1781 = vpack.c.b16 %v1565, %v1563
      %v1782 = vpack.c.b16 %v1566, %v1564
      %v1783 = vpack.c.b16 %v1569, %v1567
      %v1784 = vpack.c.b16 %v1570, %v1568
      %v1785 = vpack.c.b16 %v1573, %v1571
      %v1786 = vpack.c.b16 %v1574, %v1572
      %v1787 = vpack.c.b16 %v1577, %v1575
      %v1788 = vpack.c.b16 %v1578, %v1576
      %v1789 = vpack.c.b16 %v1581, %v1579
      %v1790 = vpack.c.b16 %v1582, %v1580
      %v1791 = vpack.c.b16 %v1585, %v1583
      %v1792 = vpack.c.b16 %v1586, %v1584
      %v1793 = vpack.c.b16 %v1589, %v1587
      %v1794 = vpack.c.b16 %v1590, %v1588
      %v1795 = vpack.c.b16 %v1593, %v1591
      %v1796 = vpack.c.b16 %v1594, %v1592
      %v1797 = vpack.c.b16 %v1597, %v1595
      %v1798 = vpack.c.b16 %v1598, %v1596
      %v1799 = vpack.c.b16 %v1601, %v1599
      %v1800 = vpack.c.b16 %v1602, %v1600
      %v1801 = vpack.c.b16 %v1605, %v1603
      %v1802 = vpack.c.b16 %v1606, %v1604
      %v1803 = vpack.c.b16 %v1609, %v1607
      %v1804 = vpack.c.b16 %v1610, %v1608
      %v1805 = vpack.c.b16 %v1613, %v1611
      %v1806 = vpack.c.b16 %v1614, %v1612
      %v1807 = vpack.c.b16 %v1617, %v1615
      %v1808 = vpack.c.b16 %v1618, %v1616
      %v1809 = vpack.c.b16 %v1621, %v1619
      %v1810 = vpack.c.b16 %v1622, %v1620
      %v1811 = vpack.c.b16 %v1625, %v1623
      %v1812 = vpack.c.b16 %v1626, %v1624
      %v1813 = vpack.c.b16 %v1629, %v1627
      %v1814 = vpack.c.b16 %v1630, %v1628
      %v1815 = vpack.c.b16 %v1633, %v1631
      %v1816 = vpack.c.b16 %v1634, %v1632
      %v1817 = vpack.c.b16 %v1637, %v1635
      %v1818 = vpack.c.b16 %v1638, %v1636
      %v1819 = vpack.c.b16 %v1641, %v1639
      %v1820 = vpack.c.b16 %v1642, %v1640
      %v1821 = vpack.c.b16 %v1645, %v1643
      %v1822 = vpack.c.b16 %v1646, %v1644
      %v1823 = vpack.c.b16 %v1649, %v1647
      %v1824 = vpack.c.b16 %v1650, %v1648
      %v1825 = vpack.c.b16 %v1653, %v1651
      %v1826 = vpack.c.b16 %v1654, %v1652
      %v1827 = vpack.c.b16 %v1657, %v1655
      %v1828 = vpack.c.b16 %v1658, %v1656
      %v1829 = vpack.c.b16 %v1661, %v1659
      %v1830 = vpack.c.b16 %v1662, %v1660
      %v1831 = vpack.c.b16 %v1665, %v1663
      %v1832 = vpack.c.b16 %v1666, %v1664
      %v1833 = vpack.c.b16 %v1669, %v1667
      %v1834 = vpack.c.b16 %v1670, %v1668
      %v1835 = vpack.c.b16 %v1673, %v1671
      %v1836 = vpack.c.b16 %v1674, %v1672
      %v1837 = vpack.c.b16 %v1677, %v1675
      %v1838 = vpack.c.b16 %v1678, %v1676
      %v1839 = vpack.c.b16 %v1681, %v1679
      %v1840 = vpack.c.b16 %v1682, %v1680
      %v1841 = vpack.c.b16 %v1685, %v1683
      %v1842 = vpack.c.b16 %v1686, %v1684
      %v1843 = vpack.c.b16 %v1689, %v1687
      %v1844 = vpack.c.b16 %v1690, %v1688
      %v1845 = vpack.c.b16 %v1693, %v1691
      %v1846 = vpack.c.b16 %v1694, %v1692
      %v1847 = vpack.c.b16 %v1697, %v1695
      %v1848 = vpack.c.b16 %v1698, %v1696
      %v1849 = vpack.c.b16 %v1701, %v1699
      %v1850 = vpack.c.b16 %v1702, %v1700
      %v1851 = vpack.c.b16 %v1705, %v1703
      %v1852 = vpack.c.b16 %v1706, %v1704
      %v1853 = vpack.c.b16 %v1709, %v1707
      %v1854 = vpack.c.b16 %v1710, %v1708
      %1999 = vmatprep.subr.bf16.mxu0 %v1712
      %2000 = vmatpush1.bf16.msra.mxu0 %v1711
      %2001 = vmatprep.subr.bf16.mxu0 %v1714
      %2002 = vmatpush1.bf16.msra.mxu0 %v1713
      %2003 = vmatprep.subr.bf16.mxu0 %v1716
      %2004 = vmatpush1.bf16.msra.mxu0 %v1715
      %2005 = vmatprep.subr.bf16.mxu0 %v1718
      %2006 = vmatpush1.bf16.msra.mxu0 %v1717
      %2007 = vmatprep.subr.bf16.mxu0 %v1720
      %2008 = vmatpush1.bf16.msra.mxu0 %v1719
      %2009 = vmatprep.subr.bf16.mxu0 %v1722
      %2010 = vmatpush1.bf16.msra.mxu0 %v1721
      %2011 = vmatprep.subr.bf16.mxu0 %v1724
      %2012 = vmatpush1.bf16.msra.mxu0 %v1723
      %2013 = vmatprep.subr.bf16.mxu0 %v1726
      %2014 = vmatpush1.bf16.msra.mxu0 %v1725
      %2015 = vmatprep.subr.bf16.mxu0 %v1728
      %2016 = vmatpush1.bf16.msra.mxu0 %v1727
      %2017 = vmatprep.subr.bf16.mxu0 %v1730
      %2018 = vmatpush1.bf16.msra.mxu0 %v1729
      %2019 = vmatprep.subr.bf16.mxu0 %v1732
      %2020 = vmatpush1.bf16.msra.mxu0 %v1731
      %2021 = vmatprep.subr.bf16.mxu0 %v1734
      %2022 = vmatpush1.bf16.msra.mxu0 %v1733
      %2023 = vmatprep.subr.bf16.mxu0 %v1736
      %2024 = vmatpush1.bf16.msra.mxu0 %v1735
      %2025 = vmatprep.subr.bf16.mxu0 %v1738
      %2026 = vmatpush1.bf16.msra.mxu0 %v1737
      %2027 = vmatprep.subr.bf16.mxu0 %v1740
      %2028 = vmatpush1.bf16.msra.mxu0 %v1739
      %2029 = vmatprep.subr.bf16.mxu0 %v1742
      %2030 = vmatpush1.bf16.msra.mxu0 %v1741
      %2031 = vmatprep.mubr.bf16.mxu0 %v992
      %2032 = vmatmul.mubr.bf16.gmra.mrb[0].mxu0 %v991
      %v2033 = vpop.f32.mrb[0].mxu0
      %v2034 = vadd.f32 %v536, %v2033
      %v2035 = vpop.f32.mrb[0].mxu0
      %v2036 = vadd.f32 %v540, %v2035
      %v2037 = vpop.f32.mrb[0].mxu0
      %v2038 = vadd.f32 %v536, %v2037
      %v2039 = vpop.f32.mrb[0].mxu0
      %v2040 = vadd.f32 %v540, %v2039
      %2041 = vmatprep.mubr.bf16.mxu0 %v1001
      %2042 = vmatmul.mubr.bf16.gmra.mrb[0].mxu0 %v1000
      %v2043 = vpop.f32.mrb[0].mxu0
      %v2044 = vadd.f32 %v536, %v2043
      %v2045 = vpop.f32.mrb[0].mxu0
      %v2046 = vadd.f32 %v540, %v2045
      %v2047 = vpop.f32.mrb[0].mxu0
      %v2048 = vadd.f32 %v536, %v2047
      %v2049 = vpop.f32.mrb[0].mxu0
      %v2050 = vadd.f32 %v540, %v2049
      %2051 = vmatprep.mubr.bf16.mxu0 %v1010
      %2052 = vmatmul.mubr.bf16.gmra.mrb[0].mxu0 %v1009
      %v2053 = vpop.f32.mrb[0].mxu0
      %v2054 = vadd.f32 %v536, %v2053
      %v2055 = vpop.f32.mrb[0].mxu0
      %v2056 = vadd.f32 %v540, %v2055
      %v2057 = vpop.f32.mrb[0].mxu0
      %v2058 = vadd.f32 %v536, %v2057
      %v2059 = vpop.f32.mrb[0].mxu0
      %v2060 = vadd.f32 %v540, %v2059
      %2061 = vmatprep.mubr.bf16.mxu0 %v1019
      %2062 = vmatmul.mubr.bf16.gmra.mrb[0].mxu0 %v1018
      %v2063 = vpop.f32.mrb[0].mxu0
      %v2064 = vadd.f32 %v536, %v2063
      %v2065 = vpop.f32.mrb[0].mxu0
      %v2066 = vadd.f32 %v540, %v2065
      %v2067 = vpop.f32.mrb[0].mxu0
      %v2068 = vadd.f32 %v536, %v2067
      %v2069 = vpop.f32.mrb[0].mxu0
      %v2070 = vadd.f32 %v540, %v2069
      %2071 = vmatprep.mubr.bf16.mxu0 %v1028
      %2072 = vmatmul.mubr.bf16.gmra.mrb[0].mxu0 %v1027
      %v2073 = vpop.f32.mrb[0].mxu0
      %v2074 = vadd.f32 %v536, %v2073
      %v2075 = vpop.f32.mrb[0].mxu0
      %v2076 = vadd.f32 %v540, %v2075
      %v2077 = vpop.f32.mrb[0].mxu0
      %v2078 = vadd.f32 %v536, %v2077
      %v2079 = vpop.f32.mrb[0].mxu0
      %v2080 = vadd.f32 %v540, %v2079
      %2081 = vmatprep.mubr.bf16.mxu0 %v1037
      %2082 = vmatmul.mubr.bf16.gmra.mrb[0].mxu0 %v1036
      %v2083 = vpop.f32.mrb[0].mxu0
      %v2084 = vadd.f32 %v536, %v2083
      %v2085 = vpop.f32.mrb[0].mxu0
      %v2086 = vadd.f32 %v540, %v2085
      %v2087 = vpop.f32.mrb[0].mxu0
      %v2088 = vadd.f32 %v536, %v2087
      %v2089 = vpop.f32.mrb[0].mxu0
      %v2090 = vadd.f32 %v540, %v2089
      %2091 = vmatprep.mubr.bf16.mxu0 %v1046
      %2092 = vmatmul.mubr.bf16.gmra.mrb[0].mxu0 %v1045
      %v2093 = vpop.f32.mrb[0].mxu0
      %v2094 = vadd.f32 %v536, %v2093
      %v2095 = vpop.f32.mrb[0].mxu0
      %v2096 = vadd.f32 %v540, %v2095
      %v2097 = vpop.f32.mrb[0].mxu0
      %v2098 = vadd.f32 %v536, %v2097
      %v2099 = vpop.f32.mrb[0].mxu0
      %v2100 = vadd.f32 %v540, %v2099
      %2101 = vmatprep.mubr.bf16.mxu0 %v1055
      %2102 = vmatmul.mubr.bf16.gmra.mrb[0].mxu0 %v1054
      %v2103 = vpop.f32.mrb[0].mxu0
      %v2104 = vadd.f32 %v536, %v2103
      %v2105 = vpop.f32.mrb[0].mxu0
      %v2106 = vadd.f32 %v540, %v2105
      %v2107 = vpop.f32.mrb[0].mxu0
      %v2108 = vadd.f32 %v536, %v2107
      %v2109 = vpop.f32.mrb[0].mxu0
      %v2110 = vadd.f32 %v540, %v2109
      %2111 = vmatprep.mubr.bf16.mxu0 %v1064
      %2112 = vmatmul.mubr.bf16.gmra.mrb[0].mxu0 %v1063
      %v2113 = vpop.f32.mrb[0].mxu0
      %v2114 = vadd.f32 %v536, %v2113
      %v2115 = vpop.f32.mrb[0].mxu0
      %v2116 = vadd.f32 %v540, %v2115
      %v2117 = vpop.f32.mrb[0].mxu0
      %v2118 = vadd.f32 %v536, %v2117
      %v2119 = vpop.f32.mrb[0].mxu0
      %v2120 = vadd.f32 %v540, %v2119
      %2121 = vmatprep.mubr.bf16.mxu0 %v1073
      %2122 = vmatmul.mubr.bf16.gmra.mrb[0].mxu0 %v1072
      %v2123 = vpop.f32.mrb[0].mxu0
      %v2124 = vadd.f32 %v536, %v2123
      %v2125 = vpop.f32.mrb[0].mxu0
      %v2126 = vadd.f32 %v540, %v2125
      %v2127 = vpop.f32.mrb[0].mxu0
      %v2128 = vadd.f32 %v536, %v2127
      %v2129 = vpop.f32.mrb[0].mxu0
      %v2130 = vadd.f32 %v540, %v2129
      %2131 = vmatprep.mubr.bf16.mxu0 %v1082
      %2132 = vmatmul.mubr.bf16.gmra.mrb[0].mxu0 %v1081
      %v2133 = vpop.f32.mrb[0].mxu0
      %v2134 = vadd.f32 %v536, %v2133
      %v2135 = vpop.f32.mrb[0].mxu0
      %v2136 = vadd.f32 %v540, %v2135
      %v2137 = vpop.f32.mrb[0].mxu0
      %v2138 = vadd.f32 %v536, %v2137
      %v2139 = vpop.f32.mrb[0].mxu0
      %v2140 = vadd.f32 %v540, %v2139
      %2141 = vmatprep.mubr.bf16.mxu0 %v1091
      %2142 = vmatmul.mubr.bf16.gmra.mrb[0].mxu0 %v1090
      %v2143 = vpop.f32.mrb[0].mxu0
      %v2144 = vadd.f32 %v536, %v2143
      %v2145 = vpop.f32.mrb[0].mxu0
      %v2146 = vadd.f32 %v540, %v2145
      %v2147 = vpop.f32.mrb[0].mxu0
      %v2148 = vadd.f32 %v536, %v2147
      %v2149 = vpop.f32.mrb[0].mxu0
      %v2150 = vadd.f32 %v540, %v2149
      %2151 = vmatprep.mubr.bf16.mxu0 %v1100
      %2152 = vmatmul.mubr.bf16.gmra.mrb[0].mxu0 %v1099
      %v2153 = vpop.f32.mrb[0].mxu0
      %v2154 = vadd.f32 %v536, %v2153
      %v2155 = vpop.f32.mrb[0].mxu0
      %v2156 = vadd.f32 %v540, %v2155
      %v2157 = vpop.f32.mrb[0].mxu0
      %v2158 = vadd.f32 %v536, %v2157
      %v2159 = vpop.f32.mrb[0].mxu0
      %v2160 = vadd.f32 %v540, %v2159
      %2161 = vmatprep.mubr.bf16.mxu0 %v1109
      %2162 = vmatmul.mubr.bf16.gmra.mrb[0].mxu0 %v1108
      %v2163 = vpop.f32.mrb[0].mxu0
      %v2164 = vadd.f32 %v536, %v2163
      %v2165 = vpop.f32.mrb[0].mxu0
      %v2166 = vadd.f32 %v540, %v2165
      %v2167 = vpop.f32.mrb[0].mxu0
      %v2168 = vadd.f32 %v536, %v2167
      %v2169 = vpop.f32.mrb[0].mxu0
      %v2170 = vadd.f32 %v540, %v2169
      %2171 = vmatprep.mubr.bf16.mxu0 %v1118
      %2172 = vmatmul.mubr.bf16.gmra.mrb[0].mxu0 %v1117
      %v2173 = vpop.f32.mrb[0].mxu0
      %v2174 = vadd.f32 %v536, %v2173
      %v2175 = vpop.f32.mrb[0].mxu0
      %v2176 = vadd.f32 %v540, %v2175
      %v2177 = vpop.f32.mrb[0].mxu0
      %v2178 = vadd.f32 %v536, %v2177
      %v2179 = vpop.f32.mrb[0].mxu0
      %v2180 = vadd.f32 %v540, %v2179
      %2181 = vmatprep.mubr.bf16.mxu0 %v1127
      %2182 = vmatmul.mubr.bf16.gmra.mrb[0].mxu0 %v1126
      %v2183 = vpop.f32.mrb[0].mxu0
      %v2184 = vadd.f32 %v536, %v2183
      %v2185 = vpop.f32.mrb[0].mxu0
      %v2186 = vadd.f32 %v540, %v2185
      %v2187 = vpop.f32.mrb[0].mxu0
      %v2188 = vadd.f32 %v536, %v2187
      %v2189 = vpop.f32.mrb[0].mxu0
      %v2190 = vadd.f32 %v540, %v2189
      %2191 = vdwg.mxu0
      %2192 = vmatprep.subr.bf16.mxu0 %v1744
      %2193 = vmatpush1.bf16.msra.mxu0 %v1743
      %2194 = vmatprep.subr.bf16.mxu0 %v1746
      %2195 = vmatpush1.bf16.msra.mxu0 %v1745
      %2196 = vmatprep.subr.bf16.mxu0 %v1748
      %2197 = vmatpush1.bf16.msra.mxu0 %v1747
      %2198 = vmatprep.subr.bf16.mxu0 %v1750
      %2199 = vmatpush1.bf16.msra.mxu0 %v1749
      %2200 = vmatprep.subr.bf16.mxu0 %v1752
      %2201 = vmatpush1.bf16.msra.mxu0 %v1751
      %2202 = vmatprep.subr.bf16.mxu0 %v1754
      %2203 = vmatpush1.bf16.msra.mxu0 %v1753
      %2204 = vmatprep.subr.bf16.mxu0 %v1756
      %2205 = vmatpush1.bf16.msra.mxu0 %v1755
      %2206 = vmatprep.subr.bf16.mxu0 %v1758
      %2207 = vmatpush1.bf16.msra.mxu0 %v1757
      %2208 = vmatprep.subr.bf16.mxu0 %v1760
      %2209 = vmatpush1.bf16.msra.mxu0 %v1759
      %2210 = vmatprep.subr.bf16.mxu0 %v1762
      %2211 = vmatpush1.bf16.msra.mxu0 %v1761
      %2212 = vmatprep.subr.bf16.mxu0 %v1764
      %2213 = vmatpush1.bf16.msra.mxu0 %v1763
      %2214 = vmatprep.subr.bf16.mxu0 %v1766
      %2215 = vmatpush1.bf16.msra.mxu0 %v1765
      %2216 = vmatprep.subr.bf16.mxu0 %v1768
      %2217 = vmatpush1.bf16.msra.mxu0 %v1767
      %2218 = vmatprep.subr.bf16.mxu0 %v1770
      %2219 = vmatpush1.bf16.msra.mxu0 %v1769
      %2220 = vmatprep.subr.bf16.mxu0 %v1772
      %2221 = vmatpush1.bf16.msra.mxu0 %v1771
      %2222 = vmatprep.subr.bf16.mxu0 %v1774
      %2223 = vmatpush1.bf16.msra.mxu0 %v1773
      %2224 = vmatprep.mubr.bf16.mxu0 %v994
      %2225 = vmatmul.mubr.bf16.gmra.mrb[0].mxu0 %v993
      %v2226 = vpop.f32.mrb[0].mxu0
      %v2227 = vadd.f32 %v2034, %v2226
      %v2228 = vpop.f32.mrb[0].mxu0
      %v2229 = vadd.f32 %v2036, %v2228
      %v2230 = vpop.f32.mrb[0].mxu0
      %v2231 = vadd.f32 %v2038, %v2230
      %v2232 = vpop.f32.mrb[0].mxu0
      %v2233 = vadd.f32 %v2040, %v2232
      %2234 = vmatprep.mubr.bf16.mxu0 %v1003
      %2235 = vmatmul.mubr.bf16.gmra.mrb[0].mxu0 %v1002
      %v2236 = vpop.f32.mrb[0].mxu0
      %v2237 = vadd.f32 %v2044, %v2236
      %v2238 = vpop.f32.mrb[0].mxu0
      %v2239 = vadd.f32 %v2046, %v2238
      %v2240 = vpop.f32.mrb[0].mxu0
      %v2241 = vadd.f32 %v2048, %v2240
      %v2242 = vpop.f32.mrb[0].mxu0
      %v2243 = vadd.f32 %v2050, %v2242
      %2244 = vmatprep.mubr.bf16.mxu0 %v1012
      %2245 = vmatmul.mubr.bf16.gmra.mrb[0].mxu0 %v1011
      %v2246 = vpop.f32.mrb[0].mxu0
      %v2247 = vadd.f32 %v2054, %v2246
      %v2248 = vpop.f32.mrb[0].mxu0
      %v2249 = vadd.f32 %v2056, %v2248
      %v2250 = vpop.f32.mrb[0].mxu0
      %v2251 = vadd.f32 %v2058, %v2250
      %v2252 = vpop.f32.mrb[0].mxu0
      %v2253 = vadd.f32 %v2060, %v2252
      %2254 = vmatprep.mubr.bf16.mxu0 %v1021
      %2255 = vmatmul.mubr.bf16.gmra.mrb[0].mxu0 %v1020
      %v2256 = vpop.f32.mrb[0].mxu0
      %v2257 = vadd.f32 %v2064, %v2256
      %v2258 = vpop.f32.mrb[0].mxu0
      %v2259 = vadd.f32 %v2066, %v2258
      %v2260 = vpop.f32.mrb[0].mxu0
      %v2261 = vadd.f32 %v2068, %v2260
      %v2262 = vpop.f32.mrb[0].mxu0
      %v2263 = vadd.f32 %v2070, %v2262
      %2264 = vmatprep.mubr.bf16.mxu0 %v1030
      %2265 = vmatmul.mubr.bf16.gmra.mrb[0].mxu0 %v1029
      %v2266 = vpop.f32.mrb[0].mxu0
      %v2267 = vadd.f32 %v2074, %v2266
      %v2268 = vpop.f32.mrb[0].mxu0
      %v2269 = vadd.f32 %v2076, %v2268
      %v2270 = vpop.f32.mrb[0].mxu0
      %v2271 = vadd.f32 %v2078, %v2270
      %v2272 = vpop.f32.mrb[0].mxu0
      %v2273 = vadd.f32 %v2080, %v2272
      %2274 = vmatprep.mubr.bf16.mxu0 %v1039
      %2275 = vmatmul.mubr.bf16.gmra.mrb[0].mxu0 %v1038
      %v2276 = vpop.f32.mrb[0].mxu0
      %v2277 = vadd.f32 %v2084, %v2276
      %v2278 = vpop.f32.mrb[0].mxu0
      %v2279 = vadd.f32 %v2086, %v2278
      %v2280 = vpop.f32.mrb[0].mxu0
      %v2281 = vadd.f32 %v2088, %v2280
      %v2282 = vpop.f32.mrb[0].mxu0
      %v2283 = vadd.f32 %v2090, %v2282
      %2284 = vmatprep.mubr.bf16.mxu0 %v1048
      %2285 = vmatmul.mubr.bf16.gmra.mrb[0].mxu0 %v1047
      %v2286 = vpop.f32.mrb[0].mxu0
      %v2287 = vadd.f32 %v2094, %v2286
      %v2288 = vpop.f32.mrb[0].mxu0
      %v2289 = vadd.f32 %v2096, %v2288
      %v2290 = vpop.f32.mrb[0].mxu0
      %v2291 = vadd.f32 %v2098, %v2290
      %v2292 = vpop.f32.mrb[0].mxu0
      %v2293 = vadd.f32 %v2100, %v2292
      %2294 = vmatprep.mubr.bf16.mxu0 %v1057
      %2295 = vmatmul.mubr.bf16.gmra.mrb[0].mxu0 %v1056
      %v2296 = vpop.f32.mrb[0].mxu0
      %v2297 = vadd.f32 %v2104, %v2296
      %v2298 = vpop.f32.mrb[0].mxu0
      %v2299 = vadd.f32 %v2106, %v2298
      %v2300 = vpop.f32.mrb[0].mxu0
      %v2301 = vadd.f32 %v2108, %v2300
      %v2302 = vpop.f32.mrb[0].mxu0
      %v2303 = vadd.f32 %v2110, %v2302
      %2304 = vmatprep.mubr.bf16.mxu0 %v1066
      %2305 = vmatmul.mubr.bf16.gmra.mrb[0].mxu0 %v1065
      %v2306 = vpop.f32.mrb[0].mxu0
      %v2307 = vadd.f32 %v2114, %v2306
      %v2308 = vpop.f32.mrb[0].mxu0
      %v2309 = vadd.f32 %v2116, %v2308
      %v2310 = vpop.f32.mrb[0].mxu0
      %v2311 = vadd.f32 %v2118, %v2310
      %v2312 = vpop.f32.mrb[0].mxu0
      %v2313 = vadd.f32 %v2120, %v2312
      %2314 = vmatprep.mubr.bf16.mxu0 %v1075
      %2315 = vmatmul.mubr.bf16.gmra.mrb[0].mxu0 %v1074
      %v2316 = vpop.f32.mrb[0].mxu0
      %v2317 = vadd.f32 %v2124, %v2316
      %v2318 = vpop.f32.mrb[0].mxu0
      %v2319 = vadd.f32 %v2126, %v2318
      %v2320 = vpop.f32.mrb[0].mxu0
      %v2321 = vadd.f32 %v2128, %v2320
      %v2322 = vpop.f32.mrb[0].mxu0
      %v2323 = vadd.f32 %v2130, %v2322
      %2324 = vmatprep.mubr.bf16.mxu0 %v1084
      %2325 = vmatmul.mubr.bf16.gmra.mrb[0].mxu0 %v1083
      %v2326 = vpop.f32.mrb[0].mxu0
      %v2327 = vadd.f32 %v2134, %v2326
      %v2328 = vpop.f32.mrb[0].mxu0
      %v2329 = vadd.f32 %v2136, %v2328
      %v2330 = vpop.f32.mrb[0].mxu0
      %v2331 = vadd.f32 %v2138, %v2330
      %v2332 = vpop.f32.mrb[0].mxu0
      %v2333 = vadd.f32 %v2140, %v2332
      %2334 = vmatprep.mubr.bf16.mxu0 %v1093
      %2335 = vmatmul.mubr.bf16.gmra.mrb[0].mxu0 %v1092
      %v2336 = vpop.f32.mrb[0].mxu0
      %v2337 = vadd.f32 %v2144, %v2336
      %v2338 = vpop.f32.mrb[0].mxu0
      %v2339 = vadd.f32 %v2146, %v2338
      %v2340 = vpop.f32.mrb[0].mxu0
      %v2341 = vadd.f32 %v2148, %v2340
      %v2342 = vpop.f32.mrb[0].mxu0
      %v2343 = vadd.f32 %v2150, %v2342
      %2344 = vmatprep.mubr.bf16.mxu0 %v1102
      %2345 = vmatmul.mubr.bf16.gmra.mrb[0].mxu0 %v1101
      %v2346 = vpop.f32.mrb[0].mxu0
      %v2347 = vadd.f32 %v2154, %v2346
      %v2348 = vpop.f32.mrb[0].mxu0
      %v2349 = vadd.f32 %v2156, %v2348
      %v2350 = vpop.f32.mrb[0].mxu0
      %v2351 = vadd.f32 %v2158, %v2350
      %v2352 = vpop.f32.mrb[0].mxu0
      %v2353 = vadd.f32 %v2160, %v2352
      %2354 = vmatprep.mubr.bf16.mxu0 %v1111
      %2355 = vmatmul.mubr.bf16.gmra.mrb[0].mxu0 %v1110
      %v2356 = vpop.f32.mrb[0].mxu0
      %v2357 = vadd.f32 %v2164, %v2356
      %v2358 = vpop.f32.mrb[0].mxu0
      %v2359 = vadd.f32 %v2166, %v2358
      %v2360 = vpop.f32.mrb[0].mxu0
      %v2361 = vadd.f32 %v2168, %v2360
      %v2362 = vpop.f32.mrb[0].mxu0
      %v2363 = vadd.f32 %v2170, %v2362
      %2364 = vmatprep.mubr.bf16.mxu0 %v1120
      %2365 = vmatmul.mubr.bf16.gmra.mrb[0].mxu0 %v1119
      %v2366 = vpop.f32.mrb[0].mxu0
      %v2367 = vadd.f32 %v2174, %v2366
      %v2368 = vpop.f32.mrb[0].mxu0
      %v2369 = vadd.f32 %v2176, %v2368
      %v2370 = vpop.f32.mrb[0].mxu0
      %v2371 = vadd.f32 %v2178, %v2370
      %v2372 = vpop.f32.mrb[0].mxu0
      %v2373 = vadd.f32 %v2180, %v2372
      %2374 = vmatprep.mubr.bf16.mxu0 %v1129
      %2375 = vmatmul.mubr.bf16.gmra.mrb[0].mxu0 %v1128
      %v2376 = vpop.f32.mrb[0].mxu0
      %v2377 = vadd.f32 %v2184, %v2376
      %v2378 = vpop.f32.mrb[0].mxu0
      %v2379 = vadd.f32 %v2186, %v2378
      %v2380 = vpop.f32.mrb[0].mxu0
      %v2381 = vadd.f32 %v2188, %v2380
      %v2382 = vpop.f32.mrb[0].mxu0
      %v2383 = vadd.f32 %v2190, %v2382
      %2384 = vdwg.mxu0
      %2385 = vmatprep.subr.bf16.mxu0 %v1776
      %2386 = vmatpush1.bf16.msra.mxu0 %v1775
      %2387 = vmatprep.subr.bf16.mxu0 %v1778
      %2388 = vmatpush1.bf16.msra.mxu0 %v1777
      %2389 = vmatprep.subr.bf16.mxu0 %v1780
      %2390 = vmatpush1.bf16.msra.mxu0 %v1779
      %2391 = vmatprep.subr.bf16.mxu0 %v1782
      %2392 = vmatpush1.bf16.msra.mxu0 %v1781
      %2393 = vmatprep.subr.bf16.mxu0 %v1784
      %2394 = vmatpush1.bf16.msra.mxu0 %v1783
      %2395 = vmatprep.subr.bf16.mxu0 %v1786
      %2396 = vmatpush1.bf16.msra.mxu0 %v1785
      %2397 = vmatprep.subr.bf16.mxu0 %v1788
      %2398 = vmatpush1.bf16.msra.mxu0 %v1787
      %2399 = vmatprep.subr.bf16.mxu0 %v1790
      %2400 = vmatpush1.bf16.msra.mxu0 %v1789
      %2401 = vmatprep.subr.bf16.mxu0 %v1792
      %2402 = vmatpush1.bf16.msra.mxu0 %v1791
      %2403 = vmatprep.subr.bf16.mxu0 %v1794
      %2404 = vmatpush1.bf16.msra.mxu0 %v1793
      %2405 = vmatprep.subr.bf16.mxu0 %v1796
      %2406 = vmatpush1.bf16.msra.mxu0 %v1795
      %2407 = vmatprep.subr.bf16.mxu0 %v1798
      %2408 = vmatpush1.bf16.msra.mxu0 %v1797
      %2409 = vmatprep.subr.bf16.mxu0 %v1800
      %2410 = vmatpush1.bf16.msra.mxu0 %v1799
      %2411 = vmatprep.subr.bf16.mxu0 %v1802
      %2412 = vmatpush1.bf16.msra.mxu0 %v1801
      %2413 = vmatprep.subr.bf16.mxu0 %v1804
      %2414 = vmatpush1.bf16.msra.mxu0 %v1803
      %2415 = vmatprep.subr.bf16.mxu0 %v1806
      %2416 = vmatpush1.bf16.msra.mxu0 %v1805
      %2417 = vmatprep.mubr.bf16.mxu0 %v996
      %2418 = vmatmul.mubr.bf16.gmra.mrb[0].mxu0 %v995
      %v2419 = vpop.f32.mrb[0].mxu0
      %v2420 = vadd.f32 %v2227, %v2419
      %v2421 = vpop.f32.mrb[0].mxu0
      %v2422 = vadd.f32 %v2229, %v2421
      %v2423 = vpop.f32.mrb[0].mxu0
      %v2424 = vadd.f32 %v2231, %v2423
      %v2425 = vpop.f32.mrb[0].mxu0
      %v2426 = vadd.f32 %v2233, %v2425
      %2427 = vmatprep.mubr.bf16.mxu0 %v1005
      %2428 = vmatmul.mubr.bf16.gmra.mrb[0].mxu0 %v1004
      %v2429 = vpop.f32.mrb[0].mxu0
      %v2430 = vadd.f32 %v2237, %v2429
      %v2431 = vpop.f32.mrb[0].mxu0
      %v2432 = vadd.f32 %v2239, %v2431
      %v2433 = vpop.f32.mrb[0].mxu0
      %v2434 = vadd.f32 %v2241, %v2433
      %v2435 = vpop.f32.mrb[0].mxu0
      %v2436 = vadd.f32 %v2243, %v2435
      %2437 = vmatprep.mubr.bf16.mxu0 %v1014
      %2438 = vmatmul.mubr.bf16.gmra.mrb[0].mxu0 %v1013
      %v2439 = vpop.f32.mrb[0].mxu0
      %v2440 = vadd.f32 %v2247, %v2439
      %v2441 = vpop.f32.mrb[0].mxu0
      %v2442 = vadd.f32 %v2249, %v2441
      %v2443 = vpop.f32.mrb[0].mxu0
      %v2444 = vadd.f32 %v2251, %v2443
      %v2445 = vpop.f32.mrb[0].mxu0
      %v2446 = vadd.f32 %v2253, %v2445
      %2447 = vmatprep.mubr.bf16.mxu0 %v1023
      %2448 = vmatmul.mubr.bf16.gmra.mrb[0].mxu0 %v1022
      %v2449 = vpop.f32.mrb[0].mxu0
      %v2450 = vadd.f32 %v2257, %v2449
      %v2451 = vpop.f32.mrb[0].mxu0
      %v2452 = vadd.f32 %v2259, %v2451
      %v2453 = vpop.f32.mrb[0].mxu0
      %v2454 = vadd.f32 %v2261, %v2453
      %v2455 = vpop.f32.mrb[0].mxu0
      %v2456 = vadd.f32 %v2263, %v2455
      %2457 = vmatprep.mubr.bf16.mxu0 %v1032
      %2458 = vmatmul.mubr.bf16.gmra.mrb[0].mxu0 %v1031
      %v2459 = vpop.f32.mrb[0].mxu0
      %v2460 = vadd.f32 %v2267, %v2459
      %v2461 = vpop.f32.mrb[0].mxu0
      %v2462 = vadd.f32 %v2269, %v2461
      %v2463 = vpop.f32.mrb[0].mxu0
      %v2464 = vadd.f32 %v2271, %v2463
      %v2465 = vpop.f32.mrb[0].mxu0
      %v2466 = vadd.f32 %v2273, %v2465
      %2467 = vmatprep.mubr.bf16.mxu0 %v1041
      %2468 = vmatmul.mubr.bf16.gmra.mrb[0].mxu0 %v1040
      %v2469 = vpop.f32.mrb[0].mxu0
      %v2470 = vadd.f32 %v2277, %v2469
      %v2471 = vpop.f32.mrb[0].mxu0
      %v2472 = vadd.f32 %v2279, %v2471
      %v2473 = vpop.f32.mrb[0].mxu0
      %v2474 = vadd.f32 %v2281, %v2473
      %v2475 = vpop.f32.mrb[0].mxu0
      %v2476 = vadd.f32 %v2283, %v2475
      %2477 = vmatprep.mubr.bf16.mxu0 %v1050
      %2478 = vmatmul.mubr.bf16.gmra.mrb[0].mxu0 %v1049
      %v2479 = vpop.f32.mrb[0].mxu0
      %v2480 = vadd.f32 %v2287, %v2479
      %v2481 = vpop.f32.mrb[0].mxu0
      %v2482 = vadd.f32 %v2289, %v2481
      %v2483 = vpop.f32.mrb[0].mxu0
      %v2484 = vadd.f32 %v2291, %v2483
      %v2485 = vpop.f32.mrb[0].mxu0
      %v2486 = vadd.f32 %v2293, %v2485
      %2487 = vmatprep.mubr.bf16.mxu0 %v1059
      %2488 = vmatmul.mubr.bf16.gmra.mrb[0].mxu0 %v1058
      %v2489 = vpop.f32.mrb[0].mxu0
      %v2490 = vadd.f32 %v2297, %v2489
      %v2491 = vpop.f32.mrb[0].mxu0
      %v2492 = vadd.f32 %v2299, %v2491
      %v2493 = vpop.f32.mrb[0].mxu0
      %v2494 = vadd.f32 %v2301, %v2493
      %v2495 = vpop.f32.mrb[0].mxu0
      %v2496 = vadd.f32 %v2303, %v2495
      %2497 = vmatprep.mubr.bf16.mxu0 %v1068
      %2498 = vmatmul.mubr.bf16.gmra.mrb[0].mxu0 %v1067
      %v2499 = vpop.f32.mrb[0].mxu0
      %v2500 = vadd.f32 %v2307, %v2499
      %v2501 = vpop.f32.mrb[0].mxu0
      %v2502 = vadd.f32 %v2309, %v2501
      %v2503 = vpop.f32.mrb[0].mxu0
      %v2504 = vadd.f32 %v2311, %v2503
      %v2505 = vpop.f32.mrb[0].mxu0
      %v2506 = vadd.f32 %v2313, %v2505
      %2507 = vmatprep.mubr.bf16.mxu0 %v1077
      %2508 = vmatmul.mubr.bf16.gmra.mrb[0].mxu0 %v1076
      %v2509 = vpop.f32.mrb[0].mxu0
      %v2510 = vadd.f32 %v2317, %v2509
      %v2511 = vpop.f32.mrb[0].mxu0
      %v2512 = vadd.f32 %v2319, %v2511
      %v2513 = vpop.f32.mrb[0].mxu0
      %v2514 = vadd.f32 %v2321, %v2513
      %v2515 = vpop.f32.mrb[0].mxu0
      %v2516 = vadd.f32 %v2323, %v2515
      %2517 = vmatprep.mubr.bf16.mxu0 %v1086
      %2518 = vmatmul.mubr.bf16.gmra.mrb[0].mxu0 %v1085
      %v2519 = vpop.f32.mrb[0].mxu0
      %v2520 = vadd.f32 %v2327, %v2519
      %v2521 = vpop.f32.mrb[0].mxu0
      %v2522 = vadd.f32 %v2329, %v2521
      %v2523 = vpop.f32.mrb[0].mxu0
      %v2524 = vadd.f32 %v2331, %v2523
      %v2525 = vpop.f32.mrb[0].mxu0
      %v2526 = vadd.f32 %v2333, %v2525
      %2527 = vmatprep.mubr.bf16.mxu0 %v1095
      %2528 = vmatmul.mubr.bf16.gmra.mrb[0].mxu0 %v1094
      %v2529 = vpop.f32.mrb[0].mxu0
      %v2530 = vadd.f32 %v2337, %v2529
      %v2531 = vpop.f32.mrb[0].mxu0
      %v2532 = vadd.f32 %v2339, %v2531
      %v2533 = vpop.f32.mrb[0].mxu0
      %v2534 = vadd.f32 %v2341, %v2533
      %v2535 = vpop.f32.mrb[0].mxu0
      %v2536 = vadd.f32 %v2343, %v2535
      %2537 = vmatprep.mubr.bf16.mxu0 %v1104
      %2538 = vmatmul.mubr.bf16.gmra.mrb[0].mxu0 %v1103
      %v2539 = vpop.f32.mrb[0].mxu0
      %v2540 = vadd.f32 %v2347, %v2539
      %v2541 = vpop.f32.mrb[0].mxu0
      %v2542 = vadd.f32 %v2349, %v2541
      %v2543 = vpop.f32.mrb[0].mxu0
      %v2544 = vadd.f32 %v2351, %v2543
      %v2545 = vpop.f32.mrb[0].mxu0
      %v2546 = vadd.f32 %v2353, %v2545
      %2547 = vmatprep.mubr.bf16.mxu0 %v1113
      %2548 = vmatmul.mubr.bf16.gmra.mrb[0].mxu0 %v1112
      %v2549 = vpop.f32.mrb[0].mxu0
      %v2550 = vadd.f32 %v2357, %v2549
      %v2551 = vpop.f32.mrb[0].mxu0
      %v2552 = vadd.f32 %v2359, %v2551
      %v2553 = vpop.f32.mrb[0].mxu0
      %v2554 = vadd.f32 %v2361, %v2553
      %v2555 = vpop.f32.mrb[0].mxu0
      %v2556 = vadd.f32 %v2363, %v2555
      %2557 = vmatprep.mubr.bf16.mxu0 %v1122
      %2558 = vmatmul.mubr.bf16.gmra.mrb[0].mxu0 %v1121
      %v2559 = vpop.f32.mrb[0].mxu0
      %v2560 = vadd.f32 %v2367, %v2559
      %v2561 = vpop.f32.mrb[0].mxu0
      %v2562 = vadd.f32 %v2369, %v2561
      %v2563 = vpop.f32.mrb[0].mxu0
      %v2564 = vadd.f32 %v2371, %v2563
      %v2565 = vpop.f32.mrb[0].mxu0
      %v2566 = vadd.f32 %v2373, %v2565
      %2567 = vmatprep.mubr.bf16.mxu0 %v1131
      %2568 = vmatmul.mubr.bf16.gmra.mrb[0].mxu0 %v1130
      %v2569 = vpop.f32.mrb[0].mxu0
      %v2570 = vadd.f32 %v2377, %v2569
      %v2571 = vpop.f32.mrb[0].mxu0
      %v2572 = vadd.f32 %v2379, %v2571
      %v2573 = vpop.f32.mrb[0].mxu0
      %v2574 = vadd.f32 %v2381, %v2573
      %v2575 = vpop.f32.mrb[0].mxu0
      %v2576 = vadd.f32 %v2383, %v2575
      %2577 = vdwg.mxu0
      %2578 = vmatprep.subr.bf16.mxu0 %v1808
      %2579 = vmatpush1.bf16.msra.mxu0 %v1807
      %2580 = vmatprep.subr.bf16.mxu0 %v1810
      %2581 = vmatpush1.bf16.msra.mxu0 %v1809
      %2582 = vmatprep.subr.bf16.mxu0 %v1812
      %2583 = vmatpush1.bf16.msra.mxu0 %v1811
      %2584 = vmatprep.subr.bf16.mxu0 %v1814
      %2585 = vmatpush1.bf16.msra.mxu0 %v1813
      %2586 = vmatprep.subr.bf16.mxu0 %v1816
      %2587 = vmatpush1.bf16.msra.mxu0 %v1815
      %2588 = vmatprep.subr.bf16.mxu0 %v1818
      %2589 = vmatpush1.bf16.msra.mxu0 %v1817
      %2590 = vmatprep.subr.bf16.mxu0 %v1820
      %2591 = vmatpush1.bf16.msra.mxu0 %v1819
      %2592 = vmatprep.subr.bf16.mxu0 %v1822
      %2593 = vmatpush1.bf16.msra.mxu0 %v1821
      %2594 = vmatprep.subr.bf16.mxu0 %v1824
      %2595 = vmatpush1.bf16.msra.mxu0 %v1823
      %2596 = vmatprep.subr.bf16.mxu0 %v1826
      %2597 = vmatpush1.bf16.msra.mxu0 %v1825
      %2598 = vmatprep.subr.bf16.mxu0 %v1828
      %2599 = vmatpush1.bf16.msra.mxu0 %v1827
      %2600 = vmatprep.subr.bf16.mxu0 %v1830
      %2601 = vmatpush1.bf16.msra.mxu0 %v1829
      %2602 = vmatprep.subr.bf16.mxu0 %v1832
      %2603 = vmatpush1.bf16.msra.mxu0 %v1831
      %2604 = vmatprep.subr.bf16.mxu0 %v1834
      %2605 = vmatpush1.bf16.msra.mxu0 %v1833
      %2606 = vmatprep.subr.bf16.mxu0 %v1836
      %2607 = vmatpush1.bf16.msra.mxu0 %v1835
      %2608 = vmatprep.subr.bf16.mxu0 %v1838
      %2609 = vmatpush1.bf16.msra.mxu0 %v1837
      %2610 = vmatprep.mubr.bf16.mxu0 %v998
      %2611 = vmatmul.mubr.bf16.gmra.mrb[0].mxu0 %v997
      %v2612 = vpop.f32.mrb[0].mxu0
      %v2613 = vadd.f32 %v2420, %v2612
      %v2614 = vpop.f32.mrb[0].mxu0
      %v2615 = vadd.f32 %v2422, %v2614
      %v2616 = vpop.f32.mrb[0].mxu0
      %v2617 = vadd.f32 %v2424, %v2616
      %v2618 = vpop.f32.mrb[0].mxu0
      %v2619 = vadd.f32 %v2426, %v2618
      %2620 = vmatprep.mubr.bf16.mxu0 %v1007
      %2621 = vmatmul.mubr.bf16.gmra.mrb[0].mxu0 %v1006
      %v2622 = vpop.f32.mrb[0].mxu0
      %v2623 = vadd.f32 %v2430, %v2622
      %v2624 = vpop.f32.mrb[0].mxu0
      %v2625 = vadd.f32 %v2432, %v2624
      %v2626 = vpop.f32.mrb[0].mxu0
      %v2627 = vadd.f32 %v2434, %v2626
      %v2628 = vpop.f32.mrb[0].mxu0
      %v2629 = vadd.f32 %v2436, %v2628
      %2630 = vmatprep.mubr.bf16.mxu0 %v1016
      %2631 = vmatmul.mubr.bf16.gmra.mrb[0].mxu0 %v1015
      %v2632 = vpop.f32.mrb[0].mxu0
      %v2633 = vadd.f32 %v2440, %v2632
      %v2634 = vpop.f32.mrb[0].mxu0
      %v2635 = vadd.f32 %v2442, %v2634
      %v2636 = vpop.f32.mrb[0].mxu0
      %v2637 = vadd.f32 %v2444, %v2636
      %v2638 = vpop.f32.mrb[0].mxu0
      %v2639 = vadd.f32 %v2446, %v2638
      %2640 = vmatprep.mubr.bf16.mxu0 %v1025
      %2641 = vmatmul.mubr.bf16.gmra.mrb[0].mxu0 %v1024
      %v2642 = vpop.f32.mrb[0].mxu0
      %v2643 = vadd.f32 %v2450, %v2642
      %v2644 = vpop.f32.mrb[0].mxu0
      %v2645 = vadd.f32 %v2452, %v2644
      %v2646 = vpop.f32.mrb[0].mxu0
      %v2647 = vadd.f32 %v2454, %v2646
      %v2648 = vpop.f32.mrb[0].mxu0
      %v2649 = vadd.f32 %v2456, %v2648
      %2650 = vmatprep.mubr.bf16.mxu0 %v1034
      %2651 = vmatmul.mubr.bf16.gmra.mrb[0].mxu0 %v1033
      %v2652 = vpop.f32.mrb[0].mxu0
      %v2653 = vadd.f32 %v2460, %v2652
      %v2654 = vpop.f32.mrb[0].mxu0
      %v2655 = vadd.f32 %v2462, %v2654
      %v2656 = vpop.f32.mrb[0].mxu0
      %v2657 = vadd.f32 %v2464, %v2656
      %v2658 = vpop.f32.mrb[0].mxu0
      %v2659 = vadd.f32 %v2466, %v2658
      %2660 = vmatprep.mubr.bf16.mxu0 %v1043
      %2661 = vmatmul.mubr.bf16.gmra.mrb[0].mxu0 %v1042
      %v2662 = vpop.f32.mrb[0].mxu0
      %v2663 = vadd.f32 %v2470, %v2662
      %v2664 = vpop.f32.mrb[0].mxu0
      %v2665 = vadd.f32 %v2472, %v2664
      %v2666 = vpop.f32.mrb[0].mxu0
      %v2667 = vadd.f32 %v2474, %v2666
      %v2668 = vpop.f32.mrb[0].mxu0
      %v2669 = vadd.f32 %v2476, %v2668
      %2670 = vmatprep.mubr.bf16.mxu0 %v1052
      %2671 = vmatmul.mubr.bf16.gmra.mrb[0].mxu0 %v1051
      %v2672 = vpop.f32.mrb[0].mxu0
      %v2673 = vadd.f32 %v2480, %v2672
      %v2674 = vpop.f32.mrb[0].mxu0
      %v2675 = vadd.f32 %v2482, %v2674
      %v2676 = vpop.f32.mrb[0].mxu0
      %v2677 = vadd.f32 %v2484, %v2676
      %v2678 = vpop.f32.mrb[0].mxu0
      %v2679 = vadd.f32 %v2486, %v2678
      %2680 = vmatprep.mubr.bf16.mxu0 %v1061
      %2681 = vmatmul.mubr.bf16.gmra.mrb[0].mxu0 %v1060
      %v2682 = vpop.f32.mrb[0].mxu0
      %v2683 = vadd.f32 %v2490, %v2682
      %v2684 = vpop.f32.mrb[0].mxu0
      %v2685 = vadd.f32 %v2492, %v2684
      %v2686 = vpop.f32.mrb[0].mxu0
      %v2687 = vadd.f32 %v2494, %v2686
      %v2688 = vpop.f32.mrb[0].mxu0
      %v2689 = vadd.f32 %v2496, %v2688
      %2690 = vmatprep.mubr.bf16.mxu0 %v1070
      %2691 = vmatmul.mubr.bf16.gmra.mrb[0].mxu0 %v1069
      %v2692 = vpop.f32.mrb[0].mxu0
      %v2693 = vadd.f32 %v2500, %v2692
      %v2694 = vpop.f32.mrb[0].mxu0
      %v2695 = vadd.f32 %v2502, %v2694
      %v2696 = vpop.f32.mrb[0].mxu0
      %v2697 = vadd.f32 %v2504, %v2696
      %v2698 = vpop.f32.mrb[0].mxu0
      %v2699 = vadd.f32 %v2506, %v2698
      %2700 = vmatprep.mubr.bf16.mxu0 %v1079
      %2701 = vmatmul.mubr.bf16.gmra.mrb[0].mxu0 %v1078
      %v2702 = vpop.f32.mrb[0].mxu0
      %v2703 = vadd.f32 %v2510, %v2702
      %v2704 = vpop.f32.mrb[0].mxu0
      %v2705 = vadd.f32 %v2512, %v2704
      %v2706 = vpop.f32.mrb[0].mxu0
      %v2707 = vadd.f32 %v2514, %v2706
      %v2708 = vpop.f32.mrb[0].mxu0
      %v2709 = vadd.f32 %v2516, %v2708
      %2710 = vmatprep.mubr.bf16.mxu0 %v1088
      %2711 = vmatmul.mubr.bf16.gmra.mrb[0].mxu0 %v1087
      %v2712 = vpop.f32.mrb[0].mxu0
      %v2713 = vadd.f32 %v2520, %v2712
      %v2714 = vpop.f32.mrb[0].mxu0
      %v2715 = vadd.f32 %v2522, %v2714
      %v2716 = vpop.f32.mrb[0].mxu0
      %v2717 = vadd.f32 %v2524, %v2716
      %v2718 = vpop.f32.mrb[0].mxu0
      %v2719 = vadd.f32 %v2526, %v2718
      %2720 = vmatprep.mubr.bf16.mxu0 %v1097
      %2721 = vmatmul.mubr.bf16.gmra.mrb[0].mxu0 %v1096
      %v2722 = vpop.f32.mrb[0].mxu0
      %v2723 = vadd.f32 %v2530, %v2722
      %v2724 = vpop.f32.mrb[0].mxu0
      %v2725 = vadd.f32 %v2532, %v2724
      %v2726 = vpop.f32.mrb[0].mxu0
      %v2727 = vadd.f32 %v2534, %v2726
      %v2728 = vpop.f32.mrb[0].mxu0
      %v2729 = vadd.f32 %v2536, %v2728
      %2730 = vmatprep.mubr.bf16.mxu0 %v1106
      %2731 = vmatmul.mubr.bf16.gmra.mrb[0].mxu0 %v1105
      %v2732 = vpop.f32.mrb[0].mxu0
      %v2733 = vadd.f32 %v2540, %v2732
      %v2734 = vpop.f32.mrb[0].mxu0
      %v2735 = vadd.f32 %v2542, %v2734
      %v2736 = vpop.f32.mrb[0].mxu0
      %v2737 = vadd.f32 %v2544, %v2736
      %v2738 = vpop.f32.mrb[0].mxu0
      %v2739 = vadd.f32 %v2546, %v2738
      %2740 = vmatprep.mubr.bf16.mxu0 %v1115
      %2741 = vmatmul.mubr.bf16.gmra.mrb[0].mxu0 %v1114
      %v2742 = vpop.f32.mrb[0].mxu0
      %v2743 = vadd.f32 %v2550, %v2742
      %v2744 = vpop.f32.mrb[0].mxu0
      %v2745 = vadd.f32 %v2552, %v2744
      %v2746 = vpop.f32.mrb[0].mxu0
      %v2747 = vadd.f32 %v2554, %v2746
      %v2748 = vpop.f32.mrb[0].mxu0
      %v2749 = vadd.f32 %v2556, %v2748
      %2750 = vmatprep.mubr.bf16.mxu0 %v1124
      %2751 = vmatmul.mubr.bf16.gmra.mrb[0].mxu0 %v1123
      %v2752 = vpop.f32.mrb[0].mxu0
      %v2753 = vadd.f32 %v2560, %v2752
      %v2754 = vpop.f32.mrb[0].mxu0
      %v2755 = vadd.f32 %v2562, %v2754
      %v2756 = vpop.f32.mrb[0].mxu0
      %v2757 = vadd.f32 %v2564, %v2756
      %v2758 = vpop.f32.mrb[0].mxu0
      %v2759 = vadd.f32 %v2566, %v2758
      %2760 = vmatprep.mubr.bf16.mxu0 %v1133
      %2761 = vmatmul.mubr.bf16.gmra.mrb[0].mxu0 %v1132
      %v2762 = vpop.f32.mrb[0].mxu0
      %v2763 = vadd.f32 %v2570, %v2762
      %v2764 = vpop.f32.mrb[0].mxu0
      %v2765 = vadd.f32 %v2572, %v2764
      %v2766 = vpop.f32.mrb[0].mxu0
      %v2767 = vadd.f32 %v2574, %v2766
      %v2768 = vpop.f32.mrb[0].mxu0
      %v2769 = vadd.f32 %v2576, %v2768
      %2770 = vdwg.mxu0
      %2771 = vmatprep.subr.bf16.mxu0 %v1840
      %2772 = vmatpush1.bf16.msra.mxu0 %v1839
      %2773 = vmatprep.subr.bf16.mxu0 %v1842
      %2774 = vmatpush1.bf16.msra.mxu0 %v1841
      %2775 = vmatprep.subr.bf16.mxu0 %v1844
      %2776 = vmatpush1.bf16.msra.mxu0 %v1843
      %2777 = vmatprep.subr.bf16.mxu0 %v1846
      %2778 = vmatpush1.bf16.msra.mxu0 %v1845
      %2779 = vmatprep.subr.bf16.mxu0 %v1848
      %2780 = vmatpush1.bf16.msra.mxu0 %v1847
      %2781 = vmatprep.subr.bf16.mxu0 %v1850
      %2782 = vmatpush1.bf16.msra.mxu0 %v1849
      %2783 = vmatprep.subr.bf16.mxu0 %v1852
      %2784 = vmatpush1.bf16.msra.mxu0 %v1851
      %2785 = vmatprep.subr.bf16.mxu0 %v1854
      %2786 = vmatpush1.bf16.msra.mxu0 %v1853
      %2787 = vmatprep.subr.bf16.mxu0 0
      %2788 = vmatpush1.bf16.msra.mxu0 0
      %2789 = vmatprep.subr.bf16.mxu0 0
      %2790 = vmatpush1.bf16.msra.mxu0 0
      %2791 = vmatprep.subr.bf16.mxu0 0
      %2792 = vmatpush1.bf16.msra.mxu0 0
      %2793 = vmatprep.subr.bf16.mxu0 0
      %2794 = vmatpush1.bf16.msra.mxu0 0
      %2795 = vmatprep.subr.bf16.mxu0 0
      %2796 = vmatpush1.bf16.msra.mxu0 0
      %2797 = vmatprep.subr.bf16.mxu0 0
      %2798 = vmatpush1.bf16.msra.mxu0 0
      %2799 = vmatprep.subr.bf16.mxu0 0
      %2800 = vmatpush1.bf16.msra.mxu0 0
      %2801 = vmatprep.subr.bf16.mxu0 0
      %2802 = vmatpush1.bf16.msra.mxu0 0
      %2803 = vmatprep.mubr.bf16.mxu0 0
      %2804 = vmatmul.mubr.bf16.gmra.mrb[0].mxu0 %v999
      %v2805 = vpop.f32.mrb[0].mxu0
      %v2806 = vadd.f32 %v2613, %v2805
      %v2807 = vpop.f32.mrb[0].mxu0
      %v2808 = vadd.f32 %v2615, %v2807
      %v2809 = vpop.f32.mrb[0].mxu0
      %v2810 = vadd.f32 %v2617, %v2809
      %v2811 = vpop.f32.mrb[0].mxu0
      %v2812 = vadd.f32 %v2619, %v2811
      %2813 = vmatprep.mubr.bf16.mxu0 0
      %2814 = vmatmul.mubr.bf16.gmra.mrb[0].mxu0 %v1008
      %v2815 = vpop.f32.mrb[0].mxu0
      %v2816 = vadd.f32 %v2623, %v2815
      %v2817 = vpop.f32.mrb[0].mxu0
      %v2818 = vadd.f32 %v2625, %v2817
      %v2819 = vpop.f32.mrb[0].mxu0
      %v2820 = vadd.f32 %v2627, %v2819
      %v2821 = vpop.f32.mrb[0].mxu0
      %v2822 = vadd.f32 %v2629, %v2821
      %2823 = vmatprep.mubr.bf16.mxu0 0
      %2824 = vmatmul.mubr.bf16.gmra.mrb[0].mxu0 %v1017
      %v2825 = vpop.f32.mrb[0].mxu0
      %v2826 = vadd.f32 %v2633, %v2825
      %v2827 = vpop.f32.mrb[0].mxu0
      %v2828 = vadd.f32 %v2635, %v2827
      %v2829 = vpop.f32.mrb[0].mxu0
      %v2830 = vadd.f32 %v2637, %v2829
      %v2831 = vpop.f32.mrb[0].mxu0
      %v2832 = vadd.f32 %v2639, %v2831
      %2833 = vmatprep.mubr.bf16.mxu0 0
      %2834 = vmatmul.mubr.bf16.gmra.mrb[0].mxu0 %v1026
      %v2835 = vpop.f32.mrb[0].mxu0
      %v2836 = vadd.f32 %v2643, %v2835
      %v2837 = vpop.f32.mrb[0].mxu0
      %v2838 = vadd.f32 %v2645, %v2837
      %v2839 = vpop.f32.mrb[0].mxu0
      %v2840 = vadd.f32 %v2647, %v2839
      %v2841 = vpop.f32.mrb[0].mxu0
      %v2842 = vadd.f32 %v2649, %v2841
      %2843 = vmatprep.mubr.bf16.mxu0 0
      %2844 = vmatmul.mubr.bf16.gmra.mrb[0].mxu0 %v1035
      %v2845 = vpop.f32.mrb[0].mxu0
      %v2846 = vadd.f32 %v2653, %v2845
      %v2847 = vpop.f32.mrb[0].mxu0
      %v2848 = vadd.f32 %v2655, %v2847
      %v2849 = vpop.f32.mrb[0].mxu0
      %v2850 = vadd.f32 %v2657, %v2849
      %v2851 = vpop.f32.mrb[0].mxu0
      %v2852 = vadd.f32 %v2659, %v2851
      %2853 = vmatprep.mubr.bf16.mxu0 0
      %2854 = vmatmul.mubr.bf16.gmra.mrb[0].mxu0 %v1044
      %v2855 = vpop.f32.mrb[0].mxu0
      %v2856 = vadd.f32 %v2663, %v2855
      %v2857 = vpop.f32.mrb[0].mxu0
      %v2858 = vadd.f32 %v2665, %v2857
      %v2859 = vpop.f32.mrb[0].mxu0
      %v2860 = vadd.f32 %v2667, %v2859
      %v2861 = vpop.f32.mrb[0].mxu0
      %v2862 = vadd.f32 %v2669, %v2861
      %2863 = vmatprep.mubr.bf16.mxu0 0
      %2864 = vmatmul.mubr.bf16.gmra.mrb[0].mxu0 %v1053
      %v2865 = vpop.f32.mrb[0].mxu0
      %v2866 = vadd.f32 %v2673, %v2865
      %v2867 = vpop.f32.mrb[0].mxu0
      %v2868 = vadd.f32 %v2675, %v2867
      %v2869 = vpop.f32.mrb[0].mxu0
      %v2870 = vadd.f32 %v2677, %v2869
      %v2871 = vpop.f32.mrb[0].mxu0
      %v2872 = vadd.f32 %v2679, %v2871
      %2873 = vmatprep.mubr.bf16.mxu0 0
      %2874 = vmatmul.mubr.bf16.gmra.mrb[0].mxu0 %v1062
      %v2875 = vpop.f32.mrb[0].mxu0
      %v2876 = vadd.f32 %v2683, %v2875
      %v2877 = vpop.f32.mrb[0].mxu0
      %v2878 = vadd.f32 %v2685, %v2877
      %v2879 = vpop.f32.mrb[0].mxu0
      %v2880 = vadd.f32 %v2687, %v2879
      %v2881 = vpop.f32.mrb[0].mxu0
      %v2882 = vadd.f32 %v2689, %v2881
      %2883 = vmatprep.mubr.bf16.mxu0 0
      %2884 = vmatmul.mubr.bf16.gmra.mrb[0].mxu0 %v1071
      %v2885 = vpop.f32.mrb[0].mxu0
      %v2886 = vadd.f32 %v2693, %v2885
      %v2887 = vpop.f32.mrb[0].mxu0
      %v2888 = vadd.f32 %v2695, %v2887
      %v2889 = vpop.f32.mrb[0].mxu0
      %v2890 = vadd.f32 %v2697, %v2889
      %v2891 = vpop.f32.mrb[0].mxu0
      %v2892 = vadd.f32 %v2699, %v2891
      %2893 = vmatprep.mubr.bf16.mxu0 0
      %2894 = vmatmul.mubr.bf16.gmra.mrb[0].mxu0 %v1080
      %v2895 = vpop.f32.mrb[0].mxu0
      %v2896 = vadd.f32 %v2703, %v2895
      %v2897 = vpop.f32.mrb[0].mxu0
      %v2898 = vadd.f32 %v2705, %v2897
      %v2899 = vpop.f32.mrb[0].mxu0
      %v2900 = vadd.f32 %v2707, %v2899
      %v2901 = vpop.f32.mrb[0].mxu0
      %v2902 = vadd.f32 %v2709, %v2901
      %2903 = vmatprep.mubr.bf16.mxu0 0
      %2904 = vmatmul.mubr.bf16.gmra.mrb[0].mxu0 %v1089
      %v2905 = vpop.f32.mrb[0].mxu0
      %v2906 = vadd.f32 %v2713, %v2905
      %v2907 = vpop.f32.mrb[0].mxu0
      %v2908 = vadd.f32 %v2715, %v2907
      %v2909 = vpop.f32.mrb[0].mxu0
      %v2910 = vadd.f32 %v2717, %v2909
      %v2911 = vpop.f32.mrb[0].mxu0
      %v2912 = vadd.f32 %v2719, %v2911
      %2913 = vmatprep.mubr.bf16.mxu0 0
      %2914 = vmatmul.mubr.bf16.gmra.mrb[0].mxu0 %v1098
      %v2915 = vpop.f32.mrb[0].mxu0
      %v2916 = vadd.f32 %v2723, %v2915
      %v2917 = vpop.f32.mrb[0].mxu0
      %v2918 = vadd.f32 %v2725, %v2917
      %v2919 = vpop.f32.mrb[0].mxu0
      %v2920 = vadd.f32 %v2727, %v2919
      %v2921 = vpop.f32.mrb[0].mxu0
      %v2922 = vadd.f32 %v2729, %v2921
      %2923 = vmatprep.mubr.bf16.mxu0 0
      %2924 = vmatmul.mubr.bf16.gmra.mrb[0].mxu0 %v1107
      %v2925 = vpop.f32.mrb[0].mxu0
      %v2926 = vadd.f32 %v2733, %v2925
      %v2927 = vpop.f32.mrb[0].mxu0
      %v2928 = vadd.f32 %v2735, %v2927
      %v2929 = vpop.f32.mrb[0].mxu0
      %v2930 = vadd.f32 %v2737, %v2929
      %v2931 = vpop.f32.mrb[0].mxu0
      %v2932 = vadd.f32 %v2739, %v2931
      %2933 = vmatprep.mubr.bf16.mxu0 0
      %2934 = vmatmul.mubr.bf16.gmra.mrb[0].mxu0 %v1116
      %v2935 = vpop.f32.mrb[0].mxu0
      %v2936 = vadd.f32 %v2743, %v2935
      %v2937 = vpop.f32.mrb[0].mxu0
      %v2938 = vadd.f32 %v2745, %v2937
      %v2939 = vpop.f32.mrb[0].mxu0
      %v2940 = vadd.f32 %v2747, %v2939
      %v2941 = vpop.f32.mrb[0].mxu0
      %v2942 = vadd.f32 %v2749, %v2941
      %2943 = vmatprep.mubr.bf16.mxu0 0
      %2944 = vmatmul.mubr.bf16.gmra.mrb[0].mxu0 %v1125
      %v2945 = vpop.f32.mrb[0].mxu0
      %v2946 = vadd.f32 %v2753, %v2945
      %v2947 = vpop.f32.mrb[0].mxu0
      %v2948 = vadd.f32 %v2755, %v2947
      %v2949 = vpop.f32.mrb[0].mxu0
      %v2950 = vadd.f32 %v2757, %v2949
      %v2951 = vpop.f32.mrb[0].mxu0
      %v2952 = vadd.f32 %v2759, %v2951
      %2953 = vmatprep.mubr.bf16.mxu0 0
      %2954 = vmatmul.mubr.bf16.gmra.mrb[0].mxu0 %v1134
      %v2955 = vpop.f32.mrb[0].mxu0
      %v2956 = vadd.f32 %v2763, %v2955
      %v2957 = vpop.f32.mrb[0].mxu0
      %v2958 = vadd.f32 %v2765, %v2957
      %v2959 = vpop.f32.mrb[0].mxu0
      %v2960 = vadd.f32 %v2767, %v2959
      %v2961 = vpop.f32.mrb[0].mxu0
      %v2962 = vadd.f32 %v2769, %v2961
      %2963 = vdwg.mxu0
      %v2964 = vld [vmem:[%s218] sm:$0xff]
      %v2965 = vld [vmem:[%s218 + $0x8] sm:$0xff]
      %v2966 = vld [vmem:[%s218 + $0x10] sm:$0xff]
      %v2967 = vld [vmem:[%s218 + $0x18] sm:$0xff]
      %v2968 = vld [vmem:[%s218 + $0x20] sm:$0xff]
      %v2969 = vld [vmem:[%s218 + $0x28] sm:$0xff]
      %v2970 = vld [vmem:[%s218 + $0x30] sm:$0xff]
      %v2971 = vld [vmem:[%s218 + $0x38] sm:$0xff]
      %v2972 = vld [vmem:[%s218 + $0x40] sm:$0xff]
      %v2973 = vld [vmem:[%s218 + $0x48] sm:$0xff]
      %v2974 = vld [vmem:[%s218 + $0x50] sm:$0xff]
      %v2975 = vld [vmem:[%s218 + $0x58] sm:$0xff]
      %v2976 = vld [vmem:[%s218 + $0x60] sm:$0xff]
      %v2977 = vld [vmem:[%s218 + $0x68] sm:$0xff]
      %v2978 = vld [vmem:[%s218 + $0x70] sm:$0xff]
      %v2979 = vld [vmem:[%s218 + $0x78] sm:$0xff]
      %v2980 = vld [vmem:[%s218 + $0x80] sm:$0xff]
      %v2981 = vld [vmem:[%s218 + $0x88] sm:$0xff]
      %v2982 = vld [vmem:[%s218 + $0x90] sm:$0xff]
      %v2983 = vld [vmem:[%s218 + $0x98] sm:$0xff]
      %v2984 = vld [vmem:[%s218 + $0xa0] sm:$0xff]
      %v2985 = vld [vmem:[%s218 + $0xa8] sm:$0xff]
      %v2986 = vld [vmem:[%s218 + $0xb0] sm:$0xff]
      %v2987 = vld [vmem:[%s218 + $0xb8] sm:$0xff]
      %v2988 = vld [vmem:[%s218 + $0xc0] sm:$0xff]
      %v2989 = vld [vmem:[%s218 + $0xc8] sm:$0xff]
      %v2990 = vld [vmem:[%s218 + $0xd0] sm:$0xff]
      %v2991 = vld [vmem:[%s218 + $0xd8] sm:$0xff]
      %v2992 = vld [vmem:[%s218 + $0xe0] sm:$0xff]
      %v2993 = vld [vmem:[%s218 + $0xe8] sm:$0xff]
      %v2994 = vld [vmem:[%s218 + $0xf0] sm:$0xff]
      %v2995 = vld [vmem:[%s218 + $0xf8] sm:$0xff]
      %v2996 = vadd.f32 %v2806, 1.0
      %v2997 = vadd.f32 %v2810, 1.0
      %v2998 = vadd.f32 %v2816, 1.0
      %v2999 = vadd.f32 %v2820, 1.0
      %v3000 = vadd.f32 %v2826, 1.0
      %v3001 = vadd.f32 %v2830, 1.0
      %v3002 = vadd.f32 %v2836, 1.0
      %v3003 = vadd.f32 %v2840, 1.0
      %v3004 = vadd.f32 %v2846, 1.0
      %v3005 = vadd.f32 %v2850, 1.0
      %v3006 = vadd.f32 %v2856, 1.0
      %v3007 = vadd.f32 %v2860, 1.0
      %v3008 = vadd.f32 %v2866, 1.0
      %v3009 = vadd.f32 %v2870, 1.0
      %v3010 = vadd.f32 %v2876, 1.0
      %v3011 = vadd.f32 %v2880, 1.0
      %v3012 = vadd.f32 %v2886, 1.0
      %v3013 = vadd.f32 %v2890, 1.0
      %v3014 = vadd.f32 %v2896, 1.0
      %v3015 = vadd.f32 %v2900, 1.0
      %v3016 = vadd.f32 %v2906, 1.0
      %v3017 = vadd.f32 %v2910, 1.0
      %v3018 = vadd.f32 %v2916, 1.0
      %v3019 = vadd.f32 %v2920, 1.0
      %v3020 = vadd.f32 %v2926, 1.0
      %v3021 = vadd.f32 %v2930, 1.0
      %v3022 = vadd.f32 %v2936, 1.0
      %v3023 = vadd.f32 %v2940, 1.0
      %v3024 = vadd.f32 %v2946, 1.0
      %v3025 = vadd.f32 %v2950, 1.0
      %v3026 = vadd.f32 %v2956, 1.0
      %v3027 = vadd.f32 %v2960, 1.0
      %v3028 = vmul.f32 %v2964, %v2996
      %v3029 = vmul.f32 %v2965, %v2997
      %v3030 = vmul.f32 %v2966, %v2998
      %v3031 = vmul.f32 %v2967, %v2999
      %v3032 = vmul.f32 %v2968, %v3000
      %v3033 = vmul.f32 %v2969, %v3001
      %v3034 = vmul.f32 %v2970, %v3002
      %v3035 = vmul.f32 %v2971, %v3003
      %v3036 = vmul.f32 %v2972, %v3004
      %v3037 = vmul.f32 %v2973, %v3005
      %v3038 = vmul.f32 %v2974, %v3006
      %v3039 = vmul.f32 %v2975, %v3007
      %v3040 = vmul.f32 %v2976, %v3008
      %v3041 = vmul.f32 %v2977, %v3009
      %v3042 = vmul.f32 %v2978, %v3010
      %v3043 = vmul.f32 %v2979, %v3011
      %v3044 = vmul.f32 %v2980, %v3012
      %v3045 = vmul.f32 %v2981, %v3013
      %v3046 = vmul.f32 %v2982, %v3014
      %v3047 = vmul.f32 %v2983, %v3015
      %v3048 = vmul.f32 %v2984, %v3016
      %v3049 = vmul.f32 %v2985, %v3017
      %v3050 = vmul.f32 %v2986, %v3018
      %v3051 = vmul.f32 %v2987, %v3019
      %v3052 = vmul.f32 %v2988, %v3020
      %v3053 = vmul.f32 %v2989, %v3021
      %v3054 = vmul.f32 %v2990, %v3022
      %v3055 = vmul.f32 %v2991, %v3023
      %v3056 = vmul.f32 %v2992, %v3024
      %v3057 = vmul.f32 %v2993, %v3025
      %v3058 = vmul.f32 %v2994, %v3026
      %v3059 = vmul.f32 %v2995, %v3027
      %v3060 = vadd.f32 %v3028, %v2808
      %v3061 = vadd.f32 %v3029, %v2812
      %v3062 = vadd.f32 %v3030, %v2818
      %v3063 = vadd.f32 %v3031, %v2822
      %v3064 = vadd.f32 %v3032, %v2828
      %v3065 = vadd.f32 %v3033, %v2832
      %v3066 = vadd.f32 %v3034, %v2838
      %v3067 = vadd.f32 %v3035, %v2842
      %v3068 = vadd.f32 %v3036, %v2848
      %v3069 = vadd.f32 %v3037, %v2852
      %v3070 = vadd.f32 %v3038, %v2858
      %v3071 = vadd.f32 %v3039, %v2862
      %v3072 = vadd.f32 %v3040, %v2868
      %v3073 = vadd.f32 %v3041, %v2872
      %v3074 = vadd.f32 %v3042, %v2878
      %v3075 = vadd.f32 %v3043, %v2882
      %v3076 = vadd.f32 %v3044, %v2888
      %v3077 = vadd.f32 %v3045, %v2892
      %v3078 = vadd.f32 %v3046, %v2898
      %v3079 = vadd.f32 %v3047, %v2902
      %v3080 = vadd.f32 %v3048, %v2908
      %v3081 = vadd.f32 %v3049, %v2912
      %v3082 = vadd.f32 %v3050, %v2918
      %v3083 = vadd.f32 %v3051, %v2922
      %v3084 = vadd.f32 %v3052, %v2928
      %v3085 = vadd.f32 %v3053, %v2932
      %v3086 = vadd.f32 %v3054, %v2938
      %v3087 = vadd.f32 %v3055, %v2942
      %v3088 = vadd.f32 %v3056, %v2948
      %v3089 = vadd.f32 %v3057, %v2952
      %v3090 = vadd.f32 %v3058, %v2958
      %v3091 = vadd.f32 %v3059, %v2962
      %3092 = vst [vmem:[%s224] sm:$0xff] %v3060
      %3093 = vst [vmem:[%s224 + $0x8] sm:$0xff] %v3061
      %3094 = vst [vmem:[%s224 + $0x10] sm:$0xff] %v3062
      %3095 = vst [vmem:[%s224 + $0x18] sm:$0xff] %v3063
      %3096 = vst [vmem:[%s224 + $0x20] sm:$0xff] %v3064
      %3097 = vst [vmem:[%s224 + $0x28] sm:$0xff] %v3065
      %3098 = vst [vmem:[%s224 + $0x30] sm:$0xff] %v3066
      %3099 = vst [vmem:[%s224 + $0x38] sm:$0xff] %v3067
      %3100 = vst [vmem:[%s224 + $0x40] sm:$0xff] %v3068
      %3101 = vst [vmem:[%s224 + $0x48] sm:$0xff] %v3069
      %3102 = vst [vmem:[%s224 + $0x50] sm:$0xff] %v3070
      %3103 = vst [vmem:[%s224 + $0x58] sm:$0xff] %v3071
      %3104 = vst [vmem:[%s224 + $0x60] sm:$0xff] %v3072
      %3105 = vst [vmem:[%s224 + $0x68] sm:$0xff] %v3073
      %3106 = vst [vmem:[%s224 + $0x70] sm:$0xff] %v3074
      %3107 = vst [vmem:[%s224 + $0x78] sm:$0xff] %v3075
      %3108 = vst [vmem:[%s224 + $0x80] sm:$0xff] %v3076
      %3109 = vst [vmem:[%s224 + $0x88] sm:$0xff] %v3077
      %3110 = vst [vmem:[%s224 + $0x90] sm:$0xff] %v3078
      %3111 = vst [vmem:[%s224 + $0x98] sm:$0xff] %v3079
      %3112 = vst [vmem:[%s224 + $0xa0] sm:$0xff] %v3080
      %3113 = vst [vmem:[%s224 + $0xa8] sm:$0xff] %v3081
      %3114 = vst [vmem:[%s224 + $0xb0] sm:$0xff] %v3082
      %3115 = vst [vmem:[%s224 + $0xb8] sm:$0xff] %v3083
      %3116 = vst [vmem:[%s224 + $0xc0] sm:$0xff] %v3084
      %3117 = vst [vmem:[%s224 + $0xc8] sm:$0xff] %v3085
      %3118 = vst [vmem:[%s224 + $0xd0] sm:$0xff] %v3086
      %3119 = vst [vmem:[%s224 + $0xd8] sm:$0xff] %v3087
      %3120 = vst [vmem:[%s224 + $0xe0] sm:$0xff] %v3088
      %3121 = vst [vmem:[%s224 + $0xe8] sm:$0xff] %v3089
      %3122 = vst [vmem:[%s224 + $0xf0] sm:$0xff] %v3090
      %3123 = vst [vmem:[%s224 + $0xf8] sm:$0xff] %v3091
      %s3124 = smul.u32 32, %s15
      %p3125 = scmp.lt.s32.totalorder %s3124, 63
      %s3126 = scalar_select %p3125, %s3124, 63
      %s3127 = smul.addr %s3126, 8
      %s3128 = scalar_lea.vmem %s4, %s3127
      // Predicated region
      $region37: #{_lambda_.10} parent=35 // pred_check
        %p3129 = pneg %p127
      $region38: #{_lambda_.10} parent=35 // pred_check_branch
        %3131 = sbr.rel (%p3129) target = $region40
      $region39: #{_lambda_.10} parent=35 // pred_region
        %s3132 = smul.u32 32, %s15
      $region40: #{_lambda_.10} parent=35 // pred_fallthru
        _
    $region36: #{_lambda_.10} parent=5 // pred_fallthru
      _
    %p3133 = scmp.le.s32.totalorder 2, %s10
    // Predicated region
    $region41: #{_lambda_.10} parent=5 // pred_check
      %p3134 = pneg %p3133
    $region42: #{_lambda_.10} parent=5 // pred_check_branch
      %3136 = sbr.rel (%p3134) target = $region44
    $region43: #{_lambda_.10} parent=5 // pred_region
      %s3137 = ssub.s32 %s10, 2
      // Predicated region
      $region45: #{_lambda_.10} parent=43 // pred_check
        %p3138 = pneg %p133
      $region46: #{_lambda_.10} parent=43 // pred_check_branch
        %3140 = sbr.rel (%p3138) target = $region48
      $region47: #{_lambda_.10} parent=43 // pred_region
        %s3141 = smul.u32 32, %s16
        %p3142 = scmp.lt.s32.totalorder %s3141, 63
        %s3143 = scalar_select %p3142, %s3141, 63
        %s3144 = smul.addr %s3143, 8
        %s3145 = scalar_lea.vmem %s4, %s3144
      $region48: #{_lambda_.10} parent=43 // pred_fallthru
        _
    $region44: #{_lambda_.10} parent=5 // pred_fallthru
      _
  $region6: #{_lambda_.10} parent=0 // loop_footer
    %s14 = sadd.s32 1, %s10
  $region7: #{_lambda_.10} parent=0 // loop_footer_branch
    %9 = sbr.rel target = $region3
  $region8: #{_lambda_.10} parent=0 // loop_exit
    _

</llo_original>
